<compile_context>
chip_gen: v7x
topology: tpu7x:2x2x1
jax: 0.10.0
libtpu: 0.0.40
codegen_flags: <defaults>
</compile_context>

<pallas_src>
import numpy as np
import jax
import jax.numpy as jnp
from jax import lax
from jax.experimental import pallas as pl
from jax.experimental.pallas import tpu as pltpu

NEG_SLOPE = 0.2  # LeakyReLU slope used throughout the block


# ---------------------------------------------------------------------------
# small helpers
# ---------------------------------------------------------------------------
def _pick_hw_tile(hw):
    for t in (2048, 1024, 512, 256, 128):
        if hw % t == 0:
            return t
    return hw


def _vmem_limit_bytes():
    # Generation-aware scoped-VMEM limit (3/4 of physical); None -> default.
    try:
        return int(pltpu.get_tpu_info().vmem_capacity_bytes * 3 // 4)
    except Exception:
        return None


def _compiler_params(sem):
    kw = dict(dimension_semantics=sem)
    lim = _vmem_limit_bytes()
    if lim is not None:
        kw["vmem_limit_bytes"] = lim
    return pltpu.CompilerParams(**kw)


def _apply_act(y, act):
    if act == "lrelu":
        return jnp.where(y >= 0, y, NEG_SLOPE * y)
    if act == "gelu":
        return jax.nn.gelu(y, approximate=True)
    return y


def leaky(x, slope):
    return jnp.where(x >= 0, x, slope * x)


# ---------------------------------------------------------------------------
# Pallas kernel 1: fused pointwise (1x1-conv / per-pixel linear) MXU matmul
# ---------------------------------------------------------------------------
_PW_CACHE = {}


def _pointwise_call(cfg):
    (B, cin, cout, hw, hw_tile, dtype_name, act, ln_eps, gated,
     has_scale, has_bias, has_post, has_res) = cfg
    has_ln = ln_eps is not None
    cin_mm = cin // 2 if gated else cin     # rows entering the matmul
    n_hw = hw // hw_tile

    def kernel(*refs):
        o_ref = refs[-1]
        it = iter(refs[:-1])
        x = next(it)[0].astype(jnp.float32)                   # (cin, hw_tile)
        w = next(it)[...].astype(jnp.float32)                 # (cout, cin_mm)
        if has_ln:                                            # channel LayerNorm
            ln_w = next(it)[...]
            ln_b = next(it)[...]
            mu = jnp.mean(x, axis=0, keepdims=True)
            var = jnp.mean(jnp.square(x - mu), axis=0, keepdims=True)
            x = (x - mu) * lax.rsqrt(var + ln_eps)
            x = x * ln_w + ln_b
        if gated:                                             # gelu(x1) * x2
            x = jax.nn.gelu(x[:cin_mm], approximate=True) * x[cin_mm:]
        if has_scale:                                         # ECA / SE gate
            x = x * next(it)[0]
        y = jnp.dot(w, x, preferred_element_type=jnp.float32)  # MXU
        if has_bias:
            y = y + next(it)[...]
        y = _apply_act(y, act)
        if has_post:                                          # DRT affine etc.
            ps = next(it)[0]
            psh = next(it)[0]
            y = y * ps + psh
        if has_res:                                           # fused skip
            y = y + next(it)[0].astype(jnp.float32)
        o_ref[0] = y.astype(o_ref.dtype)

    in_specs = [
        pl.BlockSpec((1, cin, hw_tile), lambda b, t: (b, 0, t)),
        pl.BlockSpec((cout, cin_mm), lambda b, t: (0, 0)),
    ]
    if has_ln:
        in_specs += [pl.BlockSpec((cin, 1), lambda b, t: (0, 0))] * 2
    if has_scale:
        in_specs += [pl.BlockSpec((1, cin_mm, 1), lambda b, t: (b, 0, 0))]
    if has_bias:
        in_specs += [pl.BlockSpec((cout, 1), lambda b, t: (0, 0))]
    if has_post:
        in_specs += [pl.BlockSpec((1, cout, 1), lambda b, t: (b, 0, 0))] * 2
    if has_res:
        in_specs += [pl.BlockSpec((1, cout, hw_tile), lambda b, t: (b, 0, t))]

    dtype = jnp.dtype(dtype_name)
    cost = pl.CostEstimate(
        flops=2 * B * cout * cin_mm * hw,
        transcendentals=(B * cin_mm * hw if gated else 0)
        + (B * cout * hw if act == "gelu" else 0),
        bytes_accessed=dtype.itemsize
        * (B * cin * hw + cout * cin_mm + B * cout * hw
           + (B * cout * hw if has_res else 0)),
    )

    return pl.pallas_call(
        kernel,
        out_shape=jax.ShapeDtypeStruct((B, cout, hw), dtype),
        grid_spec=pltpu.PrefetchScalarGridSpec(
            num_scalar_prefetch=0,
            grid=(B, n_hw),
            in_specs=in_specs,
            out_specs=pl.BlockSpec((1, cout, hw_tile), lambda b, t: (b, 0, t)),
        ),
        compiler_params=_compiler_params(("parallel", "parallel")),
        cost_estimate=cost,
    )


def pointwise(x, w, *, bias=None, act="none", pre_ln=None, ln_eps=1e-6,
              in_scale=None, gated=False, post=None, residual=None):
    """1x1 conv / per-pixel linear with fused epilogues.  x: (B, Cin, HW)."""
    B, cin, hw = x.shape
    cout = w.shape[0]
    hw_tile = _pick_hw_tile(hw)
    has_ln = pre_ln is not None
    cfg = (B, cin, cout, hw, hw_tile, str(x.dtype), act,
           float(ln_eps) if has_ln else None, bool(gated),
           in_scale is not None, bias is not None, post is not None,
           residual is not None)
    if cfg not in _PW_CACHE:
        _PW_CACHE[cfg] = _pointwise_call(cfg)
    call = _PW_CACHE[cfg]

    args = [x, w.astype(x.dtype)]
    if has_ln:
        ln_w, ln_b = pre_ln
        args += [ln_w.reshape(cin, 1).astype(jnp.float32),
                 ln_b.reshape(cin, 1).astype(jnp.float32)]
    if in_scale is not None:
        cs = cin // 2 if gated else cin
        args += [in_scale.reshape(B, cs, 1).astype(jnp.float32)]
    if bias is not None:
        args += [bias.reshape(cout, 1).astype(jnp.float32)]
    if post is not None:
        ps, pb = post
        args += [ps.reshape(B, cout, 1).astype(jnp.float32),
                 pb.reshape(B, cout, 1).astype(jnp.float32)]
    if residual is not None:
        args += [residual]
    return call(*args)


# ---------------------------------------------------------------------------
# Pallas kernel 2: depthwise 3x3 conv (shared or per-sample dynamic weights)
# ---------------------------------------------------------------------------
_DW_CACHE = {}


def _dw_call(cfg):
    (B, C, H, W, dtype_name, per_batch, has_bias, act) = cfg
    Hp, Wp = H + 2, W + 2

    def kernel(*refs):
        o_ref = refs[-1]
        it = iter(refs[:-1])
        x = next(it)[0].astype(jnp.float32)          # (C, Hp, Wp)
        wgt = next(it)[0].astype(jnp.float32)        # (C, 9)
        acc = jnp.zeros((C, H, W), jnp.float32)
        for t in range(9):                           # unrolled 3x3 taps
            dy, dx = t // 3, t % 3
            acc = acc + x[:, dy:dy + H, dx:dx + W] * wgt[:, t][:, None, None]
        if has_bias:
            acc = acc + next(it)[...][:, :, None]
        acc = _apply_act(acc, act)
        o_ref[0] = acc.astype(o_ref.dtype)

    in_specs = [
        pl.BlockSpec((1, C, Hp, Wp), lambda b: (b, 0, 0, 0)),
        pl.BlockSpec((1, C, 9),
                     (lambda b: (b, 0, 0)) if per_batch else (lambda b: (0, 0, 0))),
    ]
    if has_bias:
        in_specs += [pl.BlockSpec((C, 1), lambda b: (0, 0))]

    dtype = jnp.dtype(dtype_name)
    cost = pl.CostEstimate(
        flops=2 * 9 * B * C * H * W,
        transcendentals=B * C * H * W if act == "gelu" else 0,
        bytes_accessed=dtype.itemsize * (B * C * Hp * Wp + B * C * H * W),
    )
    return pl.pallas_call(
        kernel,
        out_shape=jax.ShapeDtypeStruct((B, C, H, W), dtype),
        grid_spec=pltpu.PrefetchScalarGridSpec(
            num_scalar_prefetch=0,
            grid=(B,),
            in_specs=in_specs,
            out_specs=pl.BlockSpec((1, C, H, W), lambda b: (b, 0, 0, 0)),
        ),
        compiler_params=_compiler_params(("parallel",)),
        cost_estimate=cost,
    )


def dwconv3x3(x_img, w9, *, bias=None, act="none"):
    """Depthwise 3x3 conv, stride 1, pad 1.  w9: (C,9) shared or (B,C,9) dynamic."""
    B, C, H, W = x_img.shape
    per_batch = (w9.ndim == 3)
    cfg = (B, C, H, W, str(x_img.dtype), per_batch, bias is not None, act)
    if cfg not in _DW_CACHE:
        _DW_CACHE[cfg] = _dw_call(cfg)
    call = _DW_CACHE[cfg]
    xp = jnp.pad(x_img, ((0, 0), (0, 0), (1, 1), (1, 1)))
    wp = w9 if per_batch else w9.reshape(1, C, 9)
    args = [xp, wp.astype(x_img.dtype)]
    if bias is not None:
        args += [bias.reshape(C, 1).astype(jnp.float32)]
    return call(*args)


def conv3x3(x_img, w, b, *, act="lrelu", post=None, residual=None):
    """Dense 3x3 conv (stride 1, pad 1) = im2col + fused Pallas MXU matmul."""
    B, cin, H, W = x_img.shape
    cout = w.shape[0]
    xp = jnp.pad(x_img, ((0, 0), (0, 0), (1, 1), (1, 1)))
    # tap-major / channel-minor patches; weight flattening below matches.
    patches = jnp.concatenate(
        [xp[:, :, dy:dy + H, dx:dx + W] for dy in range(3) for dx in range(3)],
        axis=1).reshape(B, 9 * cin, H * W)
    w_flat = jnp.transpose(w, (0, 2, 3, 1)).reshape(cout, 9 * cin)
    y = pointwise(patches, w_flat, bias=b, act=act, post=post, residual=residual)
    return y.reshape(B, cout, H, W)


# ---------------------------------------------------------------------------
# tiny XLA glue shared by the Pallas path and the reference
# ---------------------------------------------------------------------------
def eca_attention(d, w3):
    # ECA: avg-pool of a 1x1 map is the identity; k=3 conv1d over channels.
    dp = jnp.pad(d, ((0, 0), (1, 1)))
    att = w3[0] * dp[:, :-2] + w3[1] * dp[:, 1:-1] + w3[2] * dp[:, 2:]
    return jax.nn.sigmoid(att)


def se_gate(mean_c, w1, w2):
    return jax.nn.sigmoid(jax.nn.silu(mean_c @ w1.T) @ w2.T)


def dyn_kernels(d, w1, w2):
    h = leaky(d @ w1.T, 0.1)
    return (h @ w2.T).reshape(d.shape[0], -1, 9)


def drt_gamma_beta(d, P):
    h = jax.nn.relu(d @ P["drt_w1"].T + P["drt_b1"])
    h = jax.nn.relu(h @ P["drt_w2"].T + P["drt_b2"])
    gb = h @ P["drt_w3"].T + P["drt_b3"]
    C = gb.shape[1] // 2
    return gb[:, :C], gb[:, C:]


def ca_inner(qkv, temp, heads=4):
    # Channel_Attention body for window_size==1 (per-pixel d x d attention).
    # TODO(synk): tiny per-pixel einsums left in XLA; could become a Pallas kernel.
    B, c3, HW = qkv.shape
    C = c3 // 3
    dh = C // heads
    q, k, v = (qkv[:, i * C:(i + 1) * C].reshape(B, heads, dh, HW) for i in range(3))
    qn = q / jnp.maximum(jnp.abs(q), 1e-12)
    kn = k / jnp.maximum(jnp.abs(k), 1e-12)
    attn = qn[:, :, :, None, :] * kn[:, :, None, :, :] * temp[None, :, None, None, None]
    attn = jax.nn.softmax(attn, axis=3)
    out = jnp.sum(attn * v[:, :, None, :, :], axis=3)
    return out.reshape(B, C, HW)


def ca_grid_inner(qkv, temp, heads=4):
    # Channel_Attention_grid body for window_size==1 (q/k normalised over HW).
    B, c3, HW = qkv.shape
    C = c3 // 3
    dh = C // heads
    q, k, v = (qkv[:, i * C:(i + 1) * C].reshape(B, heads, dh, HW) for i in range(3))
    qn = q / jnp.maximum(jnp.sqrt(jnp.sum(q * q, -1, keepdims=True)), 1e-12)
    kn = k / jnp.maximum(jnp.sqrt(jnp.sum(k * k, -1, keepdims=True)), 1e-12)
    attn = jnp.einsum("bhip,bhjp->bhij", qn, kn, precision=lax.Precision.HIGHEST)
    attn = jax.nn.softmax(attn * temp[None, :, None, None], axis=-1)
    out = jnp.einsum("bhij,bhjp->bhip", attn, v, precision=lax.Precision.HIGHEST)
    return out.reshape(B, C, HW)


# ---------------------------------------------------------------------------
# ResidualDenseBlock forward, composed from the Pallas kernels
# ---------------------------------------------------------------------------
def residual_dense_block_pallas(x0_img, d, P):
    B, C, H, W = x0_img.shape
    HW = H * W
    x_flat = x0_img.reshape(B, C, HW)

    # per-sample degradation-conditioned depthwise conv + lrelu, then 1x1 conv
    kdyn = dyn_kernels(d, P["k_w1"], P["k_w2"])                     # (B, C, 9)
    x0 = dwconv3x3(x0_img, kdyn, act="lrelu")
    x0 = pointwise(x0.reshape(B, C, HW), P["conv_w"], bias=P["conv_b"])

    # ECA channel gate on the raw input
    att = eca_attention(d, P["eca_w"])
    x_eca = x_flat * att[:, :, None]

    # --- GDA block ----------------------------------------------------------
    # MBConv (expansion 1); SE gate + MBConv residual fused into the last 1x1.
    h1 = pointwise(x_eca, P["mb_w1"], bias=P["mb_b1"], act="gelu")
    h2 = dwconv3x3(h1.reshape(B, C, H, W), P["mb_dw_w"], bias=P["mb_dw_b"],
                   act="gelu").reshape(B, C, HW)
    gate = se_gate(jnp.mean(h2, axis=-1), P["se_w1"], P["se_w2"])
    m = pointwise(h2, P["mb_w2"], bias=P["mb_b2"], in_scale=gate, residual=x_eca)

    def win_attention(x, p):
        # window_size=1: softmax over a single token is exactly 1, so the
        # attention block collapses (exactly) to  x + Wo @ Wv @ LayerNorm(x).
        w_eff = p["wo"] @ p["wv"]
        return pointwise(x, w_eff, pre_ln=(p["ln_w"], p["ln_b"]), ln_eps=1e-5,
                         residual=x)

    def gcff(x, p):     # Conv_PreNormResidual(Gated_Conv_FeedForward)
        t = pointwise(x, p["pin_w"], pre_ln=(p["ln_w"], p["ln_b"]), ln_eps=1e-6)
        t = dwconv3x3(t.reshape(B, 2 * C, H, W), p["dw_w"]).reshape(B, 2 * C, HW)
        return pointwise(t, p["pout_w"], gated=True, residual=x)

    def chan_attention(x, p, grid):   # Conv_PreNormResidual(Channel_Attention[_grid])
        qkv = pointwise(x, p["qkv_w"], pre_ln=(p["ln_w"], p["ln_b"]), ln_eps=1e-6)
        qkv = dwconv3x3(qkv.reshape(B, 3 * C, H, W), p["dw_w"]).reshape(B, 3 * C, HW)
        inner = (ca_grid_inner if grid else ca_inner)(qkv, p["temp"])
        return pointwise(inner, p["pout_w"], residual=x)

    y = win_attention(m, P["att1"])
    y = gcff(y, P["gcff"][0])
    y = chan_attention(y, P["ca"], grid=False)
    y = gcff(y, P["gcff"][1])
    y = win_attention(y, P["att2"])
    y = gcff(y, P["gcff"][2])
    y = chan_attention(y, P["ca_grid"], grid=True)
    x_gda = gcff(y, P["gcff"][3])

    # --- dense 3x3 conv chain; conv5 fuses DRT affine + 0.2 scale + skip -----
    x_gda_img = x_gda.reshape(B, C, H, W)
    x0_img2 = x0.reshape(B, C, H, W)
    x1 = conv3x3(jnp.concatenate([x0_img2, x_gda_img], 1), P["c1_w"], P["c1_b"])
    x2 = conv3x3(jnp.concatenate([x_gda_img, x1], 1), P["c2_w"], P["c2_b"])
    x3 = conv3x3(jnp.concatenate([x_gda_img, x1, x2], 1), P["c3_w"], P["c3_b"])
    x4 = conv3x3(jnp.concatenate([x_gda_img, x1, x2, x3], 1), P["c4_w"], P["c4_b"])

    gamma, beta = drt_gamma_beta(d, P)
    out = conv3x3(jnp.concatenate([x_gda_img, x1, x2, x3, x4], 1),
                  P["c5_w"], P["c5_b"],
                  post=(0.2 * (1.0 + gamma), 0.2 * beta),
                  residual=x_flat)
    return out


# ---------------------------------------------------------------------------
# pure-XLA reference (same weights, lax convs / einsums at HIGHEST precision)
# ---------------------------------------------------------------------------
def _conv_ref(x, w, b=None, groups=1, pad=1):
    out = lax.conv_general_dilated(
        x, w, (1, 1), ((pad, pad), (pad, pad)),
        dimension_numbers=("NCHW", "OIHW", "NCHW"),
        feature_group_count=groups, precision=lax.Precision.HIGHEST)
    if b is not None:
        out = out + b[None, :, None, None]
    return out


def _pw_ref(x, w, b=None):
    out = jnp.einsum("oc,bchw->bohw", w, x, precision=lax.Precision.HIGHEST)
    if b is not None:
        out = out + b[None, :, None, None]
    return out


def _ln_c_ref(x, w, b, eps):
    mu = jnp.mean(x, axis=1, keepdims=True)
    var = jnp.mean(jnp.square(x - mu), axis=1, keepdims=True)
    return (x - mu) / jnp.sqrt(var + eps) * w[None, :, None, None] + b[None, :, None, None]


def residual_dense_block_reference(x0_img, d, P):
    B, C, H, W = x0_img.shape
    HW = H * W

    kd = dyn_kernels(d, P["k_w1"], P["k_w2"]).reshape(B * C, 1, 3, 3)
    x0 = _conv_ref(x0_img.reshape(1, B * C, H, W), kd, groups=B * C)
    x0 = leaky(x0, NEG_SLOPE).reshape(B, C, H, W)
    x0 = _pw_ref(x0, P["conv_w"], P["conv_b"])

    att = eca_attention(d, P["eca_w"])
    x_eca = x0_img * att[:, :, None, None]

    h1 = jax.nn.gelu(_pw_ref(x_eca, P["mb_w1"], P["mb_b1"]), approximate=True)
    h2 = jax.nn.gelu(_conv_ref(h1, P["mb_dw_w"].reshape(C, 1, 3, 3),
                               P["mb_dw_b"], groups=C), approximate=True)
    gate = se_gate(jnp.mean(h2, axis=(2, 3)), P["se_w1"], P["se_w2"])
    m = _pw_ref(h2 * gate[:, :, None, None], P["mb_w2"], P["mb_b2"]) + x_eca

    def win_attention(x, p):
        xn = _ln_c_ref(x, p["ln_w"], p["ln_b"], 1e-5)
        return _pw_ref(_pw_ref(xn, p["wv"]), p["wo"]) + x

    def gcff(x, p):
        xn = _ln_c_ref(x, p["ln_w"], p["ln_b"], 1e-6)
        t = _pw_ref(xn, p["pin_w"])
        t = _conv_ref(t, p["dw_w"].reshape(2 * C, 1, 3, 3), groups=2 * C)
        return _pw_ref(jax.nn.gelu(t[:, :C], approximate=True) * t[:, C:],
                       p["pout_w"]) + x

    def chan_attention(x, p, grid):
        xn = _ln_c_ref(x, p["ln_w"], p["ln_b"], 1e-6)
        qkv = _conv_ref(_pw_ref(xn, p["qkv_w"]),
                        p["dw_w"].reshape(3 * C, 1, 3, 3), groups=3 * C)
        inner = (ca_grid_inner if grid else ca_inner)(qkv.reshape(B, 3 * C, HW),
                                                      p["temp"])
        return _pw_ref(inner.reshape(B, C, H, W), p["pout_w"]) + x

    y = win_attention(m, P["att1"])
    y = gcff(y, P["gcff"][0])
    y = chan_attention(y, P["ca"], grid=False)
    y = gcff(y, P["gcff"][1])
    y = win_attention(y, P["att2"])
    y = gcff(y, P["gcff"][2])
    y = chan_attention(y, P["ca_grid"], grid=True)
    x_gda = gcff(y, P["gcff"][3])

    x1 = leaky(_conv_ref(jnp.concatenate([x0, x_gda], 1), P["c1_w"], P["c1_b"]), NEG_SLOPE)
    x2 = leaky(_conv_ref(jnp.concatenate([x_gda, x1], 1), P["c2_w"], P["c2_b"]), NEG_SLOPE)
    x3 = leaky(_conv_ref(jnp.concatenate([x_gda, x1, x2], 1), P["c3_w"], P["c3_b"]), NEG_SLOPE)
    x4 = leaky(_conv_ref(jnp.concatenate([x_gda, x1, x2, x3], 1), P["c4_w"], P["c4_b"]), NEG_SLOPE)
    out = leaky(_conv_ref(jnp.concatenate([x_gda, x1, x2, x3, x4], 1),
                          P["c5_w"], P["c5_b"]), NEG_SLOPE)

    gamma, beta = drt_gamma_beta(d, P)
    out = (1.0 + gamma)[:, :, None, None] * out + beta[:, :, None, None]
    return out * 0.2 + x0_img


# ---------------------------------------------------------------------------
# deterministic parameter construction
# ---------------------------------------------------------------------------
def init_params(key, C=64, growth=32, heads=4):
    kit = iter(jax.random.split(key, 160))
    nk = lambda: next(kit)

    def w(shape, scale=None):
        fan_in = int(np.prod(shape[1:])) if len(shape) > 1 else int(shape[0])
        s = (1.0 / np.sqrt(fan_in)) if scale is None else scale
        return (s * jax.random.normal(nk(), shape)).astype(jnp.float32)

    def b(n):
        return (0.05 * jax.random.normal(nk(), (n,))).astype(jnp.float32)

    def ln(n):
        return ((1.0 + 0.1 * jax.random.normal(nk(), (n,))).astype(jnp.float32), b(n))

    P = {}
    P["k_w1"] = w((C, C))
    P["k_w2"] = w((C * 9, C))
    P["conv_w"] = w((C, C)); P["conv_b"] = b(C)
    P["eca_w"] = w((3,), scale=0.5)
    P["mb_w1"] = w((C, C)); P["mb_b1"] = b(C)
    P["mb_dw_w"] = w((C, 9)); P["mb_dw_b"] = b(C)
    P["se_w1"] = w((C // 4, C)); P["se_w2"] = w((C, C // 4))
    P["mb_w2"] = w((C, C)); P["mb_b2"] = b(C)
    for name in ("att1", "att2"):
        lw, lb = ln(C)
        P[name] = dict(ln_w=lw, ln_b=lb, wv=w((C, C)), wo=w((C, C)))
    P["gcff"] = []
    for _ in range(4):
        lw, lb = ln(C)
        P["gcff"].append(dict(ln_w=lw, ln_b=lb, pin_w=w((2 * C, C)),
                              dw_w=w((2 * C, 9)), pout_w=w((C, C))))
    for name in ("ca", "ca_grid"):
        lw, lb = ln(C)
        P[name] = dict(ln_w=lw, ln_b=lb, qkv_w=w((3 * C, C)), dw_w=w((3 * C, 9)),
                       temp=jnp.ones((heads,), jnp.float32), pout_w=w((C, C)))
    P["c1_w"] = w((growth, 2 * C, 3, 3)); P["c1_b"] = b(growth)
    P["c2_w"] = w((growth, C + growth, 3, 3)); P["c2_b"] = b(growth)
    P["c3_w"] = w((growth, C + 2 * growth, 3, 3)); P["c3_b"] = b(growth)
    P["c4_w"] = w((growth, C + 3 * growth, 3, 3)); P["c4_b"] = b(growth)
    P["c5_w"] = w((C, C + 4 * growth, 3, 3)); P["c5_b"] = b(C)
    hid = (C + 2 * C) // 2
    P["drt_w1"] = w((hid, C)); P["drt_b1"] = b(hid)
    P["drt_w2"] = w((hid, hid)); P["drt_b2"] = b(hid)
    P["drt_w3"] = w((2 * C, hid)); P["drt_b3"] = b(2 * C)
    return P


if __name__ == "__main__":
    key = jax.random.PRNGKey(0)
    kp, kx, kd = jax.random.split(key, 3)

    # The module hard-codes 64 channels (dynamic-kernel MLP, self.conv, DRT,
    # GDA_Block), so num_feat must be 64 for the forward to type-check;
    # num_grow_ch=32.  Spatial 16x24 -> HW=384 exercises the 128-lane HW tiling.
    B, C, H, W = 2, 64, 16, 24
    params = init_params(kp, C=C, growth=32)
    x0_img = jax.random.normal(kx, (B, C, H, W), dtype=jnp.float32)
    d = jax.random.normal(kd, (B, C), dtype=jnp.float32)

    out = residual_dense_block_pallas(x0_img, d, params)
    out = jax.block_until_ready(out)
    assert out.shape == (B, C, H, W)
    assert bool(jnp.all(jnp.isfinite(out)))

    ref = residual_dense_block_reference(x0_img, d, params)
    ref = jax.block_until_ready(ref)
    np.testing.assert_allclose(np.asarray(out), np.asarray(ref),
                               rtol=5e-2, atol=5e-2)
    print("KERNEL_OK")
</pallas_src>

<mosaic_0001>
module attributes {stable_mosaic.version = 11 : i64} {
  func.func @kernel(%arg0: i32, %arg1: memref<1x64x18x26xf32, #tpu.memory_space<vmem>>, %arg2: memref<1x64x9xf32, #tpu.memory_space<vmem>>, %arg3: memref<1x64x16x24xf32, #tpu.memory_space<vmem>>) attributes {dimension_semantics = [#tpu.dimension_semantics<parallel>], iteration_bounds = array<i64: 2>, scalar_prefetch = 0 : i64, scratch_operands = 0 : i64, tpu.core_type = #tpu.core_type<tc>, window_params = [{transform_indices = @transform_0, window_bounds = array<i64: 1, 64, 18, 26>}, {transform_indices = @transform_1, window_bounds = array<i64: 1, 64, 9>}, {transform_indices = @transform_2, window_bounds = array<i64: 1, 64, 16, 24>}]} {
    %c0 = arith.constant 0 : index
    %c0_0 = arith.constant 0 : index
    %c0_1 = arith.constant 0 : index
    %c0_2 = arith.constant 0 : index
    %0 = vector.load %arg1[%c0, %c0_0, %c0_1, %c0_2] : memref<1x64x18x26xf32, #tpu.memory_space<vmem>>, vector<1x64x18x26xf32>
    %1 = vector.shape_cast %0 : vector<1x64x18x26xf32> to vector<64x18x26xf32>
    %c0_3 = arith.constant 0 : index
    %c0_4 = arith.constant 0 : index
    %c0_5 = arith.constant 0 : index
    %2 = vector.load %arg2[%c0_3, %c0_4, %c0_5] : memref<1x64x9xf32, #tpu.memory_space<vmem>>, vector<1x64x9xf32>
    %3 = vector.shape_cast %2 : vector<1x64x9xf32> to vector<64x9xf32>
    %cst = arith.constant 0.000000e+00 : f32
    %4 = vector.broadcast %cst : f32 to vector<64x16x24xf32>
    %5 = vector.extract_strided_slice %1 {offsets = [0, 0, 0], sizes = [64, 16, 24], strides = [1, 1, 1]} : vector<64x18x26xf32> to vector<64x16x24xf32>
    %6 = vector.extract_strided_slice %3 {offsets = [0, 0], sizes = [64, 1], strides = [1, 1]} : vector<64x9xf32> to vector<64x1xf32>
    %7 = vector.shape_cast %6 : vector<64x1xf32> to vector<64xf32>
    %8 = vector.shape_cast %7 : vector<64xf32> to vector<64x1x1xf32>
    %9 = vector.broadcast %8 : vector<64x1x1xf32> to vector<64x16x24xf32>
    %10 = arith.mulf %5, %9 : vector<64x16x24xf32>
    %11 = arith.addf %4, %10 : vector<64x16x24xf32>
    %12 = vector.extract_strided_slice %1 {offsets = [0, 0, 1], sizes = [64, 16, 24], strides = [1, 1, 1]} : vector<64x18x26xf32> to vector<64x16x24xf32>
    %13 = vector.extract_strided_slice %3 {offsets = [0, 1], sizes = [64, 1], strides = [1, 1]} : vector<64x9xf32> to vector<64x1xf32>
    %14 = vector.shape_cast %13 : vector<64x1xf32> to vector<64xf32>
    %15 = vector.shape_cast %14 : vector<64xf32> to vector<64x1x1xf32>
    %16 = vector.broadcast %15 : vector<64x1x1xf32> to vector<64x16x24xf32>
    %17 = arith.mulf %12, %16 : vector<64x16x24xf32>
    %18 = arith.addf %11, %17 : vector<64x16x24xf32>
    %19 = vector.extract_strided_slice %1 {offsets = [0, 0, 2], sizes = [64, 16, 24], strides = [1, 1, 1]} : vector<64x18x26xf32> to vector<64x16x24xf32>
    %20 = vector.extract_strided_slice %3 {offsets = [0, 2], sizes = [64, 1], strides = [1, 1]} : vector<64x9xf32> to vector<64x1xf32>
    %21 = vector.shape_cast %20 : vector<64x1xf32> to vector<64xf32>
    %22 = vector.shape_cast %21 : vector<64xf32> to vector<64x1x1xf32>
    %23 = vector.broadcast %22 : vector<64x1x1xf32> to vector<64x16x24xf32>
    %24 = arith.mulf %19, %23 : vector<64x16x24xf32>
    %25 = arith.addf %18, %24 : vector<64x16x24xf32>
    %26 = vector.extract_strided_slice %1 {offsets = [0, 1, 0], sizes = [64, 16, 24], strides = [1, 1, 1]} : vector<64x18x26xf32> to vector<64x16x24xf32>
    %27 = vector.extract_strided_slice %3 {offsets = [0, 3], sizes = [64, 1], strides = [1, 1]} : vector<64x9xf32> to vector<64x1xf32>
    %28 = vector.shape_cast %27 : vector<64x1xf32> to vector<64xf32>
    %29 = vector.shape_cast %28 : vector<64xf32> to vector<64x1x1xf32>
    %30 = vector.broadcast %29 : vector<64x1x1xf32> to vector<64x16x24xf32>
    %31 = arith.mulf %26, %30 : vector<64x16x24xf32>
    %32 = arith.addf %25, %31 : vector<64x16x24xf32>
    %33 = vector.extract_strided_slice %1 {offsets = [0, 1, 1], sizes = [64, 16, 24], strides = [1, 1, 1]} : vector<64x18x26xf32> to vector<64x16x24xf32>
    %34 = vector.extract_strided_slice %3 {offsets = [0, 4], sizes = [64, 1], strides = [1, 1]} : vector<64x9xf32> to vector<64x1xf32>
    %35 = vector.shape_cast %34 : vector<64x1xf32> to vector<64xf32>
    %36 = vector.shape_cast %35 : vector<64xf32> to vector<64x1x1xf32>
    %37 = vector.broadcast %36 : vector<64x1x1xf32> to vector<64x16x24xf32>
    %38 = arith.mulf %33, %37 : vector<64x16x24xf32>
    %39 = arith.addf %32, %38 : vector<64x16x24xf32>
    %40 = vector.extract_strided_slice %1 {offsets = [0, 1, 2], sizes = [64, 16, 24], strides = [1, 1, 1]} : vector<64x18x26xf32> to vector<64x16x24xf32>
    %41 = vector.extract_strided_slice %3 {offsets = [0, 5], sizes = [64, 1], strides = [1, 1]} : vector<64x9xf32> to vector<64x1xf32>
    %42 = vector.shape_cast %41 : vector<64x1xf32> to vector<64xf32>
    %43 = vector.shape_cast %42 : vector<64xf32> to vector<64x1x1xf32>
    %44 = vector.broadcast %43 : vector<64x1x1xf32> to vector<64x16x24xf32>
    %45 = arith.mulf %40, %44 : vector<64x16x24xf32>
    %46 = arith.addf %39, %45 : vector<64x16x24xf32>
    %47 = vector.extract_strided_slice %1 {offsets = [0, 2, 0], sizes = [64, 16, 24], strides = [1, 1, 1]} : vector<64x18x26xf32> to vector<64x16x24xf32>
    %48 = vector.extract_strided_slice %3 {offsets = [0, 6], sizes = [64, 1], strides = [1, 1]} : vector<64x9xf32> to vector<64x1xf32>
    %49 = vector.shape_cast %48 : vector<64x1xf32> to vector<64xf32>
    %50 = vector.shape_cast %49 : vector<64xf32> to vector<64x1x1xf32>
    %51 = vector.broadcast %50 : vector<64x1x1xf32> to vector<64x16x24xf32>
    %52 = arith.mulf %47, %51 : vector<64x16x24xf32>
    %53 = arith.addf %46, %52 : vector<64x16x24xf32>
    %54 = vector.extract_strided_slice %1 {offsets = [0, 2, 1], sizes = [64, 16, 24], strides = [1, 1, 1]} : vector<64x18x26xf32> to vector<64x16x24xf32>
    %55 = vector.extract_strided_slice %3 {offsets = [0, 7], sizes = [64, 1], strides = [1, 1]} : vector<64x9xf32> to vector<64x1xf32>
    %56 = vector.shape_cast %55 : vector<64x1xf32> to vector<64xf32>
    %57 = vector.shape_cast %56 : vector<64xf32> to vector<64x1x1xf32>
    %58 = vector.broadcast %57 : vector<64x1x1xf32> to vector<64x16x24xf32>
    %59 = arith.mulf %54, %58 : vector<64x16x24xf32>
    %60 = arith.addf %53, %59 : vector<64x16x24xf32>
    %61 = vector.extract_strided_slice %1 {offsets = [0, 2, 2], sizes = [64, 16, 24], strides = [1, 1, 1]} : vector<64x18x26xf32> to vector<64x16x24xf32>
    %62 = vector.extract_strided_slice %3 {offsets = [0, 8], sizes = [64, 1], strides = [1, 1]} : vector<64x9xf32> to vector<64x1xf32>
    %63 = vector.shape_cast %62 : vector<64x1xf32> to vector<64xf32>
    %64 = vector.shape_cast %63 : vector<64xf32> to vector<64x1x1xf32>
    %65 = vector.broadcast %64 : vector<64x1x1xf32> to vector<64x16x24xf32>
    %66 = arith.mulf %61, %65 : vector<64x16x24xf32>
    %67 = arith.addf %60, %66 : vector<64x16x24xf32>
    %cst_6 = arith.constant 0.000000e+00 : f32
    %68 = vector.broadcast %cst_6 : f32 to vector<64x16x24xf32>
    %69 = arith.cmpf oge, %67, %68 : vector<64x16x24xf32>
    %cst_7 = arith.constant 2.000000e-01 : f32
    %70 = vector.broadcast %cst_7 : f32 to vector<64x16x24xf32>
    %71 = arith.mulf %70, %67 : vector<64x16x24xf32>
    %72 = arith.select %69, %67, %71 : vector<64x16x24xi1>, vector<64x16x24xf32>
    %c0_8 = arith.constant 0 : index
    %c0_9 = arith.constant 0 : index
    %c0_10 = arith.constant 0 : index
    %c0_11 = arith.constant 0 : index
    %73 = vector.load %arg3[%c0_8, %c0_9, %c0_10, %c0_11] : memref<1x64x16x24xf32, #tpu.memory_space<vmem>>, vector<1x64x16x24xf32>
    %74 = vector.shape_cast %73 : vector<1x64x16x24xf32> to vector<64x16x24xf32>
    %75 = vector.shape_cast %72 : vector<64x16x24xf32> to vector<1x64x16x24xf32>
    tpu.vector_store %arg3[%c0_8, %c0_9, %c0_10, %c0_11], %75 {strides = array<i32>} : memref<1x64x16x24xf32, #tpu.memory_space<vmem>>, vector<1x64x16x24xf32>,
    return
  }
  func.func @transform_0(%arg0: i32) -> (i32, i32, i32, i32) {
    %c0_i32 = arith.constant 0 : i32
    %c0_i32_0 = arith.constant 0 : i32
    %c0_i32_1 = arith.constant 0 : i32
    %c0_i32_2 = arith.constant 0 : i32
    return %arg0, %c0_i32, %c0_i32_0, %c0_i32_1 : i32, i32, i32, i32
  }
  func.func @transform_1(%arg0: i32) -> (i32, i32, i32) {
    %c0_i32 = arith.constant 0 : i32
    %c0_i32_0 = arith.constant 0 : i32
    %c0_i32_1 = arith.constant 0 : i32
    return %arg0, %c0_i32, %c0_i32_0 : i32, i32, i32
  }
  func.func @transform_2(%arg0: i32) -> (i32, i32, i32, i32) {
    %c0_i32 = arith.constant 0 : i32
    %c0_i32_0 = arith.constant 0 : i32
    %c0_i32_1 = arith.constant 0 : i32
    %c0_i32_2 = arith.constant 0 : i32
    return %arg0, %c0_i32, %c0_i32_0, %c0_i32_1 : i32, i32, i32, i32
  }
}

</mosaic_0001>

<llo_original>
// kernel: tpu_custom_call.1
$region0: #{tpu_custom_call.1}
  #allocation0 [shape = 'u32[]', space=smem, size = 0x4, offset = 0x4, fixed_abs, tag = 'smem constant byte address 0x4 - core index']
  #allocation1 [shape = 'u32[144,128]{1,0:T(1,128)}', space=vmem, size = 0x12000, scoped, tag = 'internal scratch']
  %s0 = inlined_call_operand.vmem [shape: f32[2,64,18,26], index: 0, kind: input, shape index: {}]
  %s1 = inlined_call_operand.vmem [shape: f32[2,64,9], index: 1, kind: input, shape index: {}]
  %s2 = inlined_call_operand.vmem [shape: f32[2,64,16,24], index: 2, kind: output, shape index: {}]
  %s3 = sld [smem:[#allocation0]]
  $region41: #{tpu_custom_call.1} parent=0
    _
  %s5 = ssub.s32 1, %s3
  %s6 = scalar_select 0, %s5, %s3
  loop: start=0, step=1, limit=4
  $region2: #{tpu_custom_call.1} parent=0 // loop_pre_header
    _
  $region3: #{tpu_custom_call.1} parent=0 // loop_header
    %s8 = sphi 0, %s12
    %p9 = scmp.ge.s32.totalorder %s8, 4
    %s18 = sphi 0, %s20
    %s21 = sphi 0, %s18
    %s22 = sphi 0, %s21
    %s38 = sphi 0, %s22
    %s44 = sphi 0, %s46
    %s47 = sphi 0, %s44
    %s48 = sphi 0, %s47
    %s64 = sphi 0, %s48
    %s70 = sphi 0, %s72
    %s73 = sphi 0, %s70
    %s74 = sphi 0, %s73
    %s90 = sphi 0, %s74
  $region4: #{tpu_custom_call.1} parent=0 // loop_header_branch
    %11 = sbr.rel (%p9) target = $region8
  $region5: #{tpu_custom_call.1} parent=0 // loop_body
    %s13 = ssub.s32 %s8, 1
    %s14 = ssub.s32 %s8, 2
    %s15 = sadd.s32 %s8, 1
    %s16 = ssub.s32 %s8, %s15
    %p17 = scmp.eq.s32.totalorder %s16, 0
    %s19 = sadd.s32 %s18, 1
    %s20 = scalar_select %p17, %s18, %s19
    %p23 = pneg %p17
    %p24 = scmp.eq.s32.totalorder %s8, 1
    %p25 = por %p23, %p24
    %p26 = scmp.ne.s32.totalorder %s18, %s21
    %p27 = scmp.eq.s32.totalorder %s8, 0
    %p28 = por %p26, %p27
    %p29 = scmp.ne.s32.totalorder %s18, %s21
    %p30 = scmp.eq.s32.totalorder %s13, 1
    %p31 = por %p29, %p30
    %p32 = scmp.ne.s32.totalorder %s21, %s22
    %p33 = scmp.eq.s32.totalorder %s13, 0
    %p34 = por %p32, %p33
    %p35 = scmp.ne.s32.totalorder %s21, %s22
    %p36 = scmp.eq.s32.totalorder %s14, 1
    %p37 = por %p35, %p36
    %p39 = scmp.ne.s32.totalorder %s22, %s38
    %p40 = scmp.eq.s32.totalorder %s14, 0
    %p41 = por %p39, %p40
    %s42 = ssub.s32 %s8, %s15
    %p43 = scmp.eq.s32.totalorder %s42, 0
    %s45 = sadd.s32 %s44, 1
    %s46 = scalar_select %p43, %s44, %s45
    %p49 = pneg %p43
    %p50 = scmp.eq.s32.totalorder %s8, 1
    %p51 = por %p49, %p50
    %p52 = scmp.ne.s32.totalorder %s44, %s47
    %p53 = scmp.eq.s32.totalorder %s8, 0
    %p54 = por %p52, %p53
    %p55 = scmp.ne.s32.totalorder %s44, %s47
    %p56 = scmp.eq.s32.totalorder %s13, 1
    %p57 = por %p55, %p56
    %p58 = scmp.ne.s32.totalorder %s47, %s48
    %p59 = scmp.eq.s32.totalorder %s13, 0
    %p60 = por %p58, %p59
    %p61 = scmp.ne.s32.totalorder %s47, %s48
    %p62 = scmp.eq.s32.totalorder %s14, 1
    %p63 = por %p61, %p62
    %p65 = scmp.ne.s32.totalorder %s48, %s64
    %p66 = scmp.eq.s32.totalorder %s14, 0
    %p67 = por %p65, %p66
    %s68 = ssub.s32 %s8, %s15
    %p69 = scmp.eq.s32.totalorder %s68, 0
    %s71 = sadd.s32 %s70, 1
    %s72 = scalar_select %p69, %s70, %s71
    %p75 = pneg %p69
    %p76 = scmp.eq.s32.totalorder %s8, 1
    %p77 = por %p75, %p76
    %p78 = scmp.ne.s32.totalorder %s70, %s73
    %p79 = scmp.eq.s32.totalorder %s8, 0
    %p80 = por %p78, %p79
    %p81 = scmp.ne.s32.totalorder %s70, %s73
    %p82 = scmp.eq.s32.totalorder %s13, 1
    %p83 = por %p81, %p82
    %p84 = scmp.ne.s32.totalorder %s73, %s74
    %p85 = scmp.eq.s32.totalorder %s13, 0
    %p86 = por %p84, %p85
    %p87 = scmp.ne.s32.totalorder %s73, %s74
    %p88 = scmp.eq.s32.totalorder %s14, 1
    %p89 = por %p87, %p88
    %p91 = scmp.ne.s32.totalorder %s74, %s90
    %p92 = scmp.eq.s32.totalorder %s14, 0
    %p93 = por %p91, %p92
    %p94 = scmp.le.s32.totalorder 1, %s8
    %p95 = scmp.lt.s32.totalorder %s8, 3
    %p96 = pnand %p94, %p95
    %p97 = pneg %p96
    // Predicated region
    $region9: #{tpu_custom_call.1} parent=5 // pred_check
      _
    $region10: #{tpu_custom_call.1} parent=5 // pred_check_branch
      %99 = sbr.rel (%p96) target = $region12
    $region11: #{tpu_custom_call.1} parent=5 // pred_region
      %s100 = ssub.s32 %s8, 1
    $region12: #{tpu_custom_call.1} parent=5 // pred_fallthru
      _
    %p101 = scmp.lt.s32.totalorder %s8, 2
    // Predicated region
    $region13: #{tpu_custom_call.1} parent=5 // pred_check
      %p102 = pneg %p101
    $region14: #{tpu_custom_call.1} parent=5 // pred_check_branch
      %104 = sbr.rel (%p102) target = $region16
    $region15: #{tpu_custom_call.1} parent=5 // pred_region
      // Predicated region
      $region17: #{tpu_custom_call.1} parent=15 // pred_check
        %p105 = pneg %p28
      $region18: #{tpu_custom_call.1} parent=15 // pred_check_branch
        %107 = sbr.rel (%p105) target = $region20
      $region19: #{tpu_custom_call.1} parent=15 // pred_region
        %p108 = scmp.lt.s32.totalorder %s8, 1
        %s109 = scalar_select %p108, %s8, 1
        %s110 = smul.addr %s109, 192
        %s111 = smul.addr %s110, 8
        %s112 = scalar_lea.vmem %s0, %s111
      $region20: #{tpu_custom_call.1} parent=15 // pred_fallthru
        _
      // Predicated region
      $region21: #{tpu_custom_call.1} parent=15 // pred_check
        %p113 = pneg %p54
      $region22: #{tpu_custom_call.1} parent=15 // pred_check_branch
        %115 = sbr.rel (%p113) target = $region24
      $region23: #{tpu_custom_call.1} parent=15 // pred_region
        %p116 = scmp.lt.s32.totalorder %s8, 1
        %s117 = scalar_select %p116, %s8, 1
        %s118 = smul.addr %s117, 8
        %s119 = smul.addr %s118, 8
        %s120 = scalar_lea.vmem %s1, %s119
      $region24: #{tpu_custom_call.1} parent=15 // pred_fallthru
        _
    $region16: #{tpu_custom_call.1} parent=5 // pred_fallthru
      _
    %p121 = scmp.le.s32.totalorder 1, %s8
    %p122 = scmp.lt.s32.totalorder %s8, 3
    %p123 = pnand %p121, %p122
    %p124 = pneg %p123
    // Predicated region
    $region25: #{tpu_custom_call.1} parent=5 // pred_check
      _
    $region26: #{tpu_custom_call.1} parent=5 // pred_check_branch
      %126 = sbr.rel (%p123) target = $region28
    $region27: #{tpu_custom_call.1} parent=5 // pred_region
      %s127 = ssub.s32 %s8, 1
      %p128 = scmp.lt.s32.totalorder %s13, 1
      %s129 = scalar_select %p128, %s13, 1
      %s130 = smul.addr %s129, 192
      %s131 = smul.addr %s130, 8
      %s132 = scalar_lea.vmem %s0, %s131
      %p133 = pneg %p34
      %p134 = pneg %p31
      %p135 = scmp.lt.s32.totalorder %s13, 1
      %s136 = scalar_select %p135, %s13, 1
      %s137 = smul.addr %s136, 8
      %s138 = smul.addr %s137, 8
      %s139 = scalar_lea.vmem %s1, %s138
      %p140 = pneg %p60
      %p141 = pneg %p57
      %p142 = pneg %p86
      %p143 = pneg %p83
      %p144 = scmp.lt.s32.totalorder %s13, 1
      %s145 = scalar_select %p144, %s13, 1
      %s146 = smul.addr %s145, 128
      %s147 = smul.addr %s146, 8
      %s148 = scalar_lea.vmem %s2, %s147
      %p149 = scmp.lt.s32.totalorder %s13, 1
      %s150 = scalar_select %p149, %s13, 1
      %s151 = smul.addr %s150, 192
      %s152 = smul.addr %s151, 8
      %s153 = scalar_lea.vmem %s0, %s152
      %p154 = scmp.lt.s32.totalorder %s13, 1
      %s155 = scalar_select %p154, %s13, 1
      %s156 = smul.addr %s155, 8
      %s157 = smul.addr %s156, 8
      %s158 = scalar_lea.vmem %s1, %s157
      %p159 = scmp.lt.s32.totalorder %s13, 1
      %s160 = scalar_select %p159, %s13, 1
      %s161 = smul.addr %s160, 128
      %s162 = smul.addr %s161, 8
      %s163 = scalar_lea.vmem %s2, %s162
      %v164 = vld [vmem:[%s153] sm:$0xff]
      %v165 = vld [vmem:[%s153 + $0x8] sm:$0xff]
      %v166 = vld [vmem:[%s153 + $0x10] sm:$0x3]
      %v167 = vld [vmem:[%s153 + $0x18] sm:$0xff]
      %v168 = vld [vmem:[%s153 + $0x20] sm:$0xff]
      %v169 = vld [vmem:[%s153 + $0x28] sm:$0x3]
      %v170 = vld [vmem:[%s153 + $0x30] sm:$0xff]
      %v171 = vld [vmem:[%s153 + $0x38] sm:$0xff]
      %v172 = vld [vmem:[%s153 + $0x40] sm:$0x3]
      %v173 = vld [vmem:[%s153 + $0x48] sm:$0xff]
      %v174 = vld [vmem:[%s153 + $0x50] sm:$0xff]
      %v175 = vld [vmem:[%s153 + $0x58] sm:$0x3]
      %v176 = vld [vmem:[%s153 + $0x60] sm:$0xff]
      %v177 = vld [vmem:[%s153 + $0x68] sm:$0xff]
      %v178 = vld [vmem:[%s153 + $0x70] sm:$0x3]
      %v179 = vld [vmem:[%s153 + $0x78] sm:$0xff]
      %v180 = vld [vmem:[%s153 + $0x80] sm:$0xff]
      %v181 = vld [vmem:[%s153 + $0x88] sm:$0x3]
      %v182 = vld [vmem:[%s153 + $0x90] sm:$0xff]
      %v183 = vld [vmem:[%s153 + $0x98] sm:$0xff]
      %v184 = vld [vmem:[%s153 + $0xa0] sm:$0x3]
      %v185 = vld [vmem:[%s153 + $0xa8] sm:$0xff]
      %v186 = vld [vmem:[%s153 + $0xb0] sm:$0xff]
      %v187 = vld [vmem:[%s153 + $0xb8] sm:$0x3]
      %v188 = vld [vmem:[%s153 + $0xc0] sm:$0xff]
      %v189 = vld [vmem:[%s153 + $0xc8] sm:$0xff]
      %v190 = vld [vmem:[%s153 + $0xd0] sm:$0x3]
      %v191 = vld [vmem:[%s153 + $0xd8] sm:$0xff]
      %v192 = vld [vmem:[%s153 + $0xe0] sm:$0xff]
      %v193 = vld [vmem:[%s153 + $0xe8] sm:$0x3]
      %v194 = vld [vmem:[%s153 + $0xf0] sm:$0xff]
      %v195 = vld [vmem:[%s153 + $0xf8] sm:$0xff]
      %v196 = vld [vmem:[%s153 + $0x100] sm:$0x3]
      %v197 = vld [vmem:[%s153 + $0x108] sm:$0xff]
      %v198 = vld [vmem:[%s153 + $0x110] sm:$0xff]
      %v199 = vld [vmem:[%s153 + $0x118] sm:$0x3]
      %v200 = vld [vmem:[%s153 + $0x120] sm:$0xff]
      %v201 = vld [vmem:[%s153 + $0x128] sm:$0xff]
      %v202 = vld [vmem:[%s153 + $0x130] sm:$0x3]
      %v203 = vld [vmem:[%s153 + $0x138] sm:$0xff]
      %v204 = vld [vmem:[%s153 + $0x140] sm:$0xff]
      %v205 = vld [vmem:[%s153 + $0x148] sm:$0x3]
      %v206 = vld [vmem:[%s153 + $0x150] sm:$0xff]
      %v207 = vld [vmem:[%s153 + $0x158] sm:$0xff]
      %v208 = vld [vmem:[%s153 + $0x160] sm:$0x3]
      %v209 = vld [vmem:[%s153 + $0x168] sm:$0xff]
      %v210 = vld [vmem:[%s153 + $0x170] sm:$0xff]
      %v211 = vld [vmem:[%s153 + $0x178] sm:$0x3]
      %v212 = vld [vmem:[%s153 + $0x180] sm:$0xff]
      %v213 = vld [vmem:[%s153 + $0x188] sm:$0xff]
      %v214 = vld [vmem:[%s153 + $0x190] sm:$0x3]
      %v215 = vld [vmem:[%s153 + $0x198] sm:$0xff]
      %v216 = vld [vmem:[%s153 + $0x1a0] sm:$0xff]
      %v217 = vld [vmem:[%s153 + $0x1a8] sm:$0x3]
      %v218 = vld [vmem:[%s153 + $0x1b0] sm:$0xff]
      %v219 = vld [vmem:[%s153 + $0x1b8] sm:$0xff]
      %v220 = vld [vmem:[%s153 + $0x1c0] sm:$0x3]
      %v221 = vld [vmem:[%s153 + $0x1c8] sm:$0xff]
      %v222 = vld [vmem:[%s153 + $0x1d0] sm:$0xff]
      %v223 = vld [vmem:[%s153 + $0x1d8] sm:$0x3]
      %v224 = vld [vmem:[%s153 + $0x1e0] sm:$0xff]
      %v225 = vld [vmem:[%s153 + $0x1e8] sm:$0xff]
      %v226 = vld [vmem:[%s153 + $0x1f0] sm:$0x3]
      %v227 = vld [vmem:[%s153 + $0x1f8] sm:$0xff]
      %v228 = vld [vmem:[%s153 + $0x200] sm:$0xff]
      %v229 = vld [vmem:[%s153 + $0x208] sm:$0x3]
      %v230 = vld [vmem:[%s153 + $0x210] sm:$0xff]
      %v231 = vld [vmem:[%s153 + $0x218] sm:$0xff]
      %v232 = vld [vmem:[%s153 + $0x220] sm:$0x3]
      %v233 = vld [vmem:[%s153 + $0x228] sm:$0xff]
      %v234 = vld [vmem:[%s153 + $0x230] sm:$0xff]
      %v235 = vld [vmem:[%s153 + $0x238] sm:$0x3]
      %v236 = vld [vmem:[%s153 + $0x240] sm:$0xff]
      %v237 = vld [vmem:[%s153 + $0x248] sm:$0xff]
      %v238 = vld [vmem:[%s153 + $0x250] sm:$0x3]
      %v239 = vld [vmem:[%s153 + $0x258] sm:$0xff]
      %v240 = vld [vmem:[%s153 + $0x260] sm:$0xff]
      %v241 = vld [vmem:[%s153 + $0x268] sm:$0x3]
      %v242 = vld [vmem:[%s153 + $0x270] sm:$0xff]
      %v243 = vld [vmem:[%s153 + $0x278] sm:$0xff]
      %v244 = vld [vmem:[%s153 + $0x280] sm:$0x3]
      %v245 = vld [vmem:[%s153 + $0x288] sm:$0xff]
      %v246 = vld [vmem:[%s153 + $0x290] sm:$0xff]
      %v247 = vld [vmem:[%s153 + $0x298] sm:$0x3]
      %v248 = vld [vmem:[%s153 + $0x2a0] sm:$0xff]
      %v249 = vld [vmem:[%s153 + $0x2a8] sm:$0xff]
      %v250 = vld [vmem:[%s153 + $0x2b0] sm:$0x3]
      %v251 = vld [vmem:[%s153 + $0x2b8] sm:$0xff]
      %v252 = vld [vmem:[%s153 + $0x2c0] sm:$0xff]
      %v253 = vld [vmem:[%s153 + $0x2c8] sm:$0x3]
      %v254 = vld [vmem:[%s153 + $0x2d0] sm:$0xff]
      %v255 = vld [vmem:[%s153 + $0x2d8] sm:$0xff]
      %v256 = vld [vmem:[%s153 + $0x2e0] sm:$0x3]
      %v257 = vld [vmem:[%s153 + $0x2e8] sm:$0xff]
      %v258 = vld [vmem:[%s153 + $0x2f0] sm:$0xff]
      %v259 = vld [vmem:[%s153 + $0x2f8] sm:$0x3]
      %v260 = vld [vmem:[%s153 + $0x300] sm:$0xff]
      %v261 = vld [vmem:[%s153 + $0x308] sm:$0xff]
      %v262 = vld [vmem:[%s153 + $0x310] sm:$0x3]
      %v263 = vld [vmem:[%s153 + $0x318] sm:$0xff]
      %v264 = vld [vmem:[%s153 + $0x320] sm:$0xff]
      %v265 = vld [vmem:[%s153 + $0x328] sm:$0x3]
      %v266 = vld [vmem:[%s153 + $0x330] sm:$0xff]
      %v267 = vld [vmem:[%s153 + $0x338] sm:$0xff]
      %v268 = vld [vmem:[%s153 + $0x340] sm:$0x3]
      %v269 = vld [vmem:[%s153 + $0x348] sm:$0xff]
      %v270 = vld [vmem:[%s153 + $0x350] sm:$0xff]
      %v271 = vld [vmem:[%s153 + $0x358] sm:$0x3]
      %v272 = vld [vmem:[%s153 + $0x360] sm:$0xff]
      %v273 = vld [vmem:[%s153 + $0x368] sm:$0xff]
      %v274 = vld [vmem:[%s153 + $0x370] sm:$0x3]
      %v275 = vld [vmem:[%s153 + $0x378] sm:$0xff]
      %v276 = vld [vmem:[%s153 + $0x380] sm:$0xff]
      %v277 = vld [vmem:[%s153 + $0x388] sm:$0x3]
      %v278 = vld [vmem:[%s153 + $0x390] sm:$0xff]
      %v279 = vld [vmem:[%s153 + $0x398] sm:$0xff]
      %v280 = vld [vmem:[%s153 + $0x3a0] sm:$0x3]
      %v281 = vld [vmem:[%s153 + $0x3a8] sm:$0xff]
      %v282 = vld [vmem:[%s153 + $0x3b0] sm:$0xff]
      %v283 = vld [vmem:[%s153 + $0x3b8] sm:$0x3]
      %v284 = vld [vmem:[%s153 + $0x3c0] sm:$0xff]
      %v285 = vld [vmem:[%s153 + $0x3c8] sm:$0xff]
      %v286 = vld [vmem:[%s153 + $0x3d0] sm:$0x3]
      %v287 = vld [vmem:[%s153 + $0x3d8] sm:$0xff]
      %v288 = vld [vmem:[%s153 + $0x3e0] sm:$0xff]
      %v289 = vld [vmem:[%s153 + $0x3e8] sm:$0x3]
      %v290 = vld [vmem:[%s153 + $0x3f0] sm:$0xff]
      %v291 = vld [vmem:[%s153 + $0x3f8] sm:$0xff]
      %v292 = vld [vmem:[%s153 + $0x400] sm:$0x3]
      %v293 = vld [vmem:[%s153 + $0x408] sm:$0xff]
      %v294 = vld [vmem:[%s153 + $0x410] sm:$0xff]
      %v295 = vld [vmem:[%s153 + $0x418] sm:$0x3]
      %v296 = vld [vmem:[%s153 + $0x420] sm:$0xff]
      %v297 = vld [vmem:[%s153 + $0x428] sm:$0xff]
      %v298 = vld [vmem:[%s153 + $0x430] sm:$0x3]
      %v299 = vld [vmem:[%s153 + $0x438] sm:$0xff]
      %v300 = vld [vmem:[%s153 + $0x440] sm:$0xff]
      %v301 = vld [vmem:[%s153 + $0x448] sm:$0x3]
      %v302 = vld [vmem:[%s153 + $0x450] sm:$0xff]
      %v303 = vld [vmem:[%s153 + $0x458] sm:$0xff]
      %v304 = vld [vmem:[%s153 + $0x460] sm:$0x3]
      %v305 = vld [vmem:[%s153 + $0x468] sm:$0xff]
      %v306 = vld [vmem:[%s153 + $0x470] sm:$0xff]
      %v307 = vld [vmem:[%s153 + $0x478] sm:$0x3]
      %v308 = vld [vmem:[%s153 + $0x480] sm:$0xff]
      %v309 = vld [vmem:[%s153 + $0x488] sm:$0xff]
      %v310 = vld [vmem:[%s153 + $0x490] sm:$0x3]
      %v311 = vld [vmem:[%s153 + $0x498] sm:$0xff]
      %v312 = vld [vmem:[%s153 + $0x4a0] sm:$0xff]
      %v313 = vld [vmem:[%s153 + $0x4a8] sm:$0x3]
      %v314 = vld [vmem:[%s153 + $0x4b0] sm:$0xff]
      %v315 = vld [vmem:[%s153 + $0x4b8] sm:$0xff]
      %v316 = vld [vmem:[%s153 + $0x4c0] sm:$0x3]
      %v317 = vld [vmem:[%s153 + $0x4c8] sm:$0xff]
      %v318 = vld [vmem:[%s153 + $0x4d0] sm:$0xff]
      %v319 = vld [vmem:[%s153 + $0x4d8] sm:$0x3]
      %v320 = vld [vmem:[%s153 + $0x4e0] sm:$0xff]
      %v321 = vld [vmem:[%s153 + $0x4e8] sm:$0xff]
      %v322 = vld [vmem:[%s153 + $0x4f0] sm:$0x3]
      %v323 = vld [vmem:[%s153 + $0x4f8] sm:$0xff]
      %v324 = vld [vmem:[%s153 + $0x500] sm:$0xff]
      %v325 = vld [vmem:[%s153 + $0x508] sm:$0x3]
      %v326 = vld [vmem:[%s153 + $0x510] sm:$0xff]
      %v327 = vld [vmem:[%s153 + $0x518] sm:$0xff]
      %v328 = vld [vmem:[%s153 + $0x520] sm:$0x3]
      %v329 = vld [vmem:[%s153 + $0x528] sm:$0xff]
      %v330 = vld [vmem:[%s153 + $0x530] sm:$0xff]
      %v331 = vld [vmem:[%s153 + $0x538] sm:$0x3]
      %v332 = vld [vmem:[%s153 + $0x540] sm:$0xff]
      %v333 = vld [vmem:[%s153 + $0x548] sm:$0xff]
      %v334 = vld [vmem:[%s153 + $0x550] sm:$0x3]
      %v335 = vld [vmem:[%s153 + $0x558] sm:$0xff]
      %v336 = vld [vmem:[%s153 + $0x560] sm:$0xff]
      %v337 = vld [vmem:[%s153 + $0x568] sm:$0x3]
      %v338 = vld [vmem:[%s153 + $0x570] sm:$0xff]
      %v339 = vld [vmem:[%s153 + $0x578] sm:$0xff]
      %v340 = vld [vmem:[%s153 + $0x580] sm:$0x3]
      %v341 = vld [vmem:[%s153 + $0x588] sm:$0xff]
      %v342 = vld [vmem:[%s153 + $0x590] sm:$0xff]
      %v343 = vld [vmem:[%s153 + $0x598] sm:$0x3]
      %v344 = vld [vmem:[%s153 + $0x5a0] sm:$0xff]
      %v345 = vld [vmem:[%s153 + $0x5a8] sm:$0xff]
      %v346 = vld [vmem:[%s153 + $0x5b0] sm:$0x3]
      %v347 = vld [vmem:[%s153 + $0x5b8] sm:$0xff]
      %v348 = vld [vmem:[%s153 + $0x5c0] sm:$0xff]
      %v349 = vld [vmem:[%s153 + $0x5c8] sm:$0x3]
      %v350 = vld [vmem:[%s153 + $0x5d0] sm:$0xff]
      %v351 = vld [vmem:[%s153 + $0x5d8] sm:$0xff]
      %v352 = vld [vmem:[%s153 + $0x5e0] sm:$0x3]
      %v353 = vld [vmem:[%s153 + $0x5e8] sm:$0xff]
      %v354 = vld [vmem:[%s153 + $0x5f0] sm:$0xff]
      %v355 = vld [vmem:[%s153 + $0x5f8] sm:$0x3]
      %v356 = vld [vmem:[%s158] sm:$0xff]
      %v357 = vld [vmem:[%s158 + $0x8] sm:$0xff]
      %v358 = vld [vmem:[%s158 + $0x10] sm:$0xff]
      %v359 = vld [vmem:[%s158 + $0x18] sm:$0xff]
      %v360 = vld [vmem:[%s158 + $0x20] sm:$0xff]
      %v361 = vld [vmem:[%s158 + $0x28] sm:$0xff]
      %v362 = vld [vmem:[%s158 + $0x30] sm:$0xff]
      %v363 = vld [vmem:[%s158 + $0x38] sm:$0xff]
      %v372 = vcombine.high %v356, %v356
      %v374 = vunpack.c.l.s4 1966171168
      %v375 = vunpack.c.0.s8 %v374
      %v376 = vlaneseq
      %v377 = vshrl.u32 %v376, 7
      %v378 = vsub.s32 %v375, %v377
      %v379 = vrot.slane %v356, %v378
      %v381 = vunpack.c.l.s4 1966171168
      %v382 = vunpack.c.0.s8 %v381
      %v383 = vlaneseq
      %v384 = vshrl.u32 %v383, 7
      %v385 = vsub.s32 %v382, %v384
      %v386 = vrot.slane %v372, %v385
      %v387 = vcombine.high %v379, %v379
      %v388 = vcombine.high %v386, %v386
      %v390 = vunpack.c.l.s4 1966171168
      %v391 = vunpack.c.0.s8 %v390
      %v392 = vlaneseq
      %v393 = vshrl.u32 %v392, 7
      %v394 = vsub.s32 %v391, %v393
      %v395 = vrot.slane %v379, %v394
      %v397 = vunpack.c.l.s4 1966171168
      %v398 = vunpack.c.0.s8 %v397
      %v399 = vlaneseq
      %v400 = vshrl.u32 %v399, 7
      %v401 = vsub.s32 %v398, %v400
      %v402 = vrot.slane %v386, %v401
      %v404 = vunpack.c.l.s4 1966171168
      %v405 = vunpack.c.0.s8 %v404
      %v406 = vlaneseq
      %v407 = vshrl.u32 %v406, 7
      %v408 = vsub.s32 %v405, %v407
      %v409 = vrot.slane %v387, %v408
      %v411 = vunpack.c.l.s4 1966171168
      %v412 = vunpack.c.0.s8 %v411
      %v413 = vlaneseq
      %v414 = vshrl.u32 %v413, 7
      %v415 = vsub.s32 %v412, %v414
      %v416 = vrot.slane %v388, %v415
      %v417 = vcombine.high %v395, %v395
      %v418 = vcombine.high %v402, %v402
      %v419 = vcombine.high %v409, %v409
      %v420 = vcombine.high %v416, %v416
      %v421 = vcombine.high %v357, %v357
      %v423 = vunpack.c.l.s4 1966171168
      %v424 = vunpack.c.0.s8 %v423
      %v425 = vlaneseq
      %v426 = vshrl.u32 %v425, 7
      %v427 = vsub.s32 %v424, %v426
      %v428 = vrot.slane %v357, %v427
      %v430 = vunpack.c.l.s4 1966171168
      %v431 = vunpack.c.0.s8 %v430
      %v432 = vlaneseq
      %v433 = vshrl.u32 %v432, 7
      %v434 = vsub.s32 %v431, %v433
      %v435 = vrot.slane %v421, %v434
      %v436 = vcombine.high %v428, %v428
      %v437 = vcombine.high %v435, %v435
      %v439 = vunpack.c.l.s4 1966171168
      %v440 = vunpack.c.0.s8 %v439
      %v441 = vlaneseq
      %v442 = vshrl.u32 %v441, 7
      %v443 = vsub.s32 %v440, %v442
      %v444 = vrot.slane %v428, %v443
      %v446 = vunpack.c.l.s4 1966171168
      %v447 = vunpack.c.0.s8 %v446
      %v448 = vlaneseq
      %v449 = vshrl.u32 %v448, 7
      %v450 = vsub.s32 %v447, %v449
      %v451 = vrot.slane %v435, %v450
      %v453 = vunpack.c.l.s4 1966171168
      %v454 = vunpack.c.0.s8 %v453
      %v455 = vlaneseq
      %v456 = vshrl.u32 %v455, 7
      %v457 = vsub.s32 %v454, %v456
      %v458 = vrot.slane %v436, %v457
      %v460 = vunpack.c.l.s4 1966171168
      %v461 = vunpack.c.0.s8 %v460
      %v462 = vlaneseq
      %v463 = vshrl.u32 %v462, 7
      %v464 = vsub.s32 %v461, %v463
      %v465 = vrot.slane %v437, %v464
      %v466 = vcombine.high %v444, %v444
      %v467 = vcombine.high %v451, %v451
      %v468 = vcombine.high %v458, %v458
      %v469 = vcombine.high %v465, %v465
      %v470 = vcombine.high %v358, %v358
      %v472 = vunpack.c.l.s4 1966171168
      %v473 = vunpack.c.0.s8 %v472
      %v474 = vlaneseq
      %v475 = vshrl.u32 %v474, 7
      %v476 = vsub.s32 %v473, %v475
      %v477 = vrot.slane %v358, %v476
      %v479 = vunpack.c.l.s4 1966171168
      %v480 = vunpack.c.0.s8 %v479
      %v481 = vlaneseq
      %v482 = vshrl.u32 %v481, 7
      %v483 = vsub.s32 %v480, %v482
      %v484 = vrot.slane %v470, %v483
      %v485 = vcombine.high %v477, %v477
      %v486 = vcombine.high %v484, %v484
      %v488 = vunpack.c.l.s4 1966171168
      %v489 = vunpack.c.0.s8 %v488
      %v490 = vlaneseq
      %v491 = vshrl.u32 %v490, 7
      %v492 = vsub.s32 %v489, %v491
      %v493 = vrot.slane %v477, %v492
      %v495 = vunpack.c.l.s4 1966171168
      %v496 = vunpack.c.0.s8 %v495
      %v497 = vlaneseq
      %v498 = vshrl.u32 %v497, 7
      %v499 = vsub.s32 %v496, %v498
      %v500 = vrot.slane %v484, %v499
      %v502 = vunpack.c.l.s4 1966171168
      %v503 = vunpack.c.0.s8 %v502
      %v504 = vlaneseq
      %v505 = vshrl.u32 %v504, 7
      %v506 = vsub.s32 %v503, %v505
      %v507 = vrot.slane %v485, %v506
      %v509 = vunpack.c.l.s4 1966171168
      %v510 = vunpack.c.0.s8 %v509
      %v511 = vlaneseq
      %v512 = vshrl.u32 %v511, 7
      %v513 = vsub.s32 %v510, %v512
      %v514 = vrot.slane %v486, %v513
      %v515 = vcombine.high %v493, %v493
      %v516 = vcombine.high %v500, %v500
      %v517 = vcombine.high %v507, %v507
      %v518 = vcombine.high %v514, %v514
      %v519 = vcombine.high %v359, %v359
      %v521 = vunpack.c.l.s4 1966171168
      %v522 = vunpack.c.0.s8 %v521
      %v523 = vlaneseq
      %v524 = vshrl.u32 %v523, 7
      %v525 = vsub.s32 %v522, %v524
      %v526 = vrot.slane %v359, %v525
      %v528 = vunpack.c.l.s4 1966171168
      %v529 = vunpack.c.0.s8 %v528
      %v530 = vlaneseq
      %v531 = vshrl.u32 %v530, 7
      %v532 = vsub.s32 %v529, %v531
      %v533 = vrot.slane %v519, %v532
      %v534 = vcombine.high %v526, %v526
      %v535 = vcombine.high %v533, %v533
      %v537 = vunpack.c.l.s4 1966171168
      %v538 = vunpack.c.0.s8 %v537
      %v539 = vlaneseq
      %v540 = vshrl.u32 %v539, 7
      %v541 = vsub.s32 %v538, %v540
      %v542 = vrot.slane %v526, %v541
      %v544 = vunpack.c.l.s4 1966171168
      %v545 = vunpack.c.0.s8 %v544
      %v546 = vlaneseq
      %v547 = vshrl.u32 %v546, 7
      %v548 = vsub.s32 %v545, %v547
      %v549 = vrot.slane %v533, %v548
      %v551 = vunpack.c.l.s4 1966171168
      %v552 = vunpack.c.0.s8 %v551
      %v553 = vlaneseq
      %v554 = vshrl.u32 %v553, 7
      %v555 = vsub.s32 %v552, %v554
      %v556 = vrot.slane %v534, %v555
      %v558 = vunpack.c.l.s4 1966171168
      %v559 = vunpack.c.0.s8 %v558
      %v560 = vlaneseq
      %v561 = vshrl.u32 %v560, 7
      %v562 = vsub.s32 %v559, %v561
      %v563 = vrot.slane %v535, %v562
      %v564 = vcombine.high %v542, %v542
      %v565 = vcombine.high %v549, %v549
      %v566 = vcombine.high %v556, %v556
      %v567 = vcombine.high %v563, %v563
      %v568 = vcombine.high %v360, %v360
      %v570 = vunpack.c.l.s4 1966171168
      %v571 = vunpack.c.0.s8 %v570
      %v572 = vlaneseq
      %v573 = vshrl.u32 %v572, 7
      %v574 = vsub.s32 %v571, %v573
      %v575 = vrot.slane %v360, %v574
      %v577 = vunpack.c.l.s4 1966171168
      %v578 = vunpack.c.0.s8 %v577
      %v579 = vlaneseq
      %v580 = vshrl.u32 %v579, 7
      %v581 = vsub.s32 %v578, %v580
      %v582 = vrot.slane %v568, %v581
      %v583 = vcombine.high %v575, %v575
      %v584 = vcombine.high %v582, %v582
      %v586 = vunpack.c.l.s4 1966171168
      %v587 = vunpack.c.0.s8 %v586
      %v588 = vlaneseq
      %v589 = vshrl.u32 %v588, 7
      %v590 = vsub.s32 %v587, %v589
      %v591 = vrot.slane %v575, %v590
      %v593 = vunpack.c.l.s4 1966171168
      %v594 = vunpack.c.0.s8 %v593
      %v595 = vlaneseq
      %v596 = vshrl.u32 %v595, 7
      %v597 = vsub.s32 %v594, %v596
      %v598 = vrot.slane %v582, %v597
      %v600 = vunpack.c.l.s4 1966171168
      %v601 = vunpack.c.0.s8 %v600
      %v602 = vlaneseq
      %v603 = vshrl.u32 %v602, 7
      %v604 = vsub.s32 %v601, %v603
      %v605 = vrot.slane %v583, %v604
      %v607 = vunpack.c.l.s4 1966171168
      %v608 = vunpack.c.0.s8 %v607
      %v609 = vlaneseq
      %v610 = vshrl.u32 %v609, 7
      %v611 = vsub.s32 %v608, %v610
      %v612 = vrot.slane %v584, %v611
      %v613 = vcombine.high %v591, %v591
      %v614 = vcombine.high %v598, %v598
      %v615 = vcombine.high %v605, %v605
      %v616 = vcombine.high %v612, %v612
      %v617 = vcombine.high %v361, %v361
      %v619 = vunpack.c.l.s4 1966171168
      %v620 = vunpack.c.0.s8 %v619
      %v621 = vlaneseq
      %v622 = vshrl.u32 %v621, 7
      %v623 = vsub.s32 %v620, %v622
      %v624 = vrot.slane %v361, %v623
      %v626 = vunpack.c.l.s4 1966171168
      %v627 = vunpack.c.0.s8 %v626
      %v628 = vlaneseq
      %v629 = vshrl.u32 %v628, 7
      %v630 = vsub.s32 %v627, %v629
      %v631 = vrot.slane %v617, %v630
      %v632 = vcombine.high %v624, %v624
      %v633 = vcombine.high %v631, %v631
      %v635 = vunpack.c.l.s4 1966171168
      %v636 = vunpack.c.0.s8 %v635
      %v637 = vlaneseq
      %v638 = vshrl.u32 %v637, 7
      %v639 = vsub.s32 %v636, %v638
      %v640 = vrot.slane %v624, %v639
      %v642 = vunpack.c.l.s4 1966171168
      %v643 = vunpack.c.0.s8 %v642
      %v644 = vlaneseq
      %v645 = vshrl.u32 %v644, 7
      %v646 = vsub.s32 %v643, %v645
      %v647 = vrot.slane %v631, %v646
      %v649 = vunpack.c.l.s4 1966171168
      %v650 = vunpack.c.0.s8 %v649
      %v651 = vlaneseq
      %v652 = vshrl.u32 %v651, 7
      %v653 = vsub.s32 %v650, %v652
      %v654 = vrot.slane %v632, %v653
      %v656 = vunpack.c.l.s4 1966171168
      %v657 = vunpack.c.0.s8 %v656
      %v658 = vlaneseq
      %v659 = vshrl.u32 %v658, 7
      %v660 = vsub.s32 %v657, %v659
      %v661 = vrot.slane %v633, %v660
      %v662 = vcombine.high %v640, %v640
      %v663 = vcombine.high %v647, %v647
      %v664 = vcombine.high %v654, %v654
      %v665 = vcombine.high %v661, %v661
      %v666 = vcombine.high %v362, %v362
      %v668 = vunpack.c.l.s4 1966171168
      %v669 = vunpack.c.0.s8 %v668
      %v670 = vlaneseq
      %v671 = vshrl.u32 %v670, 7
      %v672 = vsub.s32 %v669, %v671
      %v673 = vrot.slane %v362, %v672
      %v675 = vunpack.c.l.s4 1966171168
      %v676 = vunpack.c.0.s8 %v675
      %v677 = vlaneseq
      %v678 = vshrl.u32 %v677, 7
      %v679 = vsub.s32 %v676, %v678
      %v680 = vrot.slane %v666, %v679
      %v681 = vcombine.high %v673, %v673
      %v682 = vcombine.high %v680, %v680
      %v684 = vunpack.c.l.s4 1966171168
      %v685 = vunpack.c.0.s8 %v684
      %v686 = vlaneseq
      %v687 = vshrl.u32 %v686, 7
      %v688 = vsub.s32 %v685, %v687
      %v689 = vrot.slane %v673, %v688
      %v691 = vunpack.c.l.s4 1966171168
      %v692 = vunpack.c.0.s8 %v691
      %v693 = vlaneseq
      %v694 = vshrl.u32 %v693, 7
      %v695 = vsub.s32 %v692, %v694
      %v696 = vrot.slane %v680, %v695
      %v698 = vunpack.c.l.s4 1966171168
      %v699 = vunpack.c.0.s8 %v698
      %v700 = vlaneseq
      %v701 = vshrl.u32 %v700, 7
      %v702 = vsub.s32 %v699, %v701
      %v703 = vrot.slane %v681, %v702
      %v705 = vunpack.c.l.s4 1966171168
      %v706 = vunpack.c.0.s8 %v705
      %v707 = vlaneseq
      %v708 = vshrl.u32 %v707, 7
      %v709 = vsub.s32 %v706, %v708
      %v710 = vrot.slane %v682, %v709
      %v711 = vcombine.high %v689, %v689
      %v712 = vcombine.high %v696, %v696
      %v713 = vcombine.high %v703, %v703
      %v714 = vcombine.high %v710, %v710
      %v715 = vcombine.high %v363, %v363
      %v717 = vunpack.c.l.s4 1966171168
      %v718 = vunpack.c.0.s8 %v717
      %v719 = vlaneseq
      %v720 = vshrl.u32 %v719, 7
      %v721 = vsub.s32 %v718, %v720
      %v722 = vrot.slane %v363, %v721
      %v724 = vunpack.c.l.s4 1966171168
      %v725 = vunpack.c.0.s8 %v724
      %v726 = vlaneseq
      %v727 = vshrl.u32 %v726, 7
      %v728 = vsub.s32 %v725, %v727
      %v729 = vrot.slane %v715, %v728
      %v730 = vcombine.high %v722, %v722
      %v731 = vcombine.high %v729, %v729
      %v733 = vunpack.c.l.s4 1966171168
      %v734 = vunpack.c.0.s8 %v733
      %v735 = vlaneseq
      %v736 = vshrl.u32 %v735, 7
      %v737 = vsub.s32 %v734, %v736
      %v738 = vrot.slane %v722, %v737
      %v740 = vunpack.c.l.s4 1966171168
      %v741 = vunpack.c.0.s8 %v740
      %v742 = vlaneseq
      %v743 = vshrl.u32 %v742, 7
      %v744 = vsub.s32 %v741, %v743
      %v745 = vrot.slane %v729, %v744
      %v747 = vunpack.c.l.s4 1966171168
      %v748 = vunpack.c.0.s8 %v747
      %v749 = vlaneseq
      %v750 = vshrl.u32 %v749, 7
      %v751 = vsub.s32 %v748, %v750
      %v752 = vrot.slane %v730, %v751
      %v754 = vunpack.c.l.s4 1966171168
      %v755 = vunpack.c.0.s8 %v754
      %v756 = vlaneseq
      %v757 = vshrl.u32 %v756, 7
      %v758 = vsub.s32 %v755, %v757
      %v759 = vrot.slane %v731, %v758
      %v760 = vcombine.high %v738, %v738
      %v761 = vcombine.high %v745, %v745
      %v762 = vcombine.high %v752, %v752
      %v763 = vcombine.high %v759, %v759
      %v764 = vlaneseq
      %v765 = vshrl.u32 %v764, 7
      %v766 = vsub.s32 0, %v765
      %v767 = vrot.slane %v395, %v766
      %v768 = vlaneseq
      %v769 = vshrl.u32 %v768, 7
      %v770 = vsub.s32 0, %v769
      %v771 = vrot.slane %v409, %v770
      %v772 = vlaneseq
      %v773 = vshrl.u32 %v772, 7
      %v774 = vsub.s32 0, %v773
      %v775 = vrot.slane %v417, %v774
      %v776 = vlaneseq
      %v777 = vshrl.u32 %v776, 7
      %v778 = vsub.s32 0, %v777
      %v779 = vrot.slane %v419, %v778
      %v780 = vlaneseq
      %v781 = vshrl.u32 %v780, 7
      %v782 = vsub.s32 0, %v781
      %v783 = vrot.slane %v402, %v782
      %v784 = vlaneseq
      %v785 = vshrl.u32 %v784, 7
      %v786 = vsub.s32 0, %v785
      %v787 = vrot.slane %v416, %v786
      %v788 = vlaneseq
      %v789 = vshrl.u32 %v788, 7
      %v790 = vsub.s32 0, %v789
      %v791 = vrot.slane %v418, %v790
      %v792 = vlaneseq
      %v793 = vshrl.u32 %v792, 7
      %v794 = vsub.s32 0, %v793
      %v795 = vrot.slane %v420, %v794
      %v796 = vlaneseq
      %v797 = vshrl.u32 %v796, 7
      %v798 = vsub.s32 0, %v797
      %v799 = vrot.slane %v444, %v798
      %v800 = vlaneseq
      %v801 = vshrl.u32 %v800, 7
      %v802 = vsub.s32 0, %v801
      %v803 = vrot.slane %v458, %v802
      %v804 = vlaneseq
      %v805 = vshrl.u32 %v804, 7
      %v806 = vsub.s32 0, %v805
      %v807 = vrot.slane %v466, %v806
      %v808 = vlaneseq
      %v809 = vshrl.u32 %v808, 7
      %v810 = vsub.s32 0, %v809
      %v811 = vrot.slane %v468, %v810
      %v812 = vlaneseq
      %v813 = vshrl.u32 %v812, 7
      %v814 = vsub.s32 0, %v813
      %v815 = vrot.slane %v451, %v814
      %v816 = vlaneseq
      %v817 = vshrl.u32 %v816, 7
      %v818 = vsub.s32 0, %v817
      %v819 = vrot.slane %v465, %v818
      %v820 = vlaneseq
      %v821 = vshrl.u32 %v820, 7
      %v822 = vsub.s32 0, %v821
      %v823 = vrot.slane %v467, %v822
      %v824 = vlaneseq
      %v825 = vshrl.u32 %v824, 7
      %v826 = vsub.s32 0, %v825
      %v827 = vrot.slane %v469, %v826
      %v828 = vlaneseq
      %v829 = vshrl.u32 %v828, 7
      %v830 = vsub.s32 0, %v829
      %v831 = vrot.slane %v493, %v830
      %v832 = vlaneseq
      %v833 = vshrl.u32 %v832, 7
      %v834 = vsub.s32 0, %v833
      %v835 = vrot.slane %v507, %v834
      %v836 = vlaneseq
      %v837 = vshrl.u32 %v836, 7
      %v838 = vsub.s32 0, %v837
      %v839 = vrot.slane %v515, %v838
      %v840 = vlaneseq
      %v841 = vshrl.u32 %v840, 7
      %v842 = vsub.s32 0, %v841
      %v843 = vrot.slane %v517, %v842
      %v844 = vlaneseq
      %v845 = vshrl.u32 %v844, 7
      %v846 = vsub.s32 0, %v845
      %v847 = vrot.slane %v500, %v846
      %v848 = vlaneseq
      %v849 = vshrl.u32 %v848, 7
      %v850 = vsub.s32 0, %v849
      %v851 = vrot.slane %v514, %v850
      %v852 = vlaneseq
      %v853 = vshrl.u32 %v852, 7
      %v854 = vsub.s32 0, %v853
      %v855 = vrot.slane %v516, %v854
      %v856 = vlaneseq
      %v857 = vshrl.u32 %v856, 7
      %v858 = vsub.s32 0, %v857
      %v859 = vrot.slane %v518, %v858
      %v860 = vlaneseq
      %v861 = vshrl.u32 %v860, 7
      %v862 = vsub.s32 0, %v861
      %v863 = vrot.slane %v542, %v862
      %v864 = vlaneseq
      %v865 = vshrl.u32 %v864, 7
      %v866 = vsub.s32 0, %v865
      %v867 = vrot.slane %v556, %v866
      %v868 = vlaneseq
      %v869 = vshrl.u32 %v868, 7
      %v870 = vsub.s32 0, %v869
      %v871 = vrot.slane %v564, %v870
      %v872 = vlaneseq
      %v873 = vshrl.u32 %v872, 7
      %v874 = vsub.s32 0, %v873
      %v875 = vrot.slane %v566, %v874
      %v876 = vlaneseq
      %v877 = vshrl.u32 %v876, 7
      %v878 = vsub.s32 0, %v877
      %v879 = vrot.slane %v549, %v878
      %v880 = vlaneseq
      %v881 = vshrl.u32 %v880, 7
      %v882 = vsub.s32 0, %v881
      %v883 = vrot.slane %v563, %v882
      %v884 = vlaneseq
      %v885 = vshrl.u32 %v884, 7
      %v886 = vsub.s32 0, %v885
      %v887 = vrot.slane %v565, %v886
      %v888 = vlaneseq
      %v889 = vshrl.u32 %v888, 7
      %v890 = vsub.s32 0, %v889
      %v891 = vrot.slane %v567, %v890
      %v892 = vlaneseq
      %v893 = vshrl.u32 %v892, 7
      %v894 = vsub.s32 0, %v893
      %v895 = vrot.slane %v591, %v894
      %v896 = vlaneseq
      %v897 = vshrl.u32 %v896, 7
      %v898 = vsub.s32 0, %v897
      %v899 = vrot.slane %v605, %v898
      %v900 = vlaneseq
      %v901 = vshrl.u32 %v900, 7
      %v902 = vsub.s32 0, %v901
      %v903 = vrot.slane %v613, %v902
      %v904 = vlaneseq
      %v905 = vshrl.u32 %v904, 7
      %v906 = vsub.s32 0, %v905
      %v907 = vrot.slane %v615, %v906
      %v908 = vlaneseq
      %v909 = vshrl.u32 %v908, 7
      %v910 = vsub.s32 0, %v909
      %v911 = vrot.slane %v598, %v910
      %v912 = vlaneseq
      %v913 = vshrl.u32 %v912, 7
      %v914 = vsub.s32 0, %v913
      %v915 = vrot.slane %v612, %v914
      %v916 = vlaneseq
      %v917 = vshrl.u32 %v916, 7
      %v918 = vsub.s32 0, %v917
      %v919 = vrot.slane %v614, %v918
      %v920 = vlaneseq
      %v921 = vshrl.u32 %v920, 7
      %v922 = vsub.s32 0, %v921
      %v923 = vrot.slane %v616, %v922
      %v924 = vlaneseq
      %v925 = vshrl.u32 %v924, 7
      %v926 = vsub.s32 0, %v925
      %v927 = vrot.slane %v640, %v926
      %v928 = vlaneseq
      %v929 = vshrl.u32 %v928, 7
      %v930 = vsub.s32 0, %v929
      %v931 = vrot.slane %v654, %v930
      %v932 = vlaneseq
      %v933 = vshrl.u32 %v932, 7
      %v934 = vsub.s32 0, %v933
      %v935 = vrot.slane %v662, %v934
      %v936 = vlaneseq
      %v937 = vshrl.u32 %v936, 7
      %v938 = vsub.s32 0, %v937
      %v939 = vrot.slane %v664, %v938
      %v940 = vlaneseq
      %v941 = vshrl.u32 %v940, 7
      %v942 = vsub.s32 0, %v941
      %v943 = vrot.slane %v647, %v942
      %v944 = vlaneseq
      %v945 = vshrl.u32 %v944, 7
      %v946 = vsub.s32 0, %v945
      %v947 = vrot.slane %v661, %v946
      %v948 = vlaneseq
      %v949 = vshrl.u32 %v948, 7
      %v950 = vsub.s32 0, %v949
      %v951 = vrot.slane %v663, %v950
      %v952 = vlaneseq
      %v953 = vshrl.u32 %v952, 7
      %v954 = vsub.s32 0, %v953
      %v955 = vrot.slane %v665, %v954
      %v956 = vlaneseq
      %v957 = vshrl.u32 %v956, 7
      %v958 = vsub.s32 0, %v957
      %v959 = vrot.slane %v689, %v958
      %v960 = vlaneseq
      %v961 = vshrl.u32 %v960, 7
      %v962 = vsub.s32 0, %v961
      %v963 = vrot.slane %v703, %v962
      %v964 = vlaneseq
      %v965 = vshrl.u32 %v964, 7
      %v966 = vsub.s32 0, %v965
      %v967 = vrot.slane %v711, %v966
      %v968 = vlaneseq
      %v969 = vshrl.u32 %v968, 7
      %v970 = vsub.s32 0, %v969
      %v971 = vrot.slane %v713, %v970
      %v972 = vlaneseq
      %v973 = vshrl.u32 %v972, 7
      %v974 = vsub.s32 0, %v973
      %v975 = vrot.slane %v696, %v974
      %v976 = vlaneseq
      %v977 = vshrl.u32 %v976, 7
      %v978 = vsub.s32 0, %v977
      %v979 = vrot.slane %v710, %v978
      %v980 = vlaneseq
      %v981 = vshrl.u32 %v980, 7
      %v982 = vsub.s32 0, %v981
      %v983 = vrot.slane %v712, %v982
      %v984 = vlaneseq
      %v985 = vshrl.u32 %v984, 7
      %v986 = vsub.s32 0, %v985
      %v987 = vrot.slane %v714, %v986
      %v988 = vlaneseq
      %v989 = vshrl.u32 %v988, 7
      %v990 = vsub.s32 0, %v989
      %v991 = vrot.slane %v738, %v990
      %v992 = vlaneseq
      %v993 = vshrl.u32 %v992, 7
      %v994 = vsub.s32 0, %v993
      %v995 = vrot.slane %v752, %v994
      %v996 = vlaneseq
      %v997 = vshrl.u32 %v996, 7
      %v998 = vsub.s32 0, %v997
      %v999 = vrot.slane %v760, %v998
      %v1000 = vlaneseq
      %v1001 = vshrl.u32 %v1000, 7
      %v1002 = vsub.s32 0, %v1001
      %v1003 = vrot.slane %v762, %v1002
      %v1004 = vlaneseq
      %v1005 = vshrl.u32 %v1004, 7
      %v1006 = vsub.s32 0, %v1005
      %v1007 = vrot.slane %v745, %v1006
      %v1008 = vlaneseq
      %v1009 = vshrl.u32 %v1008, 7
      %v1010 = vsub.s32 0, %v1009
      %v1011 = vrot.slane %v759, %v1010
      %v1012 = vlaneseq
      %v1013 = vshrl.u32 %v1012, 7
      %v1014 = vsub.s32 0, %v1013
      %v1015 = vrot.slane %v761, %v1014
      %v1016 = vlaneseq
      %v1017 = vshrl.u32 %v1016, 7
      %v1018 = vsub.s32 0, %v1017
      %v1019 = vrot.slane %v763, %v1018
      %1020 = vset.pattern.permute.xlu0 0
      %1021 = vperm.xlu0 %1020, %v767
      %v1022 = vpop.permute.xlu0 %1021
      %1024 = vset.pattern.permute.xlu0 0
      %1025 = vperm.xlu0 %1024, %v771
      %v1026 = vpop.permute.xlu0 %1025
      %1028 = vset.pattern.permute.xlu0 0
      %1029 = vperm.xlu0 %1028, %v775
      %v1030 = vpop.permute.xlu0 %1029
      %1032 = vset.pattern.permute.xlu0 0
      %1033 = vperm.xlu0 %1032, %v779
      %v1034 = vpop.permute.xlu0 %1033
      %1036 = vset.pattern.permute.xlu0 0
      %1037 = vperm.xlu0 %1036, %v783
      %v1038 = vpop.permute.xlu0 %1037
      %1040 = vset.pattern.permute.xlu0 0
      %1041 = vperm.xlu0 %1040, %v787
      %v1042 = vpop.permute.xlu0 %1041
      %1044 = vset.pattern.permute.xlu0 0
      %1045 = vperm.xlu0 %1044, %v791
      %v1046 = vpop.permute.xlu0 %1045
      %1048 = vset.pattern.permute.xlu0 0
      %1049 = vperm.xlu0 %1048, %v795
      %v1050 = vpop.permute.xlu0 %1049
      %1052 = vset.pattern.permute.xlu0 0
      %1053 = vperm.xlu0 %1052, %v799
      %v1054 = vpop.permute.xlu0 %1053
      %1056 = vset.pattern.permute.xlu0 0
      %1057 = vperm.xlu0 %1056, %v803
      %v1058 = vpop.permute.xlu0 %1057
      %1060 = vset.pattern.permute.xlu0 0
      %1061 = vperm.xlu0 %1060, %v807
      %v1062 = vpop.permute.xlu0 %1061
      %1064 = vset.pattern.permute.xlu0 0
      %1065 = vperm.xlu0 %1064, %v811
      %v1066 = vpop.permute.xlu0 %1065
      %1068 = vset.pattern.permute.xlu0 0
      %1069 = vperm.xlu0 %1068, %v815
      %v1070 = vpop.permute.xlu0 %1069
      %1072 = vset.pattern.permute.xlu0 0
      %1073 = vperm.xlu0 %1072, %v819
      %v1074 = vpop.permute.xlu0 %1073
      %1076 = vset.pattern.permute.xlu0 0
      %1077 = vperm.xlu0 %1076, %v823
      %v1078 = vpop.permute.xlu0 %1077
      %1080 = vset.pattern.permute.xlu0 0
      %1081 = vperm.xlu0 %1080, %v827
      %v1082 = vpop.permute.xlu0 %1081
      %1084 = vset.pattern.permute.xlu0 0
      %1085 = vperm.xlu0 %1084, %v831
      %v1086 = vpop.permute.xlu0 %1085
      %1088 = vset.pattern.permute.xlu0 0
      %1089 = vperm.xlu0 %1088, %v835
      %v1090 = vpop.permute.xlu0 %1089
      %1092 = vset.pattern.permute.xlu0 0
      %1093 = vperm.xlu0 %1092, %v839
      %v1094 = vpop.permute.xlu0 %1093
      %1096 = vset.pattern.permute.xlu0 0
      %1097 = vperm.xlu0 %1096, %v843
      %v1098 = vpop.permute.xlu0 %1097
      %1100 = vset.pattern.permute.xlu0 0
      %1101 = vperm.xlu0 %1100, %v847
      %v1102 = vpop.permute.xlu0 %1101
      %1104 = vset.pattern.permute.xlu0 0
      %1105 = vperm.xlu0 %1104, %v851
      %v1106 = vpop.permute.xlu0 %1105
      %1108 = vset.pattern.permute.xlu0 0
      %1109 = vperm.xlu0 %1108, %v855
      %v1110 = vpop.permute.xlu0 %1109
      %1112 = vset.pattern.permute.xlu0 0
      %1113 = vperm.xlu0 %1112, %v859
      %v1114 = vpop.permute.xlu0 %1113
      %1116 = vset.pattern.permute.xlu0 0
      %1117 = vperm.xlu0 %1116, %v863
      %v1118 = vpop.permute.xlu0 %1117
      %1120 = vset.pattern.permute.xlu0 0
      %1121 = vperm.xlu0 %1120, %v867
      %v1122 = vpop.permute.xlu0 %1121
      %1124 = vset.pattern.permute.xlu0 0
      %1125 = vperm.xlu0 %1124, %v871
      %v1126 = vpop.permute.xlu0 %1125
      %1128 = vset.pattern.permute.xlu0 0
      %1129 = vperm.xlu0 %1128, %v875
      %v1130 = vpop.permute.xlu0 %1129
      %1132 = vset.pattern.permute.xlu0 0
      %1133 = vperm.xlu0 %1132, %v879
      %v1134 = vpop.permute.xlu0 %1133
      %1136 = vset.pattern.permute.xlu0 0
      %1137 = vperm.xlu0 %1136, %v883
      %v1138 = vpop.permute.xlu0 %1137
      %1140 = vset.pattern.permute.xlu0 0
      %1141 = vperm.xlu0 %1140, %v887
      %v1142 = vpop.permute.xlu0 %1141
      %1144 = vset.pattern.permute.xlu0 0
      %1145 = vperm.xlu0 %1144, %v891
      %v1146 = vpop.permute.xlu0 %1145
      %1148 = vset.pattern.permute.xlu0 0
      %1149 = vperm.xlu0 %1148, %v895
      %v1150 = vpop.permute.xlu0 %1149
      %1152 = vset.pattern.permute.xlu0 0
      %1153 = vperm.xlu0 %1152, %v899
      %v1154 = vpop.permute.xlu0 %1153
      %1156 = vset.pattern.permute.xlu0 0
      %1157 = vperm.xlu0 %1156, %v903
      %v1158 = vpop.permute.xlu0 %1157
      %1160 = vset.pattern.permute.xlu0 0
      %1161 = vperm.xlu0 %1160, %v907
      %v1162 = vpop.permute.xlu0 %1161
      %1164 = vset.pattern.permute.xlu0 0
      %1165 = vperm.xlu0 %1164, %v911
      %v1166 = vpop.permute.xlu0 %1165
      %1168 = vset.pattern.permute.xlu0 0
      %1169 = vperm.xlu0 %1168, %v915
      %v1170 = vpop.permute.xlu0 %1169
      %1172 = vset.pattern.permute.xlu0 0
      %1173 = vperm.xlu0 %1172, %v919
      %v1174 = vpop.permute.xlu0 %1173
      %1176 = vset.pattern.permute.xlu0 0
      %1177 = vperm.xlu0 %1176, %v923
      %v1178 = vpop.permute.xlu0 %1177
      %1180 = vset.pattern.permute.xlu0 0
      %1181 = vperm.xlu0 %1180, %v927
      %v1182 = vpop.permute.xlu0 %1181
      %1184 = vset.pattern.permute.xlu0 0
      %1185 = vperm.xlu0 %1184, %v931
      %v1186 = vpop.permute.xlu0 %1185
      %1188 = vset.pattern.permute.xlu0 0
      %1189 = vperm.xlu0 %1188, %v935
      %v1190 = vpop.permute.xlu0 %1189
      %1192 = vset.pattern.permute.xlu0 0
      %1193 = vperm.xlu0 %1192, %v939
      %v1194 = vpop.permute.xlu0 %1193
      %1196 = vset.pattern.permute.xlu0 0
      %1197 = vperm.xlu0 %1196, %v943
      %v1198 = vpop.permute.xlu0 %1197
      %1200 = vset.pattern.permute.xlu0 0
      %1201 = vperm.xlu0 %1200, %v947
      %v1202 = vpop.permute.xlu0 %1201
      %1204 = vset.pattern.permute.xlu0 0
      %1205 = vperm.xlu0 %1204, %v951
      %v1206 = vpop.permute.xlu0 %1205
      %1208 = vset.pattern.permute.xlu0 0
      %1209 = vperm.xlu0 %1208, %v955
      %v1210 = vpop.permute.xlu0 %1209
      %1212 = vset.pattern.permute.xlu0 0
      %1213 = vperm.xlu0 %1212, %v959
      %v1214 = vpop.permute.xlu0 %1213
      %1216 = vset.pattern.permute.xlu0 0
      %1217 = vperm.xlu0 %1216, %v963
      %v1218 = vpop.permute.xlu0 %1217
      %1220 = vset.pattern.permute.xlu0 0
      %1221 = vperm.xlu0 %1220, %v967
      %v1222 = vpop.permute.xlu0 %1221
      %1224 = vset.pattern.permute.xlu0 0
      %1225 = vperm.xlu0 %1224, %v971
      %v1226 = vpop.permute.xlu0 %1225
      %1228 = vset.pattern.permute.xlu0 0
      %1229 = vperm.xlu0 %1228, %v975
      %v1230 = vpop.permute.xlu0 %1229
      %1232 = vset.pattern.permute.xlu0 0
      %1233 = vperm.xlu0 %1232, %v979
      %v1234 = vpop.permute.xlu0 %1233
      %1236 = vset.pattern.permute.xlu0 0
      %1237 = vperm.xlu0 %1236, %v983
      %v1238 = vpop.permute.xlu0 %1237
      %1240 = vset.pattern.permute.xlu0 0
      %1241 = vperm.xlu0 %1240, %v987
      %v1242 = vpop.permute.xlu0 %1241
      %1244 = vset.pattern.permute.xlu0 0
      %1245 = vperm.xlu0 %1244, %v991
      %v1246 = vpop.permute.xlu0 %1245
      %1248 = vset.pattern.permute.xlu0 0
      %1249 = vperm.xlu0 %1248, %v995
      %v1250 = vpop.permute.xlu0 %1249
      %1252 = vset.pattern.permute.xlu0 0
      %1253 = vperm.xlu0 %1252, %v999
      %v1254 = vpop.permute.xlu0 %1253
      %1256 = vset.pattern.permute.xlu0 0
      %1257 = vperm.xlu0 %1256, %v1003
      %v1258 = vpop.permute.xlu0 %1257
      %1260 = vset.pattern.permute.xlu0 0
      %1261 = vperm.xlu0 %1260, %v1007
      %v1262 = vpop.permute.xlu0 %1261
      %1264 = vset.pattern.permute.xlu0 0
      %1265 = vperm.xlu0 %1264, %v1011
      %v1266 = vpop.permute.xlu0 %1265
      %1268 = vset.pattern.permute.xlu0 0
      %1269 = vperm.xlu0 %1268, %v1015
      %v1270 = vpop.permute.xlu0 %1269
      %1272 = vset.pattern.permute.xlu0 0
      %1273 = vperm.xlu0 %1272, %v1019
      %v1274 = vpop.permute.xlu0 %1273
      %v1276 = vmul.f32 %v164, %v1022
      %v1277 = vmul.f32 %v165, %v1022
      %v1278 = vmul.f32 %v167, %v1026
      %v1279 = vmul.f32 %v168, %v1026
      %v1280 = vmul.f32 %v170, %v1030
      %v1281 = vmul.f32 %v171, %v1030
      %v1282 = vmul.f32 %v173, %v1034
      %v1283 = vmul.f32 %v174, %v1034
      %v1284 = vmul.f32 %v176, %v1038
      %v1285 = vmul.f32 %v177, %v1038
      %v1286 = vmul.f32 %v179, %v1042
      %v1287 = vmul.f32 %v180, %v1042
      %v1288 = vmul.f32 %v182, %v1046
      %v1289 = vmul.f32 %v183, %v1046
      %v1290 = vmul.f32 %v185, %v1050
      %v1291 = vmul.f32 %v186, %v1050
      %v1292 = vmul.f32 %v188, %v1054
      %v1293 = vmul.f32 %v189, %v1054
      %v1294 = vmul.f32 %v191, %v1058
      %v1295 = vmul.f32 %v192, %v1058
      %v1296 = vmul.f32 %v194, %v1062
      %v1297 = vmul.f32 %v195, %v1062
      %v1298 = vmul.f32 %v197, %v1066
      %v1299 = vmul.f32 %v198, %v1066
      %v1300 = vmul.f32 %v200, %v1070
      %v1301 = vmul.f32 %v201, %v1070
      %v1302 = vmul.f32 %v203, %v1074
      %v1303 = vmul.f32 %v204, %v1074
      %v1304 = vmul.f32 %v206, %v1078
      %v1305 = vmul.f32 %v207, %v1078
      %v1306 = vmul.f32 %v209, %v1082
      %v1307 = vmul.f32 %v210, %v1082
      %v1308 = vmul.f32 %v212, %v1086
      %v1309 = vmul.f32 %v213, %v1086
      %v1310 = vmul.f32 %v215, %v1090
      %v1311 = vmul.f32 %v216, %v1090
      %v1312 = vmul.f32 %v218, %v1094
      %v1313 = vmul.f32 %v219, %v1094
      %v1314 = vmul.f32 %v221, %v1098
      %v1315 = vmul.f32 %v222, %v1098
      %v1316 = vmul.f32 %v224, %v1102
      %v1317 = vmul.f32 %v225, %v1102
      %v1318 = vmul.f32 %v227, %v1106
      %v1319 = vmul.f32 %v228, %v1106
      %v1320 = vmul.f32 %v230, %v1110
      %v1321 = vmul.f32 %v231, %v1110
      %v1322 = vmul.f32 %v233, %v1114
      %v1323 = vmul.f32 %v234, %v1114
      %v1324 = vmul.f32 %v236, %v1118
      %v1325 = vmul.f32 %v237, %v1118
      %v1326 = vmul.f32 %v239, %v1122
      %v1327 = vmul.f32 %v240, %v1122
      %v1328 = vmul.f32 %v242, %v1126
      %v1329 = vmul.f32 %v243, %v1126
      %v1330 = vmul.f32 %v245, %v1130
      %v1331 = vmul.f32 %v246, %v1130
      %v1332 = vmul.f32 %v248, %v1134
      %v1333 = vmul.f32 %v249, %v1134
      %v1334 = vmul.f32 %v251, %v1138
      %v1335 = vmul.f32 %v252, %v1138
      %v1336 = vmul.f32 %v254, %v1142
      %v1337 = vmul.f32 %v255, %v1142
      %v1338 = vmul.f32 %v257, %v1146
      %v1339 = vmul.f32 %v258, %v1146
      %v1340 = vmul.f32 %v260, %v1150
      %v1341 = vmul.f32 %v261, %v1150
      %v1342 = vmul.f32 %v263, %v1154
      %v1343 = vmul.f32 %v264, %v1154
      %v1344 = vmul.f32 %v266, %v1158
      %v1345 = vmul.f32 %v267, %v1158
      %v1346 = vmul.f32 %v269, %v1162
      %v1347 = vmul.f32 %v270, %v1162
      %v1348 = vmul.f32 %v272, %v1166
      %v1349 = vmul.f32 %v273, %v1166
      %v1350 = vmul.f32 %v275, %v1170
      %v1351 = vmul.f32 %v276, %v1170
      %v1352 = vmul.f32 %v278, %v1174
      %v1353 = vmul.f32 %v279, %v1174
      %v1354 = vmul.f32 %v281, %v1178
      %v1355 = vmul.f32 %v282, %v1178
      %v1356 = vmul.f32 %v284, %v1182
      %v1357 = vmul.f32 %v285, %v1182
      %v1358 = vmul.f32 %v287, %v1186
      %v1359 = vmul.f32 %v288, %v1186
      %v1360 = vmul.f32 %v290, %v1190
      %v1361 = vmul.f32 %v291, %v1190
      %v1362 = vmul.f32 %v293, %v1194
      %v1363 = vmul.f32 %v294, %v1194
      %v1364 = vmul.f32 %v296, %v1198
      %v1365 = vmul.f32 %v297, %v1198
      %v1366 = vmul.f32 %v299, %v1202
      %v1367 = vmul.f32 %v300, %v1202
      %v1368 = vmul.f32 %v302, %v1206
      %v1369 = vmul.f32 %v303, %v1206
      %v1370 = vmul.f32 %v305, %v1210
      %v1371 = vmul.f32 %v306, %v1210
      %v1372 = vmul.f32 %v308, %v1214
      %v1373 = vmul.f32 %v309, %v1214
      %v1374 = vmul.f32 %v311, %v1218
      %v1375 = vmul.f32 %v312, %v1218
      %v1376 = vmul.f32 %v314, %v1222
      %v1377 = vmul.f32 %v315, %v1222
      %v1378 = vmul.f32 %v317, %v1226
      %v1379 = vmul.f32 %v318, %v1226
      %v1380 = vmul.f32 %v320, %v1230
      %v1381 = vmul.f32 %v321, %v1230
      %v1382 = vmul.f32 %v323, %v1234
      %v1383 = vmul.f32 %v324, %v1234
      %v1384 = vmul.f32 %v326, %v1238
      %v1385 = vmul.f32 %v327, %v1238
      %v1386 = vmul.f32 %v329, %v1242
      %v1387 = vmul.f32 %v330, %v1242
      %v1388 = vmul.f32 %v332, %v1246
      %v1389 = vmul.f32 %v333, %v1246
      %v1390 = vmul.f32 %v335, %v1250
      %v1391 = vmul.f32 %v336, %v1250
      %v1392 = vmul.f32 %v338, %v1254
      %v1393 = vmul.f32 %v339, %v1254
      %v1394 = vmul.f32 %v341, %v1258
      %v1395 = vmul.f32 %v342, %v1258
      %v1396 = vmul.f32 %v344, %v1262
      %v1397 = vmul.f32 %v345, %v1262
      %v1398 = vmul.f32 %v347, %v1266
      %v1399 = vmul.f32 %v348, %v1266
      %v1400 = vmul.f32 %v350, %v1270
      %v1401 = vmul.f32 %v351, %v1270
      %v1402 = vmul.f32 %v353, %v1274
      %v1403 = vmul.f32 %v354, %v1274
      %v1404 = vadd.f32 %v1276, 0.0
      %v1405 = vadd.f32 %v1277, 0.0
      %v1406 = vadd.f32 %v1278, 0.0
      %v1407 = vadd.f32 %v1279, 0.0
      %v1408 = vadd.f32 %v1280, 0.0
      %v1409 = vadd.f32 %v1281, 0.0
      %v1410 = vadd.f32 %v1282, 0.0
      %v1411 = vadd.f32 %v1283, 0.0
      %v1412 = vadd.f32 %v1284, 0.0
      %v1413 = vadd.f32 %v1285, 0.0
      %v1414 = vadd.f32 %v1286, 0.0
      %v1415 = vadd.f32 %v1287, 0.0
      %v1416 = vadd.f32 %v1288, 0.0
      %v1417 = vadd.f32 %v1289, 0.0
      %v1418 = vadd.f32 %v1290, 0.0
      %v1419 = vadd.f32 %v1291, 0.0
      %v1420 = vadd.f32 %v1292, 0.0
      %v1421 = vadd.f32 %v1293, 0.0
      %v1422 = vadd.f32 %v1294, 0.0
      %v1423 = vadd.f32 %v1295, 0.0
      %v1424 = vadd.f32 %v1296, 0.0
      %v1425 = vadd.f32 %v1297, 0.0
      %v1426 = vadd.f32 %v1298, 0.0
      %v1427 = vadd.f32 %v1299, 0.0
      %v1428 = vadd.f32 %v1300, 0.0
      %v1429 = vadd.f32 %v1301, 0.0
      %v1430 = vadd.f32 %v1302, 0.0
      %v1431 = vadd.f32 %v1303, 0.0
      %v1432 = vadd.f32 %v1304, 0.0
      %v1433 = vadd.f32 %v1305, 0.0
      %v1434 = vadd.f32 %v1306, 0.0
      %v1435 = vadd.f32 %v1307, 0.0
      %v1436 = vadd.f32 %v1308, 0.0
      %v1437 = vadd.f32 %v1309, 0.0
      %v1438 = vadd.f32 %v1310, 0.0
      %v1439 = vadd.f32 %v1311, 0.0
      %v1440 = vadd.f32 %v1312, 0.0
      %v1441 = vadd.f32 %v1313, 0.0
      %v1442 = vadd.f32 %v1314, 0.0
      %v1443 = vadd.f32 %v1315, 0.0
      %v1444 = vadd.f32 %v1316, 0.0
      %v1445 = vadd.f32 %v1317, 0.0
      %v1446 = vadd.f32 %v1318, 0.0
      %v1447 = vadd.f32 %v1319, 0.0
      %v1448 = vadd.f32 %v1320, 0.0
      %v1449 = vadd.f32 %v1321, 0.0
      %v1450 = vadd.f32 %v1322, 0.0
      %v1451 = vadd.f32 %v1323, 0.0
      %v1452 = vadd.f32 %v1324, 0.0
      %v1453 = vadd.f32 %v1325, 0.0
      %v1454 = vadd.f32 %v1326, 0.0
      %v1455 = vadd.f32 %v1327, 0.0
      %v1456 = vadd.f32 %v1328, 0.0
      %v1457 = vadd.f32 %v1329, 0.0
      %v1458 = vadd.f32 %v1330, 0.0
      %v1459 = vadd.f32 %v1331, 0.0
      %v1460 = vadd.f32 %v1332, 0.0
      %v1461 = vadd.f32 %v1333, 0.0
      %v1462 = vadd.f32 %v1334, 0.0
      %v1463 = vadd.f32 %v1335, 0.0
      %v1464 = vadd.f32 %v1336, 0.0
      %v1465 = vadd.f32 %v1337, 0.0
      %v1466 = vadd.f32 %v1338, 0.0
      %v1467 = vadd.f32 %v1339, 0.0
      %v1468 = vadd.f32 %v1340, 0.0
      %v1469 = vadd.f32 %v1341, 0.0
      %v1470 = vadd.f32 %v1342, 0.0
      %v1471 = vadd.f32 %v1343, 0.0
      %v1472 = vadd.f32 %v1344, 0.0
      %v1473 = vadd.f32 %v1345, 0.0
      %v1474 = vadd.f32 %v1346, 0.0
      %v1475 = vadd.f32 %v1347, 0.0
      %v1476 = vadd.f32 %v1348, 0.0
      %v1477 = vadd.f32 %v1349, 0.0
      %v1478 = vadd.f32 %v1350, 0.0
      %v1479 = vadd.f32 %v1351, 0.0
      %v1480 = vadd.f32 %v1352, 0.0
      %v1481 = vadd.f32 %v1353, 0.0
      %v1482 = vadd.f32 %v1354, 0.0
      %v1483 = vadd.f32 %v1355, 0.0
      %v1484 = vadd.f32 %v1356, 0.0
      %v1485 = vadd.f32 %v1357, 0.0
      %v1486 = vadd.f32 %v1358, 0.0
      %v1487 = vadd.f32 %v1359, 0.0
      %v1488 = vadd.f32 %v1360, 0.0
      %v1489 = vadd.f32 %v1361, 0.0
      %v1490 = vadd.f32 %v1362, 0.0
      %v1491 = vadd.f32 %v1363, 0.0
      %v1492 = vadd.f32 %v1364, 0.0
      %v1493 = vadd.f32 %v1365, 0.0
      %v1494 = vadd.f32 %v1366, 0.0
      %v1495 = vadd.f32 %v1367, 0.0
      %v1496 = vadd.f32 %v1368, 0.0
      %v1497 = vadd.f32 %v1369, 0.0
      %v1498 = vadd.f32 %v1370, 0.0
      %v1499 = vadd.f32 %v1371, 0.0
      %v1500 = vadd.f32 %v1372, 0.0
      %v1501 = vadd.f32 %v1373, 0.0
      %v1502 = vadd.f32 %v1374, 0.0
      %v1503 = vadd.f32 %v1375, 0.0
      %v1504 = vadd.f32 %v1376, 0.0
      %v1505 = vadd.f32 %v1377, 0.0
      %v1506 = vadd.f32 %v1378, 0.0
      %v1507 = vadd.f32 %v1379, 0.0
      %v1508 = vadd.f32 %v1380, 0.0
      %v1509 = vadd.f32 %v1381, 0.0
      %v1510 = vadd.f32 %v1382, 0.0
      %v1511 = vadd.f32 %v1383, 0.0
      %v1512 = vadd.f32 %v1384, 0.0
      %v1513 = vadd.f32 %v1385, 0.0
      %v1514 = vadd.f32 %v1386, 0.0
      %v1515 = vadd.f32 %v1387, 0.0
      %v1516 = vadd.f32 %v1388, 0.0
      %v1517 = vadd.f32 %v1389, 0.0
      %v1518 = vadd.f32 %v1390, 0.0
      %v1519 = vadd.f32 %v1391, 0.0
      %v1520 = vadd.f32 %v1392, 0.0
      %v1521 = vadd.f32 %v1393, 0.0
      %v1522 = vadd.f32 %v1394, 0.0
      %v1523 = vadd.f32 %v1395, 0.0
      %v1524 = vadd.f32 %v1396, 0.0
      %v1525 = vadd.f32 %v1397, 0.0
      %v1526 = vadd.f32 %v1398, 0.0
      %v1527 = vadd.f32 %v1399, 0.0
      %v1528 = vadd.f32 %v1400, 0.0
      %v1529 = vadd.f32 %v1401, 0.0
      %v1530 = vadd.f32 %v1402, 0.0
      %v1531 = vadd.f32 %v1403, 0.0
      %1532 = vset.pattern.permute.xlu0 1
      %1533 = vperm.xlu0 %1532, %v767
      %v1534 = vpop.permute.xlu0 %1533
      %1536 = vset.pattern.permute.xlu0 1
      %1537 = vperm.xlu0 %1536, %v771
      %v1538 = vpop.permute.xlu0 %1537
      %1540 = vset.pattern.permute.xlu0 1
      %1541 = vperm.xlu0 %1540, %v775
      %v1542 = vpop.permute.xlu0 %1541
      %1544 = vset.pattern.permute.xlu0 1
      %1545 = vperm.xlu0 %1544, %v779
      %v1546 = vpop.permute.xlu0 %1545
      %1548 = vset.pattern.permute.xlu0 1
      %1549 = vperm.xlu0 %1548, %v783
      %v1550 = vpop.permute.xlu0 %1549
      %1552 = vset.pattern.permute.xlu0 1
      %1553 = vperm.xlu0 %1552, %v787
      %v1554 = vpop.permute.xlu0 %1553
      %1556 = vset.pattern.permute.xlu0 1
      %1557 = vperm.xlu0 %1556, %v791
      %v1558 = vpop.permute.xlu0 %1557
      %1560 = vset.pattern.permute.xlu0 1
      %1561 = vperm.xlu0 %1560, %v795
      %v1562 = vpop.permute.xlu0 %1561
      %1564 = vset.pattern.permute.xlu0 1
      %1565 = vperm.xlu0 %1564, %v799
      %v1566 = vpop.permute.xlu0 %1565
      %1568 = vset.pattern.permute.xlu0 1
      %1569 = vperm.xlu0 %1568, %v803
      %v1570 = vpop.permute.xlu0 %1569
      %1572 = vset.pattern.permute.xlu0 1
      %1573 = vperm.xlu0 %1572, %v807
      %v1574 = vpop.permute.xlu0 %1573
      %1576 = vset.pattern.permute.xlu0 1
      %1577 = vperm.xlu0 %1576, %v811
      %v1578 = vpop.permute.xlu0 %1577
      %1580 = vset.pattern.permute.xlu0 1
      %1581 = vperm.xlu0 %1580, %v815
      %v1582 = vpop.permute.xlu0 %1581
      %1584 = vset.pattern.permute.xlu0 1
      %1585 = vperm.xlu0 %1584, %v819
      %v1586 = vpop.permute.xlu0 %1585
      %1588 = vset.pattern.permute.xlu0 1
      %1589 = vperm.xlu0 %1588, %v823
      %v1590 = vpop.permute.xlu0 %1589
      %1592 = vset.pattern.permute.xlu0 1
      %1593 = vperm.xlu0 %1592, %v827
      %v1594 = vpop.permute.xlu0 %1593
      %1596 = vset.pattern.permute.xlu0 1
      %1597 = vperm.xlu0 %1596, %v831
      %v1598 = vpop.permute.xlu0 %1597
      %1600 = vset.pattern.permute.xlu0 1
      %1601 = vperm.xlu0 %1600, %v835
      %v1602 = vpop.permute.xlu0 %1601
      %1604 = vset.pattern.permute.xlu0 1
      %1605 = vperm.xlu0 %1604, %v839
      %v1606 = vpop.permute.xlu0 %1605
      %1608 = vset.pattern.permute.xlu0 1
      %1609 = vperm.xlu0 %1608, %v843
      %v1610 = vpop.permute.xlu0 %1609
      %1612 = vset.pattern.permute.xlu0 1
      %1613 = vperm.xlu0 %1612, %v847
      %v1614 = vpop.permute.xlu0 %1613
      %1616 = vset.pattern.permute.xlu0 1
      %1617 = vperm.xlu0 %1616, %v851
      %v1618 = vpop.permute.xlu0 %1617
      %1620 = vset.pattern.permute.xlu0 1
      %1621 = vperm.xlu0 %1620, %v855
      %v1622 = vpop.permute.xlu0 %1621
      %1624 = vset.pattern.permute.xlu0 1
      %1625 = vperm.xlu0 %1624, %v859
      %v1626 = vpop.permute.xlu0 %1625
      %1628 = vset.pattern.permute.xlu0 1
      %1629 = vperm.xlu0 %1628, %v863
      %v1630 = vpop.permute.xlu0 %1629
      %1632 = vset.pattern.permute.xlu0 1
      %1633 = vperm.xlu0 %1632, %v867
      %v1634 = vpop.permute.xlu0 %1633
      %1636 = vset.pattern.permute.xlu0 1
      %1637 = vperm.xlu0 %1636, %v871
      %v1638 = vpop.permute.xlu0 %1637
      %1640 = vset.pattern.permute.xlu0 1
      %1641 = vperm.xlu0 %1640, %v875
      %v1642 = vpop.permute.xlu0 %1641
      %1644 = vset.pattern.permute.xlu0 1
      %1645 = vperm.xlu0 %1644, %v879
      %v1646 = vpop.permute.xlu0 %1645
      %1648 = vset.pattern.permute.xlu0 1
      %1649 = vperm.xlu0 %1648, %v883
      %v1650 = vpop.permute.xlu0 %1649
      %1652 = vset.pattern.permute.xlu0 1
      %1653 = vperm.xlu0 %1652, %v887
      %v1654 = vpop.permute.xlu0 %1653
      %1656 = vset.pattern.permute.xlu0 1
      %1657 = vperm.xlu0 %1656, %v891
      %v1658 = vpop.permute.xlu0 %1657
      %1660 = vset.pattern.permute.xlu0 1
      %1661 = vperm.xlu0 %1660, %v895
      %v1662 = vpop.permute.xlu0 %1661
      %1664 = vset.pattern.permute.xlu0 1
      %1665 = vperm.xlu0 %1664, %v899
      %v1666 = vpop.permute.xlu0 %1665
      %1668 = vset.pattern.permute.xlu0 1
      %1669 = vperm.xlu0 %1668, %v903
      %v1670 = vpop.permute.xlu0 %1669
      %1672 = vset.pattern.permute.xlu0 1
      %1673 = vperm.xlu0 %1672, %v907
      %v1674 = vpop.permute.xlu0 %1673
      %1676 = vset.pattern.permute.xlu0 1
      %1677 = vperm.xlu0 %1676, %v911
      %v1678 = vpop.permute.xlu0 %1677
      %1680 = vset.pattern.permute.xlu0 1
      %1681 = vperm.xlu0 %1680, %v915
      %v1682 = vpop.permute.xlu0 %1681
      %1684 = vset.pattern.permute.xlu0 1
      %1685 = vperm.xlu0 %1684, %v919
      %v1686 = vpop.permute.xlu0 %1685
      %1688 = vset.pattern.permute.xlu0 1
      %1689 = vperm.xlu0 %1688, %v923
      %v1690 = vpop.permute.xlu0 %1689
      %1692 = vset.pattern.permute.xlu0 1
      %1693 = vperm.xlu0 %1692, %v927
      %v1694 = vpop.permute.xlu0 %1693
      %1696 = vset.pattern.permute.xlu0 1
      %1697 = vperm.xlu0 %1696, %v931
      %v1698 = vpop.permute.xlu0 %1697
      %1700 = vset.pattern.permute.xlu0 1
      %1701 = vperm.xlu0 %1700, %v935
      %v1702 = vpop.permute.xlu0 %1701
      %1704 = vset.pattern.permute.xlu0 1
      %1705 = vperm.xlu0 %1704, %v939
      %v1706 = vpop.permute.xlu0 %1705
      %1708 = vset.pattern.permute.xlu0 1
      %1709 = vperm.xlu0 %1708, %v943
      %v1710 = vpop.permute.xlu0 %1709
      %1712 = vset.pattern.permute.xlu0 1
      %1713 = vperm.xlu0 %1712, %v947
      %v1714 = vpop.permute.xlu0 %1713
      %1716 = vset.pattern.permute.xlu0 1
      %1717 = vperm.xlu0 %1716, %v951
      %v1718 = vpop.permute.xlu0 %1717
      %1720 = vset.pattern.permute.xlu0 1
      %1721 = vperm.xlu0 %1720, %v955
      %v1722 = vpop.permute.xlu0 %1721
      %1724 = vset.pattern.permute.xlu0 1
      %1725 = vperm.xlu0 %1724, %v959
      %v1726 = vpop.permute.xlu0 %1725
      %1728 = vset.pattern.permute.xlu0 1
      %1729 = vperm.xlu0 %1728, %v963
      %v1730 = vpop.permute.xlu0 %1729
      %1732 = vset.pattern.permute.xlu0 1
      %1733 = vperm.xlu0 %1732, %v967
      %v1734 = vpop.permute.xlu0 %1733
      %1736 = vset.pattern.permute.xlu0 1
      %1737 = vperm.xlu0 %1736, %v971
      %v1738 = vpop.permute.xlu0 %1737
      %1740 = vset.pattern.permute.xlu0 1
      %1741 = vperm.xlu0 %1740, %v975
      %v1742 = vpop.permute.xlu0 %1741
      %1744 = vset.pattern.permute.xlu0 1
      %1745 = vperm.xlu0 %1744, %v979
      %v1746 = vpop.permute.xlu0 %1745
      %1748 = vset.pattern.permute.xlu0 1
      %1749 = vperm.xlu0 %1748, %v983
      %v1750 = vpop.permute.xlu0 %1749
      %1752 = vset.pattern.permute.xlu0 1
      %1753 = vperm.xlu0 %1752, %v987
      %v1754 = vpop.permute.xlu0 %1753
      %1756 = vset.pattern.permute.xlu0 1
      %1757 = vperm.xlu0 %1756, %v991
      %v1758 = vpop.permute.xlu0 %1757
      %1760 = vset.pattern.permute.xlu0 1
      %1761 = vperm.xlu0 %1760, %v995
      %v1762 = vpop.permute.xlu0 %1761
      %1764 = vset.pattern.permute.xlu0 1
      %1765 = vperm.xlu0 %1764, %v999
      %v1766 = vpop.permute.xlu0 %1765
      %1768 = vset.pattern.permute.xlu0 1
      %1769 = vperm.xlu0 %1768, %v1003
      %v1770 = vpop.permute.xlu0 %1769
      %1772 = vset.pattern.permute.xlu0 1
      %1773 = vperm.xlu0 %1772, %v1007
      %v1774 = vpop.permute.xlu0 %1773
      %1776 = vset.pattern.permute.xlu0 1
      %1777 = vperm.xlu0 %1776, %v1011
      %v1778 = vpop.permute.xlu0 %1777
      %1780 = vset.pattern.permute.xlu0 1
      %1781 = vperm.xlu0 %1780, %v1015
      %v1782 = vpop.permute.xlu0 %1781
      %1784 = vset.pattern.permute.xlu0 1
      %1785 = vperm.xlu0 %1784, %v1019
      %v1786 = vpop.permute.xlu0 %1785
      %v1788 = vmul.f32 %v164, %v1534
      %v1789 = vmul.f32 %v165, %v1534
      %v1790 = vmul.f32 %v167, %v1538
      %v1791 = vmul.f32 %v168, %v1538
      %v1792 = vmul.f32 %v170, %v1542
      %v1793 = vmul.f32 %v171, %v1542
      %v1794 = vmul.f32 %v173, %v1546
      %v1795 = vmul.f32 %v174, %v1546
      %v1796 = vmul.f32 %v176, %v1550
      %v1797 = vmul.f32 %v177, %v1550
      %v1798 = vmul.f32 %v179, %v1554
      %v1799 = vmul.f32 %v180, %v1554
      %v1800 = vmul.f32 %v182, %v1558
      %v1801 = vmul.f32 %v183, %v1558
      %v1802 = vmul.f32 %v185, %v1562
      %v1803 = vmul.f32 %v186, %v1562
      %v1804 = vmul.f32 %v188, %v1566
      %v1805 = vmul.f32 %v189, %v1566
      %v1806 = vmul.f32 %v191, %v1570
      %v1807 = vmul.f32 %v192, %v1570
      %v1808 = vmul.f32 %v194, %v1574
      %v1809 = vmul.f32 %v195, %v1574
      %v1810 = vmul.f32 %v197, %v1578
      %v1811 = vmul.f32 %v198, %v1578
      %v1812 = vmul.f32 %v200, %v1582
      %v1813 = vmul.f32 %v201, %v1582
      %v1814 = vmul.f32 %v203, %v1586
      %v1815 = vmul.f32 %v204, %v1586
      %v1816 = vmul.f32 %v206, %v1590
      %v1817 = vmul.f32 %v207, %v1590
      %v1818 = vmul.f32 %v209, %v1594
      %v1819 = vmul.f32 %v210, %v1594
      %v1820 = vmul.f32 %v212, %v1598
      %v1821 = vmul.f32 %v213, %v1598
      %v1822 = vmul.f32 %v215, %v1602
      %v1823 = vmul.f32 %v216, %v1602
      %v1824 = vmul.f32 %v218, %v1606
      %v1825 = vmul.f32 %v219, %v1606
      %v1826 = vmul.f32 %v221, %v1610
      %v1827 = vmul.f32 %v222, %v1610
      %v1828 = vmul.f32 %v224, %v1614
      %v1829 = vmul.f32 %v225, %v1614
      %v1830 = vmul.f32 %v227, %v1618
      %v1831 = vmul.f32 %v228, %v1618
      %v1832 = vmul.f32 %v230, %v1622
      %v1833 = vmul.f32 %v231, %v1622
      %v1834 = vmul.f32 %v233, %v1626
      %v1835 = vmul.f32 %v234, %v1626
      %v1836 = vmul.f32 %v236, %v1630
      %v1837 = vmul.f32 %v237, %v1630
      %v1838 = vmul.f32 %v239, %v1634
      %v1839 = vmul.f32 %v240, %v1634
      %v1840 = vmul.f32 %v242, %v1638
      %v1841 = vmul.f32 %v243, %v1638
      %v1842 = vmul.f32 %v245, %v1642
      %v1843 = vmul.f32 %v246, %v1642
      %v1844 = vmul.f32 %v248, %v1646
      %v1845 = vmul.f32 %v249, %v1646
      %v1846 = vmul.f32 %v251, %v1650
      %v1847 = vmul.f32 %v252, %v1650
      %v1848 = vmul.f32 %v254, %v1654
      %v1849 = vmul.f32 %v255, %v1654
      %v1850 = vmul.f32 %v257, %v1658
      %v1851 = vmul.f32 %v258, %v1658
      %v1852 = vmul.f32 %v260, %v1662
      %v1853 = vmul.f32 %v261, %v1662
      %v1854 = vmul.f32 %v263, %v1666
      %v1855 = vmul.f32 %v264, %v1666
      %v1856 = vmul.f32 %v266, %v1670
      %v1857 = vmul.f32 %v267, %v1670
      %v1858 = vmul.f32 %v269, %v1674
      %v1859 = vmul.f32 %v270, %v1674
      %v1860 = vmul.f32 %v272, %v1678
      %v1861 = vmul.f32 %v273, %v1678
      %v1862 = vmul.f32 %v275, %v1682
      %v1863 = vmul.f32 %v276, %v1682
      %v1864 = vmul.f32 %v278, %v1686
      %v1865 = vmul.f32 %v279, %v1686
      %v1866 = vmul.f32 %v281, %v1690
      %v1867 = vmul.f32 %v282, %v1690
      %v1868 = vmul.f32 %v284, %v1694
      %v1869 = vmul.f32 %v285, %v1694
      %v1870 = vmul.f32 %v287, %v1698
      %v1871 = vmul.f32 %v288, %v1698
      %v1872 = vmul.f32 %v290, %v1702
      %v1873 = vmul.f32 %v291, %v1702
      %v1874 = vmul.f32 %v293, %v1706
      %v1875 = vmul.f32 %v294, %v1706
      %v1876 = vmul.f32 %v296, %v1710
      %v1877 = vmul.f32 %v297, %v1710
      %v1878 = vmul.f32 %v299, %v1714
      %v1879 = vmul.f32 %v300, %v1714
      %v1880 = vmul.f32 %v302, %v1718
      %v1881 = vmul.f32 %v303, %v1718
      %v1882 = vmul.f32 %v305, %v1722
      %v1883 = vmul.f32 %v306, %v1722
      %v1884 = vmul.f32 %v308, %v1726
      %v1885 = vmul.f32 %v309, %v1726
      %v1886 = vmul.f32 %v311, %v1730
      %v1887 = vmul.f32 %v312, %v1730
      %v1888 = vmul.f32 %v314, %v1734
      %v1889 = vmul.f32 %v315, %v1734
      %v1890 = vmul.f32 %v317, %v1738
      %v1891 = vmul.f32 %v318, %v1738
      %v1892 = vmul.f32 %v320, %v1742
      %v1893 = vmul.f32 %v321, %v1742
      %v1894 = vmul.f32 %v323, %v1746
      %v1895 = vmul.f32 %v324, %v1746
      %v1896 = vmul.f32 %v326, %v1750
      %v1897 = vmul.f32 %v327, %v1750
      %v1898 = vmul.f32 %v329, %v1754
      %v1899 = vmul.f32 %v330, %v1754
      %v1900 = vmul.f32 %v332, %v1758
      %v1901 = vmul.f32 %v333, %v1758
      %v1902 = vmul.f32 %v335, %v1762
      %v1903 = vmul.f32 %v336, %v1762
      %v1904 = vmul.f32 %v338, %v1766
      %v1905 = vmul.f32 %v339, %v1766
      %v1906 = vmul.f32 %v341, %v1770
      %v1907 = vmul.f32 %v342, %v1770
      %v1908 = vmul.f32 %v344, %v1774
      %v1909 = vmul.f32 %v345, %v1774
      %v1910 = vmul.f32 %v347, %v1778
      %v1911 = vmul.f32 %v348, %v1778
      %v1912 = vmul.f32 %v350, %v1782
      %v1913 = vmul.f32 %v351, %v1782
      %v1914 = vmul.f32 %v353, %v1786
      %v1915 = vmul.f32 %v354, %v1786
      %2044 = vrot.lane.b32.xlu0 %v1788, 127
      %v2045 = vpop.permute.xlu0 %2044
      %2046 = vrot.lane.b32.xlu0 %v1789, 127
      %v2047 = vpop.permute.xlu0 %2046
      %2048 = vrot.lane.b32.xlu0 %v1790, 127
      %v2049 = vpop.permute.xlu0 %2048
      %2050 = vrot.lane.b32.xlu0 %v1791, 127
      %v2051 = vpop.permute.xlu0 %2050
      %2052 = vrot.lane.b32.xlu0 %v1792, 127
      %v2053 = vpop.permute.xlu0 %2052
      %2054 = vrot.lane.b32.xlu0 %v1793, 127
      %v2055 = vpop.permute.xlu0 %2054
      %2056 = vrot.lane.b32.xlu0 %v1794, 127
      %v2057 = vpop.permute.xlu0 %2056
      %2058 = vrot.lane.b32.xlu0 %v1795, 127
      %v2059 = vpop.permute.xlu0 %2058
      %2060 = vrot.lane.b32.xlu0 %v1796, 127
      %v2061 = vpop.permute.xlu0 %2060
      %2062 = vrot.lane.b32.xlu0 %v1797, 127
      %v2063 = vpop.permute.xlu0 %2062
      %2064 = vrot.lane.b32.xlu0 %v1798, 127
      %v2065 = vpop.permute.xlu0 %2064
      %2066 = vrot.lane.b32.xlu0 %v1799, 127
      %v2067 = vpop.permute.xlu0 %2066
      %2068 = vrot.lane.b32.xlu0 %v1800, 127
      %v2069 = vpop.permute.xlu0 %2068
      %2070 = vrot.lane.b32.xlu0 %v1801, 127
      %v2071 = vpop.permute.xlu0 %2070
      %2072 = vrot.lane.b32.xlu0 %v1802, 127
      %v2073 = vpop.permute.xlu0 %2072
      %2074 = vrot.lane.b32.xlu0 %v1803, 127
      %v2075 = vpop.permute.xlu0 %2074
      %2076 = vrot.lane.b32.xlu0 %v1804, 127
      %v2077 = vpop.permute.xlu0 %2076
      %2078 = vrot.lane.b32.xlu0 %v1805, 127
      %v2079 = vpop.permute.xlu0 %2078
      %2080 = vrot.lane.b32.xlu0 %v1806, 127
      %v2081 = vpop.permute.xlu0 %2080
      %2082 = vrot.lane.b32.xlu0 %v1807, 127
      %v2083 = vpop.permute.xlu0 %2082
      %2084 = vrot.lane.b32.xlu0 %v1808, 127
      %v2085 = vpop.permute.xlu0 %2084
      %2086 = vrot.lane.b32.xlu0 %v1809, 127
      %v2087 = vpop.permute.xlu0 %2086
      %2088 = vrot.lane.b32.xlu0 %v1810, 127
      %v2089 = vpop.permute.xlu0 %2088
      %2090 = vrot.lane.b32.xlu0 %v1811, 127
      %v2091 = vpop.permute.xlu0 %2090
      %2092 = vrot.lane.b32.xlu0 %v1812, 127
      %v2093 = vpop.permute.xlu0 %2092
      %2094 = vrot.lane.b32.xlu0 %v1813, 127
      %v2095 = vpop.permute.xlu0 %2094
      %2096 = vrot.lane.b32.xlu0 %v1814, 127
      %v2097 = vpop.permute.xlu0 %2096
      %2098 = vrot.lane.b32.xlu0 %v1815, 127
      %v2099 = vpop.permute.xlu0 %2098
      %2100 = vrot.lane.b32.xlu0 %v1816, 127
      %v2101 = vpop.permute.xlu0 %2100
      %2102 = vrot.lane.b32.xlu0 %v1817, 127
      %v2103 = vpop.permute.xlu0 %2102
      %2104 = vrot.lane.b32.xlu0 %v1818, 127
      %v2105 = vpop.permute.xlu0 %2104
      %2106 = vrot.lane.b32.xlu0 %v1819, 127
      %v2107 = vpop.permute.xlu0 %2106
      %2108 = vrot.lane.b32.xlu0 %v1820, 127
      %v2109 = vpop.permute.xlu0 %2108
      %2110 = vrot.lane.b32.xlu0 %v1821, 127
      %v2111 = vpop.permute.xlu0 %2110
      %2112 = vrot.lane.b32.xlu0 %v1822, 127
      %v2113 = vpop.permute.xlu0 %2112
      %2114 = vrot.lane.b32.xlu0 %v1823, 127
      %v2115 = vpop.permute.xlu0 %2114
      %2116 = vrot.lane.b32.xlu0 %v1824, 127
      %v2117 = vpop.permute.xlu0 %2116
      %2118 = vrot.lane.b32.xlu0 %v1825, 127
      %v2119 = vpop.permute.xlu0 %2118
      %2120 = vrot.lane.b32.xlu0 %v1826, 127
      %v2121 = vpop.permute.xlu0 %2120
      %2122 = vrot.lane.b32.xlu0 %v1827, 127
      %v2123 = vpop.permute.xlu0 %2122
      %2124 = vrot.lane.b32.xlu0 %v1828, 127
      %v2125 = vpop.permute.xlu0 %2124
      %2126 = vrot.lane.b32.xlu0 %v1829, 127
      %v2127 = vpop.permute.xlu0 %2126
      %2128 = vrot.lane.b32.xlu0 %v1830, 127
      %v2129 = vpop.permute.xlu0 %2128
      %2130 = vrot.lane.b32.xlu0 %v1831, 127
      %v2131 = vpop.permute.xlu0 %2130
      %2132 = vrot.lane.b32.xlu0 %v1832, 127
      %v2133 = vpop.permute.xlu0 %2132
      %2134 = vrot.lane.b32.xlu0 %v1833, 127
      %v2135 = vpop.permute.xlu0 %2134
      %2136 = vrot.lane.b32.xlu0 %v1834, 127
      %v2137 = vpop.permute.xlu0 %2136
      %2138 = vrot.lane.b32.xlu0 %v1835, 127
      %v2139 = vpop.permute.xlu0 %2138
      %2140 = vrot.lane.b32.xlu0 %v1836, 127
      %v2141 = vpop.permute.xlu0 %2140
      %2142 = vrot.lane.b32.xlu0 %v1837, 127
      %v2143 = vpop.permute.xlu0 %2142
      %2144 = vrot.lane.b32.xlu0 %v1838, 127
      %v2145 = vpop.permute.xlu0 %2144
      %2146 = vrot.lane.b32.xlu0 %v1839, 127
      %v2147 = vpop.permute.xlu0 %2146
      %2148 = vrot.lane.b32.xlu0 %v1840, 127
      %v2149 = vpop.permute.xlu0 %2148
      %2150 = vrot.lane.b32.xlu0 %v1841, 127
      %v2151 = vpop.permute.xlu0 %2150
      %2152 = vrot.lane.b32.xlu0 %v1842, 127
      %v2153 = vpop.permute.xlu0 %2152
      %2154 = vrot.lane.b32.xlu0 %v1843, 127
      %v2155 = vpop.permute.xlu0 %2154
      %2156 = vrot.lane.b32.xlu0 %v1844, 127
      %v2157 = vpop.permute.xlu0 %2156
      %2158 = vrot.lane.b32.xlu0 %v1845, 127
      %v2159 = vpop.permute.xlu0 %2158
      %2160 = vrot.lane.b32.xlu0 %v1846, 127
      %v2161 = vpop.permute.xlu0 %2160
      %2162 = vrot.lane.b32.xlu0 %v1847, 127
      %v2163 = vpop.permute.xlu0 %2162
      %2164 = vrot.lane.b32.xlu0 %v1848, 127
      %v2165 = vpop.permute.xlu0 %2164
      %2166 = vrot.lane.b32.xlu0 %v1849, 127
      %v2167 = vpop.permute.xlu0 %2166
      %2168 = vrot.lane.b32.xlu0 %v1850, 127
      %v2169 = vpop.permute.xlu0 %2168
      %2170 = vrot.lane.b32.xlu0 %v1851, 127
      %v2171 = vpop.permute.xlu0 %2170
      %2172 = vrot.lane.b32.xlu0 %v1852, 127
      %v2173 = vpop.permute.xlu0 %2172
      %2174 = vrot.lane.b32.xlu0 %v1853, 127
      %v2175 = vpop.permute.xlu0 %2174
      %2176 = vrot.lane.b32.xlu0 %v1854, 127
      %v2177 = vpop.permute.xlu0 %2176
      %2178 = vrot.lane.b32.xlu0 %v1855, 127
      %v2179 = vpop.permute.xlu0 %2178
      %2180 = vrot.lane.b32.xlu0 %v1856, 127
      %v2181 = vpop.permute.xlu0 %2180
      %2182 = vrot.lane.b32.xlu0 %v1857, 127
      %v2183 = vpop.permute.xlu0 %2182
      %2184 = vrot.lane.b32.xlu0 %v1858, 127
      %v2185 = vpop.permute.xlu0 %2184
      %2186 = vrot.lane.b32.xlu0 %v1859, 127
      %v2187 = vpop.permute.xlu0 %2186
      %2188 = vrot.lane.b32.xlu0 %v1860, 127
      %v2189 = vpop.permute.xlu0 %2188
      %2190 = vrot.lane.b32.xlu0 %v1861, 127
      %v2191 = vpop.permute.xlu0 %2190
      %2192 = vrot.lane.b32.xlu0 %v1862, 127
      %v2193 = vpop.permute.xlu0 %2192
      %2194 = vrot.lane.b32.xlu0 %v1863, 127
      %v2195 = vpop.permute.xlu0 %2194
      %2196 = vrot.lane.b32.xlu0 %v1864, 127
      %v2197 = vpop.permute.xlu0 %2196
      %2198 = vrot.lane.b32.xlu0 %v1865, 127
      %v2199 = vpop.permute.xlu0 %2198
      %2200 = vrot.lane.b32.xlu0 %v1866, 127
      %v2201 = vpop.permute.xlu0 %2200
      %2202 = vrot.lane.b32.xlu0 %v1867, 127
      %v2203 = vpop.permute.xlu0 %2202
      %2204 = vrot.lane.b32.xlu0 %v1868, 127
      %v2205 = vpop.permute.xlu0 %2204
      %2206 = vrot.lane.b32.xlu0 %v1869, 127
      %v2207 = vpop.permute.xlu0 %2206
      %2208 = vrot.lane.b32.xlu0 %v1870, 127
      %v2209 = vpop.permute.xlu0 %2208
      %2210 = vrot.lane.b32.xlu0 %v1871, 127
      %v2211 = vpop.permute.xlu0 %2210
      %2212 = vrot.lane.b32.xlu0 %v1872, 127
      %v2213 = vpop.permute.xlu0 %2212
      %2214 = vrot.lane.b32.xlu0 %v1873, 127
      %v2215 = vpop.permute.xlu0 %2214
      %2216 = vrot.lane.b32.xlu0 %v1874, 127
      %v2217 = vpop.permute.xlu0 %2216
      %2218 = vrot.lane.b32.xlu0 %v1875, 127
      %v2219 = vpop.permute.xlu0 %2218
      %2220 = vrot.lane.b32.xlu0 %v1876, 127
      %v2221 = vpop.permute.xlu0 %2220
      %2222 = vrot.lane.b32.xlu0 %v1877, 127
      %v2223 = vpop.permute.xlu0 %2222
      %2224 = vrot.lane.b32.xlu0 %v1878, 127
      %v2225 = vpop.permute.xlu0 %2224
      %2226 = vrot.lane.b32.xlu0 %v1879, 127
      %v2227 = vpop.permute.xlu0 %2226
      %2228 = vrot.lane.b32.xlu0 %v1880, 127
      %v2229 = vpop.permute.xlu0 %2228
      %2230 = vrot.lane.b32.xlu0 %v1881, 127
      %v2231 = vpop.permute.xlu0 %2230
      %2232 = vrot.lane.b32.xlu0 %v1882, 127
      %v2233 = vpop.permute.xlu0 %2232
      %2234 = vrot.lane.b32.xlu0 %v1883, 127
      %v2235 = vpop.permute.xlu0 %2234
      %2236 = vrot.lane.b32.xlu0 %v1884, 127
      %v2237 = vpop.permute.xlu0 %2236
      %2238 = vrot.lane.b32.xlu0 %v1885, 127
      %v2239 = vpop.permute.xlu0 %2238
      %2240 = vrot.lane.b32.xlu0 %v1886, 127
      %v2241 = vpop.permute.xlu0 %2240
      %2242 = vrot.lane.b32.xlu0 %v1887, 127
      %v2243 = vpop.permute.xlu0 %2242
      %2244 = vrot.lane.b32.xlu0 %v1888, 127
      %v2245 = vpop.permute.xlu0 %2244
      %2246 = vrot.lane.b32.xlu0 %v1889, 127
      %v2247 = vpop.permute.xlu0 %2246
      %2248 = vrot.lane.b32.xlu0 %v1890, 127
      %v2249 = vpop.permute.xlu0 %2248
      %2250 = vrot.lane.b32.xlu0 %v1891, 127
      %v2251 = vpop.permute.xlu0 %2250
      %2252 = vrot.lane.b32.xlu0 %v1892, 127
      %v2253 = vpop.permute.xlu0 %2252
      %2254 = vrot.lane.b32.xlu0 %v1893, 127
      %v2255 = vpop.permute.xlu0 %2254
      %2256 = vrot.lane.b32.xlu0 %v1894, 127
      %v2257 = vpop.permute.xlu0 %2256
      %2258 = vrot.lane.b32.xlu0 %v1895, 127
      %v2259 = vpop.permute.xlu0 %2258
      %2260 = vrot.lane.b32.xlu0 %v1896, 127
      %v2261 = vpop.permute.xlu0 %2260
      %2262 = vrot.lane.b32.xlu0 %v1897, 127
      %v2263 = vpop.permute.xlu0 %2262
      %2264 = vrot.lane.b32.xlu0 %v1898, 127
      %v2265 = vpop.permute.xlu0 %2264
      %2266 = vrot.lane.b32.xlu0 %v1899, 127
      %v2267 = vpop.permute.xlu0 %2266
      %2268 = vrot.lane.b32.xlu0 %v1900, 127
      %v2269 = vpop.permute.xlu0 %2268
      %2270 = vrot.lane.b32.xlu0 %v1901, 127
      %v2271 = vpop.permute.xlu0 %2270
      %2272 = vrot.lane.b32.xlu0 %v1902, 127
      %v2273 = vpop.permute.xlu0 %2272
      %2274 = vrot.lane.b32.xlu0 %v1903, 127
      %v2275 = vpop.permute.xlu0 %2274
      %2276 = vrot.lane.b32.xlu0 %v1904, 127
      %v2277 = vpop.permute.xlu0 %2276
      %2278 = vrot.lane.b32.xlu0 %v1905, 127
      %v2279 = vpop.permute.xlu0 %2278
      %2280 = vrot.lane.b32.xlu0 %v1906, 127
      %v2281 = vpop.permute.xlu0 %2280
      %2282 = vrot.lane.b32.xlu0 %v1907, 127
      %v2283 = vpop.permute.xlu0 %2282
      %2284 = vrot.lane.b32.xlu0 %v1908, 127
      %v2285 = vpop.permute.xlu0 %2284
      %2286 = vrot.lane.b32.xlu0 %v1909, 127
      %v2287 = vpop.permute.xlu0 %2286
      %2288 = vrot.lane.b32.xlu0 %v1910, 127
      %v2289 = vpop.permute.xlu0 %2288
      %2290 = vrot.lane.b32.xlu0 %v1911, 127
      %v2291 = vpop.permute.xlu0 %2290
      %2292 = vrot.lane.b32.xlu0 %v1912, 127
      %v2293 = vpop.permute.xlu0 %2292
      %2294 = vrot.lane.b32.xlu0 %v1913, 127
      %v2295 = vpop.permute.xlu0 %2294
      %2296 = vrot.lane.b32.xlu0 %v1914, 127
      %v2297 = vpop.permute.xlu0 %2296
      %2298 = vrot.lane.b32.xlu0 %v1915, 127
      %v2299 = vpop.permute.xlu0 %2298
      %v2428 = vadd.f32 %v1404, %v2045
      %v2429 = vadd.f32 %v1405, %v2047
      %v2430 = vadd.f32 %v1406, %v2049
      %v2431 = vadd.f32 %v1407, %v2051
      %v2432 = vadd.f32 %v1408, %v2053
      %v2433 = vadd.f32 %v1409, %v2055
      %v2434 = vadd.f32 %v1410, %v2057
      %v2435 = vadd.f32 %v1411, %v2059
      %v2436 = vadd.f32 %v1412, %v2061
      %v2437 = vadd.f32 %v1413, %v2063
      %v2438 = vadd.f32 %v1414, %v2065
      %v2439 = vadd.f32 %v1415, %v2067
      %v2440 = vadd.f32 %v1416, %v2069
      %v2441 = vadd.f32 %v1417, %v2071
      %v2442 = vadd.f32 %v1418, %v2073
      %v2443 = vadd.f32 %v1419, %v2075
      %v2444 = vadd.f32 %v1420, %v2077
      %v2445 = vadd.f32 %v1421, %v2079
      %v2446 = vadd.f32 %v1422, %v2081
      %v2447 = vadd.f32 %v1423, %v2083
      %v2448 = vadd.f32 %v1424, %v2085
      %v2449 = vadd.f32 %v1425, %v2087
      %v2450 = vadd.f32 %v1426, %v2089
      %v2451 = vadd.f32 %v1427, %v2091
      %v2452 = vadd.f32 %v1428, %v2093
      %v2453 = vadd.f32 %v1429, %v2095
      %v2454 = vadd.f32 %v1430, %v2097
      %v2455 = vadd.f32 %v1431, %v2099
      %v2456 = vadd.f32 %v1432, %v2101
      %v2457 = vadd.f32 %v1433, %v2103
      %v2458 = vadd.f32 %v1434, %v2105
      %v2459 = vadd.f32 %v1435, %v2107
      %v2460 = vadd.f32 %v1436, %v2109
      %v2461 = vadd.f32 %v1437, %v2111
      %v2462 = vadd.f32 %v1438, %v2113
      %v2463 = vadd.f32 %v1439, %v2115
      %v2464 = vadd.f32 %v1440, %v2117
      %v2465 = vadd.f32 %v1441, %v2119
      %v2466 = vadd.f32 %v1442, %v2121
      %v2467 = vadd.f32 %v1443, %v2123
      %v2468 = vadd.f32 %v1444, %v2125
      %v2469 = vadd.f32 %v1445, %v2127
      %v2470 = vadd.f32 %v1446, %v2129
      %v2471 = vadd.f32 %v1447, %v2131
      %v2472 = vadd.f32 %v1448, %v2133
      %v2473 = vadd.f32 %v1449, %v2135
      %v2474 = vadd.f32 %v1450, %v2137
      %v2475 = vadd.f32 %v1451, %v2139
      %v2476 = vadd.f32 %v1452, %v2141
      %v2477 = vadd.f32 %v1453, %v2143
      %v2478 = vadd.f32 %v1454, %v2145
      %v2479 = vadd.f32 %v1455, %v2147
      %v2480 = vadd.f32 %v1456, %v2149
      %v2481 = vadd.f32 %v1457, %v2151
      %v2482 = vadd.f32 %v1458, %v2153
      %v2483 = vadd.f32 %v1459, %v2155
      %v2484 = vadd.f32 %v1460, %v2157
      %v2485 = vadd.f32 %v1461, %v2159
      %v2486 = vadd.f32 %v1462, %v2161
      %v2487 = vadd.f32 %v1463, %v2163
      %v2488 = vadd.f32 %v1464, %v2165
      %v2489 = vadd.f32 %v1465, %v2167
      %v2490 = vadd.f32 %v1466, %v2169
      %v2491 = vadd.f32 %v1467, %v2171
      %v2492 = vadd.f32 %v1468, %v2173
      %v2493 = vadd.f32 %v1469, %v2175
      %v2494 = vadd.f32 %v1470, %v2177
      %v2495 = vadd.f32 %v1471, %v2179
      %v2496 = vadd.f32 %v1472, %v2181
      %v2497 = vadd.f32 %v1473, %v2183
      %v2498 = vadd.f32 %v1474, %v2185
      %v2499 = vadd.f32 %v1475, %v2187
      %v2500 = vadd.f32 %v1476, %v2189
      %v2501 = vadd.f32 %v1477, %v2191
      %v2502 = vadd.f32 %v1478, %v2193
      %v2503 = vadd.f32 %v1479, %v2195
      %v2504 = vadd.f32 %v1480, %v2197
      %v2505 = vadd.f32 %v1481, %v2199
      %v2506 = vadd.f32 %v1482, %v2201
      %v2507 = vadd.f32 %v1483, %v2203
      %v2508 = vadd.f32 %v1484, %v2205
      %v2509 = vadd.f32 %v1485, %v2207
      %v2510 = vadd.f32 %v1486, %v2209
      %v2511 = vadd.f32 %v1487, %v2211
      %v2512 = vadd.f32 %v1488, %v2213
      %v2513 = vadd.f32 %v1489, %v2215
      %v2514 = vadd.f32 %v1490, %v2217
      %v2515 = vadd.f32 %v1491, %v2219
      %v2516 = vadd.f32 %v1492, %v2221
      %v2517 = vadd.f32 %v1493, %v2223
      %v2518 = vadd.f32 %v1494, %v2225
      %v2519 = vadd.f32 %v1495, %v2227
      %v2520 = vadd.f32 %v1496, %v2229
      %v2521 = vadd.f32 %v1497, %v2231
      %v2522 = vadd.f32 %v1498, %v2233
      %v2523 = vadd.f32 %v1499, %v2235
      %v2524 = vadd.f32 %v1500, %v2237
      %v2525 = vadd.f32 %v1501, %v2239
      %v2526 = vadd.f32 %v1502, %v2241
      %v2527 = vadd.f32 %v1503, %v2243
      %v2528 = vadd.f32 %v1504, %v2245
      %v2529 = vadd.f32 %v1505, %v2247
      %v2530 = vadd.f32 %v1506, %v2249
      %v2531 = vadd.f32 %v1507, %v2251
      %v2532 = vadd.f32 %v1508, %v2253
      %v2533 = vadd.f32 %v1509, %v2255
      %v2534 = vadd.f32 %v1510, %v2257
      %v2535 = vadd.f32 %v1511, %v2259
      %v2536 = vadd.f32 %v1512, %v2261
      %v2537 = vadd.f32 %v1513, %v2263
      %v2538 = vadd.f32 %v1514, %v2265
      %v2539 = vadd.f32 %v1515, %v2267
      %v2540 = vadd.f32 %v1516, %v2269
      %v2541 = vadd.f32 %v1517, %v2271
      %v2542 = vadd.f32 %v1518, %v2273
      %v2543 = vadd.f32 %v1519, %v2275
      %v2544 = vadd.f32 %v1520, %v2277
      %v2545 = vadd.f32 %v1521, %v2279
      %v2546 = vadd.f32 %v1522, %v2281
      %v2547 = vadd.f32 %v1523, %v2283
      %v2548 = vadd.f32 %v1524, %v2285
      %v2549 = vadd.f32 %v1525, %v2287
      %v2550 = vadd.f32 %v1526, %v2289
      %v2551 = vadd.f32 %v1527, %v2291
      %v2552 = vadd.f32 %v1528, %v2293
      %v2553 = vadd.f32 %v1529, %v2295
      %v2554 = vadd.f32 %v1530, %v2297
      %v2555 = vadd.f32 %v1531, %v2299
      %2556 = vset.pattern.permute.xlu0 2
      %2557 = vperm.xlu0 %2556, %v767
      %v2558 = vpop.permute.xlu0 %2557
      %2560 = vset.pattern.permute.xlu0 2
      %2561 = vperm.xlu0 %2560, %v771
      %v2562 = vpop.permute.xlu0 %2561
      %2564 = vset.pattern.permute.xlu0 2
      %2565 = vperm.xlu0 %2564, %v775
      %v2566 = vpop.permute.xlu0 %2565
      %2568 = vset.pattern.permute.xlu0 2
      %2569 = vperm.xlu0 %2568, %v779
      %v2570 = vpop.permute.xlu0 %2569
      %2572 = vset.pattern.permute.xlu0 2
      %2573 = vperm.xlu0 %2572, %v783
      %v2574 = vpop.permute.xlu0 %2573
      %2576 = vset.pattern.permute.xlu0 2
      %2577 = vperm.xlu0 %2576, %v787
      %v2578 = vpop.permute.xlu0 %2577
      %2580 = vset.pattern.permute.xlu0 2
      %2581 = vperm.xlu0 %2580, %v791
      %v2582 = vpop.permute.xlu0 %2581
      %2584 = vset.pattern.permute.xlu0 2
      %2585 = vperm.xlu0 %2584, %v795
      %v2586 = vpop.permute.xlu0 %2585
      %2588 = vset.pattern.permute.xlu0 2
      %2589 = vperm.xlu0 %2588, %v799
      %v2590 = vpop.permute.xlu0 %2589
      %2592 = vset.pattern.permute.xlu0 2
      %2593 = vperm.xlu0 %2592, %v803
      %v2594 = vpop.permute.xlu0 %2593
      %2596 = vset.pattern.permute.xlu0 2
      %2597 = vperm.xlu0 %2596, %v807
      %v2598 = vpop.permute.xlu0 %2597
      %2600 = vset.pattern.permute.xlu0 2
      %2601 = vperm.xlu0 %2600, %v811
      %v2602 = vpop.permute.xlu0 %2601
      %2604 = vset.pattern.permute.xlu0 2
      %2605 = vperm.xlu0 %2604, %v815
      %v2606 = vpop.permute.xlu0 %2605
      %2608 = vset.pattern.permute.xlu0 2
      %2609 = vperm.xlu0 %2608, %v819
      %v2610 = vpop.permute.xlu0 %2609
      %2612 = vset.pattern.permute.xlu0 2
      %2613 = vperm.xlu0 %2612, %v823
      %v2614 = vpop.permute.xlu0 %2613
      %2616 = vset.pattern.permute.xlu0 2
      %2617 = vperm.xlu0 %2616, %v827
      %v2618 = vpop.permute.xlu0 %2617
      %2620 = vset.pattern.permute.xlu0 2
      %2621 = vperm.xlu0 %2620, %v831
      %v2622 = vpop.permute.xlu0 %2621
      %2624 = vset.pattern.permute.xlu0 2
      %2625 = vperm.xlu0 %2624, %v835
      %v2626 = vpop.permute.xlu0 %2625
      %2628 = vset.pattern.permute.xlu0 2
      %2629 = vperm.xlu0 %2628, %v839
      %v2630 = vpop.permute.xlu0 %2629
      %2632 = vset.pattern.permute.xlu0 2
      %2633 = vperm.xlu0 %2632, %v843
      %v2634 = vpop.permute.xlu0 %2633
      %2636 = vset.pattern.permute.xlu0 2
      %2637 = vperm.xlu0 %2636, %v847
      %v2638 = vpop.permute.xlu0 %2637
      %2640 = vset.pattern.permute.xlu0 2
      %2641 = vperm.xlu0 %2640, %v851
      %v2642 = vpop.permute.xlu0 %2641
      %2644 = vset.pattern.permute.xlu0 2
      %2645 = vperm.xlu0 %2644, %v855
      %v2646 = vpop.permute.xlu0 %2645
      %2648 = vset.pattern.permute.xlu0 2
      %2649 = vperm.xlu0 %2648, %v859
      %v2650 = vpop.permute.xlu0 %2649
      %2652 = vset.pattern.permute.xlu0 2
      %2653 = vperm.xlu0 %2652, %v863
      %v2654 = vpop.permute.xlu0 %2653
      %2656 = vset.pattern.permute.xlu0 2
      %2657 = vperm.xlu0 %2656, %v867
      %v2658 = vpop.permute.xlu0 %2657
      %2660 = vset.pattern.permute.xlu0 2
      %2661 = vperm.xlu0 %2660, %v871
      %v2662 = vpop.permute.xlu0 %2661
      %2664 = vset.pattern.permute.xlu0 2
      %2665 = vperm.xlu0 %2664, %v875
      %v2666 = vpop.permute.xlu0 %2665
      %2668 = vset.pattern.permute.xlu0 2
      %2669 = vperm.xlu0 %2668, %v879
      %v2670 = vpop.permute.xlu0 %2669
      %2672 = vset.pattern.permute.xlu0 2
      %2673 = vperm.xlu0 %2672, %v883
      %v2674 = vpop.permute.xlu0 %2673
      %2676 = vset.pattern.permute.xlu0 2
      %2677 = vperm.xlu0 %2676, %v887
      %v2678 = vpop.permute.xlu0 %2677
      %2680 = vset.pattern.permute.xlu0 2
      %2681 = vperm.xlu0 %2680, %v891
      %v2682 = vpop.permute.xlu0 %2681
      %2684 = vset.pattern.permute.xlu0 2
      %2685 = vperm.xlu0 %2684, %v895
      %v2686 = vpop.permute.xlu0 %2685
      %2688 = vset.pattern.permute.xlu0 2
      %2689 = vperm.xlu0 %2688, %v899
      %v2690 = vpop.permute.xlu0 %2689
      %2692 = vset.pattern.permute.xlu0 2
      %2693 = vperm.xlu0 %2692, %v903
      %v2694 = vpop.permute.xlu0 %2693
      %2696 = vset.pattern.permute.xlu0 2
      %2697 = vperm.xlu0 %2696, %v907
      %v2698 = vpop.permute.xlu0 %2697
      %2700 = vset.pattern.permute.xlu0 2
      %2701 = vperm.xlu0 %2700, %v911
      %v2702 = vpop.permute.xlu0 %2701
      %2704 = vset.pattern.permute.xlu0 2
      %2705 = vperm.xlu0 %2704, %v915
      %v2706 = vpop.permute.xlu0 %2705
      %2708 = vset.pattern.permute.xlu0 2
      %2709 = vperm.xlu0 %2708, %v919
      %v2710 = vpop.permute.xlu0 %2709
      %2712 = vset.pattern.permute.xlu0 2
      %2713 = vperm.xlu0 %2712, %v923
      %v2714 = vpop.permute.xlu0 %2713
      %2716 = vset.pattern.permute.xlu0 2
      %2717 = vperm.xlu0 %2716, %v927
      %v2718 = vpop.permute.xlu0 %2717
      %2720 = vset.pattern.permute.xlu0 2
      %2721 = vperm.xlu0 %2720, %v931
      %v2722 = vpop.permute.xlu0 %2721
      %2724 = vset.pattern.permute.xlu0 2
      %2725 = vperm.xlu0 %2724, %v935
      %v2726 = vpop.permute.xlu0 %2725
      %2728 = vset.pattern.permute.xlu0 2
      %2729 = vperm.xlu0 %2728, %v939
      %v2730 = vpop.permute.xlu0 %2729
      %2732 = vset.pattern.permute.xlu0 2
      %2733 = vperm.xlu0 %2732, %v943
      %v2734 = vpop.permute.xlu0 %2733
      %2736 = vset.pattern.permute.xlu0 2
      %2737 = vperm.xlu0 %2736, %v947
      %v2738 = vpop.permute.xlu0 %2737
      %2740 = vset.pattern.permute.xlu0 2
      %2741 = vperm.xlu0 %2740, %v951
      %v2742 = vpop.permute.xlu0 %2741
      %2744 = vset.pattern.permute.xlu0 2
      %2745 = vperm.xlu0 %2744, %v955
      %v2746 = vpop.permute.xlu0 %2745
      %2748 = vset.pattern.permute.xlu0 2
      %2749 = vperm.xlu0 %2748, %v959
      %v2750 = vpop.permute.xlu0 %2749
      %2752 = vset.pattern.permute.xlu0 2
      %2753 = vperm.xlu0 %2752, %v963
      %v2754 = vpop.permute.xlu0 %2753
      %2756 = vset.pattern.permute.xlu0 2
      %2757 = vperm.xlu0 %2756, %v967
      %v2758 = vpop.permute.xlu0 %2757
      %2760 = vset.pattern.permute.xlu0 2
      %2761 = vperm.xlu0 %2760, %v971
      %v2762 = vpop.permute.xlu0 %2761
      %2764 = vset.pattern.permute.xlu0 2
      %2765 = vperm.xlu0 %2764, %v975
      %v2766 = vpop.permute.xlu0 %2765
      %2768 = vset.pattern.permute.xlu0 2
      %2769 = vperm.xlu0 %2768, %v979
      %v2770 = vpop.permute.xlu0 %2769
      %2772 = vset.pattern.permute.xlu0 2
      %2773 = vperm.xlu0 %2772, %v983
      %v2774 = vpop.permute.xlu0 %2773
      %2776 = vset.pattern.permute.xlu0 2
      %2777 = vperm.xlu0 %2776, %v987
      %v2778 = vpop.permute.xlu0 %2777
      %2780 = vset.pattern.permute.xlu0 2
      %2781 = vperm.xlu0 %2780, %v991
      %v2782 = vpop.permute.xlu0 %2781
      %2784 = vset.pattern.permute.xlu0 2
      %2785 = vperm.xlu0 %2784, %v995
      %v2786 = vpop.permute.xlu0 %2785
      %2788 = vset.pattern.permute.xlu0 2
      %2789 = vperm.xlu0 %2788, %v999
      %v2790 = vpop.permute.xlu0 %2789
      %2792 = vset.pattern.permute.xlu0 2
      %2793 = vperm.xlu0 %2792, %v1003
      %v2794 = vpop.permute.xlu0 %2793
      %2796 = vset.pattern.permute.xlu0 2
      %2797 = vperm.xlu0 %2796, %v1007
      %v2798 = vpop.permute.xlu0 %2797
      %2800 = vset.pattern.permute.xlu0 2
      %2801 = vperm.xlu0 %2800, %v1011
      %v2802 = vpop.permute.xlu0 %2801
      %2804 = vset.pattern.permute.xlu0 2
      %2805 = vperm.xlu0 %2804, %v1015
      %v2806 = vpop.permute.xlu0 %2805
      %2808 = vset.pattern.permute.xlu0 2
      %2809 = vperm.xlu0 %2808, %v1019
      %v2810 = vpop.permute.xlu0 %2809
      %v2812 = vmul.f32 %v164, %v2558
      %v2813 = vmul.f32 %v165, %v2558
      %v2814 = vmul.f32 %v167, %v2562
      %v2815 = vmul.f32 %v168, %v2562
      %v2816 = vmul.f32 %v170, %v2566
      %v2817 = vmul.f32 %v171, %v2566
      %v2818 = vmul.f32 %v173, %v2570
      %v2819 = vmul.f32 %v174, %v2570
      %v2820 = vmul.f32 %v176, %v2574
      %v2821 = vmul.f32 %v177, %v2574
      %v2822 = vmul.f32 %v179, %v2578
      %v2823 = vmul.f32 %v180, %v2578
      %v2824 = vmul.f32 %v182, %v2582
      %v2825 = vmul.f32 %v183, %v2582
      %v2826 = vmul.f32 %v185, %v2586
      %v2827 = vmul.f32 %v186, %v2586
      %v2828 = vmul.f32 %v188, %v2590
      %v2829 = vmul.f32 %v189, %v2590
      %v2830 = vmul.f32 %v191, %v2594
      %v2831 = vmul.f32 %v192, %v2594
      %v2832 = vmul.f32 %v194, %v2598
      %v2833 = vmul.f32 %v195, %v2598
      %v2834 = vmul.f32 %v197, %v2602
      %v2835 = vmul.f32 %v198, %v2602
      %v2836 = vmul.f32 %v200, %v2606
      %v2837 = vmul.f32 %v201, %v2606
      %v2838 = vmul.f32 %v203, %v2610
      %v2839 = vmul.f32 %v204, %v2610
      %v2840 = vmul.f32 %v206, %v2614
      %v2841 = vmul.f32 %v207, %v2614
      %v2842 = vmul.f32 %v209, %v2618
      %v2843 = vmul.f32 %v210, %v2618
      %v2844 = vmul.f32 %v212, %v2622
      %v2845 = vmul.f32 %v213, %v2622
      %v2846 = vmul.f32 %v215, %v2626
      %v2847 = vmul.f32 %v216, %v2626
      %v2848 = vmul.f32 %v218, %v2630
      %v2849 = vmul.f32 %v219, %v2630
      %v2850 = vmul.f32 %v221, %v2634
      %v2851 = vmul.f32 %v222, %v2634
      %v2852 = vmul.f32 %v224, %v2638
      %v2853 = vmul.f32 %v225, %v2638
      %v2854 = vmul.f32 %v227, %v2642
      %v2855 = vmul.f32 %v228, %v2642
      %v2856 = vmul.f32 %v230, %v2646
      %v2857 = vmul.f32 %v231, %v2646
      %v2858 = vmul.f32 %v233, %v2650
      %v2859 = vmul.f32 %v234, %v2650
      %v2860 = vmul.f32 %v236, %v2654
      %v2861 = vmul.f32 %v237, %v2654
      %v2862 = vmul.f32 %v239, %v2658
      %v2863 = vmul.f32 %v240, %v2658
      %v2864 = vmul.f32 %v242, %v2662
      %v2865 = vmul.f32 %v243, %v2662
      %v2866 = vmul.f32 %v245, %v2666
      %v2867 = vmul.f32 %v246, %v2666
      %v2868 = vmul.f32 %v248, %v2670
      %v2869 = vmul.f32 %v249, %v2670
      %v2870 = vmul.f32 %v251, %v2674
      %v2871 = vmul.f32 %v252, %v2674
      %v2872 = vmul.f32 %v254, %v2678
      %v2873 = vmul.f32 %v255, %v2678
      %v2874 = vmul.f32 %v257, %v2682
      %v2875 = vmul.f32 %v258, %v2682
      %v2876 = vmul.f32 %v260, %v2686
      %v2877 = vmul.f32 %v261, %v2686
      %v2878 = vmul.f32 %v263, %v2690
      %v2879 = vmul.f32 %v264, %v2690
      %v2880 = vmul.f32 %v266, %v2694
      %v2881 = vmul.f32 %v267, %v2694
      %v2882 = vmul.f32 %v269, %v2698
      %v2883 = vmul.f32 %v270, %v2698
      %v2884 = vmul.f32 %v272, %v2702
      %v2885 = vmul.f32 %v273, %v2702
      %v2886 = vmul.f32 %v275, %v2706
      %v2887 = vmul.f32 %v276, %v2706
      %v2888 = vmul.f32 %v278, %v2710
      %v2889 = vmul.f32 %v279, %v2710
      %v2890 = vmul.f32 %v281, %v2714
      %v2891 = vmul.f32 %v282, %v2714
      %v2892 = vmul.f32 %v284, %v2718
      %v2893 = vmul.f32 %v285, %v2718
      %v2894 = vmul.f32 %v287, %v2722
      %v2895 = vmul.f32 %v288, %v2722
      %v2896 = vmul.f32 %v290, %v2726
      %v2897 = vmul.f32 %v291, %v2726
      %v2898 = vmul.f32 %v293, %v2730
      %v2899 = vmul.f32 %v294, %v2730
      %v2900 = vmul.f32 %v296, %v2734
      %v2901 = vmul.f32 %v297, %v2734
      %v2902 = vmul.f32 %v299, %v2738
      %v2903 = vmul.f32 %v300, %v2738
      %v2904 = vmul.f32 %v302, %v2742
      %v2905 = vmul.f32 %v303, %v2742
      %v2906 = vmul.f32 %v305, %v2746
      %v2907 = vmul.f32 %v306, %v2746
      %v2908 = vmul.f32 %v308, %v2750
      %v2909 = vmul.f32 %v309, %v2750
      %v2910 = vmul.f32 %v311, %v2754
      %v2911 = vmul.f32 %v312, %v2754
      %v2912 = vmul.f32 %v314, %v2758
      %v2913 = vmul.f32 %v315, %v2758
      %v2914 = vmul.f32 %v317, %v2762
      %v2915 = vmul.f32 %v318, %v2762
      %v2916 = vmul.f32 %v320, %v2766
      %v2917 = vmul.f32 %v321, %v2766
      %v2918 = vmul.f32 %v323, %v2770
      %v2919 = vmul.f32 %v324, %v2770
      %v2920 = vmul.f32 %v326, %v2774
      %v2921 = vmul.f32 %v327, %v2774
      %v2922 = vmul.f32 %v329, %v2778
      %v2923 = vmul.f32 %v330, %v2778
      %v2924 = vmul.f32 %v332, %v2782
      %v2925 = vmul.f32 %v333, %v2782
      %v2926 = vmul.f32 %v335, %v2786
      %v2927 = vmul.f32 %v336, %v2786
      %v2928 = vmul.f32 %v338, %v2790
      %v2929 = vmul.f32 %v339, %v2790
      %v2930 = vmul.f32 %v341, %v2794
      %v2931 = vmul.f32 %v342, %v2794
      %v2932 = vmul.f32 %v344, %v2798
      %v2933 = vmul.f32 %v345, %v2798
      %v2934 = vmul.f32 %v347, %v2802
      %v2935 = vmul.f32 %v348, %v2802
      %v2936 = vmul.f32 %v350, %v2806
      %v2937 = vmul.f32 %v351, %v2806
      %v2938 = vmul.f32 %v353, %v2810
      %v2939 = vmul.f32 %v354, %v2810
      %3068 = vrot.lane.b32.xlu0 %v2812, 126
      %v3069 = vpop.permute.xlu0 %3068
      %3070 = vrot.lane.b32.xlu0 %v2813, 126
      %v3071 = vpop.permute.xlu0 %3070
      %3072 = vrot.lane.b32.xlu0 %v2814, 126
      %v3073 = vpop.permute.xlu0 %3072
      %3074 = vrot.lane.b32.xlu0 %v2815, 126
      %v3075 = vpop.permute.xlu0 %3074
      %3076 = vrot.lane.b32.xlu0 %v2816, 126
      %v3077 = vpop.permute.xlu0 %3076
      %3078 = vrot.lane.b32.xlu0 %v2817, 126
      %v3079 = vpop.permute.xlu0 %3078
      %3080 = vrot.lane.b32.xlu0 %v2818, 126
      %v3081 = vpop.permute.xlu0 %3080
      %3082 = vrot.lane.b32.xlu0 %v2819, 126
      %v3083 = vpop.permute.xlu0 %3082
      %3084 = vrot.lane.b32.xlu0 %v2820, 126
      %v3085 = vpop.permute.xlu0 %3084
      %3086 = vrot.lane.b32.xlu0 %v2821, 126
      %v3087 = vpop.permute.xlu0 %3086
      %3088 = vrot.lane.b32.xlu0 %v2822, 126
      %v3089 = vpop.permute.xlu0 %3088
      %3090 = vrot.lane.b32.xlu0 %v2823, 126
      %v3091 = vpop.permute.xlu0 %3090
      %3092 = vrot.lane.b32.xlu0 %v2824, 126
      %v3093 = vpop.permute.xlu0 %3092
      %3094 = vrot.lane.b32.xlu0 %v2825, 126
      %v3095 = vpop.permute.xlu0 %3094
      %3096 = vrot.lane.b32.xlu0 %v2826, 126
      %v3097 = vpop.permute.xlu0 %3096
      %3098 = vrot.lane.b32.xlu0 %v2827, 126
      %v3099 = vpop.permute.xlu0 %3098
      %3100 = vrot.lane.b32.xlu0 %v2828, 126
      %v3101 = vpop.permute.xlu0 %3100
      %3102 = vrot.lane.b32.xlu0 %v2829, 126
      %v3103 = vpop.permute.xlu0 %3102
      %3104 = vrot.lane.b32.xlu0 %v2830, 126
      %v3105 = vpop.permute.xlu0 %3104
      %3106 = vrot.lane.b32.xlu0 %v2831, 126
      %v3107 = vpop.permute.xlu0 %3106
      %3108 = vrot.lane.b32.xlu0 %v2832, 126
      %v3109 = vpop.permute.xlu0 %3108
      %3110 = vrot.lane.b32.xlu0 %v2833, 126
      %v3111 = vpop.permute.xlu0 %3110
      %3112 = vrot.lane.b32.xlu0 %v2834, 126
      %v3113 = vpop.permute.xlu0 %3112
      %3114 = vrot.lane.b32.xlu0 %v2835, 126
      %v3115 = vpop.permute.xlu0 %3114
      %3116 = vrot.lane.b32.xlu0 %v2836, 126
      %v3117 = vpop.permute.xlu0 %3116
      %3118 = vrot.lane.b32.xlu0 %v2837, 126
      %v3119 = vpop.permute.xlu0 %3118
      %3120 = vrot.lane.b32.xlu0 %v2838, 126
      %v3121 = vpop.permute.xlu0 %3120
      %3122 = vrot.lane.b32.xlu0 %v2839, 126
      %v3123 = vpop.permute.xlu0 %3122
      %3124 = vrot.lane.b32.xlu0 %v2840, 126
      %v3125 = vpop.permute.xlu0 %3124
      %3126 = vrot.lane.b32.xlu0 %v2841, 126
      %v3127 = vpop.permute.xlu0 %3126
      %3128 = vrot.lane.b32.xlu0 %v2842, 126
      %v3129 = vpop.permute.xlu0 %3128
      %3130 = vrot.lane.b32.xlu0 %v2843, 126
      %v3131 = vpop.permute.xlu0 %3130
      %3132 = vrot.lane.b32.xlu0 %v2844, 126
      %v3133 = vpop.permute.xlu0 %3132
      %3134 = vrot.lane.b32.xlu0 %v2845, 126
      %v3135 = vpop.permute.xlu0 %3134
      %3136 = vrot.lane.b32.xlu0 %v2846, 126
      %v3137 = vpop.permute.xlu0 %3136
      %3138 = vrot.lane.b32.xlu0 %v2847, 126
      %v3139 = vpop.permute.xlu0 %3138
      %3140 = vrot.lane.b32.xlu0 %v2848, 126
      %v3141 = vpop.permute.xlu0 %3140
      %3142 = vrot.lane.b32.xlu0 %v2849, 126
      %v3143 = vpop.permute.xlu0 %3142
      %3144 = vrot.lane.b32.xlu0 %v2850, 126
      %v3145 = vpop.permute.xlu0 %3144
      %3146 = vrot.lane.b32.xlu0 %v2851, 126
      %v3147 = vpop.permute.xlu0 %3146
      %3148 = vrot.lane.b32.xlu0 %v2852, 126
      %v3149 = vpop.permute.xlu0 %3148
      %3150 = vrot.lane.b32.xlu0 %v2853, 126
      %v3151 = vpop.permute.xlu0 %3150
      %3152 = vrot.lane.b32.xlu0 %v2854, 126
      %v3153 = vpop.permute.xlu0 %3152
      %3154 = vrot.lane.b32.xlu0 %v2855, 126
      %v3155 = vpop.permute.xlu0 %3154
      %3156 = vrot.lane.b32.xlu0 %v2856, 126
      %v3157 = vpop.permute.xlu0 %3156
      %3158 = vrot.lane.b32.xlu0 %v2857, 126
      %v3159 = vpop.permute.xlu0 %3158
      %3160 = vrot.lane.b32.xlu0 %v2858, 126
      %v3161 = vpop.permute.xlu0 %3160
      %3162 = vrot.lane.b32.xlu0 %v2859, 126
      %v3163 = vpop.permute.xlu0 %3162
      %3164 = vrot.lane.b32.xlu0 %v2860, 126
      %v3165 = vpop.permute.xlu0 %3164
      %3166 = vrot.lane.b32.xlu0 %v2861, 126
      %v3167 = vpop.permute.xlu0 %3166
      %3168 = vrot.lane.b32.xlu0 %v2862, 126
      %v3169 = vpop.permute.xlu0 %3168
      %3170 = vrot.lane.b32.xlu0 %v2863, 126
      %v3171 = vpop.permute.xlu0 %3170
      %3172 = vrot.lane.b32.xlu0 %v2864, 126
      %v3173 = vpop.permute.xlu0 %3172
      %3174 = vrot.lane.b32.xlu0 %v2865, 126
      %v3175 = vpop.permute.xlu0 %3174
      %3176 = vrot.lane.b32.xlu0 %v2866, 126
      %v3177 = vpop.permute.xlu0 %3176
      %3178 = vrot.lane.b32.xlu0 %v2867, 126
      %v3179 = vpop.permute.xlu0 %3178
      %3180 = vrot.lane.b32.xlu0 %v2868, 126
      %v3181 = vpop.permute.xlu0 %3180
      %3182 = vrot.lane.b32.xlu0 %v2869, 126
      %v3183 = vpop.permute.xlu0 %3182
      %3184 = vrot.lane.b32.xlu0 %v2870, 126
      %v3185 = vpop.permute.xlu0 %3184
      %3186 = vrot.lane.b32.xlu0 %v2871, 126
      %v3187 = vpop.permute.xlu0 %3186
      %3188 = vrot.lane.b32.xlu0 %v2872, 126
      %v3189 = vpop.permute.xlu0 %3188
      %3190 = vrot.lane.b32.xlu0 %v2873, 126
      %v3191 = vpop.permute.xlu0 %3190
      %3192 = vrot.lane.b32.xlu0 %v2874, 126
      %v3193 = vpop.permute.xlu0 %3192
      %3194 = vrot.lane.b32.xlu0 %v2875, 126
      %v3195 = vpop.permute.xlu0 %3194
      %3196 = vrot.lane.b32.xlu0 %v2876, 126
      %v3197 = vpop.permute.xlu0 %3196
      %3198 = vrot.lane.b32.xlu0 %v2877, 126
      %v3199 = vpop.permute.xlu0 %3198
      %3200 = vrot.lane.b32.xlu0 %v2878, 126
      %v3201 = vpop.permute.xlu0 %3200
      %3202 = vrot.lane.b32.xlu0 %v2879, 126
      %v3203 = vpop.permute.xlu0 %3202
      %3204 = vrot.lane.b32.xlu0 %v2880, 126
      %v3205 = vpop.permute.xlu0 %3204
      %3206 = vrot.lane.b32.xlu0 %v2881, 126
      %v3207 = vpop.permute.xlu0 %3206
      %3208 = vrot.lane.b32.xlu0 %v2882, 126
      %v3209 = vpop.permute.xlu0 %3208
      %3210 = vrot.lane.b32.xlu0 %v2883, 126
      %v3211 = vpop.permute.xlu0 %3210
      %3212 = vrot.lane.b32.xlu0 %v2884, 126
      %v3213 = vpop.permute.xlu0 %3212
      %3214 = vrot.lane.b32.xlu0 %v2885, 126
      %v3215 = vpop.permute.xlu0 %3214
      %3216 = vrot.lane.b32.xlu0 %v2886, 126
      %v3217 = vpop.permute.xlu0 %3216
      %3218 = vrot.lane.b32.xlu0 %v2887, 126
      %v3219 = vpop.permute.xlu0 %3218
      %3220 = vrot.lane.b32.xlu0 %v2888, 126
      %v3221 = vpop.permute.xlu0 %3220
      %3222 = vrot.lane.b32.xlu0 %v2889, 126
      %v3223 = vpop.permute.xlu0 %3222
      %3224 = vrot.lane.b32.xlu0 %v2890, 126
      %v3225 = vpop.permute.xlu0 %3224
      %3226 = vrot.lane.b32.xlu0 %v2891, 126
      %v3227 = vpop.permute.xlu0 %3226
      %3228 = vrot.lane.b32.xlu0 %v2892, 126
      %v3229 = vpop.permute.xlu0 %3228
      %3230 = vrot.lane.b32.xlu0 %v2893, 126
      %v3231 = vpop.permute.xlu0 %3230
      %3232 = vrot.lane.b32.xlu0 %v2894, 126
      %v3233 = vpop.permute.xlu0 %3232
      %3234 = vrot.lane.b32.xlu0 %v2895, 126
      %v3235 = vpop.permute.xlu0 %3234
      %3236 = vrot.lane.b32.xlu0 %v2896, 126
      %v3237 = vpop.permute.xlu0 %3236
      %3238 = vrot.lane.b32.xlu0 %v2897, 126
      %v3239 = vpop.permute.xlu0 %3238
      %3240 = vrot.lane.b32.xlu0 %v2898, 126
      %v3241 = vpop.permute.xlu0 %3240
      %3242 = vrot.lane.b32.xlu0 %v2899, 126
      %v3243 = vpop.permute.xlu0 %3242
      %3244 = vrot.lane.b32.xlu0 %v2900, 126
      %v3245 = vpop.permute.xlu0 %3244
      %3246 = vrot.lane.b32.xlu0 %v2901, 126
      %v3247 = vpop.permute.xlu0 %3246
      %3248 = vrot.lane.b32.xlu0 %v2902, 126
      %v3249 = vpop.permute.xlu0 %3248
      %3250 = vrot.lane.b32.xlu0 %v2903, 126
      %v3251 = vpop.permute.xlu0 %3250
      %3252 = vrot.lane.b32.xlu0 %v2904, 126
      %v3253 = vpop.permute.xlu0 %3252
      %3254 = vrot.lane.b32.xlu0 %v2905, 126
      %v3255 = vpop.permute.xlu0 %3254
      %3256 = vrot.lane.b32.xlu0 %v2906, 126
      %v3257 = vpop.permute.xlu0 %3256
      %3258 = vrot.lane.b32.xlu0 %v2907, 126
      %v3259 = vpop.permute.xlu0 %3258
      %3260 = vrot.lane.b32.xlu0 %v2908, 126
      %v3261 = vpop.permute.xlu0 %3260
      %3262 = vrot.lane.b32.xlu0 %v2909, 126
      %v3263 = vpop.permute.xlu0 %3262
      %3264 = vrot.lane.b32.xlu0 %v2910, 126
      %v3265 = vpop.permute.xlu0 %3264
      %3266 = vrot.lane.b32.xlu0 %v2911, 126
      %v3267 = vpop.permute.xlu0 %3266
      %3268 = vrot.lane.b32.xlu0 %v2912, 126
      %v3269 = vpop.permute.xlu0 %3268
      %3270 = vrot.lane.b32.xlu0 %v2913, 126
      %v3271 = vpop.permute.xlu0 %3270
      %3272 = vrot.lane.b32.xlu0 %v2914, 126
      %v3273 = vpop.permute.xlu0 %3272
      %3274 = vrot.lane.b32.xlu0 %v2915, 126
      %v3275 = vpop.permute.xlu0 %3274
      %3276 = vrot.lane.b32.xlu0 %v2916, 126
      %v3277 = vpop.permute.xlu0 %3276
      %3278 = vrot.lane.b32.xlu0 %v2917, 126
      %v3279 = vpop.permute.xlu0 %3278
      %3280 = vrot.lane.b32.xlu0 %v2918, 126
      %v3281 = vpop.permute.xlu0 %3280
      %3282 = vrot.lane.b32.xlu0 %v2919, 126
      %v3283 = vpop.permute.xlu0 %3282
      %3284 = vrot.lane.b32.xlu0 %v2920, 126
      %v3285 = vpop.permute.xlu0 %3284
      %3286 = vrot.lane.b32.xlu0 %v2921, 126
      %v3287 = vpop.permute.xlu0 %3286
      %3288 = vrot.lane.b32.xlu0 %v2922, 126
      %v3289 = vpop.permute.xlu0 %3288
      %3290 = vrot.lane.b32.xlu0 %v2923, 126
      %v3291 = vpop.permute.xlu0 %3290
      %3292 = vrot.lane.b32.xlu0 %v2924, 126
      %v3293 = vpop.permute.xlu0 %3292
      %3294 = vrot.lane.b32.xlu0 %v2925, 126
      %v3295 = vpop.permute.xlu0 %3294
      %3296 = vrot.lane.b32.xlu0 %v2926, 126
      %v3297 = vpop.permute.xlu0 %3296
      %3298 = vrot.lane.b32.xlu0 %v2927, 126
      %v3299 = vpop.permute.xlu0 %3298
      %3300 = vrot.lane.b32.xlu0 %v2928, 126
      %v3301 = vpop.permute.xlu0 %3300
      %3302 = vrot.lane.b32.xlu0 %v2929, 126
      %v3303 = vpop.permute.xlu0 %3302
      %3304 = vrot.lane.b32.xlu0 %v2930, 126
      %v3305 = vpop.permute.xlu0 %3304
      %3306 = vrot.lane.b32.xlu0 %v2931, 126
      %v3307 = vpop.permute.xlu0 %3306
      %3308 = vrot.lane.b32.xlu0 %v2932, 126
      %v3309 = vpop.permute.xlu0 %3308
      %3310 = vrot.lane.b32.xlu0 %v2933, 126
      %v3311 = vpop.permute.xlu0 %3310
      %3312 = vrot.lane.b32.xlu0 %v2934, 126
      %v3313 = vpop.permute.xlu0 %3312
      %3314 = vrot.lane.b32.xlu0 %v2935, 126
      %v3315 = vpop.permute.xlu0 %3314
      %3316 = vrot.lane.b32.xlu0 %v2936, 126
      %v3317 = vpop.permute.xlu0 %3316
      %3318 = vrot.lane.b32.xlu0 %v2937, 126
      %v3319 = vpop.permute.xlu0 %3318
      %3320 = vrot.lane.b32.xlu0 %v2938, 126
      %v3321 = vpop.permute.xlu0 %3320
      %3322 = vrot.lane.b32.xlu0 %v2939, 126
      %v3323 = vpop.permute.xlu0 %3322
      %v3452 = vadd.f32 %v2428, %v3069
      %v3453 = vadd.f32 %v2429, %v3071
      %v3454 = vadd.f32 %v2430, %v3073
      %v3455 = vadd.f32 %v2431, %v3075
      %v3456 = vadd.f32 %v2432, %v3077
      %v3457 = vadd.f32 %v2433, %v3079
      %v3458 = vadd.f32 %v2434, %v3081
      %v3459 = vadd.f32 %v2435, %v3083
      %v3460 = vadd.f32 %v2436, %v3085
      %v3461 = vadd.f32 %v2437, %v3087
      %v3462 = vadd.f32 %v2438, %v3089
      %v3463 = vadd.f32 %v2439, %v3091
      %v3464 = vadd.f32 %v2440, %v3093
      %v3465 = vadd.f32 %v2441, %v3095
      %v3466 = vadd.f32 %v2442, %v3097
      %v3467 = vadd.f32 %v2443, %v3099
      %v3468 = vadd.f32 %v2444, %v3101
      %v3469 = vadd.f32 %v2445, %v3103
      %v3470 = vadd.f32 %v2446, %v3105
      %v3471 = vadd.f32 %v2447, %v3107
      %v3472 = vadd.f32 %v2448, %v3109
      %v3473 = vadd.f32 %v2449, %v3111
      %v3474 = vadd.f32 %v2450, %v3113
      %v3475 = vadd.f32 %v2451, %v3115
      %v3476 = vadd.f32 %v2452, %v3117
      %v3477 = vadd.f32 %v2453, %v3119
      %v3478 = vadd.f32 %v2454, %v3121
      %v3479 = vadd.f32 %v2455, %v3123
      %v3480 = vadd.f32 %v2456, %v3125
      %v3481 = vadd.f32 %v2457, %v3127
      %v3482 = vadd.f32 %v2458, %v3129
      %v3483 = vadd.f32 %v2459, %v3131
      %v3484 = vadd.f32 %v2460, %v3133
      %v3485 = vadd.f32 %v2461, %v3135
      %v3486 = vadd.f32 %v2462, %v3137
      %v3487 = vadd.f32 %v2463, %v3139
      %v3488 = vadd.f32 %v2464, %v3141
      %v3489 = vadd.f32 %v2465, %v3143
      %v3490 = vadd.f32 %v2466, %v3145
      %v3491 = vadd.f32 %v2467, %v3147
      %v3492 = vadd.f32 %v2468, %v3149
      %v3493 = vadd.f32 %v2469, %v3151
      %v3494 = vadd.f32 %v2470, %v3153
      %v3495 = vadd.f32 %v2471, %v3155
      %v3496 = vadd.f32 %v2472, %v3157
      %v3497 = vadd.f32 %v2473, %v3159
      %v3498 = vadd.f32 %v2474, %v3161
      %v3499 = vadd.f32 %v2475, %v3163
      %v3500 = vadd.f32 %v2476, %v3165
      %v3501 = vadd.f32 %v2477, %v3167
      %v3502 = vadd.f32 %v2478, %v3169
      %v3503 = vadd.f32 %v2479, %v3171
      %v3504 = vadd.f32 %v2480, %v3173
      %v3505 = vadd.f32 %v2481, %v3175
      %v3506 = vadd.f32 %v2482, %v3177
      %v3507 = vadd.f32 %v2483, %v3179
      %v3508 = vadd.f32 %v2484, %v3181
      %v3509 = vadd.f32 %v2485, %v3183
      %v3510 = vadd.f32 %v2486, %v3185
      %v3511 = vadd.f32 %v2487, %v3187
      %v3512 = vadd.f32 %v2488, %v3189
      %v3513 = vadd.f32 %v2489, %v3191
      %v3514 = vadd.f32 %v2490, %v3193
      %v3515 = vadd.f32 %v2491, %v3195
      %v3516 = vadd.f32 %v2492, %v3197
      %v3517 = vadd.f32 %v2493, %v3199
      %v3518 = vadd.f32 %v2494, %v3201
      %v3519 = vadd.f32 %v2495, %v3203
      %v3520 = vadd.f32 %v2496, %v3205
      %v3521 = vadd.f32 %v2497, %v3207
      %v3522 = vadd.f32 %v2498, %v3209
      %v3523 = vadd.f32 %v2499, %v3211
      %v3524 = vadd.f32 %v2500, %v3213
      %v3525 = vadd.f32 %v2501, %v3215
      %v3526 = vadd.f32 %v2502, %v3217
      %v3527 = vadd.f32 %v2503, %v3219
      %v3528 = vadd.f32 %v2504, %v3221
      %v3529 = vadd.f32 %v2505, %v3223
      %v3530 = vadd.f32 %v2506, %v3225
      %v3531 = vadd.f32 %v2507, %v3227
      %v3532 = vadd.f32 %v2508, %v3229
      %v3533 = vadd.f32 %v2509, %v3231
      %v3534 = vadd.f32 %v2510, %v3233
      %v3535 = vadd.f32 %v2511, %v3235
      %v3536 = vadd.f32 %v2512, %v3237
      %v3537 = vadd.f32 %v2513, %v3239
      %v3538 = vadd.f32 %v2514, %v3241
      %v3539 = vadd.f32 %v2515, %v3243
      %v3540 = vadd.f32 %v2516, %v3245
      %v3541 = vadd.f32 %v2517, %v3247
      %v3542 = vadd.f32 %v2518, %v3249
      %v3543 = vadd.f32 %v2519, %v3251
      %v3544 = vadd.f32 %v2520, %v3253
      %v3545 = vadd.f32 %v2521, %v3255
      %v3546 = vadd.f32 %v2522, %v3257
      %v3547 = vadd.f32 %v2523, %v3259
      %v3548 = vadd.f32 %v2524, %v3261
      %v3549 = vadd.f32 %v2525, %v3263
      %v3550 = vadd.f32 %v2526, %v3265
      %v3551 = vadd.f32 %v2527, %v3267
      %v3552 = vadd.f32 %v2528, %v3269
      %v3553 = vadd.f32 %v2529, %v3271
      %v3554 = vadd.f32 %v2530, %v3273
      %v3555 = vadd.f32 %v2531, %v3275
      %v3556 = vadd.f32 %v2532, %v3277
      %v3557 = vadd.f32 %v2533, %v3279
      %v3558 = vadd.f32 %v2534, %v3281
      %v3559 = vadd.f32 %v2535, %v3283
      %v3560 = vadd.f32 %v2536, %v3285
      %v3561 = vadd.f32 %v2537, %v3287
      %v3562 = vadd.f32 %v2538, %v3289
      %v3563 = vadd.f32 %v2539, %v3291
      %v3564 = vadd.f32 %v2540, %v3293
      %v3565 = vadd.f32 %v2541, %v3295
      %v3566 = vadd.f32 %v2542, %v3297
      %v3567 = vadd.f32 %v2543, %v3299
      %v3568 = vadd.f32 %v2544, %v3301
      %v3569 = vadd.f32 %v2545, %v3303
      %v3570 = vadd.f32 %v2546, %v3305
      %v3571 = vadd.f32 %v2547, %v3307
      %v3572 = vadd.f32 %v2548, %v3309
      %v3573 = vadd.f32 %v2549, %v3311
      %v3574 = vadd.f32 %v2550, %v3313
      %v3575 = vadd.f32 %v2551, %v3315
      %v3576 = vadd.f32 %v2552, %v3317
      %v3577 = vadd.f32 %v2553, %v3319
      %v3578 = vadd.f32 %v2554, %v3321
      %v3579 = vadd.f32 %v2555, %v3323
      %3580 = vset.pattern.permute.xlu0 3
      %3581 = vperm.xlu0 %3580, %v767
      %v3582 = vpop.permute.xlu0 %3581
      %3584 = vset.pattern.permute.xlu0 3
      %3585 = vperm.xlu0 %3584, %v771
      %v3586 = vpop.permute.xlu0 %3585
      %3588 = vset.pattern.permute.xlu0 3
      %3589 = vperm.xlu0 %3588, %v775
      %v3590 = vpop.permute.xlu0 %3589
      %3592 = vset.pattern.permute.xlu0 3
      %3593 = vperm.xlu0 %3592, %v779
      %v3594 = vpop.permute.xlu0 %3593
      %3596 = vset.pattern.permute.xlu0 3
      %3597 = vperm.xlu0 %3596, %v783
      %v3598 = vpop.permute.xlu0 %3597
      %3600 = vset.pattern.permute.xlu0 3
      %3601 = vperm.xlu0 %3600, %v787
      %v3602 = vpop.permute.xlu0 %3601
      %3604 = vset.pattern.permute.xlu0 3
      %3605 = vperm.xlu0 %3604, %v791
      %v3606 = vpop.permute.xlu0 %3605
      %3608 = vset.pattern.permute.xlu0 3
      %3609 = vperm.xlu0 %3608, %v795
      %v3610 = vpop.permute.xlu0 %3609
      %3612 = vset.pattern.permute.xlu0 3
      %3613 = vperm.xlu0 %3612, %v799
      %v3614 = vpop.permute.xlu0 %3613
      %3616 = vset.pattern.permute.xlu0 3
      %3617 = vperm.xlu0 %3616, %v803
      %v3618 = vpop.permute.xlu0 %3617
      %3620 = vset.pattern.permute.xlu0 3
      %3621 = vperm.xlu0 %3620, %v807
      %v3622 = vpop.permute.xlu0 %3621
      %3624 = vset.pattern.permute.xlu0 3
      %3625 = vperm.xlu0 %3624, %v811
      %v3626 = vpop.permute.xlu0 %3625
      %3628 = vset.pattern.permute.xlu0 3
      %3629 = vperm.xlu0 %3628, %v815
      %v3630 = vpop.permute.xlu0 %3629
      %3632 = vset.pattern.permute.xlu0 3
      %3633 = vperm.xlu0 %3632, %v819
      %v3634 = vpop.permute.xlu0 %3633
      %3636 = vset.pattern.permute.xlu0 3
      %3637 = vperm.xlu0 %3636, %v823
      %v3638 = vpop.permute.xlu0 %3637
      %3640 = vset.pattern.permute.xlu0 3
      %3641 = vperm.xlu0 %3640, %v827
      %v3642 = vpop.permute.xlu0 %3641
      %3644 = vset.pattern.permute.xlu0 3
      %3645 = vperm.xlu0 %3644, %v831
      %v3646 = vpop.permute.xlu0 %3645
      %3648 = vset.pattern.permute.xlu0 3
      %3649 = vperm.xlu0 %3648, %v835
      %v3650 = vpop.permute.xlu0 %3649
      %3652 = vset.pattern.permute.xlu0 3
      %3653 = vperm.xlu0 %3652, %v839
      %v3654 = vpop.permute.xlu0 %3653
      %3656 = vset.pattern.permute.xlu0 3
      %3657 = vperm.xlu0 %3656, %v843
      %v3658 = vpop.permute.xlu0 %3657
      %3660 = vset.pattern.permute.xlu0 3
      %3661 = vperm.xlu0 %3660, %v847
      %v3662 = vpop.permute.xlu0 %3661
      %3664 = vset.pattern.permute.xlu0 3
      %3665 = vperm.xlu0 %3664, %v851
      %v3666 = vpop.permute.xlu0 %3665
      %3668 = vset.pattern.permute.xlu0 3
      %3669 = vperm.xlu0 %3668, %v855
      %v3670 = vpop.permute.xlu0 %3669
      %3672 = vset.pattern.permute.xlu0 3
      %3673 = vperm.xlu0 %3672, %v859
      %v3674 = vpop.permute.xlu0 %3673
      %3676 = vset.pattern.permute.xlu0 3
      %3677 = vperm.xlu0 %3676, %v863
      %v3678 = vpop.permute.xlu0 %3677
      %3680 = vset.pattern.permute.xlu0 3
      %3681 = vperm.xlu0 %3680, %v867
      %v3682 = vpop.permute.xlu0 %3681
      %3684 = vset.pattern.permute.xlu0 3
      %3685 = vperm.xlu0 %3684, %v871
      %v3686 = vpop.permute.xlu0 %3685
      %3688 = vset.pattern.permute.xlu0 3
      %3689 = vperm.xlu0 %3688, %v875
      %v3690 = vpop.permute.xlu0 %3689
      %3692 = vset.pattern.permute.xlu0 3
      %3693 = vperm.xlu0 %3692, %v879
      %v3694 = vpop.permute.xlu0 %3693
      %3696 = vset.pattern.permute.xlu0 3
      %3697 = vperm.xlu0 %3696, %v883
      %v3698 = vpop.permute.xlu0 %3697
      %3700 = vset.pattern.permute.xlu0 3
      %3701 = vperm.xlu0 %3700, %v887
      %v3702 = vpop.permute.xlu0 %3701
      %3704 = vset.pattern.permute.xlu0 3
      %3705 = vperm.xlu0 %3704, %v891
      %v3706 = vpop.permute.xlu0 %3705
      %3708 = vset.pattern.permute.xlu0 3
      %3709 = vperm.xlu0 %3708, %v895
      %v3710 = vpop.permute.xlu0 %3709
      %3712 = vset.pattern.permute.xlu0 3
      %3713 = vperm.xlu0 %3712, %v899
      %v3714 = vpop.permute.xlu0 %3713
      %3716 = vset.pattern.permute.xlu0 3
      %3717 = vperm.xlu0 %3716, %v903
      %v3718 = vpop.permute.xlu0 %3717
      %3720 = vset.pattern.permute.xlu0 3
      %3721 = vperm.xlu0 %3720, %v907
      %v3722 = vpop.permute.xlu0 %3721
      %3724 = vset.pattern.permute.xlu0 3
      %3725 = vperm.xlu0 %3724, %v911
      %v3726 = vpop.permute.xlu0 %3725
      %3728 = vset.pattern.permute.xlu0 3
      %3729 = vperm.xlu0 %3728, %v915
      %v3730 = vpop.permute.xlu0 %3729
      %3732 = vset.pattern.permute.xlu0 3
      %3733 = vperm.xlu0 %3732, %v919
      %v3734 = vpop.permute.xlu0 %3733
      %3736 = vset.pattern.permute.xlu0 3
      %3737 = vperm.xlu0 %3736, %v923
      %v3738 = vpop.permute.xlu0 %3737
      %3740 = vset.pattern.permute.xlu0 3
      %3741 = vperm.xlu0 %3740, %v927
      %v3742 = vpop.permute.xlu0 %3741
      %3744 = vset.pattern.permute.xlu0 3
      %3745 = vperm.xlu0 %3744, %v931
      %v3746 = vpop.permute.xlu0 %3745
      %3748 = vset.pattern.permute.xlu0 3
      %3749 = vperm.xlu0 %3748, %v935
      %v3750 = vpop.permute.xlu0 %3749
      %3752 = vset.pattern.permute.xlu0 3
      %3753 = vperm.xlu0 %3752, %v939
      %v3754 = vpop.permute.xlu0 %3753
      %3756 = vset.pattern.permute.xlu0 3
      %3757 = vperm.xlu0 %3756, %v943
      %v3758 = vpop.permute.xlu0 %3757
      %3760 = vset.pattern.permute.xlu0 3
      %3761 = vperm.xlu0 %3760, %v947
      %v3762 = vpop.permute.xlu0 %3761
      %3764 = vset.pattern.permute.xlu0 3
      %3765 = vperm.xlu0 %3764, %v951
      %v3766 = vpop.permute.xlu0 %3765
      %3768 = vset.pattern.permute.xlu0 3
      %3769 = vperm.xlu0 %3768, %v955
      %v3770 = vpop.permute.xlu0 %3769
      %3772 = vset.pattern.permute.xlu0 3
      %3773 = vperm.xlu0 %3772, %v959
      %v3774 = vpop.permute.xlu0 %3773
      %3776 = vset.pattern.permute.xlu0 3
      %3777 = vperm.xlu0 %3776, %v963
      %v3778 = vpop.permute.xlu0 %3777
      %3780 = vset.pattern.permute.xlu0 3
      %3781 = vperm.xlu0 %3780, %v967
      %v3782 = vpop.permute.xlu0 %3781
      %3784 = vset.pattern.permute.xlu0 3
      %3785 = vperm.xlu0 %3784, %v971
      %v3786 = vpop.permute.xlu0 %3785
      %3788 = vset.pattern.permute.xlu0 3
      %3789 = vperm.xlu0 %3788, %v975
      %v3790 = vpop.permute.xlu0 %3789
      %3792 = vset.pattern.permute.xlu0 3
      %3793 = vperm.xlu0 %3792, %v979
      %v3794 = vpop.permute.xlu0 %3793
      %3796 = vset.pattern.permute.xlu0 3
      %3797 = vperm.xlu0 %3796, %v983
      %v3798 = vpop.permute.xlu0 %3797
      %3800 = vset.pattern.permute.xlu0 3
      %3801 = vperm.xlu0 %3800, %v987
      %v3802 = vpop.permute.xlu0 %3801
      %3804 = vset.pattern.permute.xlu0 3
      %3805 = vperm.xlu0 %3804, %v991
      %v3806 = vpop.permute.xlu0 %3805
      %3808 = vset.pattern.permute.xlu0 3
      %3809 = vperm.xlu0 %3808, %v995
      %v3810 = vpop.permute.xlu0 %3809
      %3812 = vset.pattern.permute.xlu0 3
      %3813 = vperm.xlu0 %3812, %v999
      %v3814 = vpop.permute.xlu0 %3813
      %3816 = vset.pattern.permute.xlu0 3
      %3817 = vperm.xlu0 %3816, %v1003
      %v3818 = vpop.permute.xlu0 %3817
      %3820 = vset.pattern.permute.xlu0 3
      %3821 = vperm.xlu0 %3820, %v1007
      %v3822 = vpop.permute.xlu0 %3821
      %3824 = vset.pattern.permute.xlu0 3
      %3825 = vperm.xlu0 %3824, %v1011
      %v3826 = vpop.permute.xlu0 %3825
      %3828 = vset.pattern.permute.xlu0 3
      %3829 = vperm.xlu0 %3828, %v1015
      %v3830 = vpop.permute.xlu0 %3829
      %3832 = vset.pattern.permute.xlu0 3
      %3833 = vperm.xlu0 %3832, %v1019
      %v3834 = vpop.permute.xlu0 %3833
      %v3836 = vmul.f32 %v164, %v3582
      %v3837 = vmul.f32 %v165, %v3582
      %v3838 = vmul.f32 %v166, %v3582
      %v3839 = vmul.f32 %v167, %v3586
      %v3840 = vmul.f32 %v168, %v3586
      %v3841 = vmul.f32 %v169, %v3586
      %v3842 = vmul.f32 %v170, %v3590
      %v3843 = vmul.f32 %v171, %v3590
      %v3844 = vmul.f32 %v172, %v3590
      %v3845 = vmul.f32 %v173, %v3594
      %v3846 = vmul.f32 %v174, %v3594
      %v3847 = vmul.f32 %v175, %v3594
      %v3848 = vmul.f32 %v176, %v3598
      %v3849 = vmul.f32 %v177, %v3598
      %v3850 = vmul.f32 %v178, %v3598
      %v3851 = vmul.f32 %v179, %v3602
      %v3852 = vmul.f32 %v180, %v3602
      %v3853 = vmul.f32 %v181, %v3602
      %v3854 = vmul.f32 %v182, %v3606
      %v3855 = vmul.f32 %v183, %v3606
      %v3856 = vmul.f32 %v184, %v3606
      %v3857 = vmul.f32 %v185, %v3610
      %v3858 = vmul.f32 %v186, %v3610
      %v3859 = vmul.f32 %v187, %v3610
      %v3860 = vmul.f32 %v188, %v3614
      %v3861 = vmul.f32 %v189, %v3614
      %v3862 = vmul.f32 %v190, %v3614
      %v3863 = vmul.f32 %v191, %v3618
      %v3864 = vmul.f32 %v192, %v3618
      %v3865 = vmul.f32 %v193, %v3618
      %v3866 = vmul.f32 %v194, %v3622
      %v3867 = vmul.f32 %v195, %v3622
      %v3868 = vmul.f32 %v196, %v3622
      %v3869 = vmul.f32 %v197, %v3626
      %v3870 = vmul.f32 %v198, %v3626
      %v3871 = vmul.f32 %v199, %v3626
      %v3872 = vmul.f32 %v200, %v3630
      %v3873 = vmul.f32 %v201, %v3630
      %v3874 = vmul.f32 %v202, %v3630
      %v3875 = vmul.f32 %v203, %v3634
      %v3876 = vmul.f32 %v204, %v3634
      %v3877 = vmul.f32 %v205, %v3634
      %v3878 = vmul.f32 %v206, %v3638
      %v3879 = vmul.f32 %v207, %v3638
      %v3880 = vmul.f32 %v208, %v3638
      %v3881 = vmul.f32 %v209, %v3642
      %v3882 = vmul.f32 %v210, %v3642
      %v3883 = vmul.f32 %v211, %v3642
      %v3884 = vmul.f32 %v212, %v3646
      %v3885 = vmul.f32 %v213, %v3646
      %v3886 = vmul.f32 %v214, %v3646
      %v3887 = vmul.f32 %v215, %v3650
      %v3888 = vmul.f32 %v216, %v3650
      %v3889 = vmul.f32 %v217, %v3650
      %v3890 = vmul.f32 %v218, %v3654
      %v3891 = vmul.f32 %v219, %v3654
      %v3892 = vmul.f32 %v220, %v3654
      %v3893 = vmul.f32 %v221, %v3658
      %v3894 = vmul.f32 %v222, %v3658
      %v3895 = vmul.f32 %v223, %v3658
      %v3896 = vmul.f32 %v224, %v3662
      %v3897 = vmul.f32 %v225, %v3662
      %v3898 = vmul.f32 %v226, %v3662
      %v3899 = vmul.f32 %v227, %v3666
      %v3900 = vmul.f32 %v228, %v3666
      %v3901 = vmul.f32 %v229, %v3666
      %v3902 = vmul.f32 %v230, %v3670
      %v3903 = vmul.f32 %v231, %v3670
      %v3904 = vmul.f32 %v232, %v3670
      %v3905 = vmul.f32 %v233, %v3674
      %v3906 = vmul.f32 %v234, %v3674
      %v3907 = vmul.f32 %v235, %v3674
      %v3908 = vmul.f32 %v236, %v3678
      %v3909 = vmul.f32 %v237, %v3678
      %v3910 = vmul.f32 %v238, %v3678
      %v3911 = vmul.f32 %v239, %v3682
      %v3912 = vmul.f32 %v240, %v3682
      %v3913 = vmul.f32 %v241, %v3682
      %v3914 = vmul.f32 %v242, %v3686
      %v3915 = vmul.f32 %v243, %v3686
      %v3916 = vmul.f32 %v244, %v3686
      %v3917 = vmul.f32 %v245, %v3690
      %v3918 = vmul.f32 %v246, %v3690
      %v3919 = vmul.f32 %v247, %v3690
      %v3920 = vmul.f32 %v248, %v3694
      %v3921 = vmul.f32 %v249, %v3694
      %v3922 = vmul.f32 %v250, %v3694
      %v3923 = vmul.f32 %v251, %v3698
      %v3924 = vmul.f32 %v252, %v3698
      %v3925 = vmul.f32 %v253, %v3698
      %v3926 = vmul.f32 %v254, %v3702
      %v3927 = vmul.f32 %v255, %v3702
      %v3928 = vmul.f32 %v256, %v3702
      %v3929 = vmul.f32 %v257, %v3706
      %v3930 = vmul.f32 %v258, %v3706
      %v3931 = vmul.f32 %v259, %v3706
      %v3932 = vmul.f32 %v260, %v3710
      %v3933 = vmul.f32 %v261, %v3710
      %v3934 = vmul.f32 %v262, %v3710
      %v3935 = vmul.f32 %v263, %v3714
      %v3936 = vmul.f32 %v264, %v3714
      %v3937 = vmul.f32 %v265, %v3714
      %v3938 = vmul.f32 %v266, %v3718
      %v3939 = vmul.f32 %v267, %v3718
      %v3940 = vmul.f32 %v268, %v3718
      %v3941 = vmul.f32 %v269, %v3722
      %v3942 = vmul.f32 %v270, %v3722
      %v3943 = vmul.f32 %v271, %v3722
      %v3944 = vmul.f32 %v272, %v3726
      %v3945 = vmul.f32 %v273, %v3726
      %v3946 = vmul.f32 %v274, %v3726
      %v3947 = vmul.f32 %v275, %v3730
      %v3948 = vmul.f32 %v276, %v3730
      %v3949 = vmul.f32 %v277, %v3730
      %v3950 = vmul.f32 %v278, %v3734
      %v3951 = vmul.f32 %v279, %v3734
      %v3952 = vmul.f32 %v280, %v3734
      %v3953 = vmul.f32 %v281, %v3738
      %v3954 = vmul.f32 %v282, %v3738
      %v3955 = vmul.f32 %v283, %v3738
      %v3956 = vmul.f32 %v284, %v3742
      %v3957 = vmul.f32 %v285, %v3742
      %v3958 = vmul.f32 %v286, %v3742
      %v3959 = vmul.f32 %v287, %v3746
      %v3960 = vmul.f32 %v288, %v3746
      %v3961 = vmul.f32 %v289, %v3746
      %v3962 = vmul.f32 %v290, %v3750
      %v3963 = vmul.f32 %v291, %v3750
      %v3964 = vmul.f32 %v292, %v3750
      %v3965 = vmul.f32 %v293, %v3754
      %v3966 = vmul.f32 %v294, %v3754
      %v3967 = vmul.f32 %v295, %v3754
      %v3968 = vmul.f32 %v296, %v3758
      %v3969 = vmul.f32 %v297, %v3758
      %v3970 = vmul.f32 %v298, %v3758
      %v3971 = vmul.f32 %v299, %v3762
      %v3972 = vmul.f32 %v300, %v3762
      %v3973 = vmul.f32 %v301, %v3762
      %v3974 = vmul.f32 %v302, %v3766
      %v3975 = vmul.f32 %v303, %v3766
      %v3976 = vmul.f32 %v304, %v3766
      %v3977 = vmul.f32 %v305, %v3770
      %v3978 = vmul.f32 %v306, %v3770
      %v3979 = vmul.f32 %v307, %v3770
      %v3980 = vmul.f32 %v308, %v3774
      %v3981 = vmul.f32 %v309, %v3774
      %v3982 = vmul.f32 %v310, %v3774
      %v3983 = vmul.f32 %v311, %v3778
      %v3984 = vmul.f32 %v312, %v3778
      %v3985 = vmul.f32 %v313, %v3778
      %v3986 = vmul.f32 %v314, %v3782
      %v3987 = vmul.f32 %v315, %v3782
      %v3988 = vmul.f32 %v316, %v3782
      %v3989 = vmul.f32 %v317, %v3786
      %v3990 = vmul.f32 %v318, %v3786
      %v3991 = vmul.f32 %v319, %v3786
      %v3992 = vmul.f32 %v320, %v3790
      %v3993 = vmul.f32 %v321, %v3790
      %v3994 = vmul.f32 %v322, %v3790
      %v3995 = vmul.f32 %v323, %v3794
      %v3996 = vmul.f32 %v324, %v3794
      %v3997 = vmul.f32 %v325, %v3794
      %v3998 = vmul.f32 %v326, %v3798
      %v3999 = vmul.f32 %v327, %v3798
      %v4000 = vmul.f32 %v328, %v3798
      %v4001 = vmul.f32 %v329, %v3802
      %v4002 = vmul.f32 %v330, %v3802
      %v4003 = vmul.f32 %v331, %v3802
      %v4004 = vmul.f32 %v332, %v3806
      %v4005 = vmul.f32 %v333, %v3806
      %v4006 = vmul.f32 %v334, %v3806
      %v4007 = vmul.f32 %v335, %v3810
      %v4008 = vmul.f32 %v336, %v3810
      %v4009 = vmul.f32 %v337, %v3810
      %v4010 = vmul.f32 %v338, %v3814
      %v4011 = vmul.f32 %v339, %v3814
      %v4012 = vmul.f32 %v340, %v3814
      %v4013 = vmul.f32 %v341, %v3818
      %v4014 = vmul.f32 %v342, %v3818
      %v4015 = vmul.f32 %v343, %v3818
      %v4016 = vmul.f32 %v344, %v3822
      %v4017 = vmul.f32 %v345, %v3822
      %v4018 = vmul.f32 %v346, %v3822
      %v4019 = vmul.f32 %v347, %v3826
      %v4020 = vmul.f32 %v348, %v3826
      %v4021 = vmul.f32 %v349, %v3826
      %v4022 = vmul.f32 %v350, %v3830
      %v4023 = vmul.f32 %v351, %v3830
      %v4024 = vmul.f32 %v352, %v3830
      %v4025 = vmul.f32 %v353, %v3834
      %v4026 = vmul.f32 %v354, %v3834
      %v4027 = vmul.f32 %v355, %v3834
      %vm4220 = vcmask 1046528
      %v4221 = vrot.slane %v3836, 1
      %v4222 = vrot.slane %v3837, 1
      %v4223 = vsel %vm4220, %v4221, %v4222
      %v4224 = vrot.slane %v3838, 1
      %v4225 = vsel %vm4220, %v4222, %v4224
      %v4226 = vrot.slane %v3839, 1
      %v4227 = vrot.slane %v3840, 1
      %v4228 = vsel %vm4220, %v4226, %v4227
      %v4229 = vrot.slane %v3841, 1
      %v4230 = vsel %vm4220, %v4227, %v4229
      %v4231 = vrot.slane %v3842, 1
      %v4232 = vrot.slane %v3843, 1
      %v4233 = vsel %vm4220, %v4231, %v4232
      %v4234 = vrot.slane %v3844, 1
      %v4235 = vsel %vm4220, %v4232, %v4234
      %v4236 = vrot.slane %v3845, 1
      %v4237 = vrot.slane %v3846, 1
      %v4238 = vsel %vm4220, %v4236, %v4237
      %v4239 = vrot.slane %v3847, 1
      %v4240 = vsel %vm4220, %v4237, %v4239
      %v4241 = vrot.slane %v3848, 1
      %v4242 = vrot.slane %v3849, 1
      %v4243 = vsel %vm4220, %v4241, %v4242
      %v4244 = vrot.slane %v3850, 1
      %v4245 = vsel %vm4220, %v4242, %v4244
      %v4246 = vrot.slane %v3851, 1
      %v4247 = vrot.slane %v3852, 1
      %v4248 = vsel %vm4220, %v4246, %v4247
      %v4249 = vrot.slane %v3853, 1
      %v4250 = vsel %vm4220, %v4247, %v4249
      %v4251 = vrot.slane %v3854, 1
      %v4252 = vrot.slane %v3855, 1
      %v4253 = vsel %vm4220, %v4251, %v4252
      %v4254 = vrot.slane %v3856, 1
      %v4255 = vsel %vm4220, %v4252, %v4254
      %v4256 = vrot.slane %v3857, 1
      %v4257 = vrot.slane %v3858, 1
      %v4258 = vsel %vm4220, %v4256, %v4257
      %v4259 = vrot.slane %v3859, 1
      %v4260 = vsel %vm4220, %v4257, %v4259
      %v4261 = vrot.slane %v3860, 1
      %v4262 = vrot.slane %v3861, 1
      %v4263 = vsel %vm4220, %v4261, %v4262
      %v4264 = vrot.slane %v3862, 1
      %v4265 = vsel %vm4220, %v4262, %v4264
      %v4266 = vrot.slane %v3863, 1
      %v4267 = vrot.slane %v3864, 1
      %v4268 = vsel %vm4220, %v4266, %v4267
      %v4269 = vrot.slane %v3865, 1
      %v4270 = vsel %vm4220, %v4267, %v4269
      %v4271 = vrot.slane %v3866, 1
      %v4272 = vrot.slane %v3867, 1
      %v4273 = vsel %vm4220, %v4271, %v4272
      %v4274 = vrot.slane %v3868, 1
      %v4275 = vsel %vm4220, %v4272, %v4274
      %v4276 = vrot.slane %v3869, 1
      %v4277 = vrot.slane %v3870, 1
      %v4278 = vsel %vm4220, %v4276, %v4277
      %v4279 = vrot.slane %v3871, 1
      %v4280 = vsel %vm4220, %v4277, %v4279
      %v4281 = vrot.slane %v3872, 1
      %v4282 = vrot.slane %v3873, 1
      %v4283 = vsel %vm4220, %v4281, %v4282
      %v4284 = vrot.slane %v3874, 1
      %v4285 = vsel %vm4220, %v4282, %v4284
      %v4286 = vrot.slane %v3875, 1
      %v4287 = vrot.slane %v3876, 1
      %v4288 = vsel %vm4220, %v4286, %v4287
      %v4289 = vrot.slane %v3877, 1
      %v4290 = vsel %vm4220, %v4287, %v4289
      %v4291 = vrot.slane %v3878, 1
      %v4292 = vrot.slane %v3879, 1
      %v4293 = vsel %vm4220, %v4291, %v4292
      %v4294 = vrot.slane %v3880, 1
      %v4295 = vsel %vm4220, %v4292, %v4294
      %v4296 = vrot.slane %v3881, 1
      %v4297 = vrot.slane %v3882, 1
      %v4298 = vsel %vm4220, %v4296, %v4297
      %v4299 = vrot.slane %v3883, 1
      %v4300 = vsel %vm4220, %v4297, %v4299
      %v4301 = vrot.slane %v3884, 1
      %v4302 = vrot.slane %v3885, 1
      %v4303 = vsel %vm4220, %v4301, %v4302
      %v4304 = vrot.slane %v3886, 1
      %v4305 = vsel %vm4220, %v4302, %v4304
      %v4306 = vrot.slane %v3887, 1
      %v4307 = vrot.slane %v3888, 1
      %v4308 = vsel %vm4220, %v4306, %v4307
      %v4309 = vrot.slane %v3889, 1
      %v4310 = vsel %vm4220, %v4307, %v4309
      %v4311 = vrot.slane %v3890, 1
      %v4312 = vrot.slane %v3891, 1
      %v4313 = vsel %vm4220, %v4311, %v4312
      %v4314 = vrot.slane %v3892, 1
      %v4315 = vsel %vm4220, %v4312, %v4314
      %v4316 = vrot.slane %v3893, 1
      %v4317 = vrot.slane %v3894, 1
      %v4318 = vsel %vm4220, %v4316, %v4317
      %v4319 = vrot.slane %v3895, 1
      %v4320 = vsel %vm4220, %v4317, %v4319
      %v4321 = vrot.slane %v3896, 1
      %v4322 = vrot.slane %v3897, 1
      %v4323 = vsel %vm4220, %v4321, %v4322
      %v4324 = vrot.slane %v3898, 1
      %v4325 = vsel %vm4220, %v4322, %v4324
      %v4326 = vrot.slane %v3899, 1
      %v4327 = vrot.slane %v3900, 1
      %v4328 = vsel %vm4220, %v4326, %v4327
      %v4329 = vrot.slane %v3901, 1
      %v4330 = vsel %vm4220, %v4327, %v4329
      %v4331 = vrot.slane %v3902, 1
      %v4332 = vrot.slane %v3903, 1
      %v4333 = vsel %vm4220, %v4331, %v4332
      %v4334 = vrot.slane %v3904, 1
      %v4335 = vsel %vm4220, %v4332, %v4334
      %v4336 = vrot.slane %v3905, 1
      %v4337 = vrot.slane %v3906, 1
      %v4338 = vsel %vm4220, %v4336, %v4337
      %v4339 = vrot.slane %v3907, 1
      %v4340 = vsel %vm4220, %v4337, %v4339
      %v4341 = vrot.slane %v3908, 1
      %v4342 = vrot.slane %v3909, 1
      %v4343 = vsel %vm4220, %v4341, %v4342
      %v4344 = vrot.slane %v3910, 1
      %v4345 = vsel %vm4220, %v4342, %v4344
      %v4346 = vrot.slane %v3911, 1
      %v4347 = vrot.slane %v3912, 1
      %v4348 = vsel %vm4220, %v4346, %v4347
      %v4349 = vrot.slane %v3913, 1
      %v4350 = vsel %vm4220, %v4347, %v4349
      %v4351 = vrot.slane %v3914, 1
      %v4352 = vrot.slane %v3915, 1
      %v4353 = vsel %vm4220, %v4351, %v4352
      %v4354 = vrot.slane %v3916, 1
      %v4355 = vsel %vm4220, %v4352, %v4354
      %v4356 = vrot.slane %v3917, 1
      %v4357 = vrot.slane %v3918, 1
      %v4358 = vsel %vm4220, %v4356, %v4357
      %v4359 = vrot.slane %v3919, 1
      %v4360 = vsel %vm4220, %v4357, %v4359
      %v4361 = vrot.slane %v3920, 1
      %v4362 = vrot.slane %v3921, 1
      %v4363 = vsel %vm4220, %v4361, %v4362
      %v4364 = vrot.slane %v3922, 1
      %v4365 = vsel %vm4220, %v4362, %v4364
      %v4366 = vrot.slane %v3923, 1
      %v4367 = vrot.slane %v3924, 1
      %v4368 = vsel %vm4220, %v4366, %v4367
      %v4369 = vrot.slane %v3925, 1
      %v4370 = vsel %vm4220, %v4367, %v4369
      %v4371 = vrot.slane %v3926, 1
      %v4372 = vrot.slane %v3927, 1
      %v4373 = vsel %vm4220, %v4371, %v4372
      %v4374 = vrot.slane %v3928, 1
      %v4375 = vsel %vm4220, %v4372, %v4374
      %v4376 = vrot.slane %v3929, 1
      %v4377 = vrot.slane %v3930, 1
      %v4378 = vsel %vm4220, %v4376, %v4377
      %v4379 = vrot.slane %v3931, 1
      %v4380 = vsel %vm4220, %v4377, %v4379
      %v4381 = vrot.slane %v3932, 1
      %v4382 = vrot.slane %v3933, 1
      %v4383 = vsel %vm4220, %v4381, %v4382
      %v4384 = vrot.slane %v3934, 1
      %v4385 = vsel %vm4220, %v4382, %v4384
      %v4386 = vrot.slane %v3935, 1
      %v4387 = vrot.slane %v3936, 1
      %v4388 = vsel %vm4220, %v4386, %v4387
      %v4389 = vrot.slane %v3937, 1
      %v4390 = vsel %vm4220, %v4387, %v4389
      %v4391 = vrot.slane %v3938, 1
      %v4392 = vrot.slane %v3939, 1
      %v4393 = vsel %vm4220, %v4391, %v4392
      %v4394 = vrot.slane %v3940, 1
      %v4395 = vsel %vm4220, %v4392, %v4394
      %v4396 = vrot.slane %v3941, 1
      %v4397 = vrot.slane %v3942, 1
      %v4398 = vsel %vm4220, %v4396, %v4397
      %v4399 = vrot.slane %v3943, 1
      %v4400 = vsel %vm4220, %v4397, %v4399
      %v4401 = vrot.slane %v3944, 1
      %v4402 = vrot.slane %v3945, 1
      %v4403 = vsel %vm4220, %v4401, %v4402
      %v4404 = vrot.slane %v3946, 1
      %v4405 = vsel %vm4220, %v4402, %v4404
      %v4406 = vrot.slane %v3947, 1
      %v4407 = vrot.slane %v3948, 1
      %v4408 = vsel %vm4220, %v4406, %v4407
      %v4409 = vrot.slane %v3949, 1
      %v4410 = vsel %vm4220, %v4407, %v4409
      %v4411 = vrot.slane %v3950, 1
      %v4412 = vrot.slane %v3951, 1
      %v4413 = vsel %vm4220, %v4411, %v4412
      %v4414 = vrot.slane %v3952, 1
      %v4415 = vsel %vm4220, %v4412, %v4414
      %v4416 = vrot.slane %v3953, 1
      %v4417 = vrot.slane %v3954, 1
      %v4418 = vsel %vm4220, %v4416, %v4417
      %v4419 = vrot.slane %v3955, 1
      %v4420 = vsel %vm4220, %v4417, %v4419
      %v4421 = vrot.slane %v3956, 1
      %v4422 = vrot.slane %v3957, 1
      %v4423 = vsel %vm4220, %v4421, %v4422
      %v4424 = vrot.slane %v3958, 1
      %v4425 = vsel %vm4220, %v4422, %v4424
      %v4426 = vrot.slane %v3959, 1
      %v4427 = vrot.slane %v3960, 1
      %v4428 = vsel %vm4220, %v4426, %v4427
      %v4429 = vrot.slane %v3961, 1
      %v4430 = vsel %vm4220, %v4427, %v4429
      %v4431 = vrot.slane %v3962, 1
      %v4432 = vrot.slane %v3963, 1
      %v4433 = vsel %vm4220, %v4431, %v4432
      %v4434 = vrot.slane %v3964, 1
      %v4435 = vsel %vm4220, %v4432, %v4434
      %v4436 = vrot.slane %v3965, 1
      %v4437 = vrot.slane %v3966, 1
      %v4438 = vsel %vm4220, %v4436, %v4437
      %v4439 = vrot.slane %v3967, 1
      %v4440 = vsel %vm4220, %v4437, %v4439
      %v4441 = vrot.slane %v3968, 1
      %v4442 = vrot.slane %v3969, 1
      %v4443 = vsel %vm4220, %v4441, %v4442
      %v4444 = vrot.slane %v3970, 1
      %v4445 = vsel %vm4220, %v4442, %v4444
      %v4446 = vrot.slane %v3971, 1
      %v4447 = vrot.slane %v3972, 1
      %v4448 = vsel %vm4220, %v4446, %v4447
      %v4449 = vrot.slane %v3973, 1
      %v4450 = vsel %vm4220, %v4447, %v4449
      %v4451 = vrot.slane %v3974, 1
      %v4452 = vrot.slane %v3975, 1
      %v4453 = vsel %vm4220, %v4451, %v4452
      %v4454 = vrot.slane %v3976, 1
      %v4455 = vsel %vm4220, %v4452, %v4454
      %v4456 = vrot.slane %v3977, 1
      %v4457 = vrot.slane %v3978, 1
      %v4458 = vsel %vm4220, %v4456, %v4457
      %v4459 = vrot.slane %v3979, 1
      %v4460 = vsel %vm4220, %v4457, %v4459
      %v4461 = vrot.slane %v3980, 1
      %v4462 = vrot.slane %v3981, 1
      %v4463 = vsel %vm4220, %v4461, %v4462
      %v4464 = vrot.slane %v3982, 1
      %v4465 = vsel %vm4220, %v4462, %v4464
      %v4466 = vrot.slane %v3983, 1
      %v4467 = vrot.slane %v3984, 1
      %v4468 = vsel %vm4220, %v4466, %v4467
      %v4469 = vrot.slane %v3985, 1
      %v4470 = vsel %vm4220, %v4467, %v4469
      %v4471 = vrot.slane %v3986, 1
      %v4472 = vrot.slane %v3987, 1
      %v4473 = vsel %vm4220, %v4471, %v4472
      %v4474 = vrot.slane %v3988, 1
      %v4475 = vsel %vm4220, %v4472, %v4474
      %v4476 = vrot.slane %v3989, 1
      %v4477 = vrot.slane %v3990, 1
      %v4478 = vsel %vm4220, %v4476, %v4477
      %v4479 = vrot.slane %v3991, 1
      %v4480 = vsel %vm4220, %v4477, %v4479
      %v4481 = vrot.slane %v3992, 1
      %v4482 = vrot.slane %v3993, 1
      %v4483 = vsel %vm4220, %v4481, %v4482
      %v4484 = vrot.slane %v3994, 1
      %v4485 = vsel %vm4220, %v4482, %v4484
      %v4486 = vrot.slane %v3995, 1
      %v4487 = vrot.slane %v3996, 1
      %v4488 = vsel %vm4220, %v4486, %v4487
      %v4489 = vrot.slane %v3997, 1
      %v4490 = vsel %vm4220, %v4487, %v4489
      %v4491 = vrot.slane %v3998, 1
      %v4492 = vrot.slane %v3999, 1
      %v4493 = vsel %vm4220, %v4491, %v4492
      %v4494 = vrot.slane %v4000, 1
      %v4495 = vsel %vm4220, %v4492, %v4494
      %v4496 = vrot.slane %v4001, 1
      %v4497 = vrot.slane %v4002, 1
      %v4498 = vsel %vm4220, %v4496, %v4497
      %v4499 = vrot.slane %v4003, 1
      %v4500 = vsel %vm4220, %v4497, %v4499
      %v4501 = vrot.slane %v4004, 1
      %v4502 = vrot.slane %v4005, 1
      %v4503 = vsel %vm4220, %v4501, %v4502
      %v4504 = vrot.slane %v4006, 1
      %v4505 = vsel %vm4220, %v4502, %v4504
      %v4506 = vrot.slane %v4007, 1
      %v4507 = vrot.slane %v4008, 1
      %v4508 = vsel %vm4220, %v4506, %v4507
      %v4509 = vrot.slane %v4009, 1
      %v4510 = vsel %vm4220, %v4507, %v4509
      %v4511 = vrot.slane %v4010, 1
      %v4512 = vrot.slane %v4011, 1
      %v4513 = vsel %vm4220, %v4511, %v4512
      %v4514 = vrot.slane %v4012, 1
      %v4515 = vsel %vm4220, %v4512, %v4514
      %v4516 = vrot.slane %v4013, 1
      %v4517 = vrot.slane %v4014, 1
      %v4518 = vsel %vm4220, %v4516, %v4517
      %v4519 = vrot.slane %v4015, 1
      %v4520 = vsel %vm4220, %v4517, %v4519
      %v4521 = vrot.slane %v4016, 1
      %v4522 = vrot.slane %v4017, 1
      %v4523 = vsel %vm4220, %v4521, %v4522
      %v4524 = vrot.slane %v4018, 1
      %v4525 = vsel %vm4220, %v4522, %v4524
      %v4526 = vrot.slane %v4019, 1
      %v4527 = vrot.slane %v4020, 1
      %v4528 = vsel %vm4220, %v4526, %v4527
      %v4529 = vrot.slane %v4021, 1
      %v4530 = vsel %vm4220, %v4527, %v4529
      %v4531 = vrot.slane %v4022, 1
      %v4532 = vrot.slane %v4023, 1
      %v4533 = vsel %vm4220, %v4531, %v4532
      %v4534 = vrot.slane %v4024, 1
      %v4535 = vsel %vm4220, %v4532, %v4534
      %v4536 = vrot.slane %v4025, 1
      %v4537 = vrot.slane %v4026, 1
      %v4538 = vsel %vm4220, %v4536, %v4537
      %v4539 = vrot.slane %v4027, 1
      %v4540 = vsel %vm4220, %v4537, %v4539
      %v4669 = vadd.f32 %v3452, %v4223
      %v4670 = vadd.f32 %v3453, %v4225
      %v4671 = vadd.f32 %v3454, %v4228
      %v4672 = vadd.f32 %v3455, %v4230
      %v4673 = vadd.f32 %v3456, %v4233
      %v4674 = vadd.f32 %v3457, %v4235
      %v4675 = vadd.f32 %v3458, %v4238
      %v4676 = vadd.f32 %v3459, %v4240
      %v4677 = vadd.f32 %v3460, %v4243
      %v4678 = vadd.f32 %v3461, %v4245
      %v4679 = vadd.f32 %v3462, %v4248
      %v4680 = vadd.f32 %v3463, %v4250
      %v4681 = vadd.f32 %v3464, %v4253
      %v4682 = vadd.f32 %v3465, %v4255
      %v4683 = vadd.f32 %v3466, %v4258
      %v4684 = vadd.f32 %v3467, %v4260
      %v4685 = vadd.f32 %v3468, %v4263
      %v4686 = vadd.f32 %v3469, %v4265
      %v4687 = vadd.f32 %v3470, %v4268
      %v4688 = vadd.f32 %v3471, %v4270
      %v4689 = vadd.f32 %v3472, %v4273
      %v4690 = vadd.f32 %v3473, %v4275
      %v4691 = vadd.f32 %v3474, %v4278
      %v4692 = vadd.f32 %v3475, %v4280
      %v4693 = vadd.f32 %v3476, %v4283
      %v4694 = vadd.f32 %v3477, %v4285
      %v4695 = vadd.f32 %v3478, %v4288
      %v4696 = vadd.f32 %v3479, %v4290
      %v4697 = vadd.f32 %v3480, %v4293
      %v4698 = vadd.f32 %v3481, %v4295
      %v4699 = vadd.f32 %v3482, %v4298
      %v4700 = vadd.f32 %v3483, %v4300
      %v4701 = vadd.f32 %v3484, %v4303
      %v4702 = vadd.f32 %v3485, %v4305
      %v4703 = vadd.f32 %v3486, %v4308
      %v4704 = vadd.f32 %v3487, %v4310
      %v4705 = vadd.f32 %v3488, %v4313
      %v4706 = vadd.f32 %v3489, %v4315
      %v4707 = vadd.f32 %v3490, %v4318
      %v4708 = vadd.f32 %v3491, %v4320
      %v4709 = vadd.f32 %v3492, %v4323
      %v4710 = vadd.f32 %v3493, %v4325
      %v4711 = vadd.f32 %v3494, %v4328
      %v4712 = vadd.f32 %v3495, %v4330
      %v4713 = vadd.f32 %v3496, %v4333
      %v4714 = vadd.f32 %v3497, %v4335
      %v4715 = vadd.f32 %v3498, %v4338
      %v4716 = vadd.f32 %v3499, %v4340
      %v4717 = vadd.f32 %v3500, %v4343
      %v4718 = vadd.f32 %v3501, %v4345
      %v4719 = vadd.f32 %v3502, %v4348
      %v4720 = vadd.f32 %v3503, %v4350
      %v4721 = vadd.f32 %v3504, %v4353
      %v4722 = vadd.f32 %v3505, %v4355
      %v4723 = vadd.f32 %v3506, %v4358
      %v4724 = vadd.f32 %v3507, %v4360
      %v4725 = vadd.f32 %v3508, %v4363
      %v4726 = vadd.f32 %v3509, %v4365
      %v4727 = vadd.f32 %v3510, %v4368
      %v4728 = vadd.f32 %v3511, %v4370
      %v4729 = vadd.f32 %v3512, %v4373
      %v4730 = vadd.f32 %v3513, %v4375
      %v4731 = vadd.f32 %v3514, %v4378
      %v4732 = vadd.f32 %v3515, %v4380
      %v4733 = vadd.f32 %v3516, %v4383
      %v4734 = vadd.f32 %v3517, %v4385
      %v4735 = vadd.f32 %v3518, %v4388
      %v4736 = vadd.f32 %v3519, %v4390
      %v4737 = vadd.f32 %v3520, %v4393
      %v4738 = vadd.f32 %v3521, %v4395
      %v4739 = vadd.f32 %v3522, %v4398
      %v4740 = vadd.f32 %v3523, %v4400
      %v4741 = vadd.f32 %v3524, %v4403
      %v4742 = vadd.f32 %v3525, %v4405
      %v4743 = vadd.f32 %v3526, %v4408
      %v4744 = vadd.f32 %v3527, %v4410
      %v4745 = vadd.f32 %v3528, %v4413
      %v4746 = vadd.f32 %v3529, %v4415
      %v4747 = vadd.f32 %v3530, %v4418
      %v4748 = vadd.f32 %v3531, %v4420
      %v4749 = vadd.f32 %v3532, %v4423
      %v4750 = vadd.f32 %v3533, %v4425
      %v4751 = vadd.f32 %v3534, %v4428
      %v4752 = vadd.f32 %v3535, %v4430
      %v4753 = vadd.f32 %v3536, %v4433
      %v4754 = vadd.f32 %v3537, %v4435
      %v4755 = vadd.f32 %v3538, %v4438
      %v4756 = vadd.f32 %v3539, %v4440
      %v4757 = vadd.f32 %v3540, %v4443
      %v4758 = vadd.f32 %v3541, %v4445
      %v4759 = vadd.f32 %v3542, %v4448
      %v4760 = vadd.f32 %v3543, %v4450
      %v4761 = vadd.f32 %v3544, %v4453
      %v4762 = vadd.f32 %v3545, %v4455
      %v4763 = vadd.f32 %v3546, %v4458
      %v4764 = vadd.f32 %v3547, %v4460
      %v4765 = vadd.f32 %v3548, %v4463
      %v4766 = vadd.f32 %v3549, %v4465
      %v4767 = vadd.f32 %v3550, %v4468
      %v4768 = vadd.f32 %v3551, %v4470
      %v4769 = vadd.f32 %v3552, %v4473
      %v4770 = vadd.f32 %v3553, %v4475
      %v4771 = vadd.f32 %v3554, %v4478
      %v4772 = vadd.f32 %v3555, %v4480
      %v4773 = vadd.f32 %v3556, %v4483
      %v4774 = vadd.f32 %v3557, %v4485
      %v4775 = vadd.f32 %v3558, %v4488
      %v4776 = vadd.f32 %v3559, %v4490
      %v4777 = vadd.f32 %v3560, %v4493
      %v4778 = vadd.f32 %v3561, %v4495
      %v4779 = vadd.f32 %v3562, %v4498
      %v4780 = vadd.f32 %v3563, %v4500
      %v4781 = vadd.f32 %v3564, %v4503
      %v4782 = vadd.f32 %v3565, %v4505
      %v4783 = vadd.f32 %v3566, %v4508
      %v4784 = vadd.f32 %v3567, %v4510
      %v4785 = vadd.f32 %v3568, %v4513
      %v4786 = vadd.f32 %v3569, %v4515
      %v4787 = vadd.f32 %v3570, %v4518
      %v4788 = vadd.f32 %v3571, %v4520
      %v4789 = vadd.f32 %v3572, %v4523
      %v4790 = vadd.f32 %v3573, %v4525
      %v4791 = vadd.f32 %v3574, %v4528
      %v4792 = vadd.f32 %v3575, %v4530
      %v4793 = vadd.f32 %v3576, %v4533
      %v4794 = vadd.f32 %v3577, %v4535
      %v4795 = vadd.f32 %v3578, %v4538
      %v4796 = vadd.f32 %v3579, %v4540
      %4797 = vset.pattern.permute.xlu0 4
      %4798 = vperm.xlu0 %4797, %v767
      %v4799 = vpop.permute.xlu0 %4798
      %4801 = vset.pattern.permute.xlu0 4
      %4802 = vperm.xlu0 %4801, %v771
      %v4803 = vpop.permute.xlu0 %4802
      %4805 = vset.pattern.permute.xlu0 4
      %4806 = vperm.xlu0 %4805, %v775
      %v4807 = vpop.permute.xlu0 %4806
      %4809 = vset.pattern.permute.xlu0 4
      %4810 = vperm.xlu0 %4809, %v779
      %v4811 = vpop.permute.xlu0 %4810
      %4813 = vset.pattern.permute.xlu0 4
      %4814 = vperm.xlu0 %4813, %v783
      %v4815 = vpop.permute.xlu0 %4814
      %4817 = vset.pattern.permute.xlu0 4
      %4818 = vperm.xlu0 %4817, %v787
      %v4819 = vpop.permute.xlu0 %4818
      %4821 = vset.pattern.permute.xlu0 4
      %4822 = vperm.xlu0 %4821, %v791
      %v4823 = vpop.permute.xlu0 %4822
      %4825 = vset.pattern.permute.xlu0 4
      %4826 = vperm.xlu0 %4825, %v795
      %v4827 = vpop.permute.xlu0 %4826
      %4829 = vset.pattern.permute.xlu0 4
      %4830 = vperm.xlu0 %4829, %v799
      %v4831 = vpop.permute.xlu0 %4830
      %4833 = vset.pattern.permute.xlu0 4
      %4834 = vperm.xlu0 %4833, %v803
      %v4835 = vpop.permute.xlu0 %4834
      %4837 = vset.pattern.permute.xlu0 4
      %4838 = vperm.xlu0 %4837, %v807
      %v4839 = vpop.permute.xlu0 %4838
      %4841 = vset.pattern.permute.xlu0 4
      %4842 = vperm.xlu0 %4841, %v811
      %v4843 = vpop.permute.xlu0 %4842
      %4845 = vset.pattern.permute.xlu0 4
      %4846 = vperm.xlu0 %4845, %v815
      %v4847 = vpop.permute.xlu0 %4846
      %4849 = vset.pattern.permute.xlu0 4
      %4850 = vperm.xlu0 %4849, %v819
      %v4851 = vpop.permute.xlu0 %4850
      %4853 = vset.pattern.permute.xlu0 4
      %4854 = vperm.xlu0 %4853, %v823
      %v4855 = vpop.permute.xlu0 %4854
      %4857 = vset.pattern.permute.xlu0 4
      %4858 = vperm.xlu0 %4857, %v827
      %v4859 = vpop.permute.xlu0 %4858
      %4861 = vset.pattern.permute.xlu0 4
      %4862 = vperm.xlu0 %4861, %v831
      %v4863 = vpop.permute.xlu0 %4862
      %4865 = vset.pattern.permute.xlu0 4
      %4866 = vperm.xlu0 %4865, %v835
      %v4867 = vpop.permute.xlu0 %4866
      %4869 = vset.pattern.permute.xlu0 4
      %4870 = vperm.xlu0 %4869, %v839
      %v4871 = vpop.permute.xlu0 %4870
      %4873 = vset.pattern.permute.xlu0 4
      %4874 = vperm.xlu0 %4873, %v843
      %v4875 = vpop.permute.xlu0 %4874
      %4877 = vset.pattern.permute.xlu0 4
      %4878 = vperm.xlu0 %4877, %v847
      %v4879 = vpop.permute.xlu0 %4878
      %4881 = vset.pattern.permute.xlu0 4
      %4882 = vperm.xlu0 %4881, %v851
      %v4883 = vpop.permute.xlu0 %4882
      %4885 = vset.pattern.permute.xlu0 4
      %4886 = vperm.xlu0 %4885, %v855
      %v4887 = vpop.permute.xlu0 %4886
      %4889 = vset.pattern.permute.xlu0 4
      %4890 = vperm.xlu0 %4889, %v859
      %v4891 = vpop.permute.xlu0 %4890
      %4893 = vset.pattern.permute.xlu0 4
      %4894 = vperm.xlu0 %4893, %v863
      %v4895 = vpop.permute.xlu0 %4894
      %4897 = vset.pattern.permute.xlu0 4
      %4898 = vperm.xlu0 %4897, %v867
      %v4899 = vpop.permute.xlu0 %4898
      %4901 = vset.pattern.permute.xlu0 4
      %4902 = vperm.xlu0 %4901, %v871
      %v4903 = vpop.permute.xlu0 %4902
      %4905 = vset.pattern.permute.xlu0 4
      %4906 = vperm.xlu0 %4905, %v875
      %v4907 = vpop.permute.xlu0 %4906
      %4909 = vset.pattern.permute.xlu0 4
      %4910 = vperm.xlu0 %4909, %v879
      %v4911 = vpop.permute.xlu0 %4910
      %4913 = vset.pattern.permute.xlu0 4
      %4914 = vperm.xlu0 %4913, %v883
      %v4915 = vpop.permute.xlu0 %4914
      %4917 = vset.pattern.permute.xlu0 4
      %4918 = vperm.xlu0 %4917, %v887
      %v4919 = vpop.permute.xlu0 %4918
      %4921 = vset.pattern.permute.xlu0 4
      %4922 = vperm.xlu0 %4921, %v891
      %v4923 = vpop.permute.xlu0 %4922
      %4925 = vset.pattern.permute.xlu0 4
      %4926 = vperm.xlu0 %4925, %v895
      %v4927 = vpop.permute.xlu0 %4926
      %4929 = vset.pattern.permute.xlu0 4
      %4930 = vperm.xlu0 %4929, %v899
      %v4931 = vpop.permute.xlu0 %4930
      %4933 = vset.pattern.permute.xlu0 4
      %4934 = vperm.xlu0 %4933, %v903
      %v4935 = vpop.permute.xlu0 %4934
      %4937 = vset.pattern.permute.xlu0 4
      %4938 = vperm.xlu0 %4937, %v907
      %v4939 = vpop.permute.xlu0 %4938
      %4941 = vset.pattern.permute.xlu0 4
      %4942 = vperm.xlu0 %4941, %v911
      %v4943 = vpop.permute.xlu0 %4942
      %4945 = vset.pattern.permute.xlu0 4
      %4946 = vperm.xlu0 %4945, %v915
      %v4947 = vpop.permute.xlu0 %4946
      %4949 = vset.pattern.permute.xlu0 4
      %4950 = vperm.xlu0 %4949, %v919
      %v4951 = vpop.permute.xlu0 %4950
      %4953 = vset.pattern.permute.xlu0 4
      %4954 = vperm.xlu0 %4953, %v923
      %v4955 = vpop.permute.xlu0 %4954
      %4957 = vset.pattern.permute.xlu0 4
      %4958 = vperm.xlu0 %4957, %v927
      %v4959 = vpop.permute.xlu0 %4958
      %4961 = vset.pattern.permute.xlu0 4
      %4962 = vperm.xlu0 %4961, %v931
      %v4963 = vpop.permute.xlu0 %4962
      %4965 = vset.pattern.permute.xlu0 4
      %4966 = vperm.xlu0 %4965, %v935
      %v4967 = vpop.permute.xlu0 %4966
      %4969 = vset.pattern.permute.xlu0 4
      %4970 = vperm.xlu0 %4969, %v939
      %v4971 = vpop.permute.xlu0 %4970
      %4973 = vset.pattern.permute.xlu0 4
      %4974 = vperm.xlu0 %4973, %v943
      %v4975 = vpop.permute.xlu0 %4974
      %4977 = vset.pattern.permute.xlu0 4
      %4978 = vperm.xlu0 %4977, %v947
      %v4979 = vpop.permute.xlu0 %4978
      %4981 = vset.pattern.permute.xlu0 4
      %4982 = vperm.xlu0 %4981, %v951
      %v4983 = vpop.permute.xlu0 %4982
      %4985 = vset.pattern.permute.xlu0 4
      %4986 = vperm.xlu0 %4985, %v955
      %v4987 = vpop.permute.xlu0 %4986
      %4989 = vset.pattern.permute.xlu0 4
      %4990 = vperm.xlu0 %4989, %v959
      %v4991 = vpop.permute.xlu0 %4990
      %4993 = vset.pattern.permute.xlu0 4
      %4994 = vperm.xlu0 %4993, %v963
      %v4995 = vpop.permute.xlu0 %4994
      %4997 = vset.pattern.permute.xlu0 4
      %4998 = vperm.xlu0 %4997, %v967
      %v4999 = vpop.permute.xlu0 %4998
      %5001 = vset.pattern.permute.xlu0 4
      %5002 = vperm.xlu0 %5001, %v971
      %v5003 = vpop.permute.xlu0 %5002
      %5005 = vset.pattern.permute.xlu0 4
      %5006 = vperm.xlu0 %5005, %v975
      %v5007 = vpop.permute.xlu0 %5006
      %5009 = vset.pattern.permute.xlu0 4
      %5010 = vperm.xlu0 %5009, %v979
      %v5011 = vpop.permute.xlu0 %5010
      %5013 = vset.pattern.permute.xlu0 4
      %5014 = vperm.xlu0 %5013, %v983
      %v5015 = vpop.permute.xlu0 %5014
      %5017 = vset.pattern.permute.xlu0 4
      %5018 = vperm.xlu0 %5017, %v987
      %v5019 = vpop.permute.xlu0 %5018
      %5021 = vset.pattern.permute.xlu0 4
      %5022 = vperm.xlu0 %5021, %v991
      %v5023 = vpop.permute.xlu0 %5022
      %5025 = vset.pattern.permute.xlu0 4
      %5026 = vperm.xlu0 %5025, %v995
      %v5027 = vpop.permute.xlu0 %5026
      %5029 = vset.pattern.permute.xlu0 4
      %5030 = vperm.xlu0 %5029, %v999
      %v5031 = vpop.permute.xlu0 %5030
      %5033 = vset.pattern.permute.xlu0 4
      %5034 = vperm.xlu0 %5033, %v1003
      %v5035 = vpop.permute.xlu0 %5034
      %5037 = vset.pattern.permute.xlu0 4
      %5038 = vperm.xlu0 %5037, %v1007
      %v5039 = vpop.permute.xlu0 %5038
      %5041 = vset.pattern.permute.xlu0 4
      %5042 = vperm.xlu0 %5041, %v1011
      %v5043 = vpop.permute.xlu0 %5042
      %5045 = vset.pattern.permute.xlu0 4
      %5046 = vperm.xlu0 %5045, %v1015
      %v5047 = vpop.permute.xlu0 %5046
      %5049 = vset.pattern.permute.xlu0 4
      %5050 = vperm.xlu0 %5049, %v1019
      %v5051 = vpop.permute.xlu0 %5050
      %v5053 = vmul.f32 %v164, %v4799
      %v5054 = vmul.f32 %v165, %v4799
      %v5055 = vmul.f32 %v166, %v4799
      %v5056 = vmul.f32 %v167, %v4803
      %v5057 = vmul.f32 %v168, %v4803
      %v5058 = vmul.f32 %v169, %v4803
      %v5059 = vmul.f32 %v170, %v4807
      %v5060 = vmul.f32 %v171, %v4807
      %v5061 = vmul.f32 %v172, %v4807
      %v5062 = vmul.f32 %v173, %v4811
      %v5063 = vmul.f32 %v174, %v4811
      %v5064 = vmul.f32 %v175, %v4811
      %v5065 = vmul.f32 %v176, %v4815
      %v5066 = vmul.f32 %v177, %v4815
      %v5067 = vmul.f32 %v178, %v4815
      %v5068 = vmul.f32 %v179, %v4819
      %v5069 = vmul.f32 %v180, %v4819
      %v5070 = vmul.f32 %v181, %v4819
      %v5071 = vmul.f32 %v182, %v4823
      %v5072 = vmul.f32 %v183, %v4823
      %v5073 = vmul.f32 %v184, %v4823
      %v5074 = vmul.f32 %v185, %v4827
      %v5075 = vmul.f32 %v186, %v4827
      %v5076 = vmul.f32 %v187, %v4827
      %v5077 = vmul.f32 %v188, %v4831
      %v5078 = vmul.f32 %v189, %v4831
      %v5079 = vmul.f32 %v190, %v4831
      %v5080 = vmul.f32 %v191, %v4835
      %v5081 = vmul.f32 %v192, %v4835
      %v5082 = vmul.f32 %v193, %v4835
      %v5083 = vmul.f32 %v194, %v4839
      %v5084 = vmul.f32 %v195, %v4839
      %v5085 = vmul.f32 %v196, %v4839
      %v5086 = vmul.f32 %v197, %v4843
      %v5087 = vmul.f32 %v198, %v4843
      %v5088 = vmul.f32 %v199, %v4843
      %v5089 = vmul.f32 %v200, %v4847
      %v5090 = vmul.f32 %v201, %v4847
      %v5091 = vmul.f32 %v202, %v4847
      %v5092 = vmul.f32 %v203, %v4851
      %v5093 = vmul.f32 %v204, %v4851
      %v5094 = vmul.f32 %v205, %v4851
      %v5095 = vmul.f32 %v206, %v4855
      %v5096 = vmul.f32 %v207, %v4855
      %v5097 = vmul.f32 %v208, %v4855
      %v5098 = vmul.f32 %v209, %v4859
      %v5099 = vmul.f32 %v210, %v4859
      %v5100 = vmul.f32 %v211, %v4859
      %v5101 = vmul.f32 %v212, %v4863
      %v5102 = vmul.f32 %v213, %v4863
      %v5103 = vmul.f32 %v214, %v4863
      %v5104 = vmul.f32 %v215, %v4867
      %v5105 = vmul.f32 %v216, %v4867
      %v5106 = vmul.f32 %v217, %v4867
      %v5107 = vmul.f32 %v218, %v4871
      %v5108 = vmul.f32 %v219, %v4871
      %v5109 = vmul.f32 %v220, %v4871
      %v5110 = vmul.f32 %v221, %v4875
      %v5111 = vmul.f32 %v222, %v4875
      %v5112 = vmul.f32 %v223, %v4875
      %v5113 = vmul.f32 %v224, %v4879
      %v5114 = vmul.f32 %v225, %v4879
      %v5115 = vmul.f32 %v226, %v4879
      %v5116 = vmul.f32 %v227, %v4883
      %v5117 = vmul.f32 %v228, %v4883
      %v5118 = vmul.f32 %v229, %v4883
      %v5119 = vmul.f32 %v230, %v4887
      %v5120 = vmul.f32 %v231, %v4887
      %v5121 = vmul.f32 %v232, %v4887
      %v5122 = vmul.f32 %v233, %v4891
      %v5123 = vmul.f32 %v234, %v4891
      %v5124 = vmul.f32 %v235, %v4891
      %v5125 = vmul.f32 %v236, %v4895
      %v5126 = vmul.f32 %v237, %v4895
      %v5127 = vmul.f32 %v238, %v4895
      %v5128 = vmul.f32 %v239, %v4899
      %v5129 = vmul.f32 %v240, %v4899
      %v5130 = vmul.f32 %v241, %v4899
      %v5131 = vmul.f32 %v242, %v4903
      %v5132 = vmul.f32 %v243, %v4903
      %v5133 = vmul.f32 %v244, %v4903
      %v5134 = vmul.f32 %v245, %v4907
      %v5135 = vmul.f32 %v246, %v4907
      %v5136 = vmul.f32 %v247, %v4907
      %v5137 = vmul.f32 %v248, %v4911
      %v5138 = vmul.f32 %v249, %v4911
      %v5139 = vmul.f32 %v250, %v4911
      %v5140 = vmul.f32 %v251, %v4915
      %v5141 = vmul.f32 %v252, %v4915
      %v5142 = vmul.f32 %v253, %v4915
      %v5143 = vmul.f32 %v254, %v4919
      %v5144 = vmul.f32 %v255, %v4919
      %v5145 = vmul.f32 %v256, %v4919
      %v5146 = vmul.f32 %v257, %v4923
      %v5147 = vmul.f32 %v258, %v4923
      %v5148 = vmul.f32 %v259, %v4923
      %v5149 = vmul.f32 %v260, %v4927
      %v5150 = vmul.f32 %v261, %v4927
      %v5151 = vmul.f32 %v262, %v4927
      %v5152 = vmul.f32 %v263, %v4931
      %v5153 = vmul.f32 %v264, %v4931
      %v5154 = vmul.f32 %v265, %v4931
      %v5155 = vmul.f32 %v266, %v4935
      %v5156 = vmul.f32 %v267, %v4935
      %v5157 = vmul.f32 %v268, %v4935
      %v5158 = vmul.f32 %v269, %v4939
      %v5159 = vmul.f32 %v270, %v4939
      %v5160 = vmul.f32 %v271, %v4939
      %v5161 = vmul.f32 %v272, %v4943
      %v5162 = vmul.f32 %v273, %v4943
      %v5163 = vmul.f32 %v274, %v4943
      %v5164 = vmul.f32 %v275, %v4947
      %v5165 = vmul.f32 %v276, %v4947
      %v5166 = vmul.f32 %v277, %v4947
      %v5167 = vmul.f32 %v278, %v4951
      %v5168 = vmul.f32 %v279, %v4951
      %v5169 = vmul.f32 %v280, %v4951
      %v5170 = vmul.f32 %v281, %v4955
      %v5171 = vmul.f32 %v282, %v4955
      %v5172 = vmul.f32 %v283, %v4955
      %v5173 = vmul.f32 %v284, %v4959
      %v5174 = vmul.f32 %v285, %v4959
      %v5175 = vmul.f32 %v286, %v4959
      %v5176 = vmul.f32 %v287, %v4963
      %v5177 = vmul.f32 %v288, %v4963
      %v5178 = vmul.f32 %v289, %v4963
      %v5179 = vmul.f32 %v290, %v4967
      %v5180 = vmul.f32 %v291, %v4967
      %v5181 = vmul.f32 %v292, %v4967
      %v5182 = vmul.f32 %v293, %v4971
      %v5183 = vmul.f32 %v294, %v4971
      %v5184 = vmul.f32 %v295, %v4971
      %v5185 = vmul.f32 %v296, %v4975
      %v5186 = vmul.f32 %v297, %v4975
      %v5187 = vmul.f32 %v298, %v4975
      %v5188 = vmul.f32 %v299, %v4979
      %v5189 = vmul.f32 %v300, %v4979
      %v5190 = vmul.f32 %v301, %v4979
      %v5191 = vmul.f32 %v302, %v4983
      %v5192 = vmul.f32 %v303, %v4983
      %v5193 = vmul.f32 %v304, %v4983
      %v5194 = vmul.f32 %v305, %v4987
      %v5195 = vmul.f32 %v306, %v4987
      %v5196 = vmul.f32 %v307, %v4987
      %v5197 = vmul.f32 %v308, %v4991
      %v5198 = vmul.f32 %v309, %v4991
      %v5199 = vmul.f32 %v310, %v4991
      %v5200 = vmul.f32 %v311, %v4995
      %v5201 = vmul.f32 %v312, %v4995
      %v5202 = vmul.f32 %v313, %v4995
      %v5203 = vmul.f32 %v314, %v4999
      %v5204 = vmul.f32 %v315, %v4999
      %v5205 = vmul.f32 %v316, %v4999
      %v5206 = vmul.f32 %v317, %v5003
      %v5207 = vmul.f32 %v318, %v5003
      %v5208 = vmul.f32 %v319, %v5003
      %v5209 = vmul.f32 %v320, %v5007
      %v5210 = vmul.f32 %v321, %v5007
      %v5211 = vmul.f32 %v322, %v5007
      %v5212 = vmul.f32 %v323, %v5011
      %v5213 = vmul.f32 %v324, %v5011
      %v5214 = vmul.f32 %v325, %v5011
      %v5215 = vmul.f32 %v326, %v5015
      %v5216 = vmul.f32 %v327, %v5015
      %v5217 = vmul.f32 %v328, %v5015
      %v5218 = vmul.f32 %v329, %v5019
      %v5219 = vmul.f32 %v330, %v5019
      %v5220 = vmul.f32 %v331, %v5019
      %v5221 = vmul.f32 %v332, %v5023
      %v5222 = vmul.f32 %v333, %v5023
      %v5223 = vmul.f32 %v334, %v5023
      %v5224 = vmul.f32 %v335, %v5027
      %v5225 = vmul.f32 %v336, %v5027
      %v5226 = vmul.f32 %v337, %v5027
      %v5227 = vmul.f32 %v338, %v5031
      %v5228 = vmul.f32 %v339, %v5031
      %v5229 = vmul.f32 %v340, %v5031
      %v5230 = vmul.f32 %v341, %v5035
      %v5231 = vmul.f32 %v342, %v5035
      %v5232 = vmul.f32 %v343, %v5035
      %v5233 = vmul.f32 %v344, %v5039
      %v5234 = vmul.f32 %v345, %v5039
      %v5235 = vmul.f32 %v346, %v5039
      %v5236 = vmul.f32 %v347, %v5043
      %v5237 = vmul.f32 %v348, %v5043
      %v5238 = vmul.f32 %v349, %v5043
      %v5239 = vmul.f32 %v350, %v5047
      %v5240 = vmul.f32 %v351, %v5047
      %v5241 = vmul.f32 %v352, %v5047
      %v5242 = vmul.f32 %v353, %v5051
      %v5243 = vmul.f32 %v354, %v5051
      %v5244 = vmul.f32 %v355, %v5051
      %v5437 = vrot.slane %v5053, 1
      %v5438 = vrot.slane %v5054, 1
      %v5439 = vsel %vm4220, %v5437, %v5438
      %v5440 = vrot.slane %v5055, 1
      %v5441 = vsel %vm4220, %v5438, %v5440
      %v5442 = vrot.slane %v5056, 1
      %v5443 = vrot.slane %v5057, 1
      %v5444 = vsel %vm4220, %v5442, %v5443
      %v5445 = vrot.slane %v5058, 1
      %v5446 = vsel %vm4220, %v5443, %v5445
      %v5447 = vrot.slane %v5059, 1
      %v5448 = vrot.slane %v5060, 1
      %v5449 = vsel %vm4220, %v5447, %v5448
      %v5450 = vrot.slane %v5061, 1
      %v5451 = vsel %vm4220, %v5448, %v5450
      %v5452 = vrot.slane %v5062, 1
      %v5453 = vrot.slane %v5063, 1
      %v5454 = vsel %vm4220, %v5452, %v5453
      %v5455 = vrot.slane %v5064, 1
      %v5456 = vsel %vm4220, %v5453, %v5455
      %v5457 = vrot.slane %v5065, 1
      %v5458 = vrot.slane %v5066, 1
      %v5459 = vsel %vm4220, %v5457, %v5458
      %v5460 = vrot.slane %v5067, 1
      %v5461 = vsel %vm4220, %v5458, %v5460
      %v5462 = vrot.slane %v5068, 1
      %v5463 = vrot.slane %v5069, 1
      %v5464 = vsel %vm4220, %v5462, %v5463
      %v5465 = vrot.slane %v5070, 1
      %v5466 = vsel %vm4220, %v5463, %v5465
      %v5467 = vrot.slane %v5071, 1
      %v5468 = vrot.slane %v5072, 1
      %v5469 = vsel %vm4220, %v5467, %v5468
      %v5470 = vrot.slane %v5073, 1
      %v5471 = vsel %vm4220, %v5468, %v5470
      %v5472 = vrot.slane %v5074, 1
      %v5473 = vrot.slane %v5075, 1
      %v5474 = vsel %vm4220, %v5472, %v5473
      %v5475 = vrot.slane %v5076, 1
      %v5476 = vsel %vm4220, %v5473, %v5475
      %v5477 = vrot.slane %v5077, 1
      %v5478 = vrot.slane %v5078, 1
      %v5479 = vsel %vm4220, %v5477, %v5478
      %v5480 = vrot.slane %v5079, 1
      %v5481 = vsel %vm4220, %v5478, %v5480
      %v5482 = vrot.slane %v5080, 1
      %v5483 = vrot.slane %v5081, 1
      %v5484 = vsel %vm4220, %v5482, %v5483
      %v5485 = vrot.slane %v5082, 1
      %v5486 = vsel %vm4220, %v5483, %v5485
      %v5487 = vrot.slane %v5083, 1
      %v5488 = vrot.slane %v5084, 1
      %v5489 = vsel %vm4220, %v5487, %v5488
      %v5490 = vrot.slane %v5085, 1
      %v5491 = vsel %vm4220, %v5488, %v5490
      %v5492 = vrot.slane %v5086, 1
      %v5493 = vrot.slane %v5087, 1
      %v5494 = vsel %vm4220, %v5492, %v5493
      %v5495 = vrot.slane %v5088, 1
      %v5496 = vsel %vm4220, %v5493, %v5495
      %v5497 = vrot.slane %v5089, 1
      %v5498 = vrot.slane %v5090, 1
      %v5499 = vsel %vm4220, %v5497, %v5498
      %v5500 = vrot.slane %v5091, 1
      %v5501 = vsel %vm4220, %v5498, %v5500
      %v5502 = vrot.slane %v5092, 1
      %v5503 = vrot.slane %v5093, 1
      %v5504 = vsel %vm4220, %v5502, %v5503
      %v5505 = vrot.slane %v5094, 1
      %v5506 = vsel %vm4220, %v5503, %v5505
      %v5507 = vrot.slane %v5095, 1
      %v5508 = vrot.slane %v5096, 1
      %v5509 = vsel %vm4220, %v5507, %v5508
      %v5510 = vrot.slane %v5097, 1
      %v5511 = vsel %vm4220, %v5508, %v5510
      %v5512 = vrot.slane %v5098, 1
      %v5513 = vrot.slane %v5099, 1
      %v5514 = vsel %vm4220, %v5512, %v5513
      %v5515 = vrot.slane %v5100, 1
      %v5516 = vsel %vm4220, %v5513, %v5515
      %v5517 = vrot.slane %v5101, 1
      %v5518 = vrot.slane %v5102, 1
      %v5519 = vsel %vm4220, %v5517, %v5518
      %v5520 = vrot.slane %v5103, 1
      %v5521 = vsel %vm4220, %v5518, %v5520
      %v5522 = vrot.slane %v5104, 1
      %v5523 = vrot.slane %v5105, 1
      %v5524 = vsel %vm4220, %v5522, %v5523
      %v5525 = vrot.slane %v5106, 1
      %v5526 = vsel %vm4220, %v5523, %v5525
      %v5527 = vrot.slane %v5107, 1
      %v5528 = vrot.slane %v5108, 1
      %v5529 = vsel %vm4220, %v5527, %v5528
      %v5530 = vrot.slane %v5109, 1
      %v5531 = vsel %vm4220, %v5528, %v5530
      %v5532 = vrot.slane %v5110, 1
      %v5533 = vrot.slane %v5111, 1
      %v5534 = vsel %vm4220, %v5532, %v5533
      %v5535 = vrot.slane %v5112, 1
      %v5536 = vsel %vm4220, %v5533, %v5535
      %v5537 = vrot.slane %v5113, 1
      %v5538 = vrot.slane %v5114, 1
      %v5539 = vsel %vm4220, %v5537, %v5538
      %v5540 = vrot.slane %v5115, 1
      %v5541 = vsel %vm4220, %v5538, %v5540
      %v5542 = vrot.slane %v5116, 1
      %v5543 = vrot.slane %v5117, 1
      %v5544 = vsel %vm4220, %v5542, %v5543
      %v5545 = vrot.slane %v5118, 1
      %v5546 = vsel %vm4220, %v5543, %v5545
      %v5547 = vrot.slane %v5119, 1
      %v5548 = vrot.slane %v5120, 1
      %v5549 = vsel %vm4220, %v5547, %v5548
      %v5550 = vrot.slane %v5121, 1
      %v5551 = vsel %vm4220, %v5548, %v5550
      %v5552 = vrot.slane %v5122, 1
      %v5553 = vrot.slane %v5123, 1
      %v5554 = vsel %vm4220, %v5552, %v5553
      %v5555 = vrot.slane %v5124, 1
      %v5556 = vsel %vm4220, %v5553, %v5555
      %v5557 = vrot.slane %v5125, 1
      %v5558 = vrot.slane %v5126, 1
      %v5559 = vsel %vm4220, %v5557, %v5558
      %v5560 = vrot.slane %v5127, 1
      %v5561 = vsel %vm4220, %v5558, %v5560
      %v5562 = vrot.slane %v5128, 1
      %v5563 = vrot.slane %v5129, 1
      %v5564 = vsel %vm4220, %v5562, %v5563
      %v5565 = vrot.slane %v5130, 1
      %v5566 = vsel %vm4220, %v5563, %v5565
      %v5567 = vrot.slane %v5131, 1
      %v5568 = vrot.slane %v5132, 1
      %v5569 = vsel %vm4220, %v5567, %v5568
      %v5570 = vrot.slane %v5133, 1
      %v5571 = vsel %vm4220, %v5568, %v5570
      %v5572 = vrot.slane %v5134, 1
      %v5573 = vrot.slane %v5135, 1
      %v5574 = vsel %vm4220, %v5572, %v5573
      %v5575 = vrot.slane %v5136, 1
      %v5576 = vsel %vm4220, %v5573, %v5575
      %v5577 = vrot.slane %v5137, 1
      %v5578 = vrot.slane %v5138, 1
      %v5579 = vsel %vm4220, %v5577, %v5578
      %v5580 = vrot.slane %v5139, 1
      %v5581 = vsel %vm4220, %v5578, %v5580
      %v5582 = vrot.slane %v5140, 1
      %v5583 = vrot.slane %v5141, 1
      %v5584 = vsel %vm4220, %v5582, %v5583
      %v5585 = vrot.slane %v5142, 1
      %v5586 = vsel %vm4220, %v5583, %v5585
      %v5587 = vrot.slane %v5143, 1
      %v5588 = vrot.slane %v5144, 1
      %v5589 = vsel %vm4220, %v5587, %v5588
      %v5590 = vrot.slane %v5145, 1
      %v5591 = vsel %vm4220, %v5588, %v5590
      %v5592 = vrot.slane %v5146, 1
      %v5593 = vrot.slane %v5147, 1
      %v5594 = vsel %vm4220, %v5592, %v5593
      %v5595 = vrot.slane %v5148, 1
      %v5596 = vsel %vm4220, %v5593, %v5595
      %v5597 = vrot.slane %v5149, 1
      %v5598 = vrot.slane %v5150, 1
      %v5599 = vsel %vm4220, %v5597, %v5598
      %v5600 = vrot.slane %v5151, 1
      %v5601 = vsel %vm4220, %v5598, %v5600
      %v5602 = vrot.slane %v5152, 1
      %v5603 = vrot.slane %v5153, 1
      %v5604 = vsel %vm4220, %v5602, %v5603
      %v5605 = vrot.slane %v5154, 1
      %v5606 = vsel %vm4220, %v5603, %v5605
      %v5607 = vrot.slane %v5155, 1
      %v5608 = vrot.slane %v5156, 1
      %v5609 = vsel %vm4220, %v5607, %v5608
      %v5610 = vrot.slane %v5157, 1
      %v5611 = vsel %vm4220, %v5608, %v5610
      %v5612 = vrot.slane %v5158, 1
      %v5613 = vrot.slane %v5159, 1
      %v5614 = vsel %vm4220, %v5612, %v5613
      %v5615 = vrot.slane %v5160, 1
      %v5616 = vsel %vm4220, %v5613, %v5615
      %v5617 = vrot.slane %v5161, 1
      %v5618 = vrot.slane %v5162, 1
      %v5619 = vsel %vm4220, %v5617, %v5618
      %v5620 = vrot.slane %v5163, 1
      %v5621 = vsel %vm4220, %v5618, %v5620
      %v5622 = vrot.slane %v5164, 1
      %v5623 = vrot.slane %v5165, 1
      %v5624 = vsel %vm4220, %v5622, %v5623
      %v5625 = vrot.slane %v5166, 1
      %v5626 = vsel %vm4220, %v5623, %v5625
      %v5627 = vrot.slane %v5167, 1
      %v5628 = vrot.slane %v5168, 1
      %v5629 = vsel %vm4220, %v5627, %v5628
      %v5630 = vrot.slane %v5169, 1
      %v5631 = vsel %vm4220, %v5628, %v5630
      %v5632 = vrot.slane %v5170, 1
      %v5633 = vrot.slane %v5171, 1
      %v5634 = vsel %vm4220, %v5632, %v5633
      %v5635 = vrot.slane %v5172, 1
      %v5636 = vsel %vm4220, %v5633, %v5635
      %v5637 = vrot.slane %v5173, 1
      %v5638 = vrot.slane %v5174, 1
      %v5639 = vsel %vm4220, %v5637, %v5638
      %v5640 = vrot.slane %v5175, 1
      %v5641 = vsel %vm4220, %v5638, %v5640
      %v5642 = vrot.slane %v5176, 1
      %v5643 = vrot.slane %v5177, 1
      %v5644 = vsel %vm4220, %v5642, %v5643
      %v5645 = vrot.slane %v5178, 1
      %v5646 = vsel %vm4220, %v5643, %v5645
      %v5647 = vrot.slane %v5179, 1
      %v5648 = vrot.slane %v5180, 1
      %v5649 = vsel %vm4220, %v5647, %v5648
      %v5650 = vrot.slane %v5181, 1
      %v5651 = vsel %vm4220, %v5648, %v5650
      %v5652 = vrot.slane %v5182, 1
      %v5653 = vrot.slane %v5183, 1
      %v5654 = vsel %vm4220, %v5652, %v5653
      %v5655 = vrot.slane %v5184, 1
      %v5656 = vsel %vm4220, %v5653, %v5655
      %v5657 = vrot.slane %v5185, 1
      %v5658 = vrot.slane %v5186, 1
      %v5659 = vsel %vm4220, %v5657, %v5658
      %v5660 = vrot.slane %v5187, 1
      %v5661 = vsel %vm4220, %v5658, %v5660
      %v5662 = vrot.slane %v5188, 1
      %v5663 = vrot.slane %v5189, 1
      %v5664 = vsel %vm4220, %v5662, %v5663
      %v5665 = vrot.slane %v5190, 1
      %v5666 = vsel %vm4220, %v5663, %v5665
      %v5667 = vrot.slane %v5191, 1
      %v5668 = vrot.slane %v5192, 1
      %v5669 = vsel %vm4220, %v5667, %v5668
      %v5670 = vrot.slane %v5193, 1
      %v5671 = vsel %vm4220, %v5668, %v5670
      %v5672 = vrot.slane %v5194, 1
      %v5673 = vrot.slane %v5195, 1
      %v5674 = vsel %vm4220, %v5672, %v5673
      %v5675 = vrot.slane %v5196, 1
      %v5676 = vsel %vm4220, %v5673, %v5675
      %v5677 = vrot.slane %v5197, 1
      %v5678 = vrot.slane %v5198, 1
      %v5679 = vsel %vm4220, %v5677, %v5678
      %v5680 = vrot.slane %v5199, 1
      %v5681 = vsel %vm4220, %v5678, %v5680
      %v5682 = vrot.slane %v5200, 1
      %v5683 = vrot.slane %v5201, 1
      %v5684 = vsel %vm4220, %v5682, %v5683
      %v5685 = vrot.slane %v5202, 1
      %v5686 = vsel %vm4220, %v5683, %v5685
      %v5687 = vrot.slane %v5203, 1
      %v5688 = vrot.slane %v5204, 1
      %v5689 = vsel %vm4220, %v5687, %v5688
      %v5690 = vrot.slane %v5205, 1
      %v5691 = vsel %vm4220, %v5688, %v5690
      %v5692 = vrot.slane %v5206, 1
      %v5693 = vrot.slane %v5207, 1
      %v5694 = vsel %vm4220, %v5692, %v5693
      %v5695 = vrot.slane %v5208, 1
      %v5696 = vsel %vm4220, %v5693, %v5695
      %v5697 = vrot.slane %v5209, 1
      %v5698 = vrot.slane %v5210, 1
      %v5699 = vsel %vm4220, %v5697, %v5698
      %v5700 = vrot.slane %v5211, 1
      %v5701 = vsel %vm4220, %v5698, %v5700
      %v5702 = vrot.slane %v5212, 1
      %v5703 = vrot.slane %v5213, 1
      %v5704 = vsel %vm4220, %v5702, %v5703
      %v5705 = vrot.slane %v5214, 1
      %v5706 = vsel %vm4220, %v5703, %v5705
      %v5707 = vrot.slane %v5215, 1
      %v5708 = vrot.slane %v5216, 1
      %v5709 = vsel %vm4220, %v5707, %v5708
      %v5710 = vrot.slane %v5217, 1
      %v5711 = vsel %vm4220, %v5708, %v5710
      %v5712 = vrot.slane %v5218, 1
      %v5713 = vrot.slane %v5219, 1
      %v5714 = vsel %vm4220, %v5712, %v5713
      %v5715 = vrot.slane %v5220, 1
      %v5716 = vsel %vm4220, %v5713, %v5715
      %v5717 = vrot.slane %v5221, 1
      %v5718 = vrot.slane %v5222, 1
      %v5719 = vsel %vm4220, %v5717, %v5718
      %v5720 = vrot.slane %v5223, 1
      %v5721 = vsel %vm4220, %v5718, %v5720
      %v5722 = vrot.slane %v5224, 1
      %v5723 = vrot.slane %v5225, 1
      %v5724 = vsel %vm4220, %v5722, %v5723
      %v5725 = vrot.slane %v5226, 1
      %v5726 = vsel %vm4220, %v5723, %v5725
      %v5727 = vrot.slane %v5227, 1
      %v5728 = vrot.slane %v5228, 1
      %v5729 = vsel %vm4220, %v5727, %v5728
      %v5730 = vrot.slane %v5229, 1
      %v5731 = vsel %vm4220, %v5728, %v5730
      %v5732 = vrot.slane %v5230, 1
      %v5733 = vrot.slane %v5231, 1
      %v5734 = vsel %vm4220, %v5732, %v5733
      %v5735 = vrot.slane %v5232, 1
      %v5736 = vsel %vm4220, %v5733, %v5735
      %v5737 = vrot.slane %v5233, 1
      %v5738 = vrot.slane %v5234, 1
      %v5739 = vsel %vm4220, %v5737, %v5738
      %v5740 = vrot.slane %v5235, 1
      %v5741 = vsel %vm4220, %v5738, %v5740
      %v5742 = vrot.slane %v5236, 1
      %v5743 = vrot.slane %v5237, 1
      %v5744 = vsel %vm4220, %v5742, %v5743
      %v5745 = vrot.slane %v5238, 1
      %v5746 = vsel %vm4220, %v5743, %v5745
      %v5747 = vrot.slane %v5239, 1
      %v5748 = vrot.slane %v5240, 1
      %v5749 = vsel %vm4220, %v5747, %v5748
      %v5750 = vrot.slane %v5241, 1
      %v5751 = vsel %vm4220, %v5748, %v5750
      %v5752 = vrot.slane %v5242, 1
      %v5753 = vrot.slane %v5243, 1
      %v5754 = vsel %vm4220, %v5752, %v5753
      %v5755 = vrot.slane %v5244, 1
      %v5756 = vsel %vm4220, %v5753, %v5755
      %5757 = vrot.lane.b32.xlu0 %v5439, 127
      %v5758 = vpop.permute.xlu0 %5757
      %5759 = vrot.lane.b32.xlu0 %v5441, 127
      %v5760 = vpop.permute.xlu0 %5759
      %5761 = vrot.lane.b32.xlu0 %v5444, 127
      %v5762 = vpop.permute.xlu0 %5761
      %5763 = vrot.lane.b32.xlu0 %v5446, 127
      %v5764 = vpop.permute.xlu0 %5763
      %5765 = vrot.lane.b32.xlu0 %v5449, 127
      %v5766 = vpop.permute.xlu0 %5765
      %5767 = vrot.lane.b32.xlu0 %v5451, 127
      %v5768 = vpop.permute.xlu0 %5767
      %5769 = vrot.lane.b32.xlu0 %v5454, 127
      %v5770 = vpop.permute.xlu0 %5769
      %5771 = vrot.lane.b32.xlu0 %v5456, 127
      %v5772 = vpop.permute.xlu0 %5771
      %5773 = vrot.lane.b32.xlu0 %v5459, 127
      %v5774 = vpop.permute.xlu0 %5773
      %5775 = vrot.lane.b32.xlu0 %v5461, 127
      %v5776 = vpop.permute.xlu0 %5775
      %5777 = vrot.lane.b32.xlu0 %v5464, 127
      %v5778 = vpop.permute.xlu0 %5777
      %5779 = vrot.lane.b32.xlu0 %v5466, 127
      %v5780 = vpop.permute.xlu0 %5779
      %5781 = vrot.lane.b32.xlu0 %v5469, 127
      %v5782 = vpop.permute.xlu0 %5781
      %5783 = vrot.lane.b32.xlu0 %v5471, 127
      %v5784 = vpop.permute.xlu0 %5783
      %5785 = vrot.lane.b32.xlu0 %v5474, 127
      %v5786 = vpop.permute.xlu0 %5785
      %5787 = vrot.lane.b32.xlu0 %v5476, 127
      %v5788 = vpop.permute.xlu0 %5787
      %5789 = vrot.lane.b32.xlu0 %v5479, 127
      %v5790 = vpop.permute.xlu0 %5789
      %5791 = vrot.lane.b32.xlu0 %v5481, 127
      %v5792 = vpop.permute.xlu0 %5791
      %5793 = vrot.lane.b32.xlu0 %v5484, 127
      %v5794 = vpop.permute.xlu0 %5793
      %5795 = vrot.lane.b32.xlu0 %v5486, 127
      %v5796 = vpop.permute.xlu0 %5795
      %5797 = vrot.lane.b32.xlu0 %v5489, 127
      %v5798 = vpop.permute.xlu0 %5797
      %5799 = vrot.lane.b32.xlu0 %v5491, 127
      %v5800 = vpop.permute.xlu0 %5799
      %5801 = vrot.lane.b32.xlu0 %v5494, 127
      %v5802 = vpop.permute.xlu0 %5801
      %5803 = vrot.lane.b32.xlu0 %v5496, 127
      %v5804 = vpop.permute.xlu0 %5803
      %5805 = vrot.lane.b32.xlu0 %v5499, 127
      %v5806 = vpop.permute.xlu0 %5805
      %5807 = vrot.lane.b32.xlu0 %v5501, 127
      %v5808 = vpop.permute.xlu0 %5807
      %5809 = vrot.lane.b32.xlu0 %v5504, 127
      %v5810 = vpop.permute.xlu0 %5809
      %5811 = vrot.lane.b32.xlu0 %v5506, 127
      %v5812 = vpop.permute.xlu0 %5811
      %5813 = vrot.lane.b32.xlu0 %v5509, 127
      %v5814 = vpop.permute.xlu0 %5813
      %5815 = vrot.lane.b32.xlu0 %v5511, 127
      %v5816 = vpop.permute.xlu0 %5815
      %5817 = vrot.lane.b32.xlu0 %v5514, 127
      %v5818 = vpop.permute.xlu0 %5817
      %5819 = vrot.lane.b32.xlu0 %v5516, 127
      %v5820 = vpop.permute.xlu0 %5819
      %5821 = vrot.lane.b32.xlu0 %v5519, 127
      %v5822 = vpop.permute.xlu0 %5821
      %5823 = vrot.lane.b32.xlu0 %v5521, 127
      %v5824 = vpop.permute.xlu0 %5823
      %5825 = vrot.lane.b32.xlu0 %v5524, 127
      %v5826 = vpop.permute.xlu0 %5825
      %5827 = vrot.lane.b32.xlu0 %v5526, 127
      %v5828 = vpop.permute.xlu0 %5827
      %5829 = vrot.lane.b32.xlu0 %v5529, 127
      %v5830 = vpop.permute.xlu0 %5829
      %5831 = vrot.lane.b32.xlu0 %v5531, 127
      %v5832 = vpop.permute.xlu0 %5831
      %5833 = vrot.lane.b32.xlu0 %v5534, 127
      %v5834 = vpop.permute.xlu0 %5833
      %5835 = vrot.lane.b32.xlu0 %v5536, 127
      %v5836 = vpop.permute.xlu0 %5835
      %5837 = vrot.lane.b32.xlu0 %v5539, 127
      %v5838 = vpop.permute.xlu0 %5837
      %5839 = vrot.lane.b32.xlu0 %v5541, 127
      %v5840 = vpop.permute.xlu0 %5839
      %5841 = vrot.lane.b32.xlu0 %v5544, 127
      %v5842 = vpop.permute.xlu0 %5841
      %5843 = vrot.lane.b32.xlu0 %v5546, 127
      %v5844 = vpop.permute.xlu0 %5843
      %5845 = vrot.lane.b32.xlu0 %v5549, 127
      %v5846 = vpop.permute.xlu0 %5845
      %5847 = vrot.lane.b32.xlu0 %v5551, 127
      %v5848 = vpop.permute.xlu0 %5847
      %5849 = vrot.lane.b32.xlu0 %v5554, 127
      %v5850 = vpop.permute.xlu0 %5849
      %5851 = vrot.lane.b32.xlu0 %v5556, 127
      %v5852 = vpop.permute.xlu0 %5851
      %5853 = vrot.lane.b32.xlu0 %v5559, 127
      %v5854 = vpop.permute.xlu0 %5853
      %5855 = vrot.lane.b32.xlu0 %v5561, 127
      %v5856 = vpop.permute.xlu0 %5855
      %5857 = vrot.lane.b32.xlu0 %v5564, 127
      %v5858 = vpop.permute.xlu0 %5857
      %5859 = vrot.lane.b32.xlu0 %v5566, 127
      %v5860 = vpop.permute.xlu0 %5859
      %5861 = vrot.lane.b32.xlu0 %v5569, 127
      %v5862 = vpop.permute.xlu0 %5861
      %5863 = vrot.lane.b32.xlu0 %v5571, 127
      %v5864 = vpop.permute.xlu0 %5863
      %5865 = vrot.lane.b32.xlu0 %v5574, 127
      %v5866 = vpop.permute.xlu0 %5865
      %5867 = vrot.lane.b32.xlu0 %v5576, 127
      %v5868 = vpop.permute.xlu0 %5867
      %5869 = vrot.lane.b32.xlu0 %v5579, 127
      %v5870 = vpop.permute.xlu0 %5869
      %5871 = vrot.lane.b32.xlu0 %v5581, 127
      %v5872 = vpop.permute.xlu0 %5871
      %5873 = vrot.lane.b32.xlu0 %v5584, 127
      %v5874 = vpop.permute.xlu0 %5873
      %5875 = vrot.lane.b32.xlu0 %v5586, 127
      %v5876 = vpop.permute.xlu0 %5875
      %5877 = vrot.lane.b32.xlu0 %v5589, 127
      %v5878 = vpop.permute.xlu0 %5877
      %5879 = vrot.lane.b32.xlu0 %v5591, 127
      %v5880 = vpop.permute.xlu0 %5879
      %5881 = vrot.lane.b32.xlu0 %v5594, 127
      %v5882 = vpop.permute.xlu0 %5881
      %5883 = vrot.lane.b32.xlu0 %v5596, 127
      %v5884 = vpop.permute.xlu0 %5883
      %5885 = vrot.lane.b32.xlu0 %v5599, 127
      %v5886 = vpop.permute.xlu0 %5885
      %5887 = vrot.lane.b32.xlu0 %v5601, 127
      %v5888 = vpop.permute.xlu0 %5887
      %5889 = vrot.lane.b32.xlu0 %v5604, 127
      %v5890 = vpop.permute.xlu0 %5889
      %5891 = vrot.lane.b32.xlu0 %v5606, 127
      %v5892 = vpop.permute.xlu0 %5891
      %5893 = vrot.lane.b32.xlu0 %v5609, 127
      %v5894 = vpop.permute.xlu0 %5893
      %5895 = vrot.lane.b32.xlu0 %v5611, 127
      %v5896 = vpop.permute.xlu0 %5895
      %5897 = vrot.lane.b32.xlu0 %v5614, 127
      %v5898 = vpop.permute.xlu0 %5897
      %5899 = vrot.lane.b32.xlu0 %v5616, 127
      %v5900 = vpop.permute.xlu0 %5899
      %5901 = vrot.lane.b32.xlu0 %v5619, 127
      %v5902 = vpop.permute.xlu0 %5901
      %5903 = vrot.lane.b32.xlu0 %v5621, 127
      %v5904 = vpop.permute.xlu0 %5903
      %5905 = vrot.lane.b32.xlu0 %v5624, 127
      %v5906 = vpop.permute.xlu0 %5905
      %5907 = vrot.lane.b32.xlu0 %v5626, 127
      %v5908 = vpop.permute.xlu0 %5907
      %5909 = vrot.lane.b32.xlu0 %v5629, 127
      %v5910 = vpop.permute.xlu0 %5909
      %5911 = vrot.lane.b32.xlu0 %v5631, 127
      %v5912 = vpop.permute.xlu0 %5911
      %5913 = vrot.lane.b32.xlu0 %v5634, 127
      %v5914 = vpop.permute.xlu0 %5913
      %5915 = vrot.lane.b32.xlu0 %v5636, 127
      %v5916 = vpop.permute.xlu0 %5915
      %5917 = vrot.lane.b32.xlu0 %v5639, 127
      %v5918 = vpop.permute.xlu0 %5917
      %5919 = vrot.lane.b32.xlu0 %v5641, 127
      %v5920 = vpop.permute.xlu0 %5919
      %5921 = vrot.lane.b32.xlu0 %v5644, 127
      %v5922 = vpop.permute.xlu0 %5921
      %5923 = vrot.lane.b32.xlu0 %v5646, 127
      %v5924 = vpop.permute.xlu0 %5923
      %5925 = vrot.lane.b32.xlu0 %v5649, 127
      %v5926 = vpop.permute.xlu0 %5925
      %5927 = vrot.lane.b32.xlu0 %v5651, 127
      %v5928 = vpop.permute.xlu0 %5927
      %5929 = vrot.lane.b32.xlu0 %v5654, 127
      %v5930 = vpop.permute.xlu0 %5929
      %5931 = vrot.lane.b32.xlu0 %v5656, 127
      %v5932 = vpop.permute.xlu0 %5931
      %5933 = vrot.lane.b32.xlu0 %v5659, 127
      %v5934 = vpop.permute.xlu0 %5933
      %5935 = vrot.lane.b32.xlu0 %v5661, 127
      %v5936 = vpop.permute.xlu0 %5935
      %5937 = vrot.lane.b32.xlu0 %v5664, 127
      %v5938 = vpop.permute.xlu0 %5937
      %5939 = vrot.lane.b32.xlu0 %v5666, 127
      %v5940 = vpop.permute.xlu0 %5939
      %5941 = vrot.lane.b32.xlu0 %v5669, 127
      %v5942 = vpop.permute.xlu0 %5941
      %5943 = vrot.lane.b32.xlu0 %v5671, 127
      %v5944 = vpop.permute.xlu0 %5943
      %5945 = vrot.lane.b32.xlu0 %v5674, 127
      %v5946 = vpop.permute.xlu0 %5945
      %5947 = vrot.lane.b32.xlu0 %v5676, 127
      %v5948 = vpop.permute.xlu0 %5947
      %5949 = vrot.lane.b32.xlu0 %v5679, 127
      %v5950 = vpop.permute.xlu0 %5949
      %5951 = vrot.lane.b32.xlu0 %v5681, 127
      %v5952 = vpop.permute.xlu0 %5951
      %5953 = vrot.lane.b32.xlu0 %v5684, 127
      %v5954 = vpop.permute.xlu0 %5953
      %5955 = vrot.lane.b32.xlu0 %v5686, 127
      %v5956 = vpop.permute.xlu0 %5955
      %5957 = vrot.lane.b32.xlu0 %v5689, 127
      %v5958 = vpop.permute.xlu0 %5957
      %5959 = vrot.lane.b32.xlu0 %v5691, 127
      %v5960 = vpop.permute.xlu0 %5959
      %5961 = vrot.lane.b32.xlu0 %v5694, 127
      %v5962 = vpop.permute.xlu0 %5961
      %5963 = vrot.lane.b32.xlu0 %v5696, 127
      %v5964 = vpop.permute.xlu0 %5963
      %5965 = vrot.lane.b32.xlu0 %v5699, 127
      %v5966 = vpop.permute.xlu0 %5965
      %5967 = vrot.lane.b32.xlu0 %v5701, 127
      %v5968 = vpop.permute.xlu0 %5967
      %5969 = vrot.lane.b32.xlu0 %v5704, 127
      %v5970 = vpop.permute.xlu0 %5969
      %5971 = vrot.lane.b32.xlu0 %v5706, 127
      %v5972 = vpop.permute.xlu0 %5971
      %5973 = vrot.lane.b32.xlu0 %v5709, 127
      %v5974 = vpop.permute.xlu0 %5973
      %5975 = vrot.lane.b32.xlu0 %v5711, 127
      %v5976 = vpop.permute.xlu0 %5975
      %5977 = vrot.lane.b32.xlu0 %v5714, 127
      %v5978 = vpop.permute.xlu0 %5977
      %5979 = vrot.lane.b32.xlu0 %v5716, 127
      %v5980 = vpop.permute.xlu0 %5979
      %5981 = vrot.lane.b32.xlu0 %v5719, 127
      %v5982 = vpop.permute.xlu0 %5981
      %5983 = vrot.lane.b32.xlu0 %v5721, 127
      %v5984 = vpop.permute.xlu0 %5983
      %5985 = vrot.lane.b32.xlu0 %v5724, 127
      %v5986 = vpop.permute.xlu0 %5985
      %5987 = vrot.lane.b32.xlu0 %v5726, 127
      %v5988 = vpop.permute.xlu0 %5987
      %5989 = vrot.lane.b32.xlu0 %v5729, 127
      %v5990 = vpop.permute.xlu0 %5989
      %5991 = vrot.lane.b32.xlu0 %v5731, 127
      %v5992 = vpop.permute.xlu0 %5991
      %5993 = vrot.lane.b32.xlu0 %v5734, 127
      %v5994 = vpop.permute.xlu0 %5993
      %5995 = vrot.lane.b32.xlu0 %v5736, 127
      %v5996 = vpop.permute.xlu0 %5995
      %5997 = vrot.lane.b32.xlu0 %v5739, 127
      %v5998 = vpop.permute.xlu0 %5997
      %5999 = vrot.lane.b32.xlu0 %v5741, 127
      %v6000 = vpop.permute.xlu0 %5999
      %6001 = vrot.lane.b32.xlu0 %v5744, 127
      %v6002 = vpop.permute.xlu0 %6001
      %6003 = vrot.lane.b32.xlu0 %v5746, 127
      %v6004 = vpop.permute.xlu0 %6003
      %6005 = vrot.lane.b32.xlu0 %v5749, 127
      %v6006 = vpop.permute.xlu0 %6005
      %6007 = vrot.lane.b32.xlu0 %v5751, 127
      %v6008 = vpop.permute.xlu0 %6007
      %6009 = vrot.lane.b32.xlu0 %v5754, 127
      %v6010 = vpop.permute.xlu0 %6009
      %6011 = vrot.lane.b32.xlu0 %v5756, 127
      %v6012 = vpop.permute.xlu0 %6011
      %v6141 = vadd.f32 %v4669, %v5758
      %v6142 = vadd.f32 %v4670, %v5760
      %v6143 = vadd.f32 %v4671, %v5762
      %v6144 = vadd.f32 %v4672, %v5764
      %v6145 = vadd.f32 %v4673, %v5766
      %v6146 = vadd.f32 %v4674, %v5768
      %v6147 = vadd.f32 %v4675, %v5770
      %v6148 = vadd.f32 %v4676, %v5772
      %v6149 = vadd.f32 %v4677, %v5774
      %v6150 = vadd.f32 %v4678, %v5776
      %v6151 = vadd.f32 %v4679, %v5778
      %v6152 = vadd.f32 %v4680, %v5780
      %v6153 = vadd.f32 %v4681, %v5782
      %v6154 = vadd.f32 %v4682, %v5784
      %v6155 = vadd.f32 %v4683, %v5786
      %v6156 = vadd.f32 %v4684, %v5788
      %v6157 = vadd.f32 %v4685, %v5790
      %v6158 = vadd.f32 %v4686, %v5792
      %v6159 = vadd.f32 %v4687, %v5794
      %v6160 = vadd.f32 %v4688, %v5796
      %v6161 = vadd.f32 %v4689, %v5798
      %v6162 = vadd.f32 %v4690, %v5800
      %v6163 = vadd.f32 %v4691, %v5802
      %v6164 = vadd.f32 %v4692, %v5804
      %v6165 = vadd.f32 %v4693, %v5806
      %v6166 = vadd.f32 %v4694, %v5808
      %v6167 = vadd.f32 %v4695, %v5810
      %v6168 = vadd.f32 %v4696, %v5812
      %v6169 = vadd.f32 %v4697, %v5814
      %v6170 = vadd.f32 %v4698, %v5816
      %v6171 = vadd.f32 %v4699, %v5818
      %v6172 = vadd.f32 %v4700, %v5820
      %v6173 = vadd.f32 %v4701, %v5822
      %v6174 = vadd.f32 %v4702, %v5824
      %v6175 = vadd.f32 %v4703, %v5826
      %v6176 = vadd.f32 %v4704, %v5828
      %v6177 = vadd.f32 %v4705, %v5830
      %v6178 = vadd.f32 %v4706, %v5832
      %v6179 = vadd.f32 %v4707, %v5834
      %v6180 = vadd.f32 %v4708, %v5836
      %v6181 = vadd.f32 %v4709, %v5838
      %v6182 = vadd.f32 %v4710, %v5840
      %v6183 = vadd.f32 %v4711, %v5842
      %v6184 = vadd.f32 %v4712, %v5844
      %v6185 = vadd.f32 %v4713, %v5846
      %v6186 = vadd.f32 %v4714, %v5848
      %v6187 = vadd.f32 %v4715, %v5850
      %v6188 = vadd.f32 %v4716, %v5852
      %v6189 = vadd.f32 %v4717, %v5854
      %v6190 = vadd.f32 %v4718, %v5856
      %v6191 = vadd.f32 %v4719, %v5858
      %v6192 = vadd.f32 %v4720, %v5860
      %v6193 = vadd.f32 %v4721, %v5862
      %v6194 = vadd.f32 %v4722, %v5864
      %v6195 = vadd.f32 %v4723, %v5866
      %v6196 = vadd.f32 %v4724, %v5868
      %v6197 = vadd.f32 %v4725, %v5870
      %v6198 = vadd.f32 %v4726, %v5872
      %v6199 = vadd.f32 %v4727, %v5874
      %v6200 = vadd.f32 %v4728, %v5876
      %v6201 = vadd.f32 %v4729, %v5878
      %v6202 = vadd.f32 %v4730, %v5880
      %v6203 = vadd.f32 %v4731, %v5882
      %v6204 = vadd.f32 %v4732, %v5884
      %v6205 = vadd.f32 %v4733, %v5886
      %v6206 = vadd.f32 %v4734, %v5888
      %v6207 = vadd.f32 %v4735, %v5890
      %v6208 = vadd.f32 %v4736, %v5892
      %v6209 = vadd.f32 %v4737, %v5894
      %v6210 = vadd.f32 %v4738, %v5896
      %v6211 = vadd.f32 %v4739, %v5898
      %v6212 = vadd.f32 %v4740, %v5900
      %v6213 = vadd.f32 %v4741, %v5902
      %v6214 = vadd.f32 %v4742, %v5904
      %v6215 = vadd.f32 %v4743, %v5906
      %v6216 = vadd.f32 %v4744, %v5908
      %v6217 = vadd.f32 %v4745, %v5910
      %v6218 = vadd.f32 %v4746, %v5912
      %v6219 = vadd.f32 %v4747, %v5914
      %v6220 = vadd.f32 %v4748, %v5916
      %v6221 = vadd.f32 %v4749, %v5918
      %v6222 = vadd.f32 %v4750, %v5920
      %v6223 = vadd.f32 %v4751, %v5922
      %v6224 = vadd.f32 %v4752, %v5924
      %v6225 = vadd.f32 %v4753, %v5926
      %v6226 = vadd.f32 %v4754, %v5928
      %v6227 = vadd.f32 %v4755, %v5930
      %v6228 = vadd.f32 %v4756, %v5932
      %v6229 = vadd.f32 %v4757, %v5934
      %v6230 = vadd.f32 %v4758, %v5936
      %v6231 = vadd.f32 %v4759, %v5938
      %v6232 = vadd.f32 %v4760, %v5940
      %v6233 = vadd.f32 %v4761, %v5942
      %v6234 = vadd.f32 %v4762, %v5944
      %v6235 = vadd.f32 %v4763, %v5946
      %v6236 = vadd.f32 %v4764, %v5948
      %v6237 = vadd.f32 %v4765, %v5950
      %v6238 = vadd.f32 %v4766, %v5952
      %v6239 = vadd.f32 %v4767, %v5954
      %v6240 = vadd.f32 %v4768, %v5956
      %v6241 = vadd.f32 %v4769, %v5958
      %v6242 = vadd.f32 %v4770, %v5960
      %v6243 = vadd.f32 %v4771, %v5962
      %v6244 = vadd.f32 %v4772, %v5964
      %v6245 = vadd.f32 %v4773, %v5966
      %v6246 = vadd.f32 %v4774, %v5968
      %v6247 = vadd.f32 %v4775, %v5970
      %v6248 = vadd.f32 %v4776, %v5972
      %v6249 = vadd.f32 %v4777, %v5974
      %v6250 = vadd.f32 %v4778, %v5976
      %v6251 = vadd.f32 %v4779, %v5978
      %v6252 = vadd.f32 %v4780, %v5980
      %v6253 = vadd.f32 %v4781, %v5982
      %v6254 = vadd.f32 %v4782, %v5984
      %v6255 = vadd.f32 %v4783, %v5986
      %v6256 = vadd.f32 %v4784, %v5988
      %v6257 = vadd.f32 %v4785, %v5990
      %v6258 = vadd.f32 %v4786, %v5992
      %v6259 = vadd.f32 %v4787, %v5994
      %v6260 = vadd.f32 %v4788, %v5996
      %v6261 = vadd.f32 %v4789, %v5998
      %v6262 = vadd.f32 %v4790, %v6000
      %v6263 = vadd.f32 %v4791, %v6002
      %v6264 = vadd.f32 %v4792, %v6004
      %v6265 = vadd.f32 %v4793, %v6006
      %v6266 = vadd.f32 %v4794, %v6008
      %v6267 = vadd.f32 %v4795, %v6010
      %v6268 = vadd.f32 %v4796, %v6012
      %6269 = vset.pattern.permute.xlu0 5
      %6270 = vperm.xlu0 %6269, %v767
      %v6271 = vpop.permute.xlu0 %6270
      %6273 = vset.pattern.permute.xlu0 5
      %6274 = vperm.xlu0 %6273, %v771
      %v6275 = vpop.permute.xlu0 %6274
      %6277 = vset.pattern.permute.xlu0 5
      %6278 = vperm.xlu0 %6277, %v775
      %v6279 = vpop.permute.xlu0 %6278
      %6281 = vset.pattern.permute.xlu0 5
      %6282 = vperm.xlu0 %6281, %v779
      %v6283 = vpop.permute.xlu0 %6282
      %6285 = vset.pattern.permute.xlu0 5
      %6286 = vperm.xlu0 %6285, %v783
      %v6287 = vpop.permute.xlu0 %6286
      %6289 = vset.pattern.permute.xlu0 5
      %6290 = vperm.xlu0 %6289, %v787
      %v6291 = vpop.permute.xlu0 %6290
      %6293 = vset.pattern.permute.xlu0 5
      %6294 = vperm.xlu0 %6293, %v791
      %v6295 = vpop.permute.xlu0 %6294
      %6297 = vset.pattern.permute.xlu0 5
      %6298 = vperm.xlu0 %6297, %v795
      %v6299 = vpop.permute.xlu0 %6298
      %6301 = vset.pattern.permute.xlu0 5
      %6302 = vperm.xlu0 %6301, %v799
      %v6303 = vpop.permute.xlu0 %6302
      %6305 = vset.pattern.permute.xlu0 5
      %6306 = vperm.xlu0 %6305, %v803
      %v6307 = vpop.permute.xlu0 %6306
      %6309 = vset.pattern.permute.xlu0 5
      %6310 = vperm.xlu0 %6309, %v807
      %v6311 = vpop.permute.xlu0 %6310
      %6313 = vset.pattern.permute.xlu0 5
      %6314 = vperm.xlu0 %6313, %v811
      %v6315 = vpop.permute.xlu0 %6314
      %6317 = vset.pattern.permute.xlu0 5
      %6318 = vperm.xlu0 %6317, %v815
      %v6319 = vpop.permute.xlu0 %6318
      %6321 = vset.pattern.permute.xlu0 5
      %6322 = vperm.xlu0 %6321, %v819
      %v6323 = vpop.permute.xlu0 %6322
      %6325 = vset.pattern.permute.xlu0 5
      %6326 = vperm.xlu0 %6325, %v823
      %v6327 = vpop.permute.xlu0 %6326
      %6329 = vset.pattern.permute.xlu0 5
      %6330 = vperm.xlu0 %6329, %v827
      %v6331 = vpop.permute.xlu0 %6330
      %6333 = vset.pattern.permute.xlu0 5
      %6334 = vperm.xlu0 %6333, %v831
      %v6335 = vpop.permute.xlu0 %6334
      %6337 = vset.pattern.permute.xlu0 5
      %6338 = vperm.xlu0 %6337, %v835
      %v6339 = vpop.permute.xlu0 %6338
      %6341 = vset.pattern.permute.xlu0 5
      %6342 = vperm.xlu0 %6341, %v839
      %v6343 = vpop.permute.xlu0 %6342
      %6345 = vset.pattern.permute.xlu0 5
      %6346 = vperm.xlu0 %6345, %v843
      %v6347 = vpop.permute.xlu0 %6346
      %6349 = vset.pattern.permute.xlu0 5
      %6350 = vperm.xlu0 %6349, %v847
      %v6351 = vpop.permute.xlu0 %6350
      %6353 = vset.pattern.permute.xlu0 5
      %6354 = vperm.xlu0 %6353, %v851
      %v6355 = vpop.permute.xlu0 %6354
      %6357 = vset.pattern.permute.xlu0 5
      %6358 = vperm.xlu0 %6357, %v855
      %v6359 = vpop.permute.xlu0 %6358
      %6361 = vset.pattern.permute.xlu0 5
      %6362 = vperm.xlu0 %6361, %v859
      %v6363 = vpop.permute.xlu0 %6362
      %6365 = vset.pattern.permute.xlu0 5
      %6366 = vperm.xlu0 %6365, %v863
      %v6367 = vpop.permute.xlu0 %6366
      %6369 = vset.pattern.permute.xlu0 5
      %6370 = vperm.xlu0 %6369, %v867
      %v6371 = vpop.permute.xlu0 %6370
      %6373 = vset.pattern.permute.xlu0 5
      %6374 = vperm.xlu0 %6373, %v871
      %v6375 = vpop.permute.xlu0 %6374
      %6377 = vset.pattern.permute.xlu0 5
      %6378 = vperm.xlu0 %6377, %v875
      %v6379 = vpop.permute.xlu0 %6378
      %6381 = vset.pattern.permute.xlu0 5
      %6382 = vperm.xlu0 %6381, %v879
      %v6383 = vpop.permute.xlu0 %6382
      %6385 = vset.pattern.permute.xlu0 5
      %6386 = vperm.xlu0 %6385, %v883
      %v6387 = vpop.permute.xlu0 %6386
      %6389 = vset.pattern.permute.xlu0 5
      %6390 = vperm.xlu0 %6389, %v887
      %v6391 = vpop.permute.xlu0 %6390
      %6393 = vset.pattern.permute.xlu0 5
      %6394 = vperm.xlu0 %6393, %v891
      %v6395 = vpop.permute.xlu0 %6394
      %6397 = vset.pattern.permute.xlu0 5
      %6398 = vperm.xlu0 %6397, %v895
      %v6399 = vpop.permute.xlu0 %6398
      %6401 = vset.pattern.permute.xlu0 5
      %6402 = vperm.xlu0 %6401, %v899
      %v6403 = vpop.permute.xlu0 %6402
      %6405 = vset.pattern.permute.xlu0 5
      %6406 = vperm.xlu0 %6405, %v903
      %v6407 = vpop.permute.xlu0 %6406
      %6409 = vset.pattern.permute.xlu0 5
      %6410 = vperm.xlu0 %6409, %v907
      %v6411 = vpop.permute.xlu0 %6410
      %6413 = vset.pattern.permute.xlu0 5
      %6414 = vperm.xlu0 %6413, %v911
      %v6415 = vpop.permute.xlu0 %6414
      %6417 = vset.pattern.permute.xlu0 5
      %6418 = vperm.xlu0 %6417, %v915
      %v6419 = vpop.permute.xlu0 %6418
      %6421 = vset.pattern.permute.xlu0 5
      %6422 = vperm.xlu0 %6421, %v919
      %v6423 = vpop.permute.xlu0 %6422
      %6425 = vset.pattern.permute.xlu0 5
      %6426 = vperm.xlu0 %6425, %v923
      %v6427 = vpop.permute.xlu0 %6426
      %6429 = vset.pattern.permute.xlu0 5
      %6430 = vperm.xlu0 %6429, %v927
      %v6431 = vpop.permute.xlu0 %6430
      %6433 = vset.pattern.permute.xlu0 5
      %6434 = vperm.xlu0 %6433, %v931
      %v6435 = vpop.permute.xlu0 %6434
      %6437 = vset.pattern.permute.xlu0 5
      %6438 = vperm.xlu0 %6437, %v935
      %v6439 = vpop.permute.xlu0 %6438
      %6441 = vset.pattern.permute.xlu0 5
      %6442 = vperm.xlu0 %6441, %v939
      %v6443 = vpop.permute.xlu0 %6442
      %6445 = vset.pattern.permute.xlu0 5
      %6446 = vperm.xlu0 %6445, %v943
      %v6447 = vpop.permute.xlu0 %6446
      %6449 = vset.pattern.permute.xlu0 5
      %6450 = vperm.xlu0 %6449, %v947
      %v6451 = vpop.permute.xlu0 %6450
      %6453 = vset.pattern.permute.xlu0 5
      %6454 = vperm.xlu0 %6453, %v951
      %v6455 = vpop.permute.xlu0 %6454
      %6457 = vset.pattern.permute.xlu0 5
      %6458 = vperm.xlu0 %6457, %v955
      %v6459 = vpop.permute.xlu0 %6458
      %6461 = vset.pattern.permute.xlu0 5
      %6462 = vperm.xlu0 %6461, %v959
      %v6463 = vpop.permute.xlu0 %6462
      %6465 = vset.pattern.permute.xlu0 5
      %6466 = vperm.xlu0 %6465, %v963
      %v6467 = vpop.permute.xlu0 %6466
      %6469 = vset.pattern.permute.xlu0 5
      %6470 = vperm.xlu0 %6469, %v967
      %v6471 = vpop.permute.xlu0 %6470
      %6473 = vset.pattern.permute.xlu0 5
      %6474 = vperm.xlu0 %6473, %v971
      %v6475 = vpop.permute.xlu0 %6474
      %6477 = vset.pattern.permute.xlu0 5
      %6478 = vperm.xlu0 %6477, %v975
      %v6479 = vpop.permute.xlu0 %6478
      %6481 = vset.pattern.permute.xlu0 5
      %6482 = vperm.xlu0 %6481, %v979
      %v6483 = vpop.permute.xlu0 %6482
      %6485 = vset.pattern.permute.xlu0 5
      %6486 = vperm.xlu0 %6485, %v983
      %v6487 = vpop.permute.xlu0 %6486
      %6489 = vset.pattern.permute.xlu0 5
      %6490 = vperm.xlu0 %6489, %v987
      %v6491 = vpop.permute.xlu0 %6490
      %6493 = vset.pattern.permute.xlu0 5
      %6494 = vperm.xlu0 %6493, %v991
      %v6495 = vpop.permute.xlu0 %6494
      %6497 = vset.pattern.permute.xlu0 5
      %6498 = vperm.xlu0 %6497, %v995
      %v6499 = vpop.permute.xlu0 %6498
      %6501 = vset.pattern.permute.xlu0 5
      %6502 = vperm.xlu0 %6501, %v999
      %v6503 = vpop.permute.xlu0 %6502
      %6505 = vset.pattern.permute.xlu0 5
      %6506 = vperm.xlu0 %6505, %v1003
      %v6507 = vpop.permute.xlu0 %6506
      %6509 = vset.pattern.permute.xlu0 5
      %6510 = vperm.xlu0 %6509, %v1007
      %v6511 = vpop.permute.xlu0 %6510
      %6513 = vset.pattern.permute.xlu0 5
      %6514 = vperm.xlu0 %6513, %v1011
      %v6515 = vpop.permute.xlu0 %6514
      %6517 = vset.pattern.permute.xlu0 5
      %6518 = vperm.xlu0 %6517, %v1015
      %v6519 = vpop.permute.xlu0 %6518
      %6521 = vset.pattern.permute.xlu0 5
      %6522 = vperm.xlu0 %6521, %v1019
      %v6523 = vpop.permute.xlu0 %6522
      %v6525 = vmul.f32 %v164, %v6271
      %v6526 = vmul.f32 %v165, %v6271
      %v6527 = vmul.f32 %v166, %v6271
      %v6528 = vmul.f32 %v167, %v6275
      %v6529 = vmul.f32 %v168, %v6275
      %v6530 = vmul.f32 %v169, %v6275
      %v6531 = vmul.f32 %v170, %v6279
      %v6532 = vmul.f32 %v171, %v6279
      %v6533 = vmul.f32 %v172, %v6279
      %v6534 = vmul.f32 %v173, %v6283
      %v6535 = vmul.f32 %v174, %v6283
      %v6536 = vmul.f32 %v175, %v6283
      %v6537 = vmul.f32 %v176, %v6287
      %v6538 = vmul.f32 %v177, %v6287
      %v6539 = vmul.f32 %v178, %v6287
      %v6540 = vmul.f32 %v179, %v6291
      %v6541 = vmul.f32 %v180, %v6291
      %v6542 = vmul.f32 %v181, %v6291
      %v6543 = vmul.f32 %v182, %v6295
      %v6544 = vmul.f32 %v183, %v6295
      %v6545 = vmul.f32 %v184, %v6295
      %v6546 = vmul.f32 %v185, %v6299
      %v6547 = vmul.f32 %v186, %v6299
      %v6548 = vmul.f32 %v187, %v6299
      %v6549 = vmul.f32 %v188, %v6303
      %v6550 = vmul.f32 %v189, %v6303
      %v6551 = vmul.f32 %v190, %v6303
      %v6552 = vmul.f32 %v191, %v6307
      %v6553 = vmul.f32 %v192, %v6307
      %v6554 = vmul.f32 %v193, %v6307
      %v6555 = vmul.f32 %v194, %v6311
      %v6556 = vmul.f32 %v195, %v6311
      %v6557 = vmul.f32 %v196, %v6311
      %v6558 = vmul.f32 %v197, %v6315
      %v6559 = vmul.f32 %v198, %v6315
      %v6560 = vmul.f32 %v199, %v6315
      %v6561 = vmul.f32 %v200, %v6319
      %v6562 = vmul.f32 %v201, %v6319
      %v6563 = vmul.f32 %v202, %v6319
      %v6564 = vmul.f32 %v203, %v6323
      %v6565 = vmul.f32 %v204, %v6323
      %v6566 = vmul.f32 %v205, %v6323
      %v6567 = vmul.f32 %v206, %v6327
      %v6568 = vmul.f32 %v207, %v6327
      %v6569 = vmul.f32 %v208, %v6327
      %v6570 = vmul.f32 %v209, %v6331
      %v6571 = vmul.f32 %v210, %v6331
      %v6572 = vmul.f32 %v211, %v6331
      %v6573 = vmul.f32 %v212, %v6335
      %v6574 = vmul.f32 %v213, %v6335
      %v6575 = vmul.f32 %v214, %v6335
      %v6576 = vmul.f32 %v215, %v6339
      %v6577 = vmul.f32 %v216, %v6339
      %v6578 = vmul.f32 %v217, %v6339
      %v6579 = vmul.f32 %v218, %v6343
      %v6580 = vmul.f32 %v219, %v6343
      %v6581 = vmul.f32 %v220, %v6343
      %v6582 = vmul.f32 %v221, %v6347
      %v6583 = vmul.f32 %v222, %v6347
      %v6584 = vmul.f32 %v223, %v6347
      %v6585 = vmul.f32 %v224, %v6351
      %v6586 = vmul.f32 %v225, %v6351
      %v6587 = vmul.f32 %v226, %v6351
      %v6588 = vmul.f32 %v227, %v6355
      %v6589 = vmul.f32 %v228, %v6355
      %v6590 = vmul.f32 %v229, %v6355
      %v6591 = vmul.f32 %v230, %v6359
      %v6592 = vmul.f32 %v231, %v6359
      %v6593 = vmul.f32 %v232, %v6359
      %v6594 = vmul.f32 %v233, %v6363
      %v6595 = vmul.f32 %v234, %v6363
      %v6596 = vmul.f32 %v235, %v6363
      %v6597 = vmul.f32 %v236, %v6367
      %v6598 = vmul.f32 %v237, %v6367
      %v6599 = vmul.f32 %v238, %v6367
      %v6600 = vmul.f32 %v239, %v6371
      %v6601 = vmul.f32 %v240, %v6371
      %v6602 = vmul.f32 %v241, %v6371
      %v6603 = vmul.f32 %v242, %v6375
      %v6604 = vmul.f32 %v243, %v6375
      %v6605 = vmul.f32 %v244, %v6375
      %v6606 = vmul.f32 %v245, %v6379
      %v6607 = vmul.f32 %v246, %v6379
      %v6608 = vmul.f32 %v247, %v6379
      %v6609 = vmul.f32 %v248, %v6383
      %v6610 = vmul.f32 %v249, %v6383
      %v6611 = vmul.f32 %v250, %v6383
      %v6612 = vmul.f32 %v251, %v6387
      %v6613 = vmul.f32 %v252, %v6387
      %v6614 = vmul.f32 %v253, %v6387
      %v6615 = vmul.f32 %v254, %v6391
      %v6616 = vmul.f32 %v255, %v6391
      %v6617 = vmul.f32 %v256, %v6391
      %v6618 = vmul.f32 %v257, %v6395
      %v6619 = vmul.f32 %v258, %v6395
      %v6620 = vmul.f32 %v259, %v6395
      %v6621 = vmul.f32 %v260, %v6399
      %v6622 = vmul.f32 %v261, %v6399
      %v6623 = vmul.f32 %v262, %v6399
      %v6624 = vmul.f32 %v263, %v6403
      %v6625 = vmul.f32 %v264, %v6403
      %v6626 = vmul.f32 %v265, %v6403
      %v6627 = vmul.f32 %v266, %v6407
      %v6628 = vmul.f32 %v267, %v6407
      %v6629 = vmul.f32 %v268, %v6407
      %v6630 = vmul.f32 %v269, %v6411
      %v6631 = vmul.f32 %v270, %v6411
      %v6632 = vmul.f32 %v271, %v6411
      %v6633 = vmul.f32 %v272, %v6415
      %v6634 = vmul.f32 %v273, %v6415
      %v6635 = vmul.f32 %v274, %v6415
      %v6636 = vmul.f32 %v275, %v6419
      %v6637 = vmul.f32 %v276, %v6419
      %v6638 = vmul.f32 %v277, %v6419
      %v6639 = vmul.f32 %v278, %v6423
      %v6640 = vmul.f32 %v279, %v6423
      %v6641 = vmul.f32 %v280, %v6423
      %v6642 = vmul.f32 %v281, %v6427
      %v6643 = vmul.f32 %v282, %v6427
      %v6644 = vmul.f32 %v283, %v6427
      %v6645 = vmul.f32 %v284, %v6431
      %v6646 = vmul.f32 %v285, %v6431
      %v6647 = vmul.f32 %v286, %v6431
      %v6648 = vmul.f32 %v287, %v6435
      %v6649 = vmul.f32 %v288, %v6435
      %v6650 = vmul.f32 %v289, %v6435
      %v6651 = vmul.f32 %v290, %v6439
      %v6652 = vmul.f32 %v291, %v6439
      %v6653 = vmul.f32 %v292, %v6439
      %v6654 = vmul.f32 %v293, %v6443
      %v6655 = vmul.f32 %v294, %v6443
      %v6656 = vmul.f32 %v295, %v6443
      %v6657 = vmul.f32 %v296, %v6447
      %v6658 = vmul.f32 %v297, %v6447
      %v6659 = vmul.f32 %v298, %v6447
      %v6660 = vmul.f32 %v299, %v6451
      %v6661 = vmul.f32 %v300, %v6451
      %v6662 = vmul.f32 %v301, %v6451
      %v6663 = vmul.f32 %v302, %v6455
      %v6664 = vmul.f32 %v303, %v6455
      %v6665 = vmul.f32 %v304, %v6455
      %v6666 = vmul.f32 %v305, %v6459
      %v6667 = vmul.f32 %v306, %v6459
      %v6668 = vmul.f32 %v307, %v6459
      %v6669 = vmul.f32 %v308, %v6463
      %v6670 = vmul.f32 %v309, %v6463
      %v6671 = vmul.f32 %v310, %v6463
      %v6672 = vmul.f32 %v311, %v6467
      %v6673 = vmul.f32 %v312, %v6467
      %v6674 = vmul.f32 %v313, %v6467
      %v6675 = vmul.f32 %v314, %v6471
      %v6676 = vmul.f32 %v315, %v6471
      %v6677 = vmul.f32 %v316, %v6471
      %v6678 = vmul.f32 %v317, %v6475
      %v6679 = vmul.f32 %v318, %v6475
      %v6680 = vmul.f32 %v319, %v6475
      %v6681 = vmul.f32 %v320, %v6479
      %v6682 = vmul.f32 %v321, %v6479
      %v6683 = vmul.f32 %v322, %v6479
      %v6684 = vmul.f32 %v323, %v6483
      %v6685 = vmul.f32 %v324, %v6483
      %v6686 = vmul.f32 %v325, %v6483
      %v6687 = vmul.f32 %v326, %v6487
      %v6688 = vmul.f32 %v327, %v6487
      %v6689 = vmul.f32 %v328, %v6487
      %v6690 = vmul.f32 %v329, %v6491
      %v6691 = vmul.f32 %v330, %v6491
      %v6692 = vmul.f32 %v331, %v6491
      %v6693 = vmul.f32 %v332, %v6495
      %v6694 = vmul.f32 %v333, %v6495
      %v6695 = vmul.f32 %v334, %v6495
      %v6696 = vmul.f32 %v335, %v6499
      %v6697 = vmul.f32 %v336, %v6499
      %v6698 = vmul.f32 %v337, %v6499
      %v6699 = vmul.f32 %v338, %v6503
      %v6700 = vmul.f32 %v339, %v6503
      %v6701 = vmul.f32 %v340, %v6503
      %v6702 = vmul.f32 %v341, %v6507
      %v6703 = vmul.f32 %v342, %v6507
      %v6704 = vmul.f32 %v343, %v6507
      %v6705 = vmul.f32 %v344, %v6511
      %v6706 = vmul.f32 %v345, %v6511
      %v6707 = vmul.f32 %v346, %v6511
      %v6708 = vmul.f32 %v347, %v6515
      %v6709 = vmul.f32 %v348, %v6515
      %v6710 = vmul.f32 %v349, %v6515
      %v6711 = vmul.f32 %v350, %v6519
      %v6712 = vmul.f32 %v351, %v6519
      %v6713 = vmul.f32 %v352, %v6519
      %v6714 = vmul.f32 %v353, %v6523
      %v6715 = vmul.f32 %v354, %v6523
      %v6716 = vmul.f32 %v355, %v6523
      %v6909 = vrot.slane %v6525, 1
      %v6910 = vrot.slane %v6526, 1
      %v6911 = vsel %vm4220, %v6909, %v6910
      %v6912 = vrot.slane %v6527, 1
      %v6913 = vsel %vm4220, %v6910, %v6912
      %v6914 = vrot.slane %v6528, 1
      %v6915 = vrot.slane %v6529, 1
      %v6916 = vsel %vm4220, %v6914, %v6915
      %v6917 = vrot.slane %v6530, 1
      %v6918 = vsel %vm4220, %v6915, %v6917
      %v6919 = vrot.slane %v6531, 1
      %v6920 = vrot.slane %v6532, 1
      %v6921 = vsel %vm4220, %v6919, %v6920
      %v6922 = vrot.slane %v6533, 1
      %v6923 = vsel %vm4220, %v6920, %v6922
      %v6924 = vrot.slane %v6534, 1
      %v6925 = vrot.slane %v6535, 1
      %v6926 = vsel %vm4220, %v6924, %v6925
      %v6927 = vrot.slane %v6536, 1
      %v6928 = vsel %vm4220, %v6925, %v6927
      %v6929 = vrot.slane %v6537, 1
      %v6930 = vrot.slane %v6538, 1
      %v6931 = vsel %vm4220, %v6929, %v6930
      %v6932 = vrot.slane %v6539, 1
      %v6933 = vsel %vm4220, %v6930, %v6932
      %v6934 = vrot.slane %v6540, 1
      %v6935 = vrot.slane %v6541, 1
      %v6936 = vsel %vm4220, %v6934, %v6935
      %v6937 = vrot.slane %v6542, 1
      %v6938 = vsel %vm4220, %v6935, %v6937
      %v6939 = vrot.slane %v6543, 1
      %v6940 = vrot.slane %v6544, 1
      %v6941 = vsel %vm4220, %v6939, %v6940
      %v6942 = vrot.slane %v6545, 1
      %v6943 = vsel %vm4220, %v6940, %v6942
      %v6944 = vrot.slane %v6546, 1
      %v6945 = vrot.slane %v6547, 1
      %v6946 = vsel %vm4220, %v6944, %v6945
      %v6947 = vrot.slane %v6548, 1
      %v6948 = vsel %vm4220, %v6945, %v6947
      %v6949 = vrot.slane %v6549, 1
      %v6950 = vrot.slane %v6550, 1
      %v6951 = vsel %vm4220, %v6949, %v6950
      %v6952 = vrot.slane %v6551, 1
      %v6953 = vsel %vm4220, %v6950, %v6952
      %v6954 = vrot.slane %v6552, 1
      %v6955 = vrot.slane %v6553, 1
      %v6956 = vsel %vm4220, %v6954, %v6955
      %v6957 = vrot.slane %v6554, 1
      %v6958 = vsel %vm4220, %v6955, %v6957
      %v6959 = vrot.slane %v6555, 1
      %v6960 = vrot.slane %v6556, 1
      %v6961 = vsel %vm4220, %v6959, %v6960
      %v6962 = vrot.slane %v6557, 1
      %v6963 = vsel %vm4220, %v6960, %v6962
      %v6964 = vrot.slane %v6558, 1
      %v6965 = vrot.slane %v6559, 1
      %v6966 = vsel %vm4220, %v6964, %v6965
      %v6967 = vrot.slane %v6560, 1
      %v6968 = vsel %vm4220, %v6965, %v6967
      %v6969 = vrot.slane %v6561, 1
      %v6970 = vrot.slane %v6562, 1
      %v6971 = vsel %vm4220, %v6969, %v6970
      %v6972 = vrot.slane %v6563, 1
      %v6973 = vsel %vm4220, %v6970, %v6972
      %v6974 = vrot.slane %v6564, 1
      %v6975 = vrot.slane %v6565, 1
      %v6976 = vsel %vm4220, %v6974, %v6975
      %v6977 = vrot.slane %v6566, 1
      %v6978 = vsel %vm4220, %v6975, %v6977
      %v6979 = vrot.slane %v6567, 1
      %v6980 = vrot.slane %v6568, 1
      %v6981 = vsel %vm4220, %v6979, %v6980
      %v6982 = vrot.slane %v6569, 1
      %v6983 = vsel %vm4220, %v6980, %v6982
      %v6984 = vrot.slane %v6570, 1
      %v6985 = vrot.slane %v6571, 1
      %v6986 = vsel %vm4220, %v6984, %v6985
      %v6987 = vrot.slane %v6572, 1
      %v6988 = vsel %vm4220, %v6985, %v6987
      %v6989 = vrot.slane %v6573, 1
      %v6990 = vrot.slane %v6574, 1
      %v6991 = vsel %vm4220, %v6989, %v6990
      %v6992 = vrot.slane %v6575, 1
      %v6993 = vsel %vm4220, %v6990, %v6992
      %v6994 = vrot.slane %v6576, 1
      %v6995 = vrot.slane %v6577, 1
      %v6996 = vsel %vm4220, %v6994, %v6995
      %v6997 = vrot.slane %v6578, 1
      %v6998 = vsel %vm4220, %v6995, %v6997
      %v6999 = vrot.slane %v6579, 1
      %v7000 = vrot.slane %v6580, 1
      %v7001 = vsel %vm4220, %v6999, %v7000
      %v7002 = vrot.slane %v6581, 1
      %v7003 = vsel %vm4220, %v7000, %v7002
      %v7004 = vrot.slane %v6582, 1
      %v7005 = vrot.slane %v6583, 1
      %v7006 = vsel %vm4220, %v7004, %v7005
      %v7007 = vrot.slane %v6584, 1
      %v7008 = vsel %vm4220, %v7005, %v7007
      %v7009 = vrot.slane %v6585, 1
      %v7010 = vrot.slane %v6586, 1
      %v7011 = vsel %vm4220, %v7009, %v7010
      %v7012 = vrot.slane %v6587, 1
      %v7013 = vsel %vm4220, %v7010, %v7012
      %v7014 = vrot.slane %v6588, 1
      %v7015 = vrot.slane %v6589, 1
      %v7016 = vsel %vm4220, %v7014, %v7015
      %v7017 = vrot.slane %v6590, 1
      %v7018 = vsel %vm4220, %v7015, %v7017
      %v7019 = vrot.slane %v6591, 1
      %v7020 = vrot.slane %v6592, 1
      %v7021 = vsel %vm4220, %v7019, %v7020
      %v7022 = vrot.slane %v6593, 1
      %v7023 = vsel %vm4220, %v7020, %v7022
      %v7024 = vrot.slane %v6594, 1
      %v7025 = vrot.slane %v6595, 1
      %v7026 = vsel %vm4220, %v7024, %v7025
      %v7027 = vrot.slane %v6596, 1
      %v7028 = vsel %vm4220, %v7025, %v7027
      %v7029 = vrot.slane %v6597, 1
      %v7030 = vrot.slane %v6598, 1
      %v7031 = vsel %vm4220, %v7029, %v7030
      %v7032 = vrot.slane %v6599, 1
      %v7033 = vsel %vm4220, %v7030, %v7032
      %v7034 = vrot.slane %v6600, 1
      %v7035 = vrot.slane %v6601, 1
      %v7036 = vsel %vm4220, %v7034, %v7035
      %v7037 = vrot.slane %v6602, 1
      %v7038 = vsel %vm4220, %v7035, %v7037
      %v7039 = vrot.slane %v6603, 1
      %v7040 = vrot.slane %v6604, 1
      %v7041 = vsel %vm4220, %v7039, %v7040
      %v7042 = vrot.slane %v6605, 1
      %v7043 = vsel %vm4220, %v7040, %v7042
      %v7044 = vrot.slane %v6606, 1
      %v7045 = vrot.slane %v6607, 1
      %v7046 = vsel %vm4220, %v7044, %v7045
      %v7047 = vrot.slane %v6608, 1
      %v7048 = vsel %vm4220, %v7045, %v7047
      %v7049 = vrot.slane %v6609, 1
      %v7050 = vrot.slane %v6610, 1
      %v7051 = vsel %vm4220, %v7049, %v7050
      %v7052 = vrot.slane %v6611, 1
      %v7053 = vsel %vm4220, %v7050, %v7052
      %v7054 = vrot.slane %v6612, 1
      %v7055 = vrot.slane %v6613, 1
      %v7056 = vsel %vm4220, %v7054, %v7055
      %v7057 = vrot.slane %v6614, 1
      %v7058 = vsel %vm4220, %v7055, %v7057
      %v7059 = vrot.slane %v6615, 1
      %v7060 = vrot.slane %v6616, 1
      %v7061 = vsel %vm4220, %v7059, %v7060
      %v7062 = vrot.slane %v6617, 1
      %v7063 = vsel %vm4220, %v7060, %v7062
      %v7064 = vrot.slane %v6618, 1
      %v7065 = vrot.slane %v6619, 1
      %v7066 = vsel %vm4220, %v7064, %v7065
      %v7067 = vrot.slane %v6620, 1
      %v7068 = vsel %vm4220, %v7065, %v7067
      %v7069 = vrot.slane %v6621, 1
      %v7070 = vrot.slane %v6622, 1
      %v7071 = vsel %vm4220, %v7069, %v7070
      %v7072 = vrot.slane %v6623, 1
      %v7073 = vsel %vm4220, %v7070, %v7072
      %v7074 = vrot.slane %v6624, 1
      %v7075 = vrot.slane %v6625, 1
      %v7076 = vsel %vm4220, %v7074, %v7075
      %v7077 = vrot.slane %v6626, 1
      %v7078 = vsel %vm4220, %v7075, %v7077
      %v7079 = vrot.slane %v6627, 1
      %v7080 = vrot.slane %v6628, 1
      %v7081 = vsel %vm4220, %v7079, %v7080
      %v7082 = vrot.slane %v6629, 1
      %v7083 = vsel %vm4220, %v7080, %v7082
      %v7084 = vrot.slane %v6630, 1
      %v7085 = vrot.slane %v6631, 1
      %v7086 = vsel %vm4220, %v7084, %v7085
      %v7087 = vrot.slane %v6632, 1
      %v7088 = vsel %vm4220, %v7085, %v7087
      %v7089 = vrot.slane %v6633, 1
      %v7090 = vrot.slane %v6634, 1
      %v7091 = vsel %vm4220, %v7089, %v7090
      %v7092 = vrot.slane %v6635, 1
      %v7093 = vsel %vm4220, %v7090, %v7092
      %v7094 = vrot.slane %v6636, 1
      %v7095 = vrot.slane %v6637, 1
      %v7096 = vsel %vm4220, %v7094, %v7095
      %v7097 = vrot.slane %v6638, 1
      %v7098 = vsel %vm4220, %v7095, %v7097
      %v7099 = vrot.slane %v6639, 1
      %v7100 = vrot.slane %v6640, 1
      %v7101 = vsel %vm4220, %v7099, %v7100
      %v7102 = vrot.slane %v6641, 1
      %v7103 = vsel %vm4220, %v7100, %v7102
      %v7104 = vrot.slane %v6642, 1
      %v7105 = vrot.slane %v6643, 1
      %v7106 = vsel %vm4220, %v7104, %v7105
      %v7107 = vrot.slane %v6644, 1
      %v7108 = vsel %vm4220, %v7105, %v7107
      %v7109 = vrot.slane %v6645, 1
      %v7110 = vrot.slane %v6646, 1
      %v7111 = vsel %vm4220, %v7109, %v7110
      %v7112 = vrot.slane %v6647, 1
      %v7113 = vsel %vm4220, %v7110, %v7112
      %v7114 = vrot.slane %v6648, 1
      %v7115 = vrot.slane %v6649, 1
      %v7116 = vsel %vm4220, %v7114, %v7115
      %v7117 = vrot.slane %v6650, 1
      %v7118 = vsel %vm4220, %v7115, %v7117
      %v7119 = vrot.slane %v6651, 1
      %v7120 = vrot.slane %v6652, 1
      %v7121 = vsel %vm4220, %v7119, %v7120
      %v7122 = vrot.slane %v6653, 1
      %v7123 = vsel %vm4220, %v7120, %v7122
      %v7124 = vrot.slane %v6654, 1
      %v7125 = vrot.slane %v6655, 1
      %v7126 = vsel %vm4220, %v7124, %v7125
      %v7127 = vrot.slane %v6656, 1
      %v7128 = vsel %vm4220, %v7125, %v7127
      %v7129 = vrot.slane %v6657, 1
      %v7130 = vrot.slane %v6658, 1
      %v7131 = vsel %vm4220, %v7129, %v7130
      %v7132 = vrot.slane %v6659, 1
      %v7133 = vsel %vm4220, %v7130, %v7132
      %v7134 = vrot.slane %v6660, 1
      %v7135 = vrot.slane %v6661, 1
      %v7136 = vsel %vm4220, %v7134, %v7135
      %v7137 = vrot.slane %v6662, 1
      %v7138 = vsel %vm4220, %v7135, %v7137
      %v7139 = vrot.slane %v6663, 1
      %v7140 = vrot.slane %v6664, 1
      %v7141 = vsel %vm4220, %v7139, %v7140
      %v7142 = vrot.slane %v6665, 1
      %v7143 = vsel %vm4220, %v7140, %v7142
      %v7144 = vrot.slane %v6666, 1
      %v7145 = vrot.slane %v6667, 1
      %v7146 = vsel %vm4220, %v7144, %v7145
      %v7147 = vrot.slane %v6668, 1
      %v7148 = vsel %vm4220, %v7145, %v7147
      %v7149 = vrot.slane %v6669, 1
      %v7150 = vrot.slane %v6670, 1
      %v7151 = vsel %vm4220, %v7149, %v7150
      %v7152 = vrot.slane %v6671, 1
      %v7153 = vsel %vm4220, %v7150, %v7152
      %v7154 = vrot.slane %v6672, 1
      %v7155 = vrot.slane %v6673, 1
      %v7156 = vsel %vm4220, %v7154, %v7155
      %v7157 = vrot.slane %v6674, 1
      %v7158 = vsel %vm4220, %v7155, %v7157
      %v7159 = vrot.slane %v6675, 1
      %v7160 = vrot.slane %v6676, 1
      %v7161 = vsel %vm4220, %v7159, %v7160
      %v7162 = vrot.slane %v6677, 1
      %v7163 = vsel %vm4220, %v7160, %v7162
      %v7164 = vrot.slane %v6678, 1
      %v7165 = vrot.slane %v6679, 1
      %v7166 = vsel %vm4220, %v7164, %v7165
      %v7167 = vrot.slane %v6680, 1
      %v7168 = vsel %vm4220, %v7165, %v7167
      %v7169 = vrot.slane %v6681, 1
      %v7170 = vrot.slane %v6682, 1
      %v7171 = vsel %vm4220, %v7169, %v7170
      %v7172 = vrot.slane %v6683, 1
      %v7173 = vsel %vm4220, %v7170, %v7172
      %v7174 = vrot.slane %v6684, 1
      %v7175 = vrot.slane %v6685, 1
      %v7176 = vsel %vm4220, %v7174, %v7175
      %v7177 = vrot.slane %v6686, 1
      %v7178 = vsel %vm4220, %v7175, %v7177
      %v7179 = vrot.slane %v6687, 1
      %v7180 = vrot.slane %v6688, 1
      %v7181 = vsel %vm4220, %v7179, %v7180
      %v7182 = vrot.slane %v6689, 1
      %v7183 = vsel %vm4220, %v7180, %v7182
      %v7184 = vrot.slane %v6690, 1
      %v7185 = vrot.slane %v6691, 1
      %v7186 = vsel %vm4220, %v7184, %v7185
      %v7187 = vrot.slane %v6692, 1
      %v7188 = vsel %vm4220, %v7185, %v7187
      %v7189 = vrot.slane %v6693, 1
      %v7190 = vrot.slane %v6694, 1
      %v7191 = vsel %vm4220, %v7189, %v7190
      %v7192 = vrot.slane %v6695, 1
      %v7193 = vsel %vm4220, %v7190, %v7192
      %v7194 = vrot.slane %v6696, 1
      %v7195 = vrot.slane %v6697, 1
      %v7196 = vsel %vm4220, %v7194, %v7195
      %v7197 = vrot.slane %v6698, 1
      %v7198 = vsel %vm4220, %v7195, %v7197
      %v7199 = vrot.slane %v6699, 1
      %v7200 = vrot.slane %v6700, 1
      %v7201 = vsel %vm4220, %v7199, %v7200
      %v7202 = vrot.slane %v6701, 1
      %v7203 = vsel %vm4220, %v7200, %v7202
      %v7204 = vrot.slane %v6702, 1
      %v7205 = vrot.slane %v6703, 1
      %v7206 = vsel %vm4220, %v7204, %v7205
      %v7207 = vrot.slane %v6704, 1
      %v7208 = vsel %vm4220, %v7205, %v7207
      %v7209 = vrot.slane %v6705, 1
      %v7210 = vrot.slane %v6706, 1
      %v7211 = vsel %vm4220, %v7209, %v7210
      %v7212 = vrot.slane %v6707, 1
      %v7213 = vsel %vm4220, %v7210, %v7212
      %v7214 = vrot.slane %v6708, 1
      %v7215 = vrot.slane %v6709, 1
      %v7216 = vsel %vm4220, %v7214, %v7215
      %v7217 = vrot.slane %v6710, 1
      %v7218 = vsel %vm4220, %v7215, %v7217
      %v7219 = vrot.slane %v6711, 1
      %v7220 = vrot.slane %v6712, 1
      %v7221 = vsel %vm4220, %v7219, %v7220
      %v7222 = vrot.slane %v6713, 1
      %v7223 = vsel %vm4220, %v7220, %v7222
      %v7224 = vrot.slane %v6714, 1
      %v7225 = vrot.slane %v6715, 1
      %v7226 = vsel %vm4220, %v7224, %v7225
      %v7227 = vrot.slane %v6716, 1
      %v7228 = vsel %vm4220, %v7225, %v7227
      %7229 = vrot.lane.b32.xlu0 %v6911, 126
      %v7230 = vpop.permute.xlu0 %7229
      %7231 = vrot.lane.b32.xlu0 %v6913, 126
      %v7232 = vpop.permute.xlu0 %7231
      %7233 = vrot.lane.b32.xlu0 %v6916, 126
      %v7234 = vpop.permute.xlu0 %7233
      %7235 = vrot.lane.b32.xlu0 %v6918, 126
      %v7236 = vpop.permute.xlu0 %7235
      %7237 = vrot.lane.b32.xlu0 %v6921, 126
      %v7238 = vpop.permute.xlu0 %7237
      %7239 = vrot.lane.b32.xlu0 %v6923, 126
      %v7240 = vpop.permute.xlu0 %7239
      %7241 = vrot.lane.b32.xlu0 %v6926, 126
      %v7242 = vpop.permute.xlu0 %7241
      %7243 = vrot.lane.b32.xlu0 %v6928, 126
      %v7244 = vpop.permute.xlu0 %7243
      %7245 = vrot.lane.b32.xlu0 %v6931, 126
      %v7246 = vpop.permute.xlu0 %7245
      %7247 = vrot.lane.b32.xlu0 %v6933, 126
      %v7248 = vpop.permute.xlu0 %7247
      %7249 = vrot.lane.b32.xlu0 %v6936, 126
      %v7250 = vpop.permute.xlu0 %7249
      %7251 = vrot.lane.b32.xlu0 %v6938, 126
      %v7252 = vpop.permute.xlu0 %7251
      %7253 = vrot.lane.b32.xlu0 %v6941, 126
      %v7254 = vpop.permute.xlu0 %7253
      %7255 = vrot.lane.b32.xlu0 %v6943, 126
      %v7256 = vpop.permute.xlu0 %7255
      %7257 = vrot.lane.b32.xlu0 %v6946, 126
      %v7258 = vpop.permute.xlu0 %7257
      %7259 = vrot.lane.b32.xlu0 %v6948, 126
      %v7260 = vpop.permute.xlu0 %7259
      %7261 = vrot.lane.b32.xlu0 %v6951, 126
      %v7262 = vpop.permute.xlu0 %7261
      %7263 = vrot.lane.b32.xlu0 %v6953, 126
      %v7264 = vpop.permute.xlu0 %7263
      %7265 = vrot.lane.b32.xlu0 %v6956, 126
      %v7266 = vpop.permute.xlu0 %7265
      %7267 = vrot.lane.b32.xlu0 %v6958, 126
      %v7268 = vpop.permute.xlu0 %7267
      %7269 = vrot.lane.b32.xlu0 %v6961, 126
      %v7270 = vpop.permute.xlu0 %7269
      %7271 = vrot.lane.b32.xlu0 %v6963, 126
      %v7272 = vpop.permute.xlu0 %7271
      %7273 = vrot.lane.b32.xlu0 %v6966, 126
      %v7274 = vpop.permute.xlu0 %7273
      %7275 = vrot.lane.b32.xlu0 %v6968, 126
      %v7276 = vpop.permute.xlu0 %7275
      %7277 = vrot.lane.b32.xlu0 %v6971, 126
      %v7278 = vpop.permute.xlu0 %7277
      %7279 = vrot.lane.b32.xlu0 %v6973, 126
      %v7280 = vpop.permute.xlu0 %7279
      %7281 = vrot.lane.b32.xlu0 %v6976, 126
      %v7282 = vpop.permute.xlu0 %7281
      %7283 = vrot.lane.b32.xlu0 %v6978, 126
      %v7284 = vpop.permute.xlu0 %7283
      %7285 = vrot.lane.b32.xlu0 %v6981, 126
      %v7286 = vpop.permute.xlu0 %7285
      %7287 = vrot.lane.b32.xlu0 %v6983, 126
      %v7288 = vpop.permute.xlu0 %7287
      %7289 = vrot.lane.b32.xlu0 %v6986, 126
      %v7290 = vpop.permute.xlu0 %7289
      %7291 = vrot.lane.b32.xlu0 %v6988, 126
      %v7292 = vpop.permute.xlu0 %7291
      %7293 = vrot.lane.b32.xlu0 %v6991, 126
      %v7294 = vpop.permute.xlu0 %7293
      %7295 = vrot.lane.b32.xlu0 %v6993, 126
      %v7296 = vpop.permute.xlu0 %7295
      %7297 = vrot.lane.b32.xlu0 %v6996, 126
      %v7298 = vpop.permute.xlu0 %7297
      %7299 = vrot.lane.b32.xlu0 %v6998, 126
      %v7300 = vpop.permute.xlu0 %7299
      %7301 = vrot.lane.b32.xlu0 %v7001, 126
      %v7302 = vpop.permute.xlu0 %7301
      %7303 = vrot.lane.b32.xlu0 %v7003, 126
      %v7304 = vpop.permute.xlu0 %7303
      %7305 = vrot.lane.b32.xlu0 %v7006, 126
      %v7306 = vpop.permute.xlu0 %7305
      %7307 = vrot.lane.b32.xlu0 %v7008, 126
      %v7308 = vpop.permute.xlu0 %7307
      %7309 = vrot.lane.b32.xlu0 %v7011, 126
      %v7310 = vpop.permute.xlu0 %7309
      %7311 = vrot.lane.b32.xlu0 %v7013, 126
      %v7312 = vpop.permute.xlu0 %7311
      %7313 = vrot.lane.b32.xlu0 %v7016, 126
      %v7314 = vpop.permute.xlu0 %7313
      %7315 = vrot.lane.b32.xlu0 %v7018, 126
      %v7316 = vpop.permute.xlu0 %7315
      %7317 = vrot.lane.b32.xlu0 %v7021, 126
      %v7318 = vpop.permute.xlu0 %7317
      %7319 = vrot.lane.b32.xlu0 %v7023, 126
      %v7320 = vpop.permute.xlu0 %7319
      %7321 = vrot.lane.b32.xlu0 %v7026, 126
      %v7322 = vpop.permute.xlu0 %7321
      %7323 = vrot.lane.b32.xlu0 %v7028, 126
      %v7324 = vpop.permute.xlu0 %7323
      %7325 = vrot.lane.b32.xlu0 %v7031, 126
      %v7326 = vpop.permute.xlu0 %7325
      %7327 = vrot.lane.b32.xlu0 %v7033, 126
      %v7328 = vpop.permute.xlu0 %7327
      %7329 = vrot.lane.b32.xlu0 %v7036, 126
      %v7330 = vpop.permute.xlu0 %7329
      %7331 = vrot.lane.b32.xlu0 %v7038, 126
      %v7332 = vpop.permute.xlu0 %7331
      %7333 = vrot.lane.b32.xlu0 %v7041, 126
      %v7334 = vpop.permute.xlu0 %7333
      %7335 = vrot.lane.b32.xlu0 %v7043, 126
      %v7336 = vpop.permute.xlu0 %7335
      %7337 = vrot.lane.b32.xlu0 %v7046, 126
      %v7338 = vpop.permute.xlu0 %7337
      %7339 = vrot.lane.b32.xlu0 %v7048, 126
      %v7340 = vpop.permute.xlu0 %7339
      %7341 = vrot.lane.b32.xlu0 %v7051, 126
      %v7342 = vpop.permute.xlu0 %7341
      %7343 = vrot.lane.b32.xlu0 %v7053, 126
      %v7344 = vpop.permute.xlu0 %7343
      %7345 = vrot.lane.b32.xlu0 %v7056, 126
      %v7346 = vpop.permute.xlu0 %7345
      %7347 = vrot.lane.b32.xlu0 %v7058, 126
      %v7348 = vpop.permute.xlu0 %7347
      %7349 = vrot.lane.b32.xlu0 %v7061, 126
      %v7350 = vpop.permute.xlu0 %7349
      %7351 = vrot.lane.b32.xlu0 %v7063, 126
      %v7352 = vpop.permute.xlu0 %7351
      %7353 = vrot.lane.b32.xlu0 %v7066, 126
      %v7354 = vpop.permute.xlu0 %7353
      %7355 = vrot.lane.b32.xlu0 %v7068, 126
      %v7356 = vpop.permute.xlu0 %7355
      %7357 = vrot.lane.b32.xlu0 %v7071, 126
      %v7358 = vpop.permute.xlu0 %7357
      %7359 = vrot.lane.b32.xlu0 %v7073, 126
      %v7360 = vpop.permute.xlu0 %7359
      %7361 = vrot.lane.b32.xlu0 %v7076, 126
      %v7362 = vpop.permute.xlu0 %7361
      %7363 = vrot.lane.b32.xlu0 %v7078, 126
      %v7364 = vpop.permute.xlu0 %7363
      %7365 = vrot.lane.b32.xlu0 %v7081, 126
      %v7366 = vpop.permute.xlu0 %7365
      %7367 = vrot.lane.b32.xlu0 %v7083, 126
      %v7368 = vpop.permute.xlu0 %7367
      %7369 = vrot.lane.b32.xlu0 %v7086, 126
      %v7370 = vpop.permute.xlu0 %7369
      %7371 = vrot.lane.b32.xlu0 %v7088, 126
      %v7372 = vpop.permute.xlu0 %7371
      %7373 = vrot.lane.b32.xlu0 %v7091, 126
      %v7374 = vpop.permute.xlu0 %7373
      %7375 = vrot.lane.b32.xlu0 %v7093, 126
      %v7376 = vpop.permute.xlu0 %7375
      %7377 = vrot.lane.b32.xlu0 %v7096, 126
      %v7378 = vpop.permute.xlu0 %7377
      %7379 = vrot.lane.b32.xlu0 %v7098, 126
      %v7380 = vpop.permute.xlu0 %7379
      %7381 = vrot.lane.b32.xlu0 %v7101, 126
      %v7382 = vpop.permute.xlu0 %7381
      %7383 = vrot.lane.b32.xlu0 %v7103, 126
      %v7384 = vpop.permute.xlu0 %7383
      %7385 = vrot.lane.b32.xlu0 %v7106, 126
      %v7386 = vpop.permute.xlu0 %7385
      %7387 = vrot.lane.b32.xlu0 %v7108, 126
      %v7388 = vpop.permute.xlu0 %7387
      %7389 = vrot.lane.b32.xlu0 %v7111, 126
      %v7390 = vpop.permute.xlu0 %7389
      %7391 = vrot.lane.b32.xlu0 %v7113, 126
      %v7392 = vpop.permute.xlu0 %7391
      %7393 = vrot.lane.b32.xlu0 %v7116, 126
      %v7394 = vpop.permute.xlu0 %7393
      %7395 = vrot.lane.b32.xlu0 %v7118, 126
      %v7396 = vpop.permute.xlu0 %7395
      %7397 = vrot.lane.b32.xlu0 %v7121, 126
      %v7398 = vpop.permute.xlu0 %7397
      %7399 = vrot.lane.b32.xlu0 %v7123, 126
      %v7400 = vpop.permute.xlu0 %7399
      %7401 = vrot.lane.b32.xlu0 %v7126, 126
      %v7402 = vpop.permute.xlu0 %7401
      %7403 = vrot.lane.b32.xlu0 %v7128, 126
      %v7404 = vpop.permute.xlu0 %7403
      %7405 = vrot.lane.b32.xlu0 %v7131, 126
      %v7406 = vpop.permute.xlu0 %7405
      %7407 = vrot.lane.b32.xlu0 %v7133, 126
      %v7408 = vpop.permute.xlu0 %7407
      %7409 = vrot.lane.b32.xlu0 %v7136, 126
      %v7410 = vpop.permute.xlu0 %7409
      %7411 = vrot.lane.b32.xlu0 %v7138, 126
      %v7412 = vpop.permute.xlu0 %7411
      %7413 = vrot.lane.b32.xlu0 %v7141, 126
      %v7414 = vpop.permute.xlu0 %7413
      %7415 = vrot.lane.b32.xlu0 %v7143, 126
      %v7416 = vpop.permute.xlu0 %7415
      %7417 = vrot.lane.b32.xlu0 %v7146, 126
      %v7418 = vpop.permute.xlu0 %7417
      %7419 = vrot.lane.b32.xlu0 %v7148, 126
      %v7420 = vpop.permute.xlu0 %7419
      %7421 = vrot.lane.b32.xlu0 %v7151, 126
      %v7422 = vpop.permute.xlu0 %7421
      %7423 = vrot.lane.b32.xlu0 %v7153, 126
      %v7424 = vpop.permute.xlu0 %7423
      %7425 = vrot.lane.b32.xlu0 %v7156, 126
      %v7426 = vpop.permute.xlu0 %7425
      %7427 = vrot.lane.b32.xlu0 %v7158, 126
      %v7428 = vpop.permute.xlu0 %7427
      %7429 = vrot.lane.b32.xlu0 %v7161, 126
      %v7430 = vpop.permute.xlu0 %7429
      %7431 = vrot.lane.b32.xlu0 %v7163, 126
      %v7432 = vpop.permute.xlu0 %7431
      %7433 = vrot.lane.b32.xlu0 %v7166, 126
      %v7434 = vpop.permute.xlu0 %7433
      %7435 = vrot.lane.b32.xlu0 %v7168, 126
      %v7436 = vpop.permute.xlu0 %7435
      %7437 = vrot.lane.b32.xlu0 %v7171, 126
      %v7438 = vpop.permute.xlu0 %7437
      %7439 = vrot.lane.b32.xlu0 %v7173, 126
      %v7440 = vpop.permute.xlu0 %7439
      %7441 = vrot.lane.b32.xlu0 %v7176, 126
      %v7442 = vpop.permute.xlu0 %7441
      %7443 = vrot.lane.b32.xlu0 %v7178, 126
      %v7444 = vpop.permute.xlu0 %7443
      %7445 = vrot.lane.b32.xlu0 %v7181, 126
      %v7446 = vpop.permute.xlu0 %7445
      %7447 = vrot.lane.b32.xlu0 %v7183, 126
      %v7448 = vpop.permute.xlu0 %7447
      %7449 = vrot.lane.b32.xlu0 %v7186, 126
      %v7450 = vpop.permute.xlu0 %7449
      %7451 = vrot.lane.b32.xlu0 %v7188, 126
      %v7452 = vpop.permute.xlu0 %7451
      %7453 = vrot.lane.b32.xlu0 %v7191, 126
      %v7454 = vpop.permute.xlu0 %7453
      %7455 = vrot.lane.b32.xlu0 %v7193, 126
      %v7456 = vpop.permute.xlu0 %7455
      %7457 = vrot.lane.b32.xlu0 %v7196, 126
      %v7458 = vpop.permute.xlu0 %7457
      %7459 = vrot.lane.b32.xlu0 %v7198, 126
      %v7460 = vpop.permute.xlu0 %7459
      %7461 = vrot.lane.b32.xlu0 %v7201, 126
      %v7462 = vpop.permute.xlu0 %7461
      %7463 = vrot.lane.b32.xlu0 %v7203, 126
      %v7464 = vpop.permute.xlu0 %7463
      %7465 = vrot.lane.b32.xlu0 %v7206, 126
      %v7466 = vpop.permute.xlu0 %7465
      %7467 = vrot.lane.b32.xlu0 %v7208, 126
      %v7468 = vpop.permute.xlu0 %7467
      %7469 = vrot.lane.b32.xlu0 %v7211, 126
      %v7470 = vpop.permute.xlu0 %7469
      %7471 = vrot.lane.b32.xlu0 %v7213, 126
      %v7472 = vpop.permute.xlu0 %7471
      %7473 = vrot.lane.b32.xlu0 %v7216, 126
      %v7474 = vpop.permute.xlu0 %7473
      %7475 = vrot.lane.b32.xlu0 %v7218, 126
      %v7476 = vpop.permute.xlu0 %7475
      %7477 = vrot.lane.b32.xlu0 %v7221, 126
      %v7478 = vpop.permute.xlu0 %7477
      %7479 = vrot.lane.b32.xlu0 %v7223, 126
      %v7480 = vpop.permute.xlu0 %7479
      %7481 = vrot.lane.b32.xlu0 %v7226, 126
      %v7482 = vpop.permute.xlu0 %7481
      %7483 = vrot.lane.b32.xlu0 %v7228, 126
      %v7484 = vpop.permute.xlu0 %7483
      %v7613 = vadd.f32 %v6141, %v7230
      %v7614 = vadd.f32 %v6142, %v7232
      %v7615 = vadd.f32 %v6143, %v7234
      %v7616 = vadd.f32 %v6144, %v7236
      %v7617 = vadd.f32 %v6145, %v7238
      %v7618 = vadd.f32 %v6146, %v7240
      %v7619 = vadd.f32 %v6147, %v7242
      %v7620 = vadd.f32 %v6148, %v7244
      %v7621 = vadd.f32 %v6149, %v7246
      %v7622 = vadd.f32 %v6150, %v7248
      %v7623 = vadd.f32 %v6151, %v7250
      %v7624 = vadd.f32 %v6152, %v7252
      %v7625 = vadd.f32 %v6153, %v7254
      %v7626 = vadd.f32 %v6154, %v7256
      %v7627 = vadd.f32 %v6155, %v7258
      %v7628 = vadd.f32 %v6156, %v7260
      %v7629 = vadd.f32 %v6157, %v7262
      %v7630 = vadd.f32 %v6158, %v7264
      %v7631 = vadd.f32 %v6159, %v7266
      %v7632 = vadd.f32 %v6160, %v7268
      %v7633 = vadd.f32 %v6161, %v7270
      %v7634 = vadd.f32 %v6162, %v7272
      %v7635 = vadd.f32 %v6163, %v7274
      %v7636 = vadd.f32 %v6164, %v7276
      %v7637 = vadd.f32 %v6165, %v7278
      %v7638 = vadd.f32 %v6166, %v7280
      %v7639 = vadd.f32 %v6167, %v7282
      %v7640 = vadd.f32 %v6168, %v7284
      %v7641 = vadd.f32 %v6169, %v7286
      %v7642 = vadd.f32 %v6170, %v7288
      %v7643 = vadd.f32 %v6171, %v7290
      %v7644 = vadd.f32 %v6172, %v7292
      %v7645 = vadd.f32 %v6173, %v7294
      %v7646 = vadd.f32 %v6174, %v7296
      %v7647 = vadd.f32 %v6175, %v7298
      %v7648 = vadd.f32 %v6176, %v7300
      %v7649 = vadd.f32 %v6177, %v7302
      %v7650 = vadd.f32 %v6178, %v7304
      %v7651 = vadd.f32 %v6179, %v7306
      %v7652 = vadd.f32 %v6180, %v7308
      %v7653 = vadd.f32 %v6181, %v7310
      %v7654 = vadd.f32 %v6182, %v7312
      %v7655 = vadd.f32 %v6183, %v7314
      %v7656 = vadd.f32 %v6184, %v7316
      %v7657 = vadd.f32 %v6185, %v7318
      %v7658 = vadd.f32 %v6186, %v7320
      %v7659 = vadd.f32 %v6187, %v7322
      %v7660 = vadd.f32 %v6188, %v7324
      %v7661 = vadd.f32 %v6189, %v7326
      %v7662 = vadd.f32 %v6190, %v7328
      %v7663 = vadd.f32 %v6191, %v7330
      %v7664 = vadd.f32 %v6192, %v7332
      %v7665 = vadd.f32 %v6193, %v7334
      %v7666 = vadd.f32 %v6194, %v7336
      %v7667 = vadd.f32 %v6195, %v7338
      %v7668 = vadd.f32 %v6196, %v7340
      %v7669 = vadd.f32 %v6197, %v7342
      %v7670 = vadd.f32 %v6198, %v7344
      %v7671 = vadd.f32 %v6199, %v7346
      %v7672 = vadd.f32 %v6200, %v7348
      %v7673 = vadd.f32 %v6201, %v7350
      %v7674 = vadd.f32 %v6202, %v7352
      %v7675 = vadd.f32 %v6203, %v7354
      %v7676 = vadd.f32 %v6204, %v7356
      %v7677 = vadd.f32 %v6205, %v7358
      %v7678 = vadd.f32 %v6206, %v7360
      %v7679 = vadd.f32 %v6207, %v7362
      %v7680 = vadd.f32 %v6208, %v7364
      %v7681 = vadd.f32 %v6209, %v7366
      %v7682 = vadd.f32 %v6210, %v7368
      %v7683 = vadd.f32 %v6211, %v7370
      %v7684 = vadd.f32 %v6212, %v7372
      %v7685 = vadd.f32 %v6213, %v7374
      %v7686 = vadd.f32 %v6214, %v7376
      %v7687 = vadd.f32 %v6215, %v7378
      %v7688 = vadd.f32 %v6216, %v7380
      %v7689 = vadd.f32 %v6217, %v7382
      %v7690 = vadd.f32 %v6218, %v7384
      %v7691 = vadd.f32 %v6219, %v7386
      %v7692 = vadd.f32 %v6220, %v7388
      %v7693 = vadd.f32 %v6221, %v7390
      %v7694 = vadd.f32 %v6222, %v7392
      %v7695 = vadd.f32 %v6223, %v7394
      %v7696 = vadd.f32 %v6224, %v7396
      %v7697 = vadd.f32 %v6225, %v7398
      %v7698 = vadd.f32 %v6226, %v7400
      %v7699 = vadd.f32 %v6227, %v7402
      %v7700 = vadd.f32 %v6228, %v7404
      %v7701 = vadd.f32 %v6229, %v7406
      %v7702 = vadd.f32 %v6230, %v7408
      %v7703 = vadd.f32 %v6231, %v7410
      %v7704 = vadd.f32 %v6232, %v7412
      %v7705 = vadd.f32 %v6233, %v7414
      %v7706 = vadd.f32 %v6234, %v7416
      %v7707 = vadd.f32 %v6235, %v7418
      %v7708 = vadd.f32 %v6236, %v7420
      %v7709 = vadd.f32 %v6237, %v7422
      %v7710 = vadd.f32 %v6238, %v7424
      %v7711 = vadd.f32 %v6239, %v7426
      %v7712 = vadd.f32 %v6240, %v7428
      %v7713 = vadd.f32 %v6241, %v7430
      %v7714 = vadd.f32 %v6242, %v7432
      %v7715 = vadd.f32 %v6243, %v7434
      %v7716 = vadd.f32 %v6244, %v7436
      %v7717 = vadd.f32 %v6245, %v7438
      %v7718 = vadd.f32 %v6246, %v7440
      %v7719 = vadd.f32 %v6247, %v7442
      %v7720 = vadd.f32 %v6248, %v7444
      %v7721 = vadd.f32 %v6249, %v7446
      %v7722 = vadd.f32 %v6250, %v7448
      %v7723 = vadd.f32 %v6251, %v7450
      %v7724 = vadd.f32 %v6252, %v7452
      %v7725 = vadd.f32 %v6253, %v7454
      %v7726 = vadd.f32 %v6254, %v7456
      %v7727 = vadd.f32 %v6255, %v7458
      %v7728 = vadd.f32 %v6256, %v7460
      %v7729 = vadd.f32 %v6257, %v7462
      %v7730 = vadd.f32 %v6258, %v7464
      %v7731 = vadd.f32 %v6259, %v7466
      %v7732 = vadd.f32 %v6260, %v7468
      %v7733 = vadd.f32 %v6261, %v7470
      %v7734 = vadd.f32 %v6262, %v7472
      %v7735 = vadd.f32 %v6263, %v7474
      %v7736 = vadd.f32 %v6264, %v7476
      %v7737 = vadd.f32 %v6265, %v7478
      %v7738 = vadd.f32 %v6266, %v7480
      %v7739 = vadd.f32 %v6267, %v7482
      %v7740 = vadd.f32 %v6268, %v7484
      %7741 = vset.pattern.permute.xlu0 6
      %7742 = vperm.xlu0 %7741, %v767
      %v7743 = vpop.permute.xlu0 %7742
      %7745 = vset.pattern.permute.xlu0 6
      %7746 = vperm.xlu0 %7745, %v771
      %v7747 = vpop.permute.xlu0 %7746
      %7749 = vset.pattern.permute.xlu0 6
      %7750 = vperm.xlu0 %7749, %v775
      %v7751 = vpop.permute.xlu0 %7750
      %7753 = vset.pattern.permute.xlu0 6
      %7754 = vperm.xlu0 %7753, %v779
      %v7755 = vpop.permute.xlu0 %7754
      %7757 = vset.pattern.permute.xlu0 6
      %7758 = vperm.xlu0 %7757, %v783
      %v7759 = vpop.permute.xlu0 %7758
      %7761 = vset.pattern.permute.xlu0 6
      %7762 = vperm.xlu0 %7761, %v787
      %v7763 = vpop.permute.xlu0 %7762
      %7765 = vset.pattern.permute.xlu0 6
      %7766 = vperm.xlu0 %7765, %v791
      %v7767 = vpop.permute.xlu0 %7766
      %7769 = vset.pattern.permute.xlu0 6
      %7770 = vperm.xlu0 %7769, %v795
      %v7771 = vpop.permute.xlu0 %7770
      %7773 = vset.pattern.permute.xlu0 6
      %7774 = vperm.xlu0 %7773, %v799
      %v7775 = vpop.permute.xlu0 %7774
      %7777 = vset.pattern.permute.xlu0 6
      %7778 = vperm.xlu0 %7777, %v803
      %v7779 = vpop.permute.xlu0 %7778
      %7781 = vset.pattern.permute.xlu0 6
      %7782 = vperm.xlu0 %7781, %v807
      %v7783 = vpop.permute.xlu0 %7782
      %7785 = vset.pattern.permute.xlu0 6
      %7786 = vperm.xlu0 %7785, %v811
      %v7787 = vpop.permute.xlu0 %7786
      %7789 = vset.pattern.permute.xlu0 6
      %7790 = vperm.xlu0 %7789, %v815
      %v7791 = vpop.permute.xlu0 %7790
      %7793 = vset.pattern.permute.xlu0 6
      %7794 = vperm.xlu0 %7793, %v819
      %v7795 = vpop.permute.xlu0 %7794
      %7797 = vset.pattern.permute.xlu0 6
      %7798 = vperm.xlu0 %7797, %v823
      %v7799 = vpop.permute.xlu0 %7798
      %7801 = vset.pattern.permute.xlu0 6
      %7802 = vperm.xlu0 %7801, %v827
      %v7803 = vpop.permute.xlu0 %7802
      %7805 = vset.pattern.permute.xlu0 6
      %7806 = vperm.xlu0 %7805, %v831
      %v7807 = vpop.permute.xlu0 %7806
      %7809 = vset.pattern.permute.xlu0 6
      %7810 = vperm.xlu0 %7809, %v835
      %v7811 = vpop.permute.xlu0 %7810
      %7813 = vset.pattern.permute.xlu0 6
      %7814 = vperm.xlu0 %7813, %v839
      %v7815 = vpop.permute.xlu0 %7814
      %7817 = vset.pattern.permute.xlu0 6
      %7818 = vperm.xlu0 %7817, %v843
      %v7819 = vpop.permute.xlu0 %7818
      %7821 = vset.pattern.permute.xlu0 6
      %7822 = vperm.xlu0 %7821, %v847
      %v7823 = vpop.permute.xlu0 %7822
      %7825 = vset.pattern.permute.xlu0 6
      %7826 = vperm.xlu0 %7825, %v851
      %v7827 = vpop.permute.xlu0 %7826
      %7829 = vset.pattern.permute.xlu0 6
      %7830 = vperm.xlu0 %7829, %v855
      %v7831 = vpop.permute.xlu0 %7830
      %7833 = vset.pattern.permute.xlu0 6
      %7834 = vperm.xlu0 %7833, %v859
      %v7835 = vpop.permute.xlu0 %7834
      %7837 = vset.pattern.permute.xlu0 6
      %7838 = vperm.xlu0 %7837, %v863
      %v7839 = vpop.permute.xlu0 %7838
      %7841 = vset.pattern.permute.xlu0 6
      %7842 = vperm.xlu0 %7841, %v867
      %v7843 = vpop.permute.xlu0 %7842
      %7845 = vset.pattern.permute.xlu0 6
      %7846 = vperm.xlu0 %7845, %v871
      %v7847 = vpop.permute.xlu0 %7846
      %7849 = vset.pattern.permute.xlu0 6
      %7850 = vperm.xlu0 %7849, %v875
      %v7851 = vpop.permute.xlu0 %7850
      %7853 = vset.pattern.permute.xlu0 6
      %7854 = vperm.xlu0 %7853, %v879
      %v7855 = vpop.permute.xlu0 %7854
      %7857 = vset.pattern.permute.xlu0 6
      %7858 = vperm.xlu0 %7857, %v883
      %v7859 = vpop.permute.xlu0 %7858
      %7861 = vset.pattern.permute.xlu0 6
      %7862 = vperm.xlu0 %7861, %v887
      %v7863 = vpop.permute.xlu0 %7862
      %7865 = vset.pattern.permute.xlu0 6
      %7866 = vperm.xlu0 %7865, %v891
      %v7867 = vpop.permute.xlu0 %7866
      %7869 = vset.pattern.permute.xlu0 6
      %7870 = vperm.xlu0 %7869, %v895
      %v7871 = vpop.permute.xlu0 %7870
      %7873 = vset.pattern.permute.xlu0 6
      %7874 = vperm.xlu0 %7873, %v899
      %v7875 = vpop.permute.xlu0 %7874
      %7877 = vset.pattern.permute.xlu0 6
      %7878 = vperm.xlu0 %7877, %v903
      %v7879 = vpop.permute.xlu0 %7878
      %7881 = vset.pattern.permute.xlu0 6
      %7882 = vperm.xlu0 %7881, %v907
      %v7883 = vpop.permute.xlu0 %7882
      %7885 = vset.pattern.permute.xlu0 6
      %7886 = vperm.xlu0 %7885, %v911
      %v7887 = vpop.permute.xlu0 %7886
      %7889 = vset.pattern.permute.xlu0 6
      %7890 = vperm.xlu0 %7889, %v915
      %v7891 = vpop.permute.xlu0 %7890
      %7893 = vset.pattern.permute.xlu0 6
      %7894 = vperm.xlu0 %7893, %v919
      %v7895 = vpop.permute.xlu0 %7894
      %7897 = vset.pattern.permute.xlu0 6
      %7898 = vperm.xlu0 %7897, %v923
      %v7899 = vpop.permute.xlu0 %7898
      %7901 = vset.pattern.permute.xlu0 6
      %7902 = vperm.xlu0 %7901, %v927
      %v7903 = vpop.permute.xlu0 %7902
      %7905 = vset.pattern.permute.xlu0 6
      %7906 = vperm.xlu0 %7905, %v931
      %v7907 = vpop.permute.xlu0 %7906
      %7909 = vset.pattern.permute.xlu0 6
      %7910 = vperm.xlu0 %7909, %v935
      %v7911 = vpop.permute.xlu0 %7910
      %7913 = vset.pattern.permute.xlu0 6
      %7914 = vperm.xlu0 %7913, %v939
      %v7915 = vpop.permute.xlu0 %7914
      %7917 = vset.pattern.permute.xlu0 6
      %7918 = vperm.xlu0 %7917, %v943
      %v7919 = vpop.permute.xlu0 %7918
      %7921 = vset.pattern.permute.xlu0 6
      %7922 = vperm.xlu0 %7921, %v947
      %v7923 = vpop.permute.xlu0 %7922
      %7925 = vset.pattern.permute.xlu0 6
      %7926 = vperm.xlu0 %7925, %v951
      %v7927 = vpop.permute.xlu0 %7926
      %7929 = vset.pattern.permute.xlu0 6
      %7930 = vperm.xlu0 %7929, %v955
      %v7931 = vpop.permute.xlu0 %7930
      %7933 = vset.pattern.permute.xlu0 6
      %7934 = vperm.xlu0 %7933, %v959
      %v7935 = vpop.permute.xlu0 %7934
      %7937 = vset.pattern.permute.xlu0 6
      %7938 = vperm.xlu0 %7937, %v963
      %v7939 = vpop.permute.xlu0 %7938
      %7941 = vset.pattern.permute.xlu0 6
      %7942 = vperm.xlu0 %7941, %v967
      %v7943 = vpop.permute.xlu0 %7942
      %7945 = vset.pattern.permute.xlu0 6
      %7946 = vperm.xlu0 %7945, %v971
      %v7947 = vpop.permute.xlu0 %7946
      %7949 = vset.pattern.permute.xlu0 6
      %7950 = vperm.xlu0 %7949, %v975
      %v7951 = vpop.permute.xlu0 %7950
      %7953 = vset.pattern.permute.xlu0 6
      %7954 = vperm.xlu0 %7953, %v979
      %v7955 = vpop.permute.xlu0 %7954
      %7957 = vset.pattern.permute.xlu0 6
      %7958 = vperm.xlu0 %7957, %v983
      %v7959 = vpop.permute.xlu0 %7958
      %7961 = vset.pattern.permute.xlu0 6
      %7962 = vperm.xlu0 %7961, %v987
      %v7963 = vpop.permute.xlu0 %7962
      %7965 = vset.pattern.permute.xlu0 6
      %7966 = vperm.xlu0 %7965, %v991
      %v7967 = vpop.permute.xlu0 %7966
      %7969 = vset.pattern.permute.xlu0 6
      %7970 = vperm.xlu0 %7969, %v995
      %v7971 = vpop.permute.xlu0 %7970
      %7973 = vset.pattern.permute.xlu0 6
      %7974 = vperm.xlu0 %7973, %v999
      %v7975 = vpop.permute.xlu0 %7974
      %7977 = vset.pattern.permute.xlu0 6
      %7978 = vperm.xlu0 %7977, %v1003
      %v7979 = vpop.permute.xlu0 %7978
      %7981 = vset.pattern.permute.xlu0 6
      %7982 = vperm.xlu0 %7981, %v1007
      %v7983 = vpop.permute.xlu0 %7982
      %7985 = vset.pattern.permute.xlu0 6
      %7986 = vperm.xlu0 %7985, %v1011
      %v7987 = vpop.permute.xlu0 %7986
      %7989 = vset.pattern.permute.xlu0 6
      %7990 = vperm.xlu0 %7989, %v1015
      %v7991 = vpop.permute.xlu0 %7990
      %7993 = vset.pattern.permute.xlu0 6
      %7994 = vperm.xlu0 %7993, %v1019
      %v7995 = vpop.permute.xlu0 %7994
      %v7997 = vmul.f32 %v164, %v7743
      %v7998 = vmul.f32 %v165, %v7743
      %v7999 = vmul.f32 %v166, %v7743
      %v8000 = vmul.f32 %v167, %v7747
      %v8001 = vmul.f32 %v168, %v7747
      %v8002 = vmul.f32 %v169, %v7747
      %v8003 = vmul.f32 %v170, %v7751
      %v8004 = vmul.f32 %v171, %v7751
      %v8005 = vmul.f32 %v172, %v7751
      %v8006 = vmul.f32 %v173, %v7755
      %v8007 = vmul.f32 %v174, %v7755
      %v8008 = vmul.f32 %v175, %v7755
      %v8009 = vmul.f32 %v176, %v7759
      %v8010 = vmul.f32 %v177, %v7759
      %v8011 = vmul.f32 %v178, %v7759
      %v8012 = vmul.f32 %v179, %v7763
      %v8013 = vmul.f32 %v180, %v7763
      %v8014 = vmul.f32 %v181, %v7763
      %v8015 = vmul.f32 %v182, %v7767
      %v8016 = vmul.f32 %v183, %v7767
      %v8017 = vmul.f32 %v184, %v7767
      %v8018 = vmul.f32 %v185, %v7771
      %v8019 = vmul.f32 %v186, %v7771
      %v8020 = vmul.f32 %v187, %v7771
      %v8021 = vmul.f32 %v188, %v7775
      %v8022 = vmul.f32 %v189, %v7775
      %v8023 = vmul.f32 %v190, %v7775
      %v8024 = vmul.f32 %v191, %v7779
      %v8025 = vmul.f32 %v192, %v7779
      %v8026 = vmul.f32 %v193, %v7779
      %v8027 = vmul.f32 %v194, %v7783
      %v8028 = vmul.f32 %v195, %v7783
      %v8029 = vmul.f32 %v196, %v7783
      %v8030 = vmul.f32 %v197, %v7787
      %v8031 = vmul.f32 %v198, %v7787
      %v8032 = vmul.f32 %v199, %v7787
      %v8033 = vmul.f32 %v200, %v7791
      %v8034 = vmul.f32 %v201, %v7791
      %v8035 = vmul.f32 %v202, %v7791
      %v8036 = vmul.f32 %v203, %v7795
      %v8037 = vmul.f32 %v204, %v7795
      %v8038 = vmul.f32 %v205, %v7795
      %v8039 = vmul.f32 %v206, %v7799
      %v8040 = vmul.f32 %v207, %v7799
      %v8041 = vmul.f32 %v208, %v7799
      %v8042 = vmul.f32 %v209, %v7803
      %v8043 = vmul.f32 %v210, %v7803
      %v8044 = vmul.f32 %v211, %v7803
      %v8045 = vmul.f32 %v212, %v7807
      %v8046 = vmul.f32 %v213, %v7807
      %v8047 = vmul.f32 %v214, %v7807
      %v8048 = vmul.f32 %v215, %v7811
      %v8049 = vmul.f32 %v216, %v7811
      %v8050 = vmul.f32 %v217, %v7811
      %v8051 = vmul.f32 %v218, %v7815
      %v8052 = vmul.f32 %v219, %v7815
      %v8053 = vmul.f32 %v220, %v7815
      %v8054 = vmul.f32 %v221, %v7819
      %v8055 = vmul.f32 %v222, %v7819
      %v8056 = vmul.f32 %v223, %v7819
      %v8057 = vmul.f32 %v224, %v7823
      %v8058 = vmul.f32 %v225, %v7823
      %v8059 = vmul.f32 %v226, %v7823
      %v8060 = vmul.f32 %v227, %v7827
      %v8061 = vmul.f32 %v228, %v7827
      %v8062 = vmul.f32 %v229, %v7827
      %v8063 = vmul.f32 %v230, %v7831
      %v8064 = vmul.f32 %v231, %v7831
      %v8065 = vmul.f32 %v232, %v7831
      %v8066 = vmul.f32 %v233, %v7835
      %v8067 = vmul.f32 %v234, %v7835
      %v8068 = vmul.f32 %v235, %v7835
      %v8069 = vmul.f32 %v236, %v7839
      %v8070 = vmul.f32 %v237, %v7839
      %v8071 = vmul.f32 %v238, %v7839
      %v8072 = vmul.f32 %v239, %v7843
      %v8073 = vmul.f32 %v240, %v7843
      %v8074 = vmul.f32 %v241, %v7843
      %v8075 = vmul.f32 %v242, %v7847
      %v8076 = vmul.f32 %v243, %v7847
      %v8077 = vmul.f32 %v244, %v7847
      %v8078 = vmul.f32 %v245, %v7851
      %v8079 = vmul.f32 %v246, %v7851
      %v8080 = vmul.f32 %v247, %v7851
      %v8081 = vmul.f32 %v248, %v7855
      %v8082 = vmul.f32 %v249, %v7855
      %v8083 = vmul.f32 %v250, %v7855
      %v8084 = vmul.f32 %v251, %v7859
      %v8085 = vmul.f32 %v252, %v7859
      %v8086 = vmul.f32 %v253, %v7859
      %v8087 = vmul.f32 %v254, %v7863
      %v8088 = vmul.f32 %v255, %v7863
      %v8089 = vmul.f32 %v256, %v7863
      %v8090 = vmul.f32 %v257, %v7867
      %v8091 = vmul.f32 %v258, %v7867
      %v8092 = vmul.f32 %v259, %v7867
      %v8093 = vmul.f32 %v260, %v7871
      %v8094 = vmul.f32 %v261, %v7871
      %v8095 = vmul.f32 %v262, %v7871
      %v8096 = vmul.f32 %v263, %v7875
      %v8097 = vmul.f32 %v264, %v7875
      %v8098 = vmul.f32 %v265, %v7875
      %v8099 = vmul.f32 %v266, %v7879
      %v8100 = vmul.f32 %v267, %v7879
      %v8101 = vmul.f32 %v268, %v7879
      %v8102 = vmul.f32 %v269, %v7883
      %v8103 = vmul.f32 %v270, %v7883
      %v8104 = vmul.f32 %v271, %v7883
      %v8105 = vmul.f32 %v272, %v7887
      %v8106 = vmul.f32 %v273, %v7887
      %v8107 = vmul.f32 %v274, %v7887
      %v8108 = vmul.f32 %v275, %v7891
      %v8109 = vmul.f32 %v276, %v7891
      %v8110 = vmul.f32 %v277, %v7891
      %v8111 = vmul.f32 %v278, %v7895
      %v8112 = vmul.f32 %v279, %v7895
      %v8113 = vmul.f32 %v280, %v7895
      %v8114 = vmul.f32 %v281, %v7899
      %v8115 = vmul.f32 %v282, %v7899
      %v8116 = vmul.f32 %v283, %v7899
      %v8117 = vmul.f32 %v284, %v7903
      %v8118 = vmul.f32 %v285, %v7903
      %v8119 = vmul.f32 %v286, %v7903
      %v8120 = vmul.f32 %v287, %v7907
      %v8121 = vmul.f32 %v288, %v7907
      %v8122 = vmul.f32 %v289, %v7907
      %v8123 = vmul.f32 %v290, %v7911
      %v8124 = vmul.f32 %v291, %v7911
      %v8125 = vmul.f32 %v292, %v7911
      %v8126 = vmul.f32 %v293, %v7915
      %v8127 = vmul.f32 %v294, %v7915
      %v8128 = vmul.f32 %v295, %v7915
      %v8129 = vmul.f32 %v296, %v7919
      %v8130 = vmul.f32 %v297, %v7919
      %v8131 = vmul.f32 %v298, %v7919
      %v8132 = vmul.f32 %v299, %v7923
      %v8133 = vmul.f32 %v300, %v7923
      %v8134 = vmul.f32 %v301, %v7923
      %v8135 = vmul.f32 %v302, %v7927
      %v8136 = vmul.f32 %v303, %v7927
      %v8137 = vmul.f32 %v304, %v7927
      %v8138 = vmul.f32 %v305, %v7931
      %v8139 = vmul.f32 %v306, %v7931
      %v8140 = vmul.f32 %v307, %v7931
      %v8141 = vmul.f32 %v308, %v7935
      %v8142 = vmul.f32 %v309, %v7935
      %v8143 = vmul.f32 %v310, %v7935
      %v8144 = vmul.f32 %v311, %v7939
      %v8145 = vmul.f32 %v312, %v7939
      %v8146 = vmul.f32 %v313, %v7939
      %v8147 = vmul.f32 %v314, %v7943
      %v8148 = vmul.f32 %v315, %v7943
      %v8149 = vmul.f32 %v316, %v7943
      %v8150 = vmul.f32 %v317, %v7947
      %v8151 = vmul.f32 %v318, %v7947
      %v8152 = vmul.f32 %v319, %v7947
      %v8153 = vmul.f32 %v320, %v7951
      %v8154 = vmul.f32 %v321, %v7951
      %v8155 = vmul.f32 %v322, %v7951
      %v8156 = vmul.f32 %v323, %v7955
      %v8157 = vmul.f32 %v324, %v7955
      %v8158 = vmul.f32 %v325, %v7955
      %v8159 = vmul.f32 %v326, %v7959
      %v8160 = vmul.f32 %v327, %v7959
      %v8161 = vmul.f32 %v328, %v7959
      %v8162 = vmul.f32 %v329, %v7963
      %v8163 = vmul.f32 %v330, %v7963
      %v8164 = vmul.f32 %v331, %v7963
      %v8165 = vmul.f32 %v332, %v7967
      %v8166 = vmul.f32 %v333, %v7967
      %v8167 = vmul.f32 %v334, %v7967
      %v8168 = vmul.f32 %v335, %v7971
      %v8169 = vmul.f32 %v336, %v7971
      %v8170 = vmul.f32 %v337, %v7971
      %v8171 = vmul.f32 %v338, %v7975
      %v8172 = vmul.f32 %v339, %v7975
      %v8173 = vmul.f32 %v340, %v7975
      %v8174 = vmul.f32 %v341, %v7979
      %v8175 = vmul.f32 %v342, %v7979
      %v8176 = vmul.f32 %v343, %v7979
      %v8177 = vmul.f32 %v344, %v7983
      %v8178 = vmul.f32 %v345, %v7983
      %v8179 = vmul.f32 %v346, %v7983
      %v8180 = vmul.f32 %v347, %v7987
      %v8181 = vmul.f32 %v348, %v7987
      %v8182 = vmul.f32 %v349, %v7987
      %v8183 = vmul.f32 %v350, %v7991
      %v8184 = vmul.f32 %v351, %v7991
      %v8185 = vmul.f32 %v352, %v7991
      %v8186 = vmul.f32 %v353, %v7995
      %v8187 = vmul.f32 %v354, %v7995
      %v8188 = vmul.f32 %v355, %v7995
      %vm8381 = vcmask 1045504
      %v8382 = vrot.slane %v7997, 2
      %v8383 = vrot.slane %v7998, 2
      %v8384 = vsel %vm8381, %v8382, %v8383
      %v8385 = vrot.slane %v7999, 2
      %v8386 = vsel %vm8381, %v8383, %v8385
      %v8387 = vrot.slane %v8000, 2
      %v8388 = vrot.slane %v8001, 2
      %v8389 = vsel %vm8381, %v8387, %v8388
      %v8390 = vrot.slane %v8002, 2
      %v8391 = vsel %vm8381, %v8388, %v8390
      %v8392 = vrot.slane %v8003, 2
      %v8393 = vrot.slane %v8004, 2
      %v8394 = vsel %vm8381, %v8392, %v8393
      %v8395 = vrot.slane %v8005, 2
      %v8396 = vsel %vm8381, %v8393, %v8395
      %v8397 = vrot.slane %v8006, 2
      %v8398 = vrot.slane %v8007, 2
      %v8399 = vsel %vm8381, %v8397, %v8398
      %v8400 = vrot.slane %v8008, 2
      %v8401 = vsel %vm8381, %v8398, %v8400
      %v8402 = vrot.slane %v8009, 2
      %v8403 = vrot.slane %v8010, 2
      %v8404 = vsel %vm8381, %v8402, %v8403
      %v8405 = vrot.slane %v8011, 2
      %v8406 = vsel %vm8381, %v8403, %v8405
      %v8407 = vrot.slane %v8012, 2
      %v8408 = vrot.slane %v8013, 2
      %v8409 = vsel %vm8381, %v8407, %v8408
      %v8410 = vrot.slane %v8014, 2
      %v8411 = vsel %vm8381, %v8408, %v8410
      %v8412 = vrot.slane %v8015, 2
      %v8413 = vrot.slane %v8016, 2
      %v8414 = vsel %vm8381, %v8412, %v8413
      %v8415 = vrot.slane %v8017, 2
      %v8416 = vsel %vm8381, %v8413, %v8415
      %v8417 = vrot.slane %v8018, 2
      %v8418 = vrot.slane %v8019, 2
      %v8419 = vsel %vm8381, %v8417, %v8418
      %v8420 = vrot.slane %v8020, 2
      %v8421 = vsel %vm8381, %v8418, %v8420
      %v8422 = vrot.slane %v8021, 2
      %v8423 = vrot.slane %v8022, 2
      %v8424 = vsel %vm8381, %v8422, %v8423
      %v8425 = vrot.slane %v8023, 2
      %v8426 = vsel %vm8381, %v8423, %v8425
      %v8427 = vrot.slane %v8024, 2
      %v8428 = vrot.slane %v8025, 2
      %v8429 = vsel %vm8381, %v8427, %v8428
      %v8430 = vrot.slane %v8026, 2
      %v8431 = vsel %vm8381, %v8428, %v8430
      %v8432 = vrot.slane %v8027, 2
      %v8433 = vrot.slane %v8028, 2
      %v8434 = vsel %vm8381, %v8432, %v8433
      %v8435 = vrot.slane %v8029, 2
      %v8436 = vsel %vm8381, %v8433, %v8435
      %v8437 = vrot.slane %v8030, 2
      %v8438 = vrot.slane %v8031, 2
      %v8439 = vsel %vm8381, %v8437, %v8438
      %v8440 = vrot.slane %v8032, 2
      %v8441 = vsel %vm8381, %v8438, %v8440
      %v8442 = vrot.slane %v8033, 2
      %v8443 = vrot.slane %v8034, 2
      %v8444 = vsel %vm8381, %v8442, %v8443
      %v8445 = vrot.slane %v8035, 2
      %v8446 = vsel %vm8381, %v8443, %v8445
      %v8447 = vrot.slane %v8036, 2
      %v8448 = vrot.slane %v8037, 2
      %v8449 = vsel %vm8381, %v8447, %v8448
      %v8450 = vrot.slane %v8038, 2
      %v8451 = vsel %vm8381, %v8448, %v8450
      %v8452 = vrot.slane %v8039, 2
      %v8453 = vrot.slane %v8040, 2
      %v8454 = vsel %vm8381, %v8452, %v8453
      %v8455 = vrot.slane %v8041, 2
      %v8456 = vsel %vm8381, %v8453, %v8455
      %v8457 = vrot.slane %v8042, 2
      %v8458 = vrot.slane %v8043, 2
      %v8459 = vsel %vm8381, %v8457, %v8458
      %v8460 = vrot.slane %v8044, 2
      %v8461 = vsel %vm8381, %v8458, %v8460
      %v8462 = vrot.slane %v8045, 2
      %v8463 = vrot.slane %v8046, 2
      %v8464 = vsel %vm8381, %v8462, %v8463
      %v8465 = vrot.slane %v8047, 2
      %v8466 = vsel %vm8381, %v8463, %v8465
      %v8467 = vrot.slane %v8048, 2
      %v8468 = vrot.slane %v8049, 2
      %v8469 = vsel %vm8381, %v8467, %v8468
      %v8470 = vrot.slane %v8050, 2
      %v8471 = vsel %vm8381, %v8468, %v8470
      %v8472 = vrot.slane %v8051, 2
      %v8473 = vrot.slane %v8052, 2
      %v8474 = vsel %vm8381, %v8472, %v8473
      %v8475 = vrot.slane %v8053, 2
      %v8476 = vsel %vm8381, %v8473, %v8475
      %v8477 = vrot.slane %v8054, 2
      %v8478 = vrot.slane %v8055, 2
      %v8479 = vsel %vm8381, %v8477, %v8478
      %v8480 = vrot.slane %v8056, 2
      %v8481 = vsel %vm8381, %v8478, %v8480
      %v8482 = vrot.slane %v8057, 2
      %v8483 = vrot.slane %v8058, 2
      %v8484 = vsel %vm8381, %v8482, %v8483
      %v8485 = vrot.slane %v8059, 2
      %v8486 = vsel %vm8381, %v8483, %v8485
      %v8487 = vrot.slane %v8060, 2
      %v8488 = vrot.slane %v8061, 2
      %v8489 = vsel %vm8381, %v8487, %v8488
      %v8490 = vrot.slane %v8062, 2
      %v8491 = vsel %vm8381, %v8488, %v8490
      %v8492 = vrot.slane %v8063, 2
      %v8493 = vrot.slane %v8064, 2
      %v8494 = vsel %vm8381, %v8492, %v8493
      %v8495 = vrot.slane %v8065, 2
      %v8496 = vsel %vm8381, %v8493, %v8495
      %v8497 = vrot.slane %v8066, 2
      %v8498 = vrot.slane %v8067, 2
      %v8499 = vsel %vm8381, %v8497, %v8498
      %v8500 = vrot.slane %v8068, 2
      %v8501 = vsel %vm8381, %v8498, %v8500
      %v8502 = vrot.slane %v8069, 2
      %v8503 = vrot.slane %v8070, 2
      %v8504 = vsel %vm8381, %v8502, %v8503
      %v8505 = vrot.slane %v8071, 2
      %v8506 = vsel %vm8381, %v8503, %v8505
      %v8507 = vrot.slane %v8072, 2
      %v8508 = vrot.slane %v8073, 2
      %v8509 = vsel %vm8381, %v8507, %v8508
      %v8510 = vrot.slane %v8074, 2
      %v8511 = vsel %vm8381, %v8508, %v8510
      %v8512 = vrot.slane %v8075, 2
      %v8513 = vrot.slane %v8076, 2
      %v8514 = vsel %vm8381, %v8512, %v8513
      %v8515 = vrot.slane %v8077, 2
      %v8516 = vsel %vm8381, %v8513, %v8515
      %v8517 = vrot.slane %v8078, 2
      %v8518 = vrot.slane %v8079, 2
      %v8519 = vsel %vm8381, %v8517, %v8518
      %v8520 = vrot.slane %v8080, 2
      %v8521 = vsel %vm8381, %v8518, %v8520
      %v8522 = vrot.slane %v8081, 2
      %v8523 = vrot.slane %v8082, 2
      %v8524 = vsel %vm8381, %v8522, %v8523
      %v8525 = vrot.slane %v8083, 2
      %v8526 = vsel %vm8381, %v8523, %v8525
      %v8527 = vrot.slane %v8084, 2
      %v8528 = vrot.slane %v8085, 2
      %v8529 = vsel %vm8381, %v8527, %v8528
      %v8530 = vrot.slane %v8086, 2
      %v8531 = vsel %vm8381, %v8528, %v8530
      %v8532 = vrot.slane %v8087, 2
      %v8533 = vrot.slane %v8088, 2
      %v8534 = vsel %vm8381, %v8532, %v8533
      %v8535 = vrot.slane %v8089, 2
      %v8536 = vsel %vm8381, %v8533, %v8535
      %v8537 = vrot.slane %v8090, 2
      %v8538 = vrot.slane %v8091, 2
      %v8539 = vsel %vm8381, %v8537, %v8538
      %v8540 = vrot.slane %v8092, 2
      %v8541 = vsel %vm8381, %v8538, %v8540
      %v8542 = vrot.slane %v8093, 2
      %v8543 = vrot.slane %v8094, 2
      %v8544 = vsel %vm8381, %v8542, %v8543
      %v8545 = vrot.slane %v8095, 2
      %v8546 = vsel %vm8381, %v8543, %v8545
      %v8547 = vrot.slane %v8096, 2
      %v8548 = vrot.slane %v8097, 2
      %v8549 = vsel %vm8381, %v8547, %v8548
      %v8550 = vrot.slane %v8098, 2
      %v8551 = vsel %vm8381, %v8548, %v8550
      %v8552 = vrot.slane %v8099, 2
      %v8553 = vrot.slane %v8100, 2
      %v8554 = vsel %vm8381, %v8552, %v8553
      %v8555 = vrot.slane %v8101, 2
      %v8556 = vsel %vm8381, %v8553, %v8555
      %v8557 = vrot.slane %v8102, 2
      %v8558 = vrot.slane %v8103, 2
      %v8559 = vsel %vm8381, %v8557, %v8558
      %v8560 = vrot.slane %v8104, 2
      %v8561 = vsel %vm8381, %v8558, %v8560
      %v8562 = vrot.slane %v8105, 2
      %v8563 = vrot.slane %v8106, 2
      %v8564 = vsel %vm8381, %v8562, %v8563
      %v8565 = vrot.slane %v8107, 2
      %v8566 = vsel %vm8381, %v8563, %v8565
      %v8567 = vrot.slane %v8108, 2
      %v8568 = vrot.slane %v8109, 2
      %v8569 = vsel %vm8381, %v8567, %v8568
      %v8570 = vrot.slane %v8110, 2
      %v8571 = vsel %vm8381, %v8568, %v8570
      %v8572 = vrot.slane %v8111, 2
      %v8573 = vrot.slane %v8112, 2
      %v8574 = vsel %vm8381, %v8572, %v8573
      %v8575 = vrot.slane %v8113, 2
      %v8576 = vsel %vm8381, %v8573, %v8575
      %v8577 = vrot.slane %v8114, 2
      %v8578 = vrot.slane %v8115, 2
      %v8579 = vsel %vm8381, %v8577, %v8578
      %v8580 = vrot.slane %v8116, 2
      %v8581 = vsel %vm8381, %v8578, %v8580
      %v8582 = vrot.slane %v8117, 2
      %v8583 = vrot.slane %v8118, 2
      %v8584 = vsel %vm8381, %v8582, %v8583
      %v8585 = vrot.slane %v8119, 2
      %v8586 = vsel %vm8381, %v8583, %v8585
      %v8587 = vrot.slane %v8120, 2
      %v8588 = vrot.slane %v8121, 2
      %v8589 = vsel %vm8381, %v8587, %v8588
      %v8590 = vrot.slane %v8122, 2
      %v8591 = vsel %vm8381, %v8588, %v8590
      %v8592 = vrot.slane %v8123, 2
      %v8593 = vrot.slane %v8124, 2
      %v8594 = vsel %vm8381, %v8592, %v8593
      %v8595 = vrot.slane %v8125, 2
      %v8596 = vsel %vm8381, %v8593, %v8595
      %v8597 = vrot.slane %v8126, 2
      %v8598 = vrot.slane %v8127, 2
      %v8599 = vsel %vm8381, %v8597, %v8598
      %v8600 = vrot.slane %v8128, 2
      %v8601 = vsel %vm8381, %v8598, %v8600
      %v8602 = vrot.slane %v8129, 2
      %v8603 = vrot.slane %v8130, 2
      %v8604 = vsel %vm8381, %v8602, %v8603
      %v8605 = vrot.slane %v8131, 2
      %v8606 = vsel %vm8381, %v8603, %v8605
      %v8607 = vrot.slane %v8132, 2
      %v8608 = vrot.slane %v8133, 2
      %v8609 = vsel %vm8381, %v8607, %v8608
      %v8610 = vrot.slane %v8134, 2
      %v8611 = vsel %vm8381, %v8608, %v8610
      %v8612 = vrot.slane %v8135, 2
      %v8613 = vrot.slane %v8136, 2
      %v8614 = vsel %vm8381, %v8612, %v8613
      %v8615 = vrot.slane %v8137, 2
      %v8616 = vsel %vm8381, %v8613, %v8615
      %v8617 = vrot.slane %v8138, 2
      %v8618 = vrot.slane %v8139, 2
      %v8619 = vsel %vm8381, %v8617, %v8618
      %v8620 = vrot.slane %v8140, 2
      %v8621 = vsel %vm8381, %v8618, %v8620
      %v8622 = vrot.slane %v8141, 2
      %v8623 = vrot.slane %v8142, 2
      %v8624 = vsel %vm8381, %v8622, %v8623
      %v8625 = vrot.slane %v8143, 2
      %v8626 = vsel %vm8381, %v8623, %v8625
      %v8627 = vrot.slane %v8144, 2
      %v8628 = vrot.slane %v8145, 2
      %v8629 = vsel %vm8381, %v8627, %v8628
      %v8630 = vrot.slane %v8146, 2
      %v8631 = vsel %vm8381, %v8628, %v8630
      %v8632 = vrot.slane %v8147, 2
      %v8633 = vrot.slane %v8148, 2
      %v8634 = vsel %vm8381, %v8632, %v8633
      %v8635 = vrot.slane %v8149, 2
      %v8636 = vsel %vm8381, %v8633, %v8635
      %v8637 = vrot.slane %v8150, 2
      %v8638 = vrot.slane %v8151, 2
      %v8639 = vsel %vm8381, %v8637, %v8638
      %v8640 = vrot.slane %v8152, 2
      %v8641 = vsel %vm8381, %v8638, %v8640
      %v8642 = vrot.slane %v8153, 2
      %v8643 = vrot.slane %v8154, 2
      %v8644 = vsel %vm8381, %v8642, %v8643
      %v8645 = vrot.slane %v8155, 2
      %v8646 = vsel %vm8381, %v8643, %v8645
      %v8647 = vrot.slane %v8156, 2
      %v8648 = vrot.slane %v8157, 2
      %v8649 = vsel %vm8381, %v8647, %v8648
      %v8650 = vrot.slane %v8158, 2
      %v8651 = vsel %vm8381, %v8648, %v8650
      %v8652 = vrot.slane %v8159, 2
      %v8653 = vrot.slane %v8160, 2
      %v8654 = vsel %vm8381, %v8652, %v8653
      %v8655 = vrot.slane %v8161, 2
      %v8656 = vsel %vm8381, %v8653, %v8655
      %v8657 = vrot.slane %v8162, 2
      %v8658 = vrot.slane %v8163, 2
      %v8659 = vsel %vm8381, %v8657, %v8658
      %v8660 = vrot.slane %v8164, 2
      %v8661 = vsel %vm8381, %v8658, %v8660
      %v8662 = vrot.slane %v8165, 2
      %v8663 = vrot.slane %v8166, 2
      %v8664 = vsel %vm8381, %v8662, %v8663
      %v8665 = vrot.slane %v8167, 2
      %v8666 = vsel %vm8381, %v8663, %v8665
      %v8667 = vrot.slane %v8168, 2
      %v8668 = vrot.slane %v8169, 2
      %v8669 = vsel %vm8381, %v8667, %v8668
      %v8670 = vrot.slane %v8170, 2
      %v8671 = vsel %vm8381, %v8668, %v8670
      %v8672 = vrot.slane %v8171, 2
      %v8673 = vrot.slane %v8172, 2
      %v8674 = vsel %vm8381, %v8672, %v8673
      %v8675 = vrot.slane %v8173, 2
      %v8676 = vsel %vm8381, %v8673, %v8675
      %v8677 = vrot.slane %v8174, 2
      %v8678 = vrot.slane %v8175, 2
      %v8679 = vsel %vm8381, %v8677, %v8678
      %v8680 = vrot.slane %v8176, 2
      %v8681 = vsel %vm8381, %v8678, %v8680
      %v8682 = vrot.slane %v8177, 2
      %v8683 = vrot.slane %v8178, 2
      %v8684 = vsel %vm8381, %v8682, %v8683
      %v8685 = vrot.slane %v8179, 2
      %v8686 = vsel %vm8381, %v8683, %v8685
      %v8687 = vrot.slane %v8180, 2
      %v8688 = vrot.slane %v8181, 2
      %v8689 = vsel %vm8381, %v8687, %v8688
      %v8690 = vrot.slane %v8182, 2
      %v8691 = vsel %vm8381, %v8688, %v8690
      %v8692 = vrot.slane %v8183, 2
      %v8693 = vrot.slane %v8184, 2
      %v8694 = vsel %vm8381, %v8692, %v8693
      %v8695 = vrot.slane %v8185, 2
      %v8696 = vsel %vm8381, %v8693, %v8695
      %v8697 = vrot.slane %v8186, 2
      %v8698 = vrot.slane %v8187, 2
      %v8699 = vsel %vm8381, %v8697, %v8698
      %v8700 = vrot.slane %v8188, 2
      %v8701 = vsel %vm8381, %v8698, %v8700
      %v8830 = vadd.f32 %v7613, %v8384
      %v8831 = vadd.f32 %v7614, %v8386
      %v8832 = vadd.f32 %v7615, %v8389
      %v8833 = vadd.f32 %v7616, %v8391
      %v8834 = vadd.f32 %v7617, %v8394
      %v8835 = vadd.f32 %v7618, %v8396
      %v8836 = vadd.f32 %v7619, %v8399
      %v8837 = vadd.f32 %v7620, %v8401
      %v8838 = vadd.f32 %v7621, %v8404
      %v8839 = vadd.f32 %v7622, %v8406
      %v8840 = vadd.f32 %v7623, %v8409
      %v8841 = vadd.f32 %v7624, %v8411
      %v8842 = vadd.f32 %v7625, %v8414
      %v8843 = vadd.f32 %v7626, %v8416
      %v8844 = vadd.f32 %v7627, %v8419
      %v8845 = vadd.f32 %v7628, %v8421
      %v8846 = vadd.f32 %v7629, %v8424
      %v8847 = vadd.f32 %v7630, %v8426
      %v8848 = vadd.f32 %v7631, %v8429
      %v8849 = vadd.f32 %v7632, %v8431
      %v8850 = vadd.f32 %v7633, %v8434
      %v8851 = vadd.f32 %v7634, %v8436
      %v8852 = vadd.f32 %v7635, %v8439
      %v8853 = vadd.f32 %v7636, %v8441
      %v8854 = vadd.f32 %v7637, %v8444
      %v8855 = vadd.f32 %v7638, %v8446
      %v8856 = vadd.f32 %v7639, %v8449
      %v8857 = vadd.f32 %v7640, %v8451
      %v8858 = vadd.f32 %v7641, %v8454
      %v8859 = vadd.f32 %v7642, %v8456
      %v8860 = vadd.f32 %v7643, %v8459
      %v8861 = vadd.f32 %v7644, %v8461
      %v8862 = vadd.f32 %v7645, %v8464
      %v8863 = vadd.f32 %v7646, %v8466
      %v8864 = vadd.f32 %v7647, %v8469
      %v8865 = vadd.f32 %v7648, %v8471
      %v8866 = vadd.f32 %v7649, %v8474
      %v8867 = vadd.f32 %v7650, %v8476
      %v8868 = vadd.f32 %v7651, %v8479
      %v8869 = vadd.f32 %v7652, %v8481
      %v8870 = vadd.f32 %v7653, %v8484
      %v8871 = vadd.f32 %v7654, %v8486
      %v8872 = vadd.f32 %v7655, %v8489
      %v8873 = vadd.f32 %v7656, %v8491
      %v8874 = vadd.f32 %v7657, %v8494
      %v8875 = vadd.f32 %v7658, %v8496
      %v8876 = vadd.f32 %v7659, %v8499
      %v8877 = vadd.f32 %v7660, %v8501
      %v8878 = vadd.f32 %v7661, %v8504
      %v8879 = vadd.f32 %v7662, %v8506
      %v8880 = vadd.f32 %v7663, %v8509
      %v8881 = vadd.f32 %v7664, %v8511
      %v8882 = vadd.f32 %v7665, %v8514
      %v8883 = vadd.f32 %v7666, %v8516
      %v8884 = vadd.f32 %v7667, %v8519
      %v8885 = vadd.f32 %v7668, %v8521
      %v8886 = vadd.f32 %v7669, %v8524
      %v8887 = vadd.f32 %v7670, %v8526
      %v8888 = vadd.f32 %v7671, %v8529
      %v8889 = vadd.f32 %v7672, %v8531
      %v8890 = vadd.f32 %v7673, %v8534
      %v8891 = vadd.f32 %v7674, %v8536
      %v8892 = vadd.f32 %v7675, %v8539
      %v8893 = vadd.f32 %v7676, %v8541
      %v8894 = vadd.f32 %v7677, %v8544
      %v8895 = vadd.f32 %v7678, %v8546
      %v8896 = vadd.f32 %v7679, %v8549
      %v8897 = vadd.f32 %v7680, %v8551
      %v8898 = vadd.f32 %v7681, %v8554
      %v8899 = vadd.f32 %v7682, %v8556
      %v8900 = vadd.f32 %v7683, %v8559
      %v8901 = vadd.f32 %v7684, %v8561
      %v8902 = vadd.f32 %v7685, %v8564
      %v8903 = vadd.f32 %v7686, %v8566
      %v8904 = vadd.f32 %v7687, %v8569
      %v8905 = vadd.f32 %v7688, %v8571
      %v8906 = vadd.f32 %v7689, %v8574
      %v8907 = vadd.f32 %v7690, %v8576
      %v8908 = vadd.f32 %v7691, %v8579
      %v8909 = vadd.f32 %v7692, %v8581
      %v8910 = vadd.f32 %v7693, %v8584
      %v8911 = vadd.f32 %v7694, %v8586
      %v8912 = vadd.f32 %v7695, %v8589
      %v8913 = vadd.f32 %v7696, %v8591
      %v8914 = vadd.f32 %v7697, %v8594
      %v8915 = vadd.f32 %v7698, %v8596
      %v8916 = vadd.f32 %v7699, %v8599
      %v8917 = vadd.f32 %v7700, %v8601
      %v8918 = vadd.f32 %v7701, %v8604
      %v8919 = vadd.f32 %v7702, %v8606
      %v8920 = vadd.f32 %v7703, %v8609
      %v8921 = vadd.f32 %v7704, %v8611
      %v8922 = vadd.f32 %v7705, %v8614
      %v8923 = vadd.f32 %v7706, %v8616
      %v8924 = vadd.f32 %v7707, %v8619
      %v8925 = vadd.f32 %v7708, %v8621
      %v8926 = vadd.f32 %v7709, %v8624
      %v8927 = vadd.f32 %v7710, %v8626
      %v8928 = vadd.f32 %v7711, %v8629
      %v8929 = vadd.f32 %v7712, %v8631
      %v8930 = vadd.f32 %v7713, %v8634
      %v8931 = vadd.f32 %v7714, %v8636
      %v8932 = vadd.f32 %v7715, %v8639
      %v8933 = vadd.f32 %v7716, %v8641
      %v8934 = vadd.f32 %v7717, %v8644
      %v8935 = vadd.f32 %v7718, %v8646
      %v8936 = vadd.f32 %v7719, %v8649
      %v8937 = vadd.f32 %v7720, %v8651
      %v8938 = vadd.f32 %v7721, %v8654
      %v8939 = vadd.f32 %v7722, %v8656
      %v8940 = vadd.f32 %v7723, %v8659
      %v8941 = vadd.f32 %v7724, %v8661
      %v8942 = vadd.f32 %v7725, %v8664
      %v8943 = vadd.f32 %v7726, %v8666
      %v8944 = vadd.f32 %v7727, %v8669
      %v8945 = vadd.f32 %v7728, %v8671
      %v8946 = vadd.f32 %v7729, %v8674
      %v8947 = vadd.f32 %v7730, %v8676
      %v8948 = vadd.f32 %v7731, %v8679
      %v8949 = vadd.f32 %v7732, %v8681
      %v8950 = vadd.f32 %v7733, %v8684
      %v8951 = vadd.f32 %v7734, %v8686
      %v8952 = vadd.f32 %v7735, %v8689
      %v8953 = vadd.f32 %v7736, %v8691
      %v8954 = vadd.f32 %v7737, %v8694
      %v8955 = vadd.f32 %v7738, %v8696
      %v8956 = vadd.f32 %v7739, %v8699
      %v8957 = vadd.f32 %v7740, %v8701
      %8958 = vset.pattern.permute.xlu0 7
      %8959 = vperm.xlu0 %8958, %v767
      %v8960 = vpop.permute.xlu0 %8959
      %8962 = vset.pattern.permute.xlu0 7
      %8963 = vperm.xlu0 %8962, %v771
      %v8964 = vpop.permute.xlu0 %8963
      %8966 = vset.pattern.permute.xlu0 7
      %8967 = vperm.xlu0 %8966, %v775
      %v8968 = vpop.permute.xlu0 %8967
      %8970 = vset.pattern.permute.xlu0 7
      %8971 = vperm.xlu0 %8970, %v779
      %v8972 = vpop.permute.xlu0 %8971
      %8974 = vset.pattern.permute.xlu0 7
      %8975 = vperm.xlu0 %8974, %v783
      %v8976 = vpop.permute.xlu0 %8975
      %8978 = vset.pattern.permute.xlu0 7
      %8979 = vperm.xlu0 %8978, %v787
      %v8980 = vpop.permute.xlu0 %8979
      %8982 = vset.pattern.permute.xlu0 7
      %8983 = vperm.xlu0 %8982, %v791
      %v8984 = vpop.permute.xlu0 %8983
      %8986 = vset.pattern.permute.xlu0 7
      %8987 = vperm.xlu0 %8986, %v795
      %v8988 = vpop.permute.xlu0 %8987
      %8990 = vset.pattern.permute.xlu0 7
      %8991 = vperm.xlu0 %8990, %v799
      %v8992 = vpop.permute.xlu0 %8991
      %8994 = vset.pattern.permute.xlu0 7
      %8995 = vperm.xlu0 %8994, %v803
      %v8996 = vpop.permute.xlu0 %8995
      %8998 = vset.pattern.permute.xlu0 7
      %8999 = vperm.xlu0 %8998, %v807
      %v9000 = vpop.permute.xlu0 %8999
      %9002 = vset.pattern.permute.xlu0 7
      %9003 = vperm.xlu0 %9002, %v811
      %v9004 = vpop.permute.xlu0 %9003
      %9006 = vset.pattern.permute.xlu0 7
      %9007 = vperm.xlu0 %9006, %v815
      %v9008 = vpop.permute.xlu0 %9007
      %9010 = vset.pattern.permute.xlu0 7
      %9011 = vperm.xlu0 %9010, %v819
      %v9012 = vpop.permute.xlu0 %9011
      %9014 = vset.pattern.permute.xlu0 7
      %9015 = vperm.xlu0 %9014, %v823
      %v9016 = vpop.permute.xlu0 %9015
      %9018 = vset.pattern.permute.xlu0 7
      %9019 = vperm.xlu0 %9018, %v827
      %v9020 = vpop.permute.xlu0 %9019
      %9022 = vset.pattern.permute.xlu0 7
      %9023 = vperm.xlu0 %9022, %v831
      %v9024 = vpop.permute.xlu0 %9023
      %9026 = vset.pattern.permute.xlu0 7
      %9027 = vperm.xlu0 %9026, %v835
      %v9028 = vpop.permute.xlu0 %9027
      %9030 = vset.pattern.permute.xlu0 7
      %9031 = vperm.xlu0 %9030, %v839
      %v9032 = vpop.permute.xlu0 %9031
      %9034 = vset.pattern.permute.xlu0 7
      %9035 = vperm.xlu0 %9034, %v843
      %v9036 = vpop.permute.xlu0 %9035
      %9038 = vset.pattern.permute.xlu0 7
      %9039 = vperm.xlu0 %9038, %v847
      %v9040 = vpop.permute.xlu0 %9039
      %9042 = vset.pattern.permute.xlu0 7
      %9043 = vperm.xlu0 %9042, %v851
      %v9044 = vpop.permute.xlu0 %9043
      %9046 = vset.pattern.permute.xlu0 7
      %9047 = vperm.xlu0 %9046, %v855
      %v9048 = vpop.permute.xlu0 %9047
      %9050 = vset.pattern.permute.xlu0 7
      %9051 = vperm.xlu0 %9050, %v859
      %v9052 = vpop.permute.xlu0 %9051
      %9054 = vset.pattern.permute.xlu0 7
      %9055 = vperm.xlu0 %9054, %v863
      %v9056 = vpop.permute.xlu0 %9055
      %9058 = vset.pattern.permute.xlu0 7
      %9059 = vperm.xlu0 %9058, %v867
      %v9060 = vpop.permute.xlu0 %9059
      %9062 = vset.pattern.permute.xlu0 7
      %9063 = vperm.xlu0 %9062, %v871
      %v9064 = vpop.permute.xlu0 %9063
      %9066 = vset.pattern.permute.xlu0 7
      %9067 = vperm.xlu0 %9066, %v875
      %v9068 = vpop.permute.xlu0 %9067
      %9070 = vset.pattern.permute.xlu0 7
      %9071 = vperm.xlu0 %9070, %v879
      %v9072 = vpop.permute.xlu0 %9071
      %9074 = vset.pattern.permute.xlu0 7
      %9075 = vperm.xlu0 %9074, %v883
      %v9076 = vpop.permute.xlu0 %9075
      %9078 = vset.pattern.permute.xlu0 7
      %9079 = vperm.xlu0 %9078, %v887
      %v9080 = vpop.permute.xlu0 %9079
      %9082 = vset.pattern.permute.xlu0 7
      %9083 = vperm.xlu0 %9082, %v891
      %v9084 = vpop.permute.xlu0 %9083
      %9086 = vset.pattern.permute.xlu0 7
      %9087 = vperm.xlu0 %9086, %v895
      %v9088 = vpop.permute.xlu0 %9087
      %9090 = vset.pattern.permute.xlu0 7
      %9091 = vperm.xlu0 %9090, %v899
      %v9092 = vpop.permute.xlu0 %9091
      %9094 = vset.pattern.permute.xlu0 7
      %9095 = vperm.xlu0 %9094, %v903
      %v9096 = vpop.permute.xlu0 %9095
      %9098 = vset.pattern.permute.xlu0 7
      %9099 = vperm.xlu0 %9098, %v907
      %v9100 = vpop.permute.xlu0 %9099
      %9102 = vset.pattern.permute.xlu0 7
      %9103 = vperm.xlu0 %9102, %v911
      %v9104 = vpop.permute.xlu0 %9103
      %9106 = vset.pattern.permute.xlu0 7
      %9107 = vperm.xlu0 %9106, %v915
      %v9108 = vpop.permute.xlu0 %9107
      %9110 = vset.pattern.permute.xlu0 7
      %9111 = vperm.xlu0 %9110, %v919
      %v9112 = vpop.permute.xlu0 %9111
      %9114 = vset.pattern.permute.xlu0 7
      %9115 = vperm.xlu0 %9114, %v923
      %v9116 = vpop.permute.xlu0 %9115
      %9118 = vset.pattern.permute.xlu0 7
      %9119 = vperm.xlu0 %9118, %v927
      %v9120 = vpop.permute.xlu0 %9119
      %9122 = vset.pattern.permute.xlu0 7
      %9123 = vperm.xlu0 %9122, %v931
      %v9124 = vpop.permute.xlu0 %9123
      %9126 = vset.pattern.permute.xlu0 7
      %9127 = vperm.xlu0 %9126, %v935
      %v9128 = vpop.permute.xlu0 %9127
      %9130 = vset.pattern.permute.xlu0 7
      %9131 = vperm.xlu0 %9130, %v939
      %v9132 = vpop.permute.xlu0 %9131
      %9134 = vset.pattern.permute.xlu0 7
      %9135 = vperm.xlu0 %9134, %v943
      %v9136 = vpop.permute.xlu0 %9135
      %9138 = vset.pattern.permute.xlu0 7
      %9139 = vperm.xlu0 %9138, %v947
      %v9140 = vpop.permute.xlu0 %9139
      %9142 = vset.pattern.permute.xlu0 7
      %9143 = vperm.xlu0 %9142, %v951
      %v9144 = vpop.permute.xlu0 %9143
      %9146 = vset.pattern.permute.xlu0 7
      %9147 = vperm.xlu0 %9146, %v955
      %v9148 = vpop.permute.xlu0 %9147
      %9150 = vset.pattern.permute.xlu0 7
      %9151 = vperm.xlu0 %9150, %v959
      %v9152 = vpop.permute.xlu0 %9151
      %9154 = vset.pattern.permute.xlu0 7
      %9155 = vperm.xlu0 %9154, %v963
      %v9156 = vpop.permute.xlu0 %9155
      %9158 = vset.pattern.permute.xlu0 7
      %9159 = vperm.xlu0 %9158, %v967
      %v9160 = vpop.permute.xlu0 %9159
      %9162 = vset.pattern.permute.xlu0 7
      %9163 = vperm.xlu0 %9162, %v971
      %v9164 = vpop.permute.xlu0 %9163
      %9166 = vset.pattern.permute.xlu0 7
      %9167 = vperm.xlu0 %9166, %v975
      %v9168 = vpop.permute.xlu0 %9167
      %9170 = vset.pattern.permute.xlu0 7
      %9171 = vperm.xlu0 %9170, %v979
      %v9172 = vpop.permute.xlu0 %9171
      %9174 = vset.pattern.permute.xlu0 7
      %9175 = vperm.xlu0 %9174, %v983
      %v9176 = vpop.permute.xlu0 %9175
      %9178 = vset.pattern.permute.xlu0 7
      %9179 = vperm.xlu0 %9178, %v987
      %v9180 = vpop.permute.xlu0 %9179
      %9182 = vset.pattern.permute.xlu0 7
      %9183 = vperm.xlu0 %9182, %v991
      %v9184 = vpop.permute.xlu0 %9183
      %9186 = vset.pattern.permute.xlu0 7
      %9187 = vperm.xlu0 %9186, %v995
      %v9188 = vpop.permute.xlu0 %9187
      %9190 = vset.pattern.permute.xlu0 7
      %9191 = vperm.xlu0 %9190, %v999
      %v9192 = vpop.permute.xlu0 %9191
      %9194 = vset.pattern.permute.xlu0 7
      %9195 = vperm.xlu0 %9194, %v1003
      %v9196 = vpop.permute.xlu0 %9195
      %9198 = vset.pattern.permute.xlu0 7
      %9199 = vperm.xlu0 %9198, %v1007
      %v9200 = vpop.permute.xlu0 %9199
      %9202 = vset.pattern.permute.xlu0 7
      %9203 = vperm.xlu0 %9202, %v1011
      %v9204 = vpop.permute.xlu0 %9203
      %9206 = vset.pattern.permute.xlu0 7
      %9207 = vperm.xlu0 %9206, %v1015
      %v9208 = vpop.permute.xlu0 %9207
      %9210 = vset.pattern.permute.xlu0 7
      %9211 = vperm.xlu0 %9210, %v1019
      %v9212 = vpop.permute.xlu0 %9211
      %v9214 = vmul.f32 %v164, %v8960
      %v9215 = vmul.f32 %v165, %v8960
      %v9216 = vmul.f32 %v166, %v8960
      %v9217 = vmul.f32 %v167, %v8964
      %v9218 = vmul.f32 %v168, %v8964
      %v9219 = vmul.f32 %v169, %v8964
      %v9220 = vmul.f32 %v170, %v8968
      %v9221 = vmul.f32 %v171, %v8968
      %v9222 = vmul.f32 %v172, %v8968
      %v9223 = vmul.f32 %v173, %v8972
      %v9224 = vmul.f32 %v174, %v8972
      %v9225 = vmul.f32 %v175, %v8972
      %v9226 = vmul.f32 %v176, %v8976
      %v9227 = vmul.f32 %v177, %v8976
      %v9228 = vmul.f32 %v178, %v8976
      %v9229 = vmul.f32 %v179, %v8980
      %v9230 = vmul.f32 %v180, %v8980
      %v9231 = vmul.f32 %v181, %v8980
      %v9232 = vmul.f32 %v182, %v8984
      %v9233 = vmul.f32 %v183, %v8984
      %v9234 = vmul.f32 %v184, %v8984
      %v9235 = vmul.f32 %v185, %v8988
      %v9236 = vmul.f32 %v186, %v8988
      %v9237 = vmul.f32 %v187, %v8988
      %v9238 = vmul.f32 %v188, %v8992
      %v9239 = vmul.f32 %v189, %v8992
      %v9240 = vmul.f32 %v190, %v8992
      %v9241 = vmul.f32 %v191, %v8996
      %v9242 = vmul.f32 %v192, %v8996
      %v9243 = vmul.f32 %v193, %v8996
      %v9244 = vmul.f32 %v194, %v9000
      %v9245 = vmul.f32 %v195, %v9000
      %v9246 = vmul.f32 %v196, %v9000
      %v9247 = vmul.f32 %v197, %v9004
      %v9248 = vmul.f32 %v198, %v9004
      %v9249 = vmul.f32 %v199, %v9004
      %v9250 = vmul.f32 %v200, %v9008
      %v9251 = vmul.f32 %v201, %v9008
      %v9252 = vmul.f32 %v202, %v9008
      %v9253 = vmul.f32 %v203, %v9012
      %v9254 = vmul.f32 %v204, %v9012
      %v9255 = vmul.f32 %v205, %v9012
      %v9256 = vmul.f32 %v206, %v9016
      %v9257 = vmul.f32 %v207, %v9016
      %v9258 = vmul.f32 %v208, %v9016
      %v9259 = vmul.f32 %v209, %v9020
      %v9260 = vmul.f32 %v210, %v9020
      %v9261 = vmul.f32 %v211, %v9020
      %v9262 = vmul.f32 %v212, %v9024
      %v9263 = vmul.f32 %v213, %v9024
      %v9264 = vmul.f32 %v214, %v9024
      %v9265 = vmul.f32 %v215, %v9028
      %v9266 = vmul.f32 %v216, %v9028
      %v9267 = vmul.f32 %v217, %v9028
      %v9268 = vmul.f32 %v218, %v9032
      %v9269 = vmul.f32 %v219, %v9032
      %v9270 = vmul.f32 %v220, %v9032
      %v9271 = vmul.f32 %v221, %v9036
      %v9272 = vmul.f32 %v222, %v9036
      %v9273 = vmul.f32 %v223, %v9036
      %v9274 = vmul.f32 %v224, %v9040
      %v9275 = vmul.f32 %v225, %v9040
      %v9276 = vmul.f32 %v226, %v9040
      %v9277 = vmul.f32 %v227, %v9044
      %v9278 = vmul.f32 %v228, %v9044
      %v9279 = vmul.f32 %v229, %v9044
      %v9280 = vmul.f32 %v230, %v9048
      %v9281 = vmul.f32 %v231, %v9048
      %v9282 = vmul.f32 %v232, %v9048
      %v9283 = vmul.f32 %v233, %v9052
      %v9284 = vmul.f32 %v234, %v9052
      %v9285 = vmul.f32 %v235, %v9052
      %v9286 = vmul.f32 %v236, %v9056
      %v9287 = vmul.f32 %v237, %v9056
      %v9288 = vmul.f32 %v238, %v9056
      %v9289 = vmul.f32 %v239, %v9060
      %v9290 = vmul.f32 %v240, %v9060
      %v9291 = vmul.f32 %v241, %v9060
      %v9292 = vmul.f32 %v242, %v9064
      %v9293 = vmul.f32 %v243, %v9064
      %v9294 = vmul.f32 %v244, %v9064
      %v9295 = vmul.f32 %v245, %v9068
      %v9296 = vmul.f32 %v246, %v9068
      %v9297 = vmul.f32 %v247, %v9068
      %v9298 = vmul.f32 %v248, %v9072
      %v9299 = vmul.f32 %v249, %v9072
      %v9300 = vmul.f32 %v250, %v9072
      %v9301 = vmul.f32 %v251, %v9076
      %v9302 = vmul.f32 %v252, %v9076
      %v9303 = vmul.f32 %v253, %v9076
      %v9304 = vmul.f32 %v254, %v9080
      %v9305 = vmul.f32 %v255, %v9080
      %v9306 = vmul.f32 %v256, %v9080
      %v9307 = vmul.f32 %v257, %v9084
      %v9308 = vmul.f32 %v258, %v9084
      %v9309 = vmul.f32 %v259, %v9084
      %v9310 = vmul.f32 %v260, %v9088
      %v9311 = vmul.f32 %v261, %v9088
      %v9312 = vmul.f32 %v262, %v9088
      %v9313 = vmul.f32 %v263, %v9092
      %v9314 = vmul.f32 %v264, %v9092
      %v9315 = vmul.f32 %v265, %v9092
      %v9316 = vmul.f32 %v266, %v9096
      %v9317 = vmul.f32 %v267, %v9096
      %v9318 = vmul.f32 %v268, %v9096
      %v9319 = vmul.f32 %v269, %v9100
      %v9320 = vmul.f32 %v270, %v9100
      %v9321 = vmul.f32 %v271, %v9100
      %v9322 = vmul.f32 %v272, %v9104
      %v9323 = vmul.f32 %v273, %v9104
      %v9324 = vmul.f32 %v274, %v9104
      %v9325 = vmul.f32 %v275, %v9108
      %v9326 = vmul.f32 %v276, %v9108
      %v9327 = vmul.f32 %v277, %v9108
      %v9328 = vmul.f32 %v278, %v9112
      %v9329 = vmul.f32 %v279, %v9112
      %v9330 = vmul.f32 %v280, %v9112
      %v9331 = vmul.f32 %v281, %v9116
      %v9332 = vmul.f32 %v282, %v9116
      %v9333 = vmul.f32 %v283, %v9116
      %v9334 = vmul.f32 %v284, %v9120
      %v9335 = vmul.f32 %v285, %v9120
      %v9336 = vmul.f32 %v286, %v9120
      %v9337 = vmul.f32 %v287, %v9124
      %v9338 = vmul.f32 %v288, %v9124
      %v9339 = vmul.f32 %v289, %v9124
      %v9340 = vmul.f32 %v290, %v9128
      %v9341 = vmul.f32 %v291, %v9128
      %v9342 = vmul.f32 %v292, %v9128
      %v9343 = vmul.f32 %v293, %v9132
      %v9344 = vmul.f32 %v294, %v9132
      %v9345 = vmul.f32 %v295, %v9132
      %v9346 = vmul.f32 %v296, %v9136
      %v9347 = vmul.f32 %v297, %v9136
      %v9348 = vmul.f32 %v298, %v9136
      %v9349 = vmul.f32 %v299, %v9140
      %v9350 = vmul.f32 %v300, %v9140
      %v9351 = vmul.f32 %v301, %v9140
      %v9352 = vmul.f32 %v302, %v9144
      %v9353 = vmul.f32 %v303, %v9144
      %v9354 = vmul.f32 %v304, %v9144
      %v9355 = vmul.f32 %v305, %v9148
      %v9356 = vmul.f32 %v306, %v9148
      %v9357 = vmul.f32 %v307, %v9148
      %v9358 = vmul.f32 %v308, %v9152
      %v9359 = vmul.f32 %v309, %v9152
      %v9360 = vmul.f32 %v310, %v9152
      %v9361 = vmul.f32 %v311, %v9156
      %v9362 = vmul.f32 %v312, %v9156
      %v9363 = vmul.f32 %v313, %v9156
      %v9364 = vmul.f32 %v314, %v9160
      %v9365 = vmul.f32 %v315, %v9160
      %v9366 = vmul.f32 %v316, %v9160
      %v9367 = vmul.f32 %v317, %v9164
      %v9368 = vmul.f32 %v318, %v9164
      %v9369 = vmul.f32 %v319, %v9164
      %v9370 = vmul.f32 %v320, %v9168
      %v9371 = vmul.f32 %v321, %v9168
      %v9372 = vmul.f32 %v322, %v9168
      %v9373 = vmul.f32 %v323, %v9172
      %v9374 = vmul.f32 %v324, %v9172
      %v9375 = vmul.f32 %v325, %v9172
      %v9376 = vmul.f32 %v326, %v9176
      %v9377 = vmul.f32 %v327, %v9176
      %v9378 = vmul.f32 %v328, %v9176
      %v9379 = vmul.f32 %v329, %v9180
      %v9380 = vmul.f32 %v330, %v9180
      %v9381 = vmul.f32 %v331, %v9180
      %v9382 = vmul.f32 %v332, %v9184
      %v9383 = vmul.f32 %v333, %v9184
      %v9384 = vmul.f32 %v334, %v9184
      %v9385 = vmul.f32 %v335, %v9188
      %v9386 = vmul.f32 %v336, %v9188
      %v9387 = vmul.f32 %v337, %v9188
      %v9388 = vmul.f32 %v338, %v9192
      %v9389 = vmul.f32 %v339, %v9192
      %v9390 = vmul.f32 %v340, %v9192
      %v9391 = vmul.f32 %v341, %v9196
      %v9392 = vmul.f32 %v342, %v9196
      %v9393 = vmul.f32 %v343, %v9196
      %v9394 = vmul.f32 %v344, %v9200
      %v9395 = vmul.f32 %v345, %v9200
      %v9396 = vmul.f32 %v346, %v9200
      %v9397 = vmul.f32 %v347, %v9204
      %v9398 = vmul.f32 %v348, %v9204
      %v9399 = vmul.f32 %v349, %v9204
      %v9400 = vmul.f32 %v350, %v9208
      %v9401 = vmul.f32 %v351, %v9208
      %v9402 = vmul.f32 %v352, %v9208
      %v9403 = vmul.f32 %v353, %v9212
      %v9404 = vmul.f32 %v354, %v9212
      %v9405 = vmul.f32 %v355, %v9212
      %v9598 = vrot.slane %v9214, 2
      %v9599 = vrot.slane %v9215, 2
      %v9600 = vsel %vm8381, %v9598, %v9599
      %v9601 = vrot.slane %v9216, 2
      %v9602 = vsel %vm8381, %v9599, %v9601
      %v9603 = vrot.slane %v9217, 2
      %v9604 = vrot.slane %v9218, 2
      %v9605 = vsel %vm8381, %v9603, %v9604
      %v9606 = vrot.slane %v9219, 2
      %v9607 = vsel %vm8381, %v9604, %v9606
      %v9608 = vrot.slane %v9220, 2
      %v9609 = vrot.slane %v9221, 2
      %v9610 = vsel %vm8381, %v9608, %v9609
      %v9611 = vrot.slane %v9222, 2
      %v9612 = vsel %vm8381, %v9609, %v9611
      %v9613 = vrot.slane %v9223, 2
      %v9614 = vrot.slane %v9224, 2
      %v9615 = vsel %vm8381, %v9613, %v9614
      %v9616 = vrot.slane %v9225, 2
      %v9617 = vsel %vm8381, %v9614, %v9616
      %v9618 = vrot.slane %v9226, 2
      %v9619 = vrot.slane %v9227, 2
      %v9620 = vsel %vm8381, %v9618, %v9619
      %v9621 = vrot.slane %v9228, 2
      %v9622 = vsel %vm8381, %v9619, %v9621
      %v9623 = vrot.slane %v9229, 2
      %v9624 = vrot.slane %v9230, 2
      %v9625 = vsel %vm8381, %v9623, %v9624
      %v9626 = vrot.slane %v9231, 2
      %v9627 = vsel %vm8381, %v9624, %v9626
      %v9628 = vrot.slane %v9232, 2
      %v9629 = vrot.slane %v9233, 2
      %v9630 = vsel %vm8381, %v9628, %v9629
      %v9631 = vrot.slane %v9234, 2
      %v9632 = vsel %vm8381, %v9629, %v9631
      %v9633 = vrot.slane %v9235, 2
      %v9634 = vrot.slane %v9236, 2
      %v9635 = vsel %vm8381, %v9633, %v9634
      %v9636 = vrot.slane %v9237, 2
      %v9637 = vsel %vm8381, %v9634, %v9636
      %v9638 = vrot.slane %v9238, 2
      %v9639 = vrot.slane %v9239, 2
      %v9640 = vsel %vm8381, %v9638, %v9639
      %v9641 = vrot.slane %v9240, 2
      %v9642 = vsel %vm8381, %v9639, %v9641
      %v9643 = vrot.slane %v9241, 2
      %v9644 = vrot.slane %v9242, 2
      %v9645 = vsel %vm8381, %v9643, %v9644
      %v9646 = vrot.slane %v9243, 2
      %v9647 = vsel %vm8381, %v9644, %v9646
      %v9648 = vrot.slane %v9244, 2
      %v9649 = vrot.slane %v9245, 2
      %v9650 = vsel %vm8381, %v9648, %v9649
      %v9651 = vrot.slane %v9246, 2
      %v9652 = vsel %vm8381, %v9649, %v9651
      %v9653 = vrot.slane %v9247, 2
      %v9654 = vrot.slane %v9248, 2
      %v9655 = vsel %vm8381, %v9653, %v9654
      %v9656 = vrot.slane %v9249, 2
      %v9657 = vsel %vm8381, %v9654, %v9656
      %v9658 = vrot.slane %v9250, 2
      %v9659 = vrot.slane %v9251, 2
      %v9660 = vsel %vm8381, %v9658, %v9659
      %v9661 = vrot.slane %v9252, 2
      %v9662 = vsel %vm8381, %v9659, %v9661
      %v9663 = vrot.slane %v9253, 2
      %v9664 = vrot.slane %v9254, 2
      %v9665 = vsel %vm8381, %v9663, %v9664
      %v9666 = vrot.slane %v9255, 2
      %v9667 = vsel %vm8381, %v9664, %v9666
      %v9668 = vrot.slane %v9256, 2
      %v9669 = vrot.slane %v9257, 2
      %v9670 = vsel %vm8381, %v9668, %v9669
      %v9671 = vrot.slane %v9258, 2
      %v9672 = vsel %vm8381, %v9669, %v9671
      %v9673 = vrot.slane %v9259, 2
      %v9674 = vrot.slane %v9260, 2
      %v9675 = vsel %vm8381, %v9673, %v9674
      %v9676 = vrot.slane %v9261, 2
      %v9677 = vsel %vm8381, %v9674, %v9676
      %v9678 = vrot.slane %v9262, 2
      %v9679 = vrot.slane %v9263, 2
      %v9680 = vsel %vm8381, %v9678, %v9679
      %v9681 = vrot.slane %v9264, 2
      %v9682 = vsel %vm8381, %v9679, %v9681
      %v9683 = vrot.slane %v9265, 2
      %v9684 = vrot.slane %v9266, 2
      %v9685 = vsel %vm8381, %v9683, %v9684
      %v9686 = vrot.slane %v9267, 2
      %v9687 = vsel %vm8381, %v9684, %v9686
      %v9688 = vrot.slane %v9268, 2
      %v9689 = vrot.slane %v9269, 2
      %v9690 = vsel %vm8381, %v9688, %v9689
      %v9691 = vrot.slane %v9270, 2
      %v9692 = vsel %vm8381, %v9689, %v9691
      %v9693 = vrot.slane %v9271, 2
      %v9694 = vrot.slane %v9272, 2
      %v9695 = vsel %vm8381, %v9693, %v9694
      %v9696 = vrot.slane %v9273, 2
      %v9697 = vsel %vm8381, %v9694, %v9696
      %v9698 = vrot.slane %v9274, 2
      %v9699 = vrot.slane %v9275, 2
      %v9700 = vsel %vm8381, %v9698, %v9699
      %v9701 = vrot.slane %v9276, 2
      %v9702 = vsel %vm8381, %v9699, %v9701
      %v9703 = vrot.slane %v9277, 2
      %v9704 = vrot.slane %v9278, 2
      %v9705 = vsel %vm8381, %v9703, %v9704
      %v9706 = vrot.slane %v9279, 2
      %v9707 = vsel %vm8381, %v9704, %v9706
      %v9708 = vrot.slane %v9280, 2
      %v9709 = vrot.slane %v9281, 2
      %v9710 = vsel %vm8381, %v9708, %v9709
      %v9711 = vrot.slane %v9282, 2
      %v9712 = vsel %vm8381, %v9709, %v9711
      %v9713 = vrot.slane %v9283, 2
      %v9714 = vrot.slane %v9284, 2
      %v9715 = vsel %vm8381, %v9713, %v9714
      %v9716 = vrot.slane %v9285, 2
      %v9717 = vsel %vm8381, %v9714, %v9716
      %v9718 = vrot.slane %v9286, 2
      %v9719 = vrot.slane %v9287, 2
      %v9720 = vsel %vm8381, %v9718, %v9719
      %v9721 = vrot.slane %v9288, 2
      %v9722 = vsel %vm8381, %v9719, %v9721
      %v9723 = vrot.slane %v9289, 2
      %v9724 = vrot.slane %v9290, 2
      %v9725 = vsel %vm8381, %v9723, %v9724
      %v9726 = vrot.slane %v9291, 2
      %v9727 = vsel %vm8381, %v9724, %v9726
      %v9728 = vrot.slane %v9292, 2
      %v9729 = vrot.slane %v9293, 2
      %v9730 = vsel %vm8381, %v9728, %v9729
      %v9731 = vrot.slane %v9294, 2
      %v9732 = vsel %vm8381, %v9729, %v9731
      %v9733 = vrot.slane %v9295, 2
      %v9734 = vrot.slane %v9296, 2
      %v9735 = vsel %vm8381, %v9733, %v9734
      %v9736 = vrot.slane %v9297, 2
      %v9737 = vsel %vm8381, %v9734, %v9736
      %v9738 = vrot.slane %v9298, 2
      %v9739 = vrot.slane %v9299, 2
      %v9740 = vsel %vm8381, %v9738, %v9739
      %v9741 = vrot.slane %v9300, 2
      %v9742 = vsel %vm8381, %v9739, %v9741
      %v9743 = vrot.slane %v9301, 2
      %v9744 = vrot.slane %v9302, 2
      %v9745 = vsel %vm8381, %v9743, %v9744
      %v9746 = vrot.slane %v9303, 2
      %v9747 = vsel %vm8381, %v9744, %v9746
      %v9748 = vrot.slane %v9304, 2
      %v9749 = vrot.slane %v9305, 2
      %v9750 = vsel %vm8381, %v9748, %v9749
      %v9751 = vrot.slane %v9306, 2
      %v9752 = vsel %vm8381, %v9749, %v9751
      %v9753 = vrot.slane %v9307, 2
      %v9754 = vrot.slane %v9308, 2
      %v9755 = vsel %vm8381, %v9753, %v9754
      %v9756 = vrot.slane %v9309, 2
      %v9757 = vsel %vm8381, %v9754, %v9756
      %v9758 = vrot.slane %v9310, 2
      %v9759 = vrot.slane %v9311, 2
      %v9760 = vsel %vm8381, %v9758, %v9759
      %v9761 = vrot.slane %v9312, 2
      %v9762 = vsel %vm8381, %v9759, %v9761
      %v9763 = vrot.slane %v9313, 2
      %v9764 = vrot.slane %v9314, 2
      %v9765 = vsel %vm8381, %v9763, %v9764
      %v9766 = vrot.slane %v9315, 2
      %v9767 = vsel %vm8381, %v9764, %v9766
      %v9768 = vrot.slane %v9316, 2
      %v9769 = vrot.slane %v9317, 2
      %v9770 = vsel %vm8381, %v9768, %v9769
      %v9771 = vrot.slane %v9318, 2
      %v9772 = vsel %vm8381, %v9769, %v9771
      %v9773 = vrot.slane %v9319, 2
      %v9774 = vrot.slane %v9320, 2
      %v9775 = vsel %vm8381, %v9773, %v9774
      %v9776 = vrot.slane %v9321, 2
      %v9777 = vsel %vm8381, %v9774, %v9776
      %v9778 = vrot.slane %v9322, 2
      %v9779 = vrot.slane %v9323, 2
      %v9780 = vsel %vm8381, %v9778, %v9779
      %v9781 = vrot.slane %v9324, 2
      %v9782 = vsel %vm8381, %v9779, %v9781
      %v9783 = vrot.slane %v9325, 2
      %v9784 = vrot.slane %v9326, 2
      %v9785 = vsel %vm8381, %v9783, %v9784
      %v9786 = vrot.slane %v9327, 2
      %v9787 = vsel %vm8381, %v9784, %v9786
      %v9788 = vrot.slane %v9328, 2
      %v9789 = vrot.slane %v9329, 2
      %v9790 = vsel %vm8381, %v9788, %v9789
      %v9791 = vrot.slane %v9330, 2
      %v9792 = vsel %vm8381, %v9789, %v9791
      %v9793 = vrot.slane %v9331, 2
      %v9794 = vrot.slane %v9332, 2
      %v9795 = vsel %vm8381, %v9793, %v9794
      %v9796 = vrot.slane %v9333, 2
      %v9797 = vsel %vm8381, %v9794, %v9796
      %v9798 = vrot.slane %v9334, 2
      %v9799 = vrot.slane %v9335, 2
      %v9800 = vsel %vm8381, %v9798, %v9799
      %v9801 = vrot.slane %v9336, 2
      %v9802 = vsel %vm8381, %v9799, %v9801
      %v9803 = vrot.slane %v9337, 2
      %v9804 = vrot.slane %v9338, 2
      %v9805 = vsel %vm8381, %v9803, %v9804
      %v9806 = vrot.slane %v9339, 2
      %v9807 = vsel %vm8381, %v9804, %v9806
      %v9808 = vrot.slane %v9340, 2
      %v9809 = vrot.slane %v9341, 2
      %v9810 = vsel %vm8381, %v9808, %v9809
      %v9811 = vrot.slane %v9342, 2
      %v9812 = vsel %vm8381, %v9809, %v9811
      %v9813 = vrot.slane %v9343, 2
      %v9814 = vrot.slane %v9344, 2
      %v9815 = vsel %vm8381, %v9813, %v9814
      %v9816 = vrot.slane %v9345, 2
      %v9817 = vsel %vm8381, %v9814, %v9816
      %v9818 = vrot.slane %v9346, 2
      %v9819 = vrot.slane %v9347, 2
      %v9820 = vsel %vm8381, %v9818, %v9819
      %v9821 = vrot.slane %v9348, 2
      %v9822 = vsel %vm8381, %v9819, %v9821
      %v9823 = vrot.slane %v9349, 2
      %v9824 = vrot.slane %v9350, 2
      %v9825 = vsel %vm8381, %v9823, %v9824
      %v9826 = vrot.slane %v9351, 2
      %v9827 = vsel %vm8381, %v9824, %v9826
      %v9828 = vrot.slane %v9352, 2
      %v9829 = vrot.slane %v9353, 2
      %v9830 = vsel %vm8381, %v9828, %v9829
      %v9831 = vrot.slane %v9354, 2
      %v9832 = vsel %vm8381, %v9829, %v9831
      %v9833 = vrot.slane %v9355, 2
      %v9834 = vrot.slane %v9356, 2
      %v9835 = vsel %vm8381, %v9833, %v9834
      %v9836 = vrot.slane %v9357, 2
      %v9837 = vsel %vm8381, %v9834, %v9836
      %v9838 = vrot.slane %v9358, 2
      %v9839 = vrot.slane %v9359, 2
      %v9840 = vsel %vm8381, %v9838, %v9839
      %v9841 = vrot.slane %v9360, 2
      %v9842 = vsel %vm8381, %v9839, %v9841
      %v9843 = vrot.slane %v9361, 2
      %v9844 = vrot.slane %v9362, 2
      %v9845 = vsel %vm8381, %v9843, %v9844
      %v9846 = vrot.slane %v9363, 2
      %v9847 = vsel %vm8381, %v9844, %v9846
      %v9848 = vrot.slane %v9364, 2
      %v9849 = vrot.slane %v9365, 2
      %v9850 = vsel %vm8381, %v9848, %v9849
      %v9851 = vrot.slane %v9366, 2
      %v9852 = vsel %vm8381, %v9849, %v9851
      %v9853 = vrot.slane %v9367, 2
      %v9854 = vrot.slane %v9368, 2
      %v9855 = vsel %vm8381, %v9853, %v9854
      %v9856 = vrot.slane %v9369, 2
      %v9857 = vsel %vm8381, %v9854, %v9856
      %v9858 = vrot.slane %v9370, 2
      %v9859 = vrot.slane %v9371, 2
      %v9860 = vsel %vm8381, %v9858, %v9859
      %v9861 = vrot.slane %v9372, 2
      %v9862 = vsel %vm8381, %v9859, %v9861
      %v9863 = vrot.slane %v9373, 2
      %v9864 = vrot.slane %v9374, 2
      %v9865 = vsel %vm8381, %v9863, %v9864
      %v9866 = vrot.slane %v9375, 2
      %v9867 = vsel %vm8381, %v9864, %v9866
      %v9868 = vrot.slane %v9376, 2
      %v9869 = vrot.slane %v9377, 2
      %v9870 = vsel %vm8381, %v9868, %v9869
      %v9871 = vrot.slane %v9378, 2
      %v9872 = vsel %vm8381, %v9869, %v9871
      %v9873 = vrot.slane %v9379, 2
      %v9874 = vrot.slane %v9380, 2
      %v9875 = vsel %vm8381, %v9873, %v9874
      %v9876 = vrot.slane %v9381, 2
      %v9877 = vsel %vm8381, %v9874, %v9876
      %v9878 = vrot.slane %v9382, 2
      %v9879 = vrot.slane %v9383, 2
      %v9880 = vsel %vm8381, %v9878, %v9879
      %v9881 = vrot.slane %v9384, 2
      %v9882 = vsel %vm8381, %v9879, %v9881
      %v9883 = vrot.slane %v9385, 2
      %v9884 = vrot.slane %v9386, 2
      %v9885 = vsel %vm8381, %v9883, %v9884
      %v9886 = vrot.slane %v9387, 2
      %v9887 = vsel %vm8381, %v9884, %v9886
      %v9888 = vrot.slane %v9388, 2
      %v9889 = vrot.slane %v9389, 2
      %v9890 = vsel %vm8381, %v9888, %v9889
      %v9891 = vrot.slane %v9390, 2
      %v9892 = vsel %vm8381, %v9889, %v9891
      %v9893 = vrot.slane %v9391, 2
      %v9894 = vrot.slane %v9392, 2
      %v9895 = vsel %vm8381, %v9893, %v9894
      %v9896 = vrot.slane %v9393, 2
      %v9897 = vsel %vm8381, %v9894, %v9896
      %v9898 = vrot.slane %v9394, 2
      %v9899 = vrot.slane %v9395, 2
      %v9900 = vsel %vm8381, %v9898, %v9899
      %v9901 = vrot.slane %v9396, 2
      %v9902 = vsel %vm8381, %v9899, %v9901
      %v9903 = vrot.slane %v9397, 2
      %v9904 = vrot.slane %v9398, 2
      %v9905 = vsel %vm8381, %v9903, %v9904
      %v9906 = vrot.slane %v9399, 2
      %v9907 = vsel %vm8381, %v9904, %v9906
      %v9908 = vrot.slane %v9400, 2
      %v9909 = vrot.slane %v9401, 2
      %v9910 = vsel %vm8381, %v9908, %v9909
      %v9911 = vrot.slane %v9402, 2
      %v9912 = vsel %vm8381, %v9909, %v9911
      %v9913 = vrot.slane %v9403, 2
      %v9914 = vrot.slane %v9404, 2
      %v9915 = vsel %vm8381, %v9913, %v9914
      %v9916 = vrot.slane %v9405, 2
      %v9917 = vsel %vm8381, %v9914, %v9916
      %9918 = vrot.lane.b32.xlu0 %v9600, 127
      %v9919 = vpop.permute.xlu0 %9918
      %9920 = vrot.lane.b32.xlu0 %v9602, 127
      %v9921 = vpop.permute.xlu0 %9920
      %9922 = vrot.lane.b32.xlu0 %v9605, 127
      %v9923 = vpop.permute.xlu0 %9922
      %9924 = vrot.lane.b32.xlu0 %v9607, 127
      %v9925 = vpop.permute.xlu0 %9924
      %9926 = vrot.lane.b32.xlu0 %v9610, 127
      %v9927 = vpop.permute.xlu0 %9926
      %9928 = vrot.lane.b32.xlu0 %v9612, 127
      %v9929 = vpop.permute.xlu0 %9928
      %9930 = vrot.lane.b32.xlu0 %v9615, 127
      %v9931 = vpop.permute.xlu0 %9930
      %9932 = vrot.lane.b32.xlu0 %v9617, 127
      %v9933 = vpop.permute.xlu0 %9932
      %9934 = vrot.lane.b32.xlu0 %v9620, 127
      %v9935 = vpop.permute.xlu0 %9934
      %9936 = vrot.lane.b32.xlu0 %v9622, 127
      %v9937 = vpop.permute.xlu0 %9936
      %9938 = vrot.lane.b32.xlu0 %v9625, 127
      %v9939 = vpop.permute.xlu0 %9938
      %9940 = vrot.lane.b32.xlu0 %v9627, 127
      %v9941 = vpop.permute.xlu0 %9940
      %9942 = vrot.lane.b32.xlu0 %v9630, 127
      %v9943 = vpop.permute.xlu0 %9942
      %9944 = vrot.lane.b32.xlu0 %v9632, 127
      %v9945 = vpop.permute.xlu0 %9944
      %9946 = vrot.lane.b32.xlu0 %v9635, 127
      %v9947 = vpop.permute.xlu0 %9946
      %9948 = vrot.lane.b32.xlu0 %v9637, 127
      %v9949 = vpop.permute.xlu0 %9948
      %9950 = vrot.lane.b32.xlu0 %v9640, 127
      %v9951 = vpop.permute.xlu0 %9950
      %9952 = vrot.lane.b32.xlu0 %v9642, 127
      %v9953 = vpop.permute.xlu0 %9952
      %9954 = vrot.lane.b32.xlu0 %v9645, 127
      %v9955 = vpop.permute.xlu0 %9954
      %9956 = vrot.lane.b32.xlu0 %v9647, 127
      %v9957 = vpop.permute.xlu0 %9956
      %9958 = vrot.lane.b32.xlu0 %v9650, 127
      %v9959 = vpop.permute.xlu0 %9958
      %9960 = vrot.lane.b32.xlu0 %v9652, 127
      %v9961 = vpop.permute.xlu0 %9960
      %9962 = vrot.lane.b32.xlu0 %v9655, 127
      %v9963 = vpop.permute.xlu0 %9962
      %9964 = vrot.lane.b32.xlu0 %v9657, 127
      %v9965 = vpop.permute.xlu0 %9964
      %9966 = vrot.lane.b32.xlu0 %v9660, 127
      %v9967 = vpop.permute.xlu0 %9966
      %9968 = vrot.lane.b32.xlu0 %v9662, 127
      %v9969 = vpop.permute.xlu0 %9968
      %9970 = vrot.lane.b32.xlu0 %v9665, 127
      %v9971 = vpop.permute.xlu0 %9970
      %9972 = vrot.lane.b32.xlu0 %v9667, 127
      %v9973 = vpop.permute.xlu0 %9972
      %9974 = vrot.lane.b32.xlu0 %v9670, 127
      %v9975 = vpop.permute.xlu0 %9974
      %9976 = vrot.lane.b32.xlu0 %v9672, 127
      %v9977 = vpop.permute.xlu0 %9976
      %9978 = vrot.lane.b32.xlu0 %v9675, 127
      %v9979 = vpop.permute.xlu0 %9978
      %9980 = vrot.lane.b32.xlu0 %v9677, 127
      %v9981 = vpop.permute.xlu0 %9980
      %9982 = vrot.lane.b32.xlu0 %v9680, 127
      %v9983 = vpop.permute.xlu0 %9982
      %9984 = vrot.lane.b32.xlu0 %v9682, 127
      %v9985 = vpop.permute.xlu0 %9984
      %9986 = vrot.lane.b32.xlu0 %v9685, 127
      %v9987 = vpop.permute.xlu0 %9986
      %9988 = vrot.lane.b32.xlu0 %v9687, 127
      %v9989 = vpop.permute.xlu0 %9988
      %9990 = vrot.lane.b32.xlu0 %v9690, 127
      %v9991 = vpop.permute.xlu0 %9990
      %9992 = vrot.lane.b32.xlu0 %v9692, 127
      %v9993 = vpop.permute.xlu0 %9992
      %9994 = vrot.lane.b32.xlu0 %v9695, 127
      %v9995 = vpop.permute.xlu0 %9994
      %9996 = vrot.lane.b32.xlu0 %v9697, 127
      %v9997 = vpop.permute.xlu0 %9996
      %9998 = vrot.lane.b32.xlu0 %v9700, 127
      %v9999 = vpop.permute.xlu0 %9998
      %10000 = vrot.lane.b32.xlu0 %v9702, 127
      %v10001 = vpop.permute.xlu0 %10000
      %10002 = vrot.lane.b32.xlu0 %v9705, 127
      %v10003 = vpop.permute.xlu0 %10002
      %10004 = vrot.lane.b32.xlu0 %v9707, 127
      %v10005 = vpop.permute.xlu0 %10004
      %10006 = vrot.lane.b32.xlu0 %v9710, 127
      %v10007 = vpop.permute.xlu0 %10006
      %10008 = vrot.lane.b32.xlu0 %v9712, 127
      %v10009 = vpop.permute.xlu0 %10008
      %10010 = vrot.lane.b32.xlu0 %v9715, 127
      %v10011 = vpop.permute.xlu0 %10010
      %10012 = vrot.lane.b32.xlu0 %v9717, 127
      %v10013 = vpop.permute.xlu0 %10012
      %10014 = vrot.lane.b32.xlu0 %v9720, 127
      %v10015 = vpop.permute.xlu0 %10014
      %10016 = vrot.lane.b32.xlu0 %v9722, 127
      %v10017 = vpop.permute.xlu0 %10016
      %10018 = vrot.lane.b32.xlu0 %v9725, 127
      %v10019 = vpop.permute.xlu0 %10018
      %10020 = vrot.lane.b32.xlu0 %v9727, 127
      %v10021 = vpop.permute.xlu0 %10020
      %10022 = vrot.lane.b32.xlu0 %v9730, 127
      %v10023 = vpop.permute.xlu0 %10022
      %10024 = vrot.lane.b32.xlu0 %v9732, 127
      %v10025 = vpop.permute.xlu0 %10024
      %10026 = vrot.lane.b32.xlu0 %v9735, 127
      %v10027 = vpop.permute.xlu0 %10026
      %10028 = vrot.lane.b32.xlu0 %v9737, 127
      %v10029 = vpop.permute.xlu0 %10028
      %10030 = vrot.lane.b32.xlu0 %v9740, 127
      %v10031 = vpop.permute.xlu0 %10030
      %10032 = vrot.lane.b32.xlu0 %v9742, 127
      %v10033 = vpop.permute.xlu0 %10032
      %10034 = vrot.lane.b32.xlu0 %v9745, 127
      %v10035 = vpop.permute.xlu0 %10034
      %10036 = vrot.lane.b32.xlu0 %v9747, 127
      %v10037 = vpop.permute.xlu0 %10036
      %10038 = vrot.lane.b32.xlu0 %v9750, 127
      %v10039 = vpop.permute.xlu0 %10038
      %10040 = vrot.lane.b32.xlu0 %v9752, 127
      %v10041 = vpop.permute.xlu0 %10040
      %10042 = vrot.lane.b32.xlu0 %v9755, 127
      %v10043 = vpop.permute.xlu0 %10042
      %10044 = vrot.lane.b32.xlu0 %v9757, 127
      %v10045 = vpop.permute.xlu0 %10044
      %10046 = vrot.lane.b32.xlu0 %v9760, 127
      %v10047 = vpop.permute.xlu0 %10046
      %10048 = vrot.lane.b32.xlu0 %v9762, 127
      %v10049 = vpop.permute.xlu0 %10048
      %10050 = vrot.lane.b32.xlu0 %v9765, 127
      %v10051 = vpop.permute.xlu0 %10050
      %10052 = vrot.lane.b32.xlu0 %v9767, 127
      %v10053 = vpop.permute.xlu0 %10052
      %10054 = vrot.lane.b32.xlu0 %v9770, 127
      %v10055 = vpop.permute.xlu0 %10054
      %10056 = vrot.lane.b32.xlu0 %v9772, 127
      %v10057 = vpop.permute.xlu0 %10056
      %10058 = vrot.lane.b32.xlu0 %v9775, 127
      %v10059 = vpop.permute.xlu0 %10058
      %10060 = vrot.lane.b32.xlu0 %v9777, 127
      %v10061 = vpop.permute.xlu0 %10060
      %10062 = vrot.lane.b32.xlu0 %v9780, 127
      %v10063 = vpop.permute.xlu0 %10062
      %10064 = vrot.lane.b32.xlu0 %v9782, 127
      %v10065 = vpop.permute.xlu0 %10064
      %10066 = vrot.lane.b32.xlu0 %v9785, 127
      %v10067 = vpop.permute.xlu0 %10066
      %10068 = vrot.lane.b32.xlu0 %v9787, 127
      %v10069 = vpop.permute.xlu0 %10068
      %10070 = vrot.lane.b32.xlu0 %v9790, 127
      %v10071 = vpop.permute.xlu0 %10070
      %10072 = vrot.lane.b32.xlu0 %v9792, 127
      %v10073 = vpop.permute.xlu0 %10072
      %10074 = vrot.lane.b32.xlu0 %v9795, 127
      %v10075 = vpop.permute.xlu0 %10074
      %10076 = vrot.lane.b32.xlu0 %v9797, 127
      %v10077 = vpop.permute.xlu0 %10076
      %10078 = vrot.lane.b32.xlu0 %v9800, 127
      %v10079 = vpop.permute.xlu0 %10078
      %10080 = vrot.lane.b32.xlu0 %v9802, 127
      %v10081 = vpop.permute.xlu0 %10080
      %10082 = vrot.lane.b32.xlu0 %v9805, 127
      %v10083 = vpop.permute.xlu0 %10082
      %10084 = vrot.lane.b32.xlu0 %v9807, 127
      %v10085 = vpop.permute.xlu0 %10084
      %10086 = vrot.lane.b32.xlu0 %v9810, 127
      %v10087 = vpop.permute.xlu0 %10086
      %10088 = vrot.lane.b32.xlu0 %v9812, 127
      %v10089 = vpop.permute.xlu0 %10088
      %10090 = vrot.lane.b32.xlu0 %v9815, 127
      %v10091 = vpop.permute.xlu0 %10090
      %10092 = vrot.lane.b32.xlu0 %v9817, 127
      %v10093 = vpop.permute.xlu0 %10092
      %10094 = vrot.lane.b32.xlu0 %v9820, 127
      %v10095 = vpop.permute.xlu0 %10094
      %10096 = vrot.lane.b32.xlu0 %v9822, 127
      %v10097 = vpop.permute.xlu0 %10096
      %10098 = vrot.lane.b32.xlu0 %v9825, 127
      %v10099 = vpop.permute.xlu0 %10098
      %10100 = vrot.lane.b32.xlu0 %v9827, 127
      %v10101 = vpop.permute.xlu0 %10100
      %10102 = vrot.lane.b32.xlu0 %v9830, 127
      %v10103 = vpop.permute.xlu0 %10102
      %10104 = vrot.lane.b32.xlu0 %v9832, 127
      %v10105 = vpop.permute.xlu0 %10104
      %10106 = vrot.lane.b32.xlu0 %v9835, 127
      %v10107 = vpop.permute.xlu0 %10106
      %10108 = vrot.lane.b32.xlu0 %v9837, 127
      %v10109 = vpop.permute.xlu0 %10108
      %10110 = vrot.lane.b32.xlu0 %v9840, 127
      %v10111 = vpop.permute.xlu0 %10110
      %10112 = vrot.lane.b32.xlu0 %v9842, 127
      %v10113 = vpop.permute.xlu0 %10112
      %10114 = vrot.lane.b32.xlu0 %v9845, 127
      %v10115 = vpop.permute.xlu0 %10114
      %10116 = vrot.lane.b32.xlu0 %v9847, 127
      %v10117 = vpop.permute.xlu0 %10116
      %10118 = vrot.lane.b32.xlu0 %v9850, 127
      %v10119 = vpop.permute.xlu0 %10118
      %10120 = vrot.lane.b32.xlu0 %v9852, 127
      %v10121 = vpop.permute.xlu0 %10120
      %10122 = vrot.lane.b32.xlu0 %v9855, 127
      %v10123 = vpop.permute.xlu0 %10122
      %10124 = vrot.lane.b32.xlu0 %v9857, 127
      %v10125 = vpop.permute.xlu0 %10124
      %10126 = vrot.lane.b32.xlu0 %v9860, 127
      %v10127 = vpop.permute.xlu0 %10126
      %10128 = vrot.lane.b32.xlu0 %v9862, 127
      %v10129 = vpop.permute.xlu0 %10128
      %10130 = vrot.lane.b32.xlu0 %v9865, 127
      %v10131 = vpop.permute.xlu0 %10130
      %10132 = vrot.lane.b32.xlu0 %v9867, 127
      %v10133 = vpop.permute.xlu0 %10132
      %10134 = vrot.lane.b32.xlu0 %v9870, 127
      %v10135 = vpop.permute.xlu0 %10134
      %10136 = vrot.lane.b32.xlu0 %v9872, 127
      %v10137 = vpop.permute.xlu0 %10136
      %10138 = vrot.lane.b32.xlu0 %v9875, 127
      %v10139 = vpop.permute.xlu0 %10138
      %10140 = vrot.lane.b32.xlu0 %v9877, 127
      %v10141 = vpop.permute.xlu0 %10140
      %10142 = vrot.lane.b32.xlu0 %v9880, 127
      %v10143 = vpop.permute.xlu0 %10142
      %10144 = vrot.lane.b32.xlu0 %v9882, 127
      %v10145 = vpop.permute.xlu0 %10144
      %10146 = vrot.lane.b32.xlu0 %v9885, 127
      %v10147 = vpop.permute.xlu0 %10146
      %10148 = vrot.lane.b32.xlu0 %v9887, 127
      %v10149 = vpop.permute.xlu0 %10148
      %10150 = vrot.lane.b32.xlu0 %v9890, 127
      %v10151 = vpop.permute.xlu0 %10150
      %10152 = vrot.lane.b32.xlu0 %v9892, 127
      %v10153 = vpop.permute.xlu0 %10152
      %10154 = vrot.lane.b32.xlu0 %v9895, 127
      %v10155 = vpop.permute.xlu0 %10154
      %10156 = vrot.lane.b32.xlu0 %v9897, 127
      %v10157 = vpop.permute.xlu0 %10156
      %10158 = vrot.lane.b32.xlu0 %v9900, 127
      %v10159 = vpop.permute.xlu0 %10158
      %10160 = vrot.lane.b32.xlu0 %v9902, 127
      %v10161 = vpop.permute.xlu0 %10160
      %10162 = vrot.lane.b32.xlu0 %v9905, 127
      %v10163 = vpop.permute.xlu0 %10162
      %10164 = vrot.lane.b32.xlu0 %v9907, 127
      %v10165 = vpop.permute.xlu0 %10164
      %10166 = vrot.lane.b32.xlu0 %v9910, 127
      %v10167 = vpop.permute.xlu0 %10166
      %10168 = vrot.lane.b32.xlu0 %v9912, 127
      %v10169 = vpop.permute.xlu0 %10168
      %10170 = vrot.lane.b32.xlu0 %v9915, 127
      %v10171 = vpop.permute.xlu0 %10170
      %10172 = vrot.lane.b32.xlu0 %v9917, 127
      %v10173 = vpop.permute.xlu0 %10172
      %v10302 = vadd.f32 %v8830, %v9919
      %v10303 = vadd.f32 %v8831, %v9921
      %v10304 = vadd.f32 %v8832, %v9923
      %v10305 = vadd.f32 %v8833, %v9925
      %v10306 = vadd.f32 %v8834, %v9927
      %v10307 = vadd.f32 %v8835, %v9929
      %v10308 = vadd.f32 %v8836, %v9931
      %v10309 = vadd.f32 %v8837, %v9933
      %v10310 = vadd.f32 %v8838, %v9935
      %v10311 = vadd.f32 %v8839, %v9937
      %v10312 = vadd.f32 %v8840, %v9939
      %v10313 = vadd.f32 %v8841, %v9941
      %v10314 = vadd.f32 %v8842, %v9943
      %v10315 = vadd.f32 %v8843, %v9945
      %v10316 = vadd.f32 %v8844, %v9947
      %v10317 = vadd.f32 %v8845, %v9949
      %v10318 = vadd.f32 %v8846, %v9951
      %v10319 = vadd.f32 %v8847, %v9953
      %v10320 = vadd.f32 %v8848, %v9955
      %v10321 = vadd.f32 %v8849, %v9957
      %v10322 = vadd.f32 %v8850, %v9959
      %v10323 = vadd.f32 %v8851, %v9961
      %v10324 = vadd.f32 %v8852, %v9963
      %v10325 = vadd.f32 %v8853, %v9965
      %v10326 = vadd.f32 %v8854, %v9967
      %v10327 = vadd.f32 %v8855, %v9969
      %v10328 = vadd.f32 %v8856, %v9971
      %v10329 = vadd.f32 %v8857, %v9973
      %v10330 = vadd.f32 %v8858, %v9975
      %v10331 = vadd.f32 %v8859, %v9977
      %v10332 = vadd.f32 %v8860, %v9979
      %v10333 = vadd.f32 %v8861, %v9981
      %v10334 = vadd.f32 %v8862, %v9983
      %v10335 = vadd.f32 %v8863, %v9985
      %v10336 = vadd.f32 %v8864, %v9987
      %v10337 = vadd.f32 %v8865, %v9989
      %v10338 = vadd.f32 %v8866, %v9991
      %v10339 = vadd.f32 %v8867, %v9993
      %v10340 = vadd.f32 %v8868, %v9995
      %v10341 = vadd.f32 %v8869, %v9997
      %v10342 = vadd.f32 %v8870, %v9999
      %v10343 = vadd.f32 %v8871, %v10001
      %v10344 = vadd.f32 %v8872, %v10003
      %v10345 = vadd.f32 %v8873, %v10005
      %v10346 = vadd.f32 %v8874, %v10007
      %v10347 = vadd.f32 %v8875, %v10009
      %v10348 = vadd.f32 %v8876, %v10011
      %v10349 = vadd.f32 %v8877, %v10013
      %v10350 = vadd.f32 %v8878, %v10015
      %v10351 = vadd.f32 %v8879, %v10017
      %v10352 = vadd.f32 %v8880, %v10019
      %v10353 = vadd.f32 %v8881, %v10021
      %v10354 = vadd.f32 %v8882, %v10023
      %v10355 = vadd.f32 %v8883, %v10025
      %v10356 = vadd.f32 %v8884, %v10027
      %v10357 = vadd.f32 %v8885, %v10029
      %v10358 = vadd.f32 %v8886, %v10031
      %v10359 = vadd.f32 %v8887, %v10033
      %v10360 = vadd.f32 %v8888, %v10035
      %v10361 = vadd.f32 %v8889, %v10037
      %v10362 = vadd.f32 %v8890, %v10039
      %v10363 = vadd.f32 %v8891, %v10041
      %v10364 = vadd.f32 %v8892, %v10043
      %v10365 = vadd.f32 %v8893, %v10045
      %v10366 = vadd.f32 %v8894, %v10047
      %v10367 = vadd.f32 %v8895, %v10049
      %v10368 = vadd.f32 %v8896, %v10051
      %v10369 = vadd.f32 %v8897, %v10053
      %v10370 = vadd.f32 %v8898, %v10055
      %v10371 = vadd.f32 %v8899, %v10057
      %v10372 = vadd.f32 %v8900, %v10059
      %v10373 = vadd.f32 %v8901, %v10061
      %v10374 = vadd.f32 %v8902, %v10063
      %v10375 = vadd.f32 %v8903, %v10065
      %v10376 = vadd.f32 %v8904, %v10067
      %v10377 = vadd.f32 %v8905, %v10069
      %v10378 = vadd.f32 %v8906, %v10071
      %v10379 = vadd.f32 %v8907, %v10073
      %v10380 = vadd.f32 %v8908, %v10075
      %v10381 = vadd.f32 %v8909, %v10077
      %v10382 = vadd.f32 %v8910, %v10079
      %v10383 = vadd.f32 %v8911, %v10081
      %v10384 = vadd.f32 %v8912, %v10083
      %v10385 = vadd.f32 %v8913, %v10085
      %v10386 = vadd.f32 %v8914, %v10087
      %v10387 = vadd.f32 %v8915, %v10089
      %v10388 = vadd.f32 %v8916, %v10091
      %v10389 = vadd.f32 %v8917, %v10093
      %v10390 = vadd.f32 %v8918, %v10095
      %v10391 = vadd.f32 %v8919, %v10097
      %v10392 = vadd.f32 %v8920, %v10099
      %v10393 = vadd.f32 %v8921, %v10101
      %v10394 = vadd.f32 %v8922, %v10103
      %v10395 = vadd.f32 %v8923, %v10105
      %v10396 = vadd.f32 %v8924, %v10107
      %v10397 = vadd.f32 %v8925, %v10109
      %v10398 = vadd.f32 %v8926, %v10111
      %v10399 = vadd.f32 %v8927, %v10113
      %v10400 = vadd.f32 %v8928, %v10115
      %v10401 = vadd.f32 %v8929, %v10117
      %v10402 = vadd.f32 %v8930, %v10119
      %v10403 = vadd.f32 %v8931, %v10121
      %v10404 = vadd.f32 %v8932, %v10123
      %v10405 = vadd.f32 %v8933, %v10125
      %v10406 = vadd.f32 %v8934, %v10127
      %v10407 = vadd.f32 %v8935, %v10129
      %v10408 = vadd.f32 %v8936, %v10131
      %v10409 = vadd.f32 %v8937, %v10133
      %v10410 = vadd.f32 %v8938, %v10135
      %v10411 = vadd.f32 %v8939, %v10137
      %v10412 = vadd.f32 %v8940, %v10139
      %v10413 = vadd.f32 %v8941, %v10141
      %v10414 = vadd.f32 %v8942, %v10143
      %v10415 = vadd.f32 %v8943, %v10145
      %v10416 = vadd.f32 %v8944, %v10147
      %v10417 = vadd.f32 %v8945, %v10149
      %v10418 = vadd.f32 %v8946, %v10151
      %v10419 = vadd.f32 %v8947, %v10153
      %v10420 = vadd.f32 %v8948, %v10155
      %v10421 = vadd.f32 %v8949, %v10157
      %v10422 = vadd.f32 %v8950, %v10159
      %v10423 = vadd.f32 %v8951, %v10161
      %v10424 = vadd.f32 %v8952, %v10163
      %v10425 = vadd.f32 %v8953, %v10165
      %v10426 = vadd.f32 %v8954, %v10167
      %v10427 = vadd.f32 %v8955, %v10169
      %v10428 = vadd.f32 %v8956, %v10171
      %v10429 = vadd.f32 %v8957, %v10173
      %10430 = vset.pattern.permute.xlu0 8
      %10431 = vperm.xlu0 %10430, %v767
      %v10432 = vpop.permute.xlu0 %10431
      %10434 = vset.pattern.permute.xlu0 8
      %10435 = vperm.xlu0 %10434, %v771
      %v10436 = vpop.permute.xlu0 %10435
      %10438 = vset.pattern.permute.xlu0 8
      %10439 = vperm.xlu0 %10438, %v775
      %v10440 = vpop.permute.xlu0 %10439
      %10442 = vset.pattern.permute.xlu0 8
      %10443 = vperm.xlu0 %10442, %v779
      %v10444 = vpop.permute.xlu0 %10443
      %10446 = vset.pattern.permute.xlu0 8
      %10447 = vperm.xlu0 %10446, %v783
      %v10448 = vpop.permute.xlu0 %10447
      %10450 = vset.pattern.permute.xlu0 8
      %10451 = vperm.xlu0 %10450, %v787
      %v10452 = vpop.permute.xlu0 %10451
      %10454 = vset.pattern.permute.xlu0 8
      %10455 = vperm.xlu0 %10454, %v791
      %v10456 = vpop.permute.xlu0 %10455
      %10458 = vset.pattern.permute.xlu0 8
      %10459 = vperm.xlu0 %10458, %v795
      %v10460 = vpop.permute.xlu0 %10459
      %10462 = vset.pattern.permute.xlu0 8
      %10463 = vperm.xlu0 %10462, %v799
      %v10464 = vpop.permute.xlu0 %10463
      %10466 = vset.pattern.permute.xlu0 8
      %10467 = vperm.xlu0 %10466, %v803
      %v10468 = vpop.permute.xlu0 %10467
      %10470 = vset.pattern.permute.xlu0 8
      %10471 = vperm.xlu0 %10470, %v807
      %v10472 = vpop.permute.xlu0 %10471
      %10474 = vset.pattern.permute.xlu0 8
      %10475 = vperm.xlu0 %10474, %v811
      %v10476 = vpop.permute.xlu0 %10475
      %10478 = vset.pattern.permute.xlu0 8
      %10479 = vperm.xlu0 %10478, %v815
      %v10480 = vpop.permute.xlu0 %10479
      %10482 = vset.pattern.permute.xlu0 8
      %10483 = vperm.xlu0 %10482, %v819
      %v10484 = vpop.permute.xlu0 %10483
      %10486 = vset.pattern.permute.xlu0 8
      %10487 = vperm.xlu0 %10486, %v823
      %v10488 = vpop.permute.xlu0 %10487
      %10490 = vset.pattern.permute.xlu0 8
      %10491 = vperm.xlu0 %10490, %v827
      %v10492 = vpop.permute.xlu0 %10491
      %10494 = vset.pattern.permute.xlu0 8
      %10495 = vperm.xlu0 %10494, %v831
      %v10496 = vpop.permute.xlu0 %10495
      %10498 = vset.pattern.permute.xlu0 8
      %10499 = vperm.xlu0 %10498, %v835
      %v10500 = vpop.permute.xlu0 %10499
      %10502 = vset.pattern.permute.xlu0 8
      %10503 = vperm.xlu0 %10502, %v839
      %v10504 = vpop.permute.xlu0 %10503
      %10506 = vset.pattern.permute.xlu0 8
      %10507 = vperm.xlu0 %10506, %v843
      %v10508 = vpop.permute.xlu0 %10507
      %10510 = vset.pattern.permute.xlu0 8
      %10511 = vperm.xlu0 %10510, %v847
      %v10512 = vpop.permute.xlu0 %10511
      %10514 = vset.pattern.permute.xlu0 8
      %10515 = vperm.xlu0 %10514, %v851
      %v10516 = vpop.permute.xlu0 %10515
      %10518 = vset.pattern.permute.xlu0 8
      %10519 = vperm.xlu0 %10518, %v855
      %v10520 = vpop.permute.xlu0 %10519
      %10522 = vset.pattern.permute.xlu0 8
      %10523 = vperm.xlu0 %10522, %v859
      %v10524 = vpop.permute.xlu0 %10523
      %10526 = vset.pattern.permute.xlu0 8
      %10527 = vperm.xlu0 %10526, %v863
      %v10528 = vpop.permute.xlu0 %10527
      %10530 = vset.pattern.permute.xlu0 8
      %10531 = vperm.xlu0 %10530, %v867
      %v10532 = vpop.permute.xlu0 %10531
      %10534 = vset.pattern.permute.xlu0 8
      %10535 = vperm.xlu0 %10534, %v871
      %v10536 = vpop.permute.xlu0 %10535
      %10538 = vset.pattern.permute.xlu0 8
      %10539 = vperm.xlu0 %10538, %v875
      %v10540 = vpop.permute.xlu0 %10539
      %10542 = vset.pattern.permute.xlu0 8
      %10543 = vperm.xlu0 %10542, %v879
      %v10544 = vpop.permute.xlu0 %10543
      %10546 = vset.pattern.permute.xlu0 8
      %10547 = vperm.xlu0 %10546, %v883
      %v10548 = vpop.permute.xlu0 %10547
      %10550 = vset.pattern.permute.xlu0 8
      %10551 = vperm.xlu0 %10550, %v887
      %v10552 = vpop.permute.xlu0 %10551
      %10554 = vset.pattern.permute.xlu0 8
      %10555 = vperm.xlu0 %10554, %v891
      %v10556 = vpop.permute.xlu0 %10555
      %10558 = vset.pattern.permute.xlu0 8
      %10559 = vperm.xlu0 %10558, %v895
      %v10560 = vpop.permute.xlu0 %10559
      %10562 = vset.pattern.permute.xlu0 8
      %10563 = vperm.xlu0 %10562, %v899
      %v10564 = vpop.permute.xlu0 %10563
      %10566 = vset.pattern.permute.xlu0 8
      %10567 = vperm.xlu0 %10566, %v903
      %v10568 = vpop.permute.xlu0 %10567
      %10570 = vset.pattern.permute.xlu0 8
      %10571 = vperm.xlu0 %10570, %v907
      %v10572 = vpop.permute.xlu0 %10571
      %10574 = vset.pattern.permute.xlu0 8
      %10575 = vperm.xlu0 %10574, %v911
      %v10576 = vpop.permute.xlu0 %10575
      %10578 = vset.pattern.permute.xlu0 8
      %10579 = vperm.xlu0 %10578, %v915
      %v10580 = vpop.permute.xlu0 %10579
      %10582 = vset.pattern.permute.xlu0 8
      %10583 = vperm.xlu0 %10582, %v919
      %v10584 = vpop.permute.xlu0 %10583
      %10586 = vset.pattern.permute.xlu0 8
      %10587 = vperm.xlu0 %10586, %v923
      %v10588 = vpop.permute.xlu0 %10587
      %10590 = vset.pattern.permute.xlu0 8
      %10591 = vperm.xlu0 %10590, %v927
      %v10592 = vpop.permute.xlu0 %10591
      %10594 = vset.pattern.permute.xlu0 8
      %10595 = vperm.xlu0 %10594, %v931
      %v10596 = vpop.permute.xlu0 %10595
      %10598 = vset.pattern.permute.xlu0 8
      %10599 = vperm.xlu0 %10598, %v935
      %v10600 = vpop.permute.xlu0 %10599
      %10602 = vset.pattern.permute.xlu0 8
      %10603 = vperm.xlu0 %10602, %v939
      %v10604 = vpop.permute.xlu0 %10603
      %10606 = vset.pattern.permute.xlu0 8
      %10607 = vperm.xlu0 %10606, %v943
      %v10608 = vpop.permute.xlu0 %10607
      %10610 = vset.pattern.permute.xlu0 8
      %10611 = vperm.xlu0 %10610, %v947
      %v10612 = vpop.permute.xlu0 %10611
      %10614 = vset.pattern.permute.xlu0 8
      %10615 = vperm.xlu0 %10614, %v951
      %v10616 = vpop.permute.xlu0 %10615
      %10618 = vset.pattern.permute.xlu0 8
      %10619 = vperm.xlu0 %10618, %v955
      %v10620 = vpop.permute.xlu0 %10619
      %10622 = vset.pattern.permute.xlu0 8
      %10623 = vperm.xlu0 %10622, %v959
      %v10624 = vpop.permute.xlu0 %10623
      %10626 = vset.pattern.permute.xlu0 8
      %10627 = vperm.xlu0 %10626, %v963
      %v10628 = vpop.permute.xlu0 %10627
      %10630 = vset.pattern.permute.xlu0 8
      %10631 = vperm.xlu0 %10630, %v967
      %v10632 = vpop.permute.xlu0 %10631
      %10634 = vset.pattern.permute.xlu0 8
      %10635 = vperm.xlu0 %10634, %v971
      %v10636 = vpop.permute.xlu0 %10635
      %10638 = vset.pattern.permute.xlu0 8
      %10639 = vperm.xlu0 %10638, %v975
      %v10640 = vpop.permute.xlu0 %10639
      %10642 = vset.pattern.permute.xlu0 8
      %10643 = vperm.xlu0 %10642, %v979
      %v10644 = vpop.permute.xlu0 %10643
      %10646 = vset.pattern.permute.xlu0 8
      %10647 = vperm.xlu0 %10646, %v983
      %v10648 = vpop.permute.xlu0 %10647
      %10650 = vset.pattern.permute.xlu0 8
      %10651 = vperm.xlu0 %10650, %v987
      %v10652 = vpop.permute.xlu0 %10651
      %10654 = vset.pattern.permute.xlu0 8
      %10655 = vperm.xlu0 %10654, %v991
      %v10656 = vpop.permute.xlu0 %10655
      %10658 = vset.pattern.permute.xlu0 8
      %10659 = vperm.xlu0 %10658, %v995
      %v10660 = vpop.permute.xlu0 %10659
      %10662 = vset.pattern.permute.xlu0 8
      %10663 = vperm.xlu0 %10662, %v999
      %v10664 = vpop.permute.xlu0 %10663
      %10666 = vset.pattern.permute.xlu0 8
      %10667 = vperm.xlu0 %10666, %v1003
      %v10668 = vpop.permute.xlu0 %10667
      %10670 = vset.pattern.permute.xlu0 8
      %10671 = vperm.xlu0 %10670, %v1007
      %v10672 = vpop.permute.xlu0 %10671
      %10674 = vset.pattern.permute.xlu0 8
      %10675 = vperm.xlu0 %10674, %v1011
      %v10676 = vpop.permute.xlu0 %10675
      %10678 = vset.pattern.permute.xlu0 8
      %10679 = vperm.xlu0 %10678, %v1015
      %v10680 = vpop.permute.xlu0 %10679
      %10682 = vset.pattern.permute.xlu0 8
      %10683 = vperm.xlu0 %10682, %v1019
      %v10684 = vpop.permute.xlu0 %10683
      %v10686 = vmul.f32 %v164, %v10432
      %v10687 = vmul.f32 %v165, %v10432
      %v10688 = vmul.f32 %v166, %v10432
      %v10689 = vmul.f32 %v167, %v10436
      %v10690 = vmul.f32 %v168, %v10436
      %v10691 = vmul.f32 %v169, %v10436
      %v10692 = vmul.f32 %v170, %v10440
      %v10693 = vmul.f32 %v171, %v10440
      %v10694 = vmul.f32 %v172, %v10440
      %v10695 = vmul.f32 %v173, %v10444
      %v10696 = vmul.f32 %v174, %v10444
      %v10697 = vmul.f32 %v175, %v10444
      %v10698 = vmul.f32 %v176, %v10448
      %v10699 = vmul.f32 %v177, %v10448
      %v10700 = vmul.f32 %v178, %v10448
      %v10701 = vmul.f32 %v179, %v10452
      %v10702 = vmul.f32 %v180, %v10452
      %v10703 = vmul.f32 %v181, %v10452
      %v10704 = vmul.f32 %v182, %v10456
      %v10705 = vmul.f32 %v183, %v10456
      %v10706 = vmul.f32 %v184, %v10456
      %v10707 = vmul.f32 %v185, %v10460
      %v10708 = vmul.f32 %v186, %v10460
      %v10709 = vmul.f32 %v187, %v10460
      %v10710 = vmul.f32 %v188, %v10464
      %v10711 = vmul.f32 %v189, %v10464
      %v10712 = vmul.f32 %v190, %v10464
      %v10713 = vmul.f32 %v191, %v10468
      %v10714 = vmul.f32 %v192, %v10468
      %v10715 = vmul.f32 %v193, %v10468
      %v10716 = vmul.f32 %v194, %v10472
      %v10717 = vmul.f32 %v195, %v10472
      %v10718 = vmul.f32 %v196, %v10472
      %v10719 = vmul.f32 %v197, %v10476
      %v10720 = vmul.f32 %v198, %v10476
      %v10721 = vmul.f32 %v199, %v10476
      %v10722 = vmul.f32 %v200, %v10480
      %v10723 = vmul.f32 %v201, %v10480
      %v10724 = vmul.f32 %v202, %v10480
      %v10725 = vmul.f32 %v203, %v10484
      %v10726 = vmul.f32 %v204, %v10484
      %v10727 = vmul.f32 %v205, %v10484
      %v10728 = vmul.f32 %v206, %v10488
      %v10729 = vmul.f32 %v207, %v10488
      %v10730 = vmul.f32 %v208, %v10488
      %v10731 = vmul.f32 %v209, %v10492
      %v10732 = vmul.f32 %v210, %v10492
      %v10733 = vmul.f32 %v211, %v10492
      %v10734 = vmul.f32 %v212, %v10496
      %v10735 = vmul.f32 %v213, %v10496
      %v10736 = vmul.f32 %v214, %v10496
      %v10737 = vmul.f32 %v215, %v10500
      %v10738 = vmul.f32 %v216, %v10500
      %v10739 = vmul.f32 %v217, %v10500
      %v10740 = vmul.f32 %v218, %v10504
      %v10741 = vmul.f32 %v219, %v10504
      %v10742 = vmul.f32 %v220, %v10504
      %v10743 = vmul.f32 %v221, %v10508
      %v10744 = vmul.f32 %v222, %v10508
      %v10745 = vmul.f32 %v223, %v10508
      %v10746 = vmul.f32 %v224, %v10512
      %v10747 = vmul.f32 %v225, %v10512
      %v10748 = vmul.f32 %v226, %v10512
      %v10749 = vmul.f32 %v227, %v10516
      %v10750 = vmul.f32 %v228, %v10516
      %v10751 = vmul.f32 %v229, %v10516
      %v10752 = vmul.f32 %v230, %v10520
      %v10753 = vmul.f32 %v231, %v10520
      %v10754 = vmul.f32 %v232, %v10520
      %v10755 = vmul.f32 %v233, %v10524
      %v10756 = vmul.f32 %v234, %v10524
      %v10757 = vmul.f32 %v235, %v10524
      %v10758 = vmul.f32 %v236, %v10528
      %v10759 = vmul.f32 %v237, %v10528
      %v10760 = vmul.f32 %v238, %v10528
      %v10761 = vmul.f32 %v239, %v10532
      %v10762 = vmul.f32 %v240, %v10532
      %v10763 = vmul.f32 %v241, %v10532
      %v10764 = vmul.f32 %v242, %v10536
      %v10765 = vmul.f32 %v243, %v10536
      %v10766 = vmul.f32 %v244, %v10536
      %v10767 = vmul.f32 %v245, %v10540
      %v10768 = vmul.f32 %v246, %v10540
      %v10769 = vmul.f32 %v247, %v10540
      %v10770 = vmul.f32 %v248, %v10544
      %v10771 = vmul.f32 %v249, %v10544
      %v10772 = vmul.f32 %v250, %v10544
      %v10773 = vmul.f32 %v251, %v10548
      %v10774 = vmul.f32 %v252, %v10548
      %v10775 = vmul.f32 %v253, %v10548
      %v10776 = vmul.f32 %v254, %v10552
      %v10777 = vmul.f32 %v255, %v10552
      %v10778 = vmul.f32 %v256, %v10552
      %v10779 = vmul.f32 %v257, %v10556
      %v10780 = vmul.f32 %v258, %v10556
      %v10781 = vmul.f32 %v259, %v10556
      %v10782 = vmul.f32 %v260, %v10560
      %v10783 = vmul.f32 %v261, %v10560
      %v10784 = vmul.f32 %v262, %v10560
      %v10785 = vmul.f32 %v263, %v10564
      %v10786 = vmul.f32 %v264, %v10564
      %v10787 = vmul.f32 %v265, %v10564
      %v10788 = vmul.f32 %v266, %v10568
      %v10789 = vmul.f32 %v267, %v10568
      %v10790 = vmul.f32 %v268, %v10568
      %v10791 = vmul.f32 %v269, %v10572
      %v10792 = vmul.f32 %v270, %v10572
      %v10793 = vmul.f32 %v271, %v10572
      %v10794 = vmul.f32 %v272, %v10576
      %v10795 = vmul.f32 %v273, %v10576
      %v10796 = vmul.f32 %v274, %v10576
      %v10797 = vmul.f32 %v275, %v10580
      %v10798 = vmul.f32 %v276, %v10580
      %v10799 = vmul.f32 %v277, %v10580
      %v10800 = vmul.f32 %v278, %v10584
      %v10801 = vmul.f32 %v279, %v10584
      %v10802 = vmul.f32 %v280, %v10584
      %v10803 = vmul.f32 %v281, %v10588
      %v10804 = vmul.f32 %v282, %v10588
      %v10805 = vmul.f32 %v283, %v10588
      %v10806 = vmul.f32 %v284, %v10592
      %v10807 = vmul.f32 %v285, %v10592
      %v10808 = vmul.f32 %v286, %v10592
      %v10809 = vmul.f32 %v287, %v10596
      %v10810 = vmul.f32 %v288, %v10596
      %v10811 = vmul.f32 %v289, %v10596
      %v10812 = vmul.f32 %v290, %v10600
      %v10813 = vmul.f32 %v291, %v10600
      %v10814 = vmul.f32 %v292, %v10600
      %v10815 = vmul.f32 %v293, %v10604
      %v10816 = vmul.f32 %v294, %v10604
      %v10817 = vmul.f32 %v295, %v10604
      %v10818 = vmul.f32 %v296, %v10608
      %v10819 = vmul.f32 %v297, %v10608
      %v10820 = vmul.f32 %v298, %v10608
      %v10821 = vmul.f32 %v299, %v10612
      %v10822 = vmul.f32 %v300, %v10612
      %v10823 = vmul.f32 %v301, %v10612
      %v10824 = vmul.f32 %v302, %v10616
      %v10825 = vmul.f32 %v303, %v10616
      %v10826 = vmul.f32 %v304, %v10616
      %v10827 = vmul.f32 %v305, %v10620
      %v10828 = vmul.f32 %v306, %v10620
      %v10829 = vmul.f32 %v307, %v10620
      %v10830 = vmul.f32 %v308, %v10624
      %v10831 = vmul.f32 %v309, %v10624
      %v10832 = vmul.f32 %v310, %v10624
      %v10833 = vmul.f32 %v311, %v10628
      %v10834 = vmul.f32 %v312, %v10628
      %v10835 = vmul.f32 %v313, %v10628
      %v10836 = vmul.f32 %v314, %v10632
      %v10837 = vmul.f32 %v315, %v10632
      %v10838 = vmul.f32 %v316, %v10632
      %v10839 = vmul.f32 %v317, %v10636
      %v10840 = vmul.f32 %v318, %v10636
      %v10841 = vmul.f32 %v319, %v10636
      %v10842 = vmul.f32 %v320, %v10640
      %v10843 = vmul.f32 %v321, %v10640
      %v10844 = vmul.f32 %v322, %v10640
      %v10845 = vmul.f32 %v323, %v10644
      %v10846 = vmul.f32 %v324, %v10644
      %v10847 = vmul.f32 %v325, %v10644
      %v10848 = vmul.f32 %v326, %v10648
      %v10849 = vmul.f32 %v327, %v10648
      %v10850 = vmul.f32 %v328, %v10648
      %v10851 = vmul.f32 %v329, %v10652
      %v10852 = vmul.f32 %v330, %v10652
      %v10853 = vmul.f32 %v331, %v10652
      %v10854 = vmul.f32 %v332, %v10656
      %v10855 = vmul.f32 %v333, %v10656
      %v10856 = vmul.f32 %v334, %v10656
      %v10857 = vmul.f32 %v335, %v10660
      %v10858 = vmul.f32 %v336, %v10660
      %v10859 = vmul.f32 %v337, %v10660
      %v10860 = vmul.f32 %v338, %v10664
      %v10861 = vmul.f32 %v339, %v10664
      %v10862 = vmul.f32 %v340, %v10664
      %v10863 = vmul.f32 %v341, %v10668
      %v10864 = vmul.f32 %v342, %v10668
      %v10865 = vmul.f32 %v343, %v10668
      %v10866 = vmul.f32 %v344, %v10672
      %v10867 = vmul.f32 %v345, %v10672
      %v10868 = vmul.f32 %v346, %v10672
      %v10869 = vmul.f32 %v347, %v10676
      %v10870 = vmul.f32 %v348, %v10676
      %v10871 = vmul.f32 %v349, %v10676
      %v10872 = vmul.f32 %v350, %v10680
      %v10873 = vmul.f32 %v351, %v10680
      %v10874 = vmul.f32 %v352, %v10680
      %v10875 = vmul.f32 %v353, %v10684
      %v10876 = vmul.f32 %v354, %v10684
      %v10877 = vmul.f32 %v355, %v10684
      %v11070 = vrot.slane %v10686, 2
      %v11071 = vrot.slane %v10687, 2
      %v11072 = vsel %vm8381, %v11070, %v11071
      %v11073 = vrot.slane %v10688, 2
      %v11074 = vsel %vm8381, %v11071, %v11073
      %v11075 = vrot.slane %v10689, 2
      %v11076 = vrot.slane %v10690, 2
      %v11077 = vsel %vm8381, %v11075, %v11076
      %v11078 = vrot.slane %v10691, 2
      %v11079 = vsel %vm8381, %v11076, %v11078
      %v11080 = vrot.slane %v10692, 2
      %v11081 = vrot.slane %v10693, 2
      %v11082 = vsel %vm8381, %v11080, %v11081
      %v11083 = vrot.slane %v10694, 2
      %v11084 = vsel %vm8381, %v11081, %v11083
      %v11085 = vrot.slane %v10695, 2
      %v11086 = vrot.slane %v10696, 2
      %v11087 = vsel %vm8381, %v11085, %v11086
      %v11088 = vrot.slane %v10697, 2
      %v11089 = vsel %vm8381, %v11086, %v11088
      %v11090 = vrot.slane %v10698, 2
      %v11091 = vrot.slane %v10699, 2
      %v11092 = vsel %vm8381, %v11090, %v11091
      %v11093 = vrot.slane %v10700, 2
      %v11094 = vsel %vm8381, %v11091, %v11093
      %v11095 = vrot.slane %v10701, 2
      %v11096 = vrot.slane %v10702, 2
      %v11097 = vsel %vm8381, %v11095, %v11096
      %v11098 = vrot.slane %v10703, 2
      %v11099 = vsel %vm8381, %v11096, %v11098
      %v11100 = vrot.slane %v10704, 2
      %v11101 = vrot.slane %v10705, 2
      %v11102 = vsel %vm8381, %v11100, %v11101
      %v11103 = vrot.slane %v10706, 2
      %v11104 = vsel %vm8381, %v11101, %v11103
      %v11105 = vrot.slane %v10707, 2
      %v11106 = vrot.slane %v10708, 2
      %v11107 = vsel %vm8381, %v11105, %v11106
      %v11108 = vrot.slane %v10709, 2
      %v11109 = vsel %vm8381, %v11106, %v11108
      %v11110 = vrot.slane %v10710, 2
      %v11111 = vrot.slane %v10711, 2
      %v11112 = vsel %vm8381, %v11110, %v11111
      %v11113 = vrot.slane %v10712, 2
      %v11114 = vsel %vm8381, %v11111, %v11113
      %v11115 = vrot.slane %v10713, 2
      %v11116 = vrot.slane %v10714, 2
      %v11117 = vsel %vm8381, %v11115, %v11116
      %v11118 = vrot.slane %v10715, 2
      %v11119 = vsel %vm8381, %v11116, %v11118
      %v11120 = vrot.slane %v10716, 2
      %v11121 = vrot.slane %v10717, 2
      %v11122 = vsel %vm8381, %v11120, %v11121
      %v11123 = vrot.slane %v10718, 2
      %v11124 = vsel %vm8381, %v11121, %v11123
      %v11125 = vrot.slane %v10719, 2
      %v11126 = vrot.slane %v10720, 2
      %v11127 = vsel %vm8381, %v11125, %v11126
      %v11128 = vrot.slane %v10721, 2
      %v11129 = vsel %vm8381, %v11126, %v11128
      %v11130 = vrot.slane %v10722, 2
      %v11131 = vrot.slane %v10723, 2
      %v11132 = vsel %vm8381, %v11130, %v11131
      %v11133 = vrot.slane %v10724, 2
      %v11134 = vsel %vm8381, %v11131, %v11133
      %v11135 = vrot.slane %v10725, 2
      %v11136 = vrot.slane %v10726, 2
      %v11137 = vsel %vm8381, %v11135, %v11136
      %v11138 = vrot.slane %v10727, 2
      %v11139 = vsel %vm8381, %v11136, %v11138
      %v11140 = vrot.slane %v10728, 2
      %v11141 = vrot.slane %v10729, 2
      %v11142 = vsel %vm8381, %v11140, %v11141
      %v11143 = vrot.slane %v10730, 2
      %v11144 = vsel %vm8381, %v11141, %v11143
      %v11145 = vrot.slane %v10731, 2
      %v11146 = vrot.slane %v10732, 2
      %v11147 = vsel %vm8381, %v11145, %v11146
      %v11148 = vrot.slane %v10733, 2
      %v11149 = vsel %vm8381, %v11146, %v11148
      %v11150 = vrot.slane %v10734, 2
      %v11151 = vrot.slane %v10735, 2
      %v11152 = vsel %vm8381, %v11150, %v11151
      %v11153 = vrot.slane %v10736, 2
      %v11154 = vsel %vm8381, %v11151, %v11153
      %v11155 = vrot.slane %v10737, 2
      %v11156 = vrot.slane %v10738, 2
      %v11157 = vsel %vm8381, %v11155, %v11156
      %v11158 = vrot.slane %v10739, 2
      %v11159 = vsel %vm8381, %v11156, %v11158
      %v11160 = vrot.slane %v10740, 2
      %v11161 = vrot.slane %v10741, 2
      %v11162 = vsel %vm8381, %v11160, %v11161
      %v11163 = vrot.slane %v10742, 2
      %v11164 = vsel %vm8381, %v11161, %v11163
      %v11165 = vrot.slane %v10743, 2
      %v11166 = vrot.slane %v10744, 2
      %v11167 = vsel %vm8381, %v11165, %v11166
      %v11168 = vrot.slane %v10745, 2
      %v11169 = vsel %vm8381, %v11166, %v11168
      %v11170 = vrot.slane %v10746, 2
      %v11171 = vrot.slane %v10747, 2
      %v11172 = vsel %vm8381, %v11170, %v11171
      %v11173 = vrot.slane %v10748, 2
      %v11174 = vsel %vm8381, %v11171, %v11173
      %v11175 = vrot.slane %v10749, 2
      %v11176 = vrot.slane %v10750, 2
      %v11177 = vsel %vm8381, %v11175, %v11176
      %v11178 = vrot.slane %v10751, 2
      %v11179 = vsel %vm8381, %v11176, %v11178
      %v11180 = vrot.slane %v10752, 2
      %v11181 = vrot.slane %v10753, 2
      %v11182 = vsel %vm8381, %v11180, %v11181
      %v11183 = vrot.slane %v10754, 2
      %v11184 = vsel %vm8381, %v11181, %v11183
      %v11185 = vrot.slane %v10755, 2
      %v11186 = vrot.slane %v10756, 2
      %v11187 = vsel %vm8381, %v11185, %v11186
      %v11188 = vrot.slane %v10757, 2
      %v11189 = vsel %vm8381, %v11186, %v11188
      %v11190 = vrot.slane %v10758, 2
      %v11191 = vrot.slane %v10759, 2
      %v11192 = vsel %vm8381, %v11190, %v11191
      %v11193 = vrot.slane %v10760, 2
      %v11194 = vsel %vm8381, %v11191, %v11193
      %v11195 = vrot.slane %v10761, 2
      %v11196 = vrot.slane %v10762, 2
      %v11197 = vsel %vm8381, %v11195, %v11196
      %v11198 = vrot.slane %v10763, 2
      %v11199 = vsel %vm8381, %v11196, %v11198
      %v11200 = vrot.slane %v10764, 2
      %v11201 = vrot.slane %v10765, 2
      %v11202 = vsel %vm8381, %v11200, %v11201
      %v11203 = vrot.slane %v10766, 2
      %v11204 = vsel %vm8381, %v11201, %v11203
      %v11205 = vrot.slane %v10767, 2
      %v11206 = vrot.slane %v10768, 2
      %v11207 = vsel %vm8381, %v11205, %v11206
      %v11208 = vrot.slane %v10769, 2
      %v11209 = vsel %vm8381, %v11206, %v11208
      %v11210 = vrot.slane %v10770, 2
      %v11211 = vrot.slane %v10771, 2
      %v11212 = vsel %vm8381, %v11210, %v11211
      %v11213 = vrot.slane %v10772, 2
      %v11214 = vsel %vm8381, %v11211, %v11213
      %v11215 = vrot.slane %v10773, 2
      %v11216 = vrot.slane %v10774, 2
      %v11217 = vsel %vm8381, %v11215, %v11216
      %v11218 = vrot.slane %v10775, 2
      %v11219 = vsel %vm8381, %v11216, %v11218
      %v11220 = vrot.slane %v10776, 2
      %v11221 = vrot.slane %v10777, 2
      %v11222 = vsel %vm8381, %v11220, %v11221
      %v11223 = vrot.slane %v10778, 2
      %v11224 = vsel %vm8381, %v11221, %v11223
      %v11225 = vrot.slane %v10779, 2
      %v11226 = vrot.slane %v10780, 2
      %v11227 = vsel %vm8381, %v11225, %v11226
      %v11228 = vrot.slane %v10781, 2
      %v11229 = vsel %vm8381, %v11226, %v11228
      %v11230 = vrot.slane %v10782, 2
      %v11231 = vrot.slane %v10783, 2
      %v11232 = vsel %vm8381, %v11230, %v11231
      %v11233 = vrot.slane %v10784, 2
      %v11234 = vsel %vm8381, %v11231, %v11233
      %v11235 = vrot.slane %v10785, 2
      %v11236 = vrot.slane %v10786, 2
      %v11237 = vsel %vm8381, %v11235, %v11236
      %v11238 = vrot.slane %v10787, 2
      %v11239 = vsel %vm8381, %v11236, %v11238
      %v11240 = vrot.slane %v10788, 2
      %v11241 = vrot.slane %v10789, 2
      %v11242 = vsel %vm8381, %v11240, %v11241
      %v11243 = vrot.slane %v10790, 2
      %v11244 = vsel %vm8381, %v11241, %v11243
      %v11245 = vrot.slane %v10791, 2
      %v11246 = vrot.slane %v10792, 2
      %v11247 = vsel %vm8381, %v11245, %v11246
      %v11248 = vrot.slane %v10793, 2
      %v11249 = vsel %vm8381, %v11246, %v11248
      %v11250 = vrot.slane %v10794, 2
      %v11251 = vrot.slane %v10795, 2
      %v11252 = vsel %vm8381, %v11250, %v11251
      %v11253 = vrot.slane %v10796, 2
      %v11254 = vsel %vm8381, %v11251, %v11253
      %v11255 = vrot.slane %v10797, 2
      %v11256 = vrot.slane %v10798, 2
      %v11257 = vsel %vm8381, %v11255, %v11256
      %v11258 = vrot.slane %v10799, 2
      %v11259 = vsel %vm8381, %v11256, %v11258
      %v11260 = vrot.slane %v10800, 2
      %v11261 = vrot.slane %v10801, 2
      %v11262 = vsel %vm8381, %v11260, %v11261
      %v11263 = vrot.slane %v10802, 2
      %v11264 = vsel %vm8381, %v11261, %v11263
      %v11265 = vrot.slane %v10803, 2
      %v11266 = vrot.slane %v10804, 2
      %v11267 = vsel %vm8381, %v11265, %v11266
      %v11268 = vrot.slane %v10805, 2
      %v11269 = vsel %vm8381, %v11266, %v11268
      %v11270 = vrot.slane %v10806, 2
      %v11271 = vrot.slane %v10807, 2
      %v11272 = vsel %vm8381, %v11270, %v11271
      %v11273 = vrot.slane %v10808, 2
      %v11274 = vsel %vm8381, %v11271, %v11273
      %v11275 = vrot.slane %v10809, 2
      %v11276 = vrot.slane %v10810, 2
      %v11277 = vsel %vm8381, %v11275, %v11276
      %v11278 = vrot.slane %v10811, 2
      %v11279 = vsel %vm8381, %v11276, %v11278
      %v11280 = vrot.slane %v10812, 2
      %v11281 = vrot.slane %v10813, 2
      %v11282 = vsel %vm8381, %v11280, %v11281
      %v11283 = vrot.slane %v10814, 2
      %v11284 = vsel %vm8381, %v11281, %v11283
      %v11285 = vrot.slane %v10815, 2
      %v11286 = vrot.slane %v10816, 2
      %v11287 = vsel %vm8381, %v11285, %v11286
      %v11288 = vrot.slane %v10817, 2
      %v11289 = vsel %vm8381, %v11286, %v11288
      %v11290 = vrot.slane %v10818, 2
      %v11291 = vrot.slane %v10819, 2
      %v11292 = vsel %vm8381, %v11290, %v11291
      %v11293 = vrot.slane %v10820, 2
      %v11294 = vsel %vm8381, %v11291, %v11293
      %v11295 = vrot.slane %v10821, 2
      %v11296 = vrot.slane %v10822, 2
      %v11297 = vsel %vm8381, %v11295, %v11296
      %v11298 = vrot.slane %v10823, 2
      %v11299 = vsel %vm8381, %v11296, %v11298
      %v11300 = vrot.slane %v10824, 2
      %v11301 = vrot.slane %v10825, 2
      %v11302 = vsel %vm8381, %v11300, %v11301
      %v11303 = vrot.slane %v10826, 2
      %v11304 = vsel %vm8381, %v11301, %v11303
      %v11305 = vrot.slane %v10827, 2
      %v11306 = vrot.slane %v10828, 2
      %v11307 = vsel %vm8381, %v11305, %v11306
      %v11308 = vrot.slane %v10829, 2
      %v11309 = vsel %vm8381, %v11306, %v11308
      %v11310 = vrot.slane %v10830, 2
      %v11311 = vrot.slane %v10831, 2
      %v11312 = vsel %vm8381, %v11310, %v11311
      %v11313 = vrot.slane %v10832, 2
      %v11314 = vsel %vm8381, %v11311, %v11313
      %v11315 = vrot.slane %v10833, 2
      %v11316 = vrot.slane %v10834, 2
      %v11317 = vsel %vm8381, %v11315, %v11316
      %v11318 = vrot.slane %v10835, 2
      %v11319 = vsel %vm8381, %v11316, %v11318
      %v11320 = vrot.slane %v10836, 2
      %v11321 = vrot.slane %v10837, 2
      %v11322 = vsel %vm8381, %v11320, %v11321
      %v11323 = vrot.slane %v10838, 2
      %v11324 = vsel %vm8381, %v11321, %v11323
      %v11325 = vrot.slane %v10839, 2
      %v11326 = vrot.slane %v10840, 2
      %v11327 = vsel %vm8381, %v11325, %v11326
      %v11328 = vrot.slane %v10841, 2
      %v11329 = vsel %vm8381, %v11326, %v11328
      %v11330 = vrot.slane %v10842, 2
      %v11331 = vrot.slane %v10843, 2
      %v11332 = vsel %vm8381, %v11330, %v11331
      %v11333 = vrot.slane %v10844, 2
      %v11334 = vsel %vm8381, %v11331, %v11333
      %v11335 = vrot.slane %v10845, 2
      %v11336 = vrot.slane %v10846, 2
      %v11337 = vsel %vm8381, %v11335, %v11336
      %v11338 = vrot.slane %v10847, 2
      %v11339 = vsel %vm8381, %v11336, %v11338
      %v11340 = vrot.slane %v10848, 2
      %v11341 = vrot.slane %v10849, 2
      %v11342 = vsel %vm8381, %v11340, %v11341
      %v11343 = vrot.slane %v10850, 2
      %v11344 = vsel %vm8381, %v11341, %v11343
      %v11345 = vrot.slane %v10851, 2
      %v11346 = vrot.slane %v10852, 2
      %v11347 = vsel %vm8381, %v11345, %v11346
      %v11348 = vrot.slane %v10853, 2
      %v11349 = vsel %vm8381, %v11346, %v11348
      %v11350 = vrot.slane %v10854, 2
      %v11351 = vrot.slane %v10855, 2
      %v11352 = vsel %vm8381, %v11350, %v11351
      %v11353 = vrot.slane %v10856, 2
      %v11354 = vsel %vm8381, %v11351, %v11353
      %v11355 = vrot.slane %v10857, 2
      %v11356 = vrot.slane %v10858, 2
      %v11357 = vsel %vm8381, %v11355, %v11356
      %v11358 = vrot.slane %v10859, 2
      %v11359 = vsel %vm8381, %v11356, %v11358
      %v11360 = vrot.slane %v10860, 2
      %v11361 = vrot.slane %v10861, 2
      %v11362 = vsel %vm8381, %v11360, %v11361
      %v11363 = vrot.slane %v10862, 2
      %v11364 = vsel %vm8381, %v11361, %v11363
      %v11365 = vrot.slane %v10863, 2
      %v11366 = vrot.slane %v10864, 2
      %v11367 = vsel %vm8381, %v11365, %v11366
      %v11368 = vrot.slane %v10865, 2
      %v11369 = vsel %vm8381, %v11366, %v11368
      %v11370 = vrot.slane %v10866, 2
      %v11371 = vrot.slane %v10867, 2
      %v11372 = vsel %vm8381, %v11370, %v11371
      %v11373 = vrot.slane %v10868, 2
      %v11374 = vsel %vm8381, %v11371, %v11373
      %v11375 = vrot.slane %v10869, 2
      %v11376 = vrot.slane %v10870, 2
      %v11377 = vsel %vm8381, %v11375, %v11376
      %v11378 = vrot.slane %v10871, 2
      %v11379 = vsel %vm8381, %v11376, %v11378
      %v11380 = vrot.slane %v10872, 2
      %v11381 = vrot.slane %v10873, 2
      %v11382 = vsel %vm8381, %v11380, %v11381
      %v11383 = vrot.slane %v10874, 2
      %v11384 = vsel %vm8381, %v11381, %v11383
      %v11385 = vrot.slane %v10875, 2
      %v11386 = vrot.slane %v10876, 2
      %v11387 = vsel %vm8381, %v11385, %v11386
      %v11388 = vrot.slane %v10877, 2
      %v11389 = vsel %vm8381, %v11386, %v11388
      %11390 = vrot.lane.b32.xlu0 %v11072, 126
      %v11391 = vpop.permute.xlu0 %11390
      %11392 = vrot.lane.b32.xlu0 %v11074, 126
      %v11393 = vpop.permute.xlu0 %11392
      %11394 = vrot.lane.b32.xlu0 %v11077, 126
      %v11395 = vpop.permute.xlu0 %11394
      %11396 = vrot.lane.b32.xlu0 %v11079, 126
      %v11397 = vpop.permute.xlu0 %11396
      %11398 = vrot.lane.b32.xlu0 %v11082, 126
      %v11399 = vpop.permute.xlu0 %11398
      %11400 = vrot.lane.b32.xlu0 %v11084, 126
      %v11401 = vpop.permute.xlu0 %11400
      %11402 = vrot.lane.b32.xlu0 %v11087, 126
      %v11403 = vpop.permute.xlu0 %11402
      %11404 = vrot.lane.b32.xlu0 %v11089, 126
      %v11405 = vpop.permute.xlu0 %11404
      %11406 = vrot.lane.b32.xlu0 %v11092, 126
      %v11407 = vpop.permute.xlu0 %11406
      %11408 = vrot.lane.b32.xlu0 %v11094, 126
      %v11409 = vpop.permute.xlu0 %11408
      %11410 = vrot.lane.b32.xlu0 %v11097, 126
      %v11411 = vpop.permute.xlu0 %11410
      %11412 = vrot.lane.b32.xlu0 %v11099, 126
      %v11413 = vpop.permute.xlu0 %11412
      %11414 = vrot.lane.b32.xlu0 %v11102, 126
      %v11415 = vpop.permute.xlu0 %11414
      %11416 = vrot.lane.b32.xlu0 %v11104, 126
      %v11417 = vpop.permute.xlu0 %11416
      %11418 = vrot.lane.b32.xlu0 %v11107, 126
      %v11419 = vpop.permute.xlu0 %11418
      %11420 = vrot.lane.b32.xlu0 %v11109, 126
      %v11421 = vpop.permute.xlu0 %11420
      %11422 = vrot.lane.b32.xlu0 %v11112, 126
      %v11423 = vpop.permute.xlu0 %11422
      %11424 = vrot.lane.b32.xlu0 %v11114, 126
      %v11425 = vpop.permute.xlu0 %11424
      %11426 = vrot.lane.b32.xlu0 %v11117, 126
      %v11427 = vpop.permute.xlu0 %11426
      %11428 = vrot.lane.b32.xlu0 %v11119, 126
      %v11429 = vpop.permute.xlu0 %11428
      %11430 = vrot.lane.b32.xlu0 %v11122, 126
      %v11431 = vpop.permute.xlu0 %11430
      %11432 = vrot.lane.b32.xlu0 %v11124, 126
      %v11433 = vpop.permute.xlu0 %11432
      %11434 = vrot.lane.b32.xlu0 %v11127, 126
      %v11435 = vpop.permute.xlu0 %11434
      %11436 = vrot.lane.b32.xlu0 %v11129, 126
      %v11437 = vpop.permute.xlu0 %11436
      %11438 = vrot.lane.b32.xlu0 %v11132, 126
      %v11439 = vpop.permute.xlu0 %11438
      %11440 = vrot.lane.b32.xlu0 %v11134, 126
      %v11441 = vpop.permute.xlu0 %11440
      %11442 = vrot.lane.b32.xlu0 %v11137, 126
      %v11443 = vpop.permute.xlu0 %11442
      %11444 = vrot.lane.b32.xlu0 %v11139, 126
      %v11445 = vpop.permute.xlu0 %11444
      %11446 = vrot.lane.b32.xlu0 %v11142, 126
      %v11447 = vpop.permute.xlu0 %11446
      %11448 = vrot.lane.b32.xlu0 %v11144, 126
      %v11449 = vpop.permute.xlu0 %11448
      %11450 = vrot.lane.b32.xlu0 %v11147, 126
      %v11451 = vpop.permute.xlu0 %11450
      %11452 = vrot.lane.b32.xlu0 %v11149, 126
      %v11453 = vpop.permute.xlu0 %11452
      %11454 = vrot.lane.b32.xlu0 %v11152, 126
      %v11455 = vpop.permute.xlu0 %11454
      %11456 = vrot.lane.b32.xlu0 %v11154, 126
      %v11457 = vpop.permute.xlu0 %11456
      %11458 = vrot.lane.b32.xlu0 %v11157, 126
      %v11459 = vpop.permute.xlu0 %11458
      %11460 = vrot.lane.b32.xlu0 %v11159, 126
      %v11461 = vpop.permute.xlu0 %11460
      %11462 = vrot.lane.b32.xlu0 %v11162, 126
      %v11463 = vpop.permute.xlu0 %11462
      %11464 = vrot.lane.b32.xlu0 %v11164, 126
      %v11465 = vpop.permute.xlu0 %11464
      %11466 = vrot.lane.b32.xlu0 %v11167, 126
      %v11467 = vpop.permute.xlu0 %11466
      %11468 = vrot.lane.b32.xlu0 %v11169, 126
      %v11469 = vpop.permute.xlu0 %11468
      %11470 = vrot.lane.b32.xlu0 %v11172, 126
      %v11471 = vpop.permute.xlu0 %11470
      %11472 = vrot.lane.b32.xlu0 %v11174, 126
      %v11473 = vpop.permute.xlu0 %11472
      %11474 = vrot.lane.b32.xlu0 %v11177, 126
      %v11475 = vpop.permute.xlu0 %11474
      %11476 = vrot.lane.b32.xlu0 %v11179, 126
      %v11477 = vpop.permute.xlu0 %11476
      %11478 = vrot.lane.b32.xlu0 %v11182, 126
      %v11479 = vpop.permute.xlu0 %11478
      %11480 = vrot.lane.b32.xlu0 %v11184, 126
      %v11481 = vpop.permute.xlu0 %11480
      %11482 = vrot.lane.b32.xlu0 %v11187, 126
      %v11483 = vpop.permute.xlu0 %11482
      %11484 = vrot.lane.b32.xlu0 %v11189, 126
      %v11485 = vpop.permute.xlu0 %11484
      %11486 = vrot.lane.b32.xlu0 %v11192, 126
      %v11487 = vpop.permute.xlu0 %11486
      %11488 = vrot.lane.b32.xlu0 %v11194, 126
      %v11489 = vpop.permute.xlu0 %11488
      %11490 = vrot.lane.b32.xlu0 %v11197, 126
      %v11491 = vpop.permute.xlu0 %11490
      %11492 = vrot.lane.b32.xlu0 %v11199, 126
      %v11493 = vpop.permute.xlu0 %11492
      %11494 = vrot.lane.b32.xlu0 %v11202, 126
      %v11495 = vpop.permute.xlu0 %11494
      %11496 = vrot.lane.b32.xlu0 %v11204, 126
      %v11497 = vpop.permute.xlu0 %11496
      %11498 = vrot.lane.b32.xlu0 %v11207, 126
      %v11499 = vpop.permute.xlu0 %11498
      %11500 = vrot.lane.b32.xlu0 %v11209, 126
      %v11501 = vpop.permute.xlu0 %11500
      %11502 = vrot.lane.b32.xlu0 %v11212, 126
      %v11503 = vpop.permute.xlu0 %11502
      %11504 = vrot.lane.b32.xlu0 %v11214, 126
      %v11505 = vpop.permute.xlu0 %11504
      %11506 = vrot.lane.b32.xlu0 %v11217, 126
      %v11507 = vpop.permute.xlu0 %11506
      %11508 = vrot.lane.b32.xlu0 %v11219, 126
      %v11509 = vpop.permute.xlu0 %11508
      %11510 = vrot.lane.b32.xlu0 %v11222, 126
      %v11511 = vpop.permute.xlu0 %11510
      %11512 = vrot.lane.b32.xlu0 %v11224, 126
      %v11513 = vpop.permute.xlu0 %11512
      %11514 = vrot.lane.b32.xlu0 %v11227, 126
      %v11515 = vpop.permute.xlu0 %11514
      %11516 = vrot.lane.b32.xlu0 %v11229, 126
      %v11517 = vpop.permute.xlu0 %11516
      %11518 = vrot.lane.b32.xlu0 %v11232, 126
      %v11519 = vpop.permute.xlu0 %11518
      %11520 = vrot.lane.b32.xlu0 %v11234, 126
      %v11521 = vpop.permute.xlu0 %11520
      %11522 = vrot.lane.b32.xlu0 %v11237, 126
      %v11523 = vpop.permute.xlu0 %11522
      %11524 = vrot.lane.b32.xlu0 %v11239, 126
      %v11525 = vpop.permute.xlu0 %11524
      %11526 = vrot.lane.b32.xlu0 %v11242, 126
      %v11527 = vpop.permute.xlu0 %11526
      %11528 = vrot.lane.b32.xlu0 %v11244, 126
      %v11529 = vpop.permute.xlu0 %11528
      %11530 = vrot.lane.b32.xlu0 %v11247, 126
      %v11531 = vpop.permute.xlu0 %11530
      %11532 = vrot.lane.b32.xlu0 %v11249, 126
      %v11533 = vpop.permute.xlu0 %11532
      %11534 = vrot.lane.b32.xlu0 %v11252, 126
      %v11535 = vpop.permute.xlu0 %11534
      %11536 = vrot.lane.b32.xlu0 %v11254, 126
      %v11537 = vpop.permute.xlu0 %11536
      %11538 = vrot.lane.b32.xlu0 %v11257, 126
      %v11539 = vpop.permute.xlu0 %11538
      %11540 = vrot.lane.b32.xlu0 %v11259, 126
      %v11541 = vpop.permute.xlu0 %11540
      %11542 = vrot.lane.b32.xlu0 %v11262, 126
      %v11543 = vpop.permute.xlu0 %11542
      %11544 = vrot.lane.b32.xlu0 %v11264, 126
      %v11545 = vpop.permute.xlu0 %11544
      %11546 = vrot.lane.b32.xlu0 %v11267, 126
      %v11547 = vpop.permute.xlu0 %11546
      %11548 = vrot.lane.b32.xlu0 %v11269, 126
      %v11549 = vpop.permute.xlu0 %11548
      %11550 = vrot.lane.b32.xlu0 %v11272, 126
      %v11551 = vpop.permute.xlu0 %11550
      %11552 = vrot.lane.b32.xlu0 %v11274, 126
      %v11553 = vpop.permute.xlu0 %11552
      %11554 = vrot.lane.b32.xlu0 %v11277, 126
      %v11555 = vpop.permute.xlu0 %11554
      %11556 = vrot.lane.b32.xlu0 %v11279, 126
      %v11557 = vpop.permute.xlu0 %11556
      %11558 = vrot.lane.b32.xlu0 %v11282, 126
      %v11559 = vpop.permute.xlu0 %11558
      %11560 = vrot.lane.b32.xlu0 %v11284, 126
      %v11561 = vpop.permute.xlu0 %11560
      %11562 = vrot.lane.b32.xlu0 %v11287, 126
      %v11563 = vpop.permute.xlu0 %11562
      %11564 = vrot.lane.b32.xlu0 %v11289, 126
      %v11565 = vpop.permute.xlu0 %11564
      %11566 = vrot.lane.b32.xlu0 %v11292, 126
      %v11567 = vpop.permute.xlu0 %11566
      %11568 = vrot.lane.b32.xlu0 %v11294, 126
      %v11569 = vpop.permute.xlu0 %11568
      %11570 = vrot.lane.b32.xlu0 %v11297, 126
      %v11571 = vpop.permute.xlu0 %11570
      %11572 = vrot.lane.b32.xlu0 %v11299, 126
      %v11573 = vpop.permute.xlu0 %11572
      %11574 = vrot.lane.b32.xlu0 %v11302, 126
      %v11575 = vpop.permute.xlu0 %11574
      %11576 = vrot.lane.b32.xlu0 %v11304, 126
      %v11577 = vpop.permute.xlu0 %11576
      %11578 = vrot.lane.b32.xlu0 %v11307, 126
      %v11579 = vpop.permute.xlu0 %11578
      %11580 = vrot.lane.b32.xlu0 %v11309, 126
      %v11581 = vpop.permute.xlu0 %11580
      %11582 = vrot.lane.b32.xlu0 %v11312, 126
      %v11583 = vpop.permute.xlu0 %11582
      %11584 = vrot.lane.b32.xlu0 %v11314, 126
      %v11585 = vpop.permute.xlu0 %11584
      %11586 = vrot.lane.b32.xlu0 %v11317, 126
      %v11587 = vpop.permute.xlu0 %11586
      %11588 = vrot.lane.b32.xlu0 %v11319, 126
      %v11589 = vpop.permute.xlu0 %11588
      %11590 = vrot.lane.b32.xlu0 %v11322, 126
      %v11591 = vpop.permute.xlu0 %11590
      %11592 = vrot.lane.b32.xlu0 %v11324, 126
      %v11593 = vpop.permute.xlu0 %11592
      %11594 = vrot.lane.b32.xlu0 %v11327, 126
      %v11595 = vpop.permute.xlu0 %11594
      %11596 = vrot.lane.b32.xlu0 %v11329, 126
      %v11597 = vpop.permute.xlu0 %11596
      %11598 = vrot.lane.b32.xlu0 %v11332, 126
      %v11599 = vpop.permute.xlu0 %11598
      %11600 = vrot.lane.b32.xlu0 %v11334, 126
      %v11601 = vpop.permute.xlu0 %11600
      %11602 = vrot.lane.b32.xlu0 %v11337, 126
      %v11603 = vpop.permute.xlu0 %11602
      %11604 = vrot.lane.b32.xlu0 %v11339, 126
      %v11605 = vpop.permute.xlu0 %11604
      %11606 = vrot.lane.b32.xlu0 %v11342, 126
      %v11607 = vpop.permute.xlu0 %11606
      %11608 = vrot.lane.b32.xlu0 %v11344, 126
      %v11609 = vpop.permute.xlu0 %11608
      %11610 = vrot.lane.b32.xlu0 %v11347, 126
      %v11611 = vpop.permute.xlu0 %11610
      %11612 = vrot.lane.b32.xlu0 %v11349, 126
      %v11613 = vpop.permute.xlu0 %11612
      %11614 = vrot.lane.b32.xlu0 %v11352, 126
      %v11615 = vpop.permute.xlu0 %11614
      %11616 = vrot.lane.b32.xlu0 %v11354, 126
      %v11617 = vpop.permute.xlu0 %11616
      %11618 = vrot.lane.b32.xlu0 %v11357, 126
      %v11619 = vpop.permute.xlu0 %11618
      %11620 = vrot.lane.b32.xlu0 %v11359, 126
      %v11621 = vpop.permute.xlu0 %11620
      %11622 = vrot.lane.b32.xlu0 %v11362, 126
      %v11623 = vpop.permute.xlu0 %11622
      %11624 = vrot.lane.b32.xlu0 %v11364, 126
      %v11625 = vpop.permute.xlu0 %11624
      %11626 = vrot.lane.b32.xlu0 %v11367, 126
      %v11627 = vpop.permute.xlu0 %11626
      %11628 = vrot.lane.b32.xlu0 %v11369, 126
      %v11629 = vpop.permute.xlu0 %11628
      %11630 = vrot.lane.b32.xlu0 %v11372, 126
      %v11631 = vpop.permute.xlu0 %11630
      %11632 = vrot.lane.b32.xlu0 %v11374, 126
      %v11633 = vpop.permute.xlu0 %11632
      %11634 = vrot.lane.b32.xlu0 %v11377, 126
      %v11635 = vpop.permute.xlu0 %11634
      %11636 = vrot.lane.b32.xlu0 %v11379, 126
      %v11637 = vpop.permute.xlu0 %11636
      %11638 = vrot.lane.b32.xlu0 %v11382, 126
      %v11639 = vpop.permute.xlu0 %11638
      %11640 = vrot.lane.b32.xlu0 %v11384, 126
      %v11641 = vpop.permute.xlu0 %11640
      %11642 = vrot.lane.b32.xlu0 %v11387, 126
      %v11643 = vpop.permute.xlu0 %11642
      %11644 = vrot.lane.b32.xlu0 %v11389, 126
      %v11645 = vpop.permute.xlu0 %11644
      %v11774 = vadd.f32 %v10302, %v11391
      %v11775 = vadd.f32 %v10303, %v11393
      %v11776 = vadd.f32 %v10304, %v11395
      %v11777 = vadd.f32 %v10305, %v11397
      %v11778 = vadd.f32 %v10306, %v11399
      %v11779 = vadd.f32 %v10307, %v11401
      %v11780 = vadd.f32 %v10308, %v11403
      %v11781 = vadd.f32 %v10309, %v11405
      %v11782 = vadd.f32 %v10310, %v11407
      %v11783 = vadd.f32 %v10311, %v11409
      %v11784 = vadd.f32 %v10312, %v11411
      %v11785 = vadd.f32 %v10313, %v11413
      %v11786 = vadd.f32 %v10314, %v11415
      %v11787 = vadd.f32 %v10315, %v11417
      %v11788 = vadd.f32 %v10316, %v11419
      %v11789 = vadd.f32 %v10317, %v11421
      %v11790 = vadd.f32 %v10318, %v11423
      %v11791 = vadd.f32 %v10319, %v11425
      %v11792 = vadd.f32 %v10320, %v11427
      %v11793 = vadd.f32 %v10321, %v11429
      %v11794 = vadd.f32 %v10322, %v11431
      %v11795 = vadd.f32 %v10323, %v11433
      %v11796 = vadd.f32 %v10324, %v11435
      %v11797 = vadd.f32 %v10325, %v11437
      %v11798 = vadd.f32 %v10326, %v11439
      %v11799 = vadd.f32 %v10327, %v11441
      %v11800 = vadd.f32 %v10328, %v11443
      %v11801 = vadd.f32 %v10329, %v11445
      %v11802 = vadd.f32 %v10330, %v11447
      %v11803 = vadd.f32 %v10331, %v11449
      %v11804 = vadd.f32 %v10332, %v11451
      %v11805 = vadd.f32 %v10333, %v11453
      %v11806 = vadd.f32 %v10334, %v11455
      %v11807 = vadd.f32 %v10335, %v11457
      %v11808 = vadd.f32 %v10336, %v11459
      %v11809 = vadd.f32 %v10337, %v11461
      %v11810 = vadd.f32 %v10338, %v11463
      %v11811 = vadd.f32 %v10339, %v11465
      %v11812 = vadd.f32 %v10340, %v11467
      %v11813 = vadd.f32 %v10341, %v11469
      %v11814 = vadd.f32 %v10342, %v11471
      %v11815 = vadd.f32 %v10343, %v11473
      %v11816 = vadd.f32 %v10344, %v11475
      %v11817 = vadd.f32 %v10345, %v11477
      %v11818 = vadd.f32 %v10346, %v11479
      %v11819 = vadd.f32 %v10347, %v11481
      %v11820 = vadd.f32 %v10348, %v11483
      %v11821 = vadd.f32 %v10349, %v11485
      %v11822 = vadd.f32 %v10350, %v11487
      %v11823 = vadd.f32 %v10351, %v11489
      %v11824 = vadd.f32 %v10352, %v11491
      %v11825 = vadd.f32 %v10353, %v11493
      %v11826 = vadd.f32 %v10354, %v11495
      %v11827 = vadd.f32 %v10355, %v11497
      %v11828 = vadd.f32 %v10356, %v11499
      %v11829 = vadd.f32 %v10357, %v11501
      %v11830 = vadd.f32 %v10358, %v11503
      %v11831 = vadd.f32 %v10359, %v11505
      %v11832 = vadd.f32 %v10360, %v11507
      %v11833 = vadd.f32 %v10361, %v11509
      %v11834 = vadd.f32 %v10362, %v11511
      %v11835 = vadd.f32 %v10363, %v11513
      %v11836 = vadd.f32 %v10364, %v11515
      %v11837 = vadd.f32 %v10365, %v11517
      %v11838 = vadd.f32 %v10366, %v11519
      %v11839 = vadd.f32 %v10367, %v11521
      %v11840 = vadd.f32 %v10368, %v11523
      %v11841 = vadd.f32 %v10369, %v11525
      %v11842 = vadd.f32 %v10370, %v11527
      %v11843 = vadd.f32 %v10371, %v11529
      %v11844 = vadd.f32 %v10372, %v11531
      %v11845 = vadd.f32 %v10373, %v11533
      %v11846 = vadd.f32 %v10374, %v11535
      %v11847 = vadd.f32 %v10375, %v11537
      %v11848 = vadd.f32 %v10376, %v11539
      %v11849 = vadd.f32 %v10377, %v11541
      %v11850 = vadd.f32 %v10378, %v11543
      %v11851 = vadd.f32 %v10379, %v11545
      %v11852 = vadd.f32 %v10380, %v11547
      %v11853 = vadd.f32 %v10381, %v11549
      %v11854 = vadd.f32 %v10382, %v11551
      %v11855 = vadd.f32 %v10383, %v11553
      %v11856 = vadd.f32 %v10384, %v11555
      %v11857 = vadd.f32 %v10385, %v11557
      %v11858 = vadd.f32 %v10386, %v11559
      %v11859 = vadd.f32 %v10387, %v11561
      %v11860 = vadd.f32 %v10388, %v11563
      %v11861 = vadd.f32 %v10389, %v11565
      %v11862 = vadd.f32 %v10390, %v11567
      %v11863 = vadd.f32 %v10391, %v11569
      %v11864 = vadd.f32 %v10392, %v11571
      %v11865 = vadd.f32 %v10393, %v11573
      %v11866 = vadd.f32 %v10394, %v11575
      %v11867 = vadd.f32 %v10395, %v11577
      %v11868 = vadd.f32 %v10396, %v11579
      %v11869 = vadd.f32 %v10397, %v11581
      %v11870 = vadd.f32 %v10398, %v11583
      %v11871 = vadd.f32 %v10399, %v11585
      %v11872 = vadd.f32 %v10400, %v11587
      %v11873 = vadd.f32 %v10401, %v11589
      %v11874 = vadd.f32 %v10402, %v11591
      %v11875 = vadd.f32 %v10403, %v11593
      %v11876 = vadd.f32 %v10404, %v11595
      %v11877 = vadd.f32 %v10405, %v11597
      %v11878 = vadd.f32 %v10406, %v11599
      %v11879 = vadd.f32 %v10407, %v11601
      %v11880 = vadd.f32 %v10408, %v11603
      %v11881 = vadd.f32 %v10409, %v11605
      %v11882 = vadd.f32 %v10410, %v11607
      %v11883 = vadd.f32 %v10411, %v11609
      %v11884 = vadd.f32 %v10412, %v11611
      %v11885 = vadd.f32 %v10413, %v11613
      %v11886 = vadd.f32 %v10414, %v11615
      %v11887 = vadd.f32 %v10415, %v11617
      %v11888 = vadd.f32 %v10416, %v11619
      %v11889 = vadd.f32 %v10417, %v11621
      %v11890 = vadd.f32 %v10418, %v11623
      %v11891 = vadd.f32 %v10419, %v11625
      %v11892 = vadd.f32 %v10420, %v11627
      %v11893 = vadd.f32 %v10421, %v11629
      %v11894 = vadd.f32 %v10422, %v11631
      %v11895 = vadd.f32 %v10423, %v11633
      %v11896 = vadd.f32 %v10424, %v11635
      %v11897 = vadd.f32 %v10425, %v11637
      %v11898 = vadd.f32 %v10426, %v11639
      %v11899 = vadd.f32 %v10427, %v11641
      %v11900 = vadd.f32 %v10428, %v11643
      %v11901 = vadd.f32 %v10429, %v11645
      %vm11902 = vcmp.ge.f32.partialorder %v11774, 0.0
      %vm11903 = vcmp.ge.f32.partialorder %v11775, 0.0
      %vm11904 = vcmp.ge.f32.partialorder %v11776, 0.0
      %vm11905 = vcmp.ge.f32.partialorder %v11777, 0.0
      %vm11906 = vcmp.ge.f32.partialorder %v11778, 0.0
      %vm11907 = vcmp.ge.f32.partialorder %v11779, 0.0
      %vm11908 = vcmp.ge.f32.partialorder %v11780, 0.0
      %vm11909 = vcmp.ge.f32.partialorder %v11781, 0.0
      %vm11910 = vcmp.ge.f32.partialorder %v11782, 0.0
      %vm11911 = vcmp.ge.f32.partialorder %v11783, 0.0
      %vm11912 = vcmp.ge.f32.partialorder %v11784, 0.0
      %vm11913 = vcmp.ge.f32.partialorder %v11785, 0.0
      %vm11914 = vcmp.ge.f32.partialorder %v11786, 0.0
      %vm11915 = vcmp.ge.f32.partialorder %v11787, 0.0
      %vm11916 = vcmp.ge.f32.partialorder %v11788, 0.0
      %vm11917 = vcmp.ge.f32.partialorder %v11789, 0.0
      %vm11918 = vcmp.ge.f32.partialorder %v11790, 0.0
      %vm11919 = vcmp.ge.f32.partialorder %v11791, 0.0
      %vm11920 = vcmp.ge.f32.partialorder %v11792, 0.0
      %vm11921 = vcmp.ge.f32.partialorder %v11793, 0.0
      %vm11922 = vcmp.ge.f32.partialorder %v11794, 0.0
      %vm11923 = vcmp.ge.f32.partialorder %v11795, 0.0
      %vm11924 = vcmp.ge.f32.partialorder %v11796, 0.0
      %vm11925 = vcmp.ge.f32.partialorder %v11797, 0.0
      %vm11926 = vcmp.ge.f32.partialorder %v11798, 0.0
      %vm11927 = vcmp.ge.f32.partialorder %v11799, 0.0
      %vm11928 = vcmp.ge.f32.partialorder %v11800, 0.0
      %vm11929 = vcmp.ge.f32.partialorder %v11801, 0.0
      %vm11930 = vcmp.ge.f32.partialorder %v11802, 0.0
      %vm11931 = vcmp.ge.f32.partialorder %v11803, 0.0
      %vm11932 = vcmp.ge.f32.partialorder %v11804, 0.0
      %vm11933 = vcmp.ge.f32.partialorder %v11805, 0.0
      %vm11934 = vcmp.ge.f32.partialorder %v11806, 0.0
      %vm11935 = vcmp.ge.f32.partialorder %v11807, 0.0
      %vm11936 = vcmp.ge.f32.partialorder %v11808, 0.0
      %vm11937 = vcmp.ge.f32.partialorder %v11809, 0.0
      %vm11938 = vcmp.ge.f32.partialorder %v11810, 0.0
      %vm11939 = vcmp.ge.f32.partialorder %v11811, 0.0
      %vm11940 = vcmp.ge.f32.partialorder %v11812, 0.0
      %vm11941 = vcmp.ge.f32.partialorder %v11813, 0.0
      %vm11942 = vcmp.ge.f32.partialorder %v11814, 0.0
      %vm11943 = vcmp.ge.f32.partialorder %v11815, 0.0
      %vm11944 = vcmp.ge.f32.partialorder %v11816, 0.0
      %vm11945 = vcmp.ge.f32.partialorder %v11817, 0.0
      %vm11946 = vcmp.ge.f32.partialorder %v11818, 0.0
      %vm11947 = vcmp.ge.f32.partialorder %v11819, 0.0
      %vm11948 = vcmp.ge.f32.partialorder %v11820, 0.0
      %vm11949 = vcmp.ge.f32.partialorder %v11821, 0.0
      %vm11950 = vcmp.ge.f32.partialorder %v11822, 0.0
      %vm11951 = vcmp.ge.f32.partialorder %v11823, 0.0
      %vm11952 = vcmp.ge.f32.partialorder %v11824, 0.0
      %vm11953 = vcmp.ge.f32.partialorder %v11825, 0.0
      %vm11954 = vcmp.ge.f32.partialorder %v11826, 0.0
      %vm11955 = vcmp.ge.f32.partialorder %v11827, 0.0
      %vm11956 = vcmp.ge.f32.partialorder %v11828, 0.0
      %vm11957 = vcmp.ge.f32.partialorder %v11829, 0.0
      %vm11958 = vcmp.ge.f32.partialorder %v11830, 0.0
      %vm11959 = vcmp.ge.f32.partialorder %v11831, 0.0
      %vm11960 = vcmp.ge.f32.partialorder %v11832, 0.0
      %vm11961 = vcmp.ge.f32.partialorder %v11833, 0.0
      %vm11962 = vcmp.ge.f32.partialorder %v11834, 0.0
      %vm11963 = vcmp.ge.f32.partialorder %v11835, 0.0
      %vm11964 = vcmp.ge.f32.partialorder %v11836, 0.0
      %vm11965 = vcmp.ge.f32.partialorder %v11837, 0.0
      %vm11966 = vcmp.ge.f32.partialorder %v11838, 0.0
      %vm11967 = vcmp.ge.f32.partialorder %v11839, 0.0
      %vm11968 = vcmp.ge.f32.partialorder %v11840, 0.0
      %vm11969 = vcmp.ge.f32.partialorder %v11841, 0.0
      %vm11970 = vcmp.ge.f32.partialorder %v11842, 0.0
      %vm11971 = vcmp.ge.f32.partialorder %v11843, 0.0
      %vm11972 = vcmp.ge.f32.partialorder %v11844, 0.0
      %vm11973 = vcmp.ge.f32.partialorder %v11845, 0.0
      %vm11974 = vcmp.ge.f32.partialorder %v11846, 0.0
      %vm11975 = vcmp.ge.f32.partialorder %v11847, 0.0
      %vm11976 = vcmp.ge.f32.partialorder %v11848, 0.0
      %vm11977 = vcmp.ge.f32.partialorder %v11849, 0.0
      %vm11978 = vcmp.ge.f32.partialorder %v11850, 0.0
      %vm11979 = vcmp.ge.f32.partialorder %v11851, 0.0
      %vm11980 = vcmp.ge.f32.partialorder %v11852, 0.0
      %vm11981 = vcmp.ge.f32.partialorder %v11853, 0.0
      %vm11982 = vcmp.ge.f32.partialorder %v11854, 0.0
      %vm11983 = vcmp.ge.f32.partialorder %v11855, 0.0
      %vm11984 = vcmp.ge.f32.partialorder %v11856, 0.0
      %vm11985 = vcmp.ge.f32.partialorder %v11857, 0.0
      %vm11986 = vcmp.ge.f32.partialorder %v11858, 0.0
      %vm11987 = vcmp.ge.f32.partialorder %v11859, 0.0
      %vm11988 = vcmp.ge.f32.partialorder %v11860, 0.0
      %vm11989 = vcmp.ge.f32.partialorder %v11861, 0.0
      %vm11990 = vcmp.ge.f32.partialorder %v11862, 0.0
      %vm11991 = vcmp.ge.f32.partialorder %v11863, 0.0
      %vm11992 = vcmp.ge.f32.partialorder %v11864, 0.0
      %vm11993 = vcmp.ge.f32.partialorder %v11865, 0.0
      %vm11994 = vcmp.ge.f32.partialorder %v11866, 0.0
      %vm11995 = vcmp.ge.f32.partialorder %v11867, 0.0
      %vm11996 = vcmp.ge.f32.partialorder %v11868, 0.0
      %vm11997 = vcmp.ge.f32.partialorder %v11869, 0.0
      %vm11998 = vcmp.ge.f32.partialorder %v11870, 0.0
      %vm11999 = vcmp.ge.f32.partialorder %v11871, 0.0
      %vm12000 = vcmp.ge.f32.partialorder %v11872, 0.0
      %vm12001 = vcmp.ge.f32.partialorder %v11873, 0.0
      %vm12002 = vcmp.ge.f32.partialorder %v11874, 0.0
      %vm12003 = vcmp.ge.f32.partialorder %v11875, 0.0
      %vm12004 = vcmp.ge.f32.partialorder %v11876, 0.0
      %vm12005 = vcmp.ge.f32.partialorder %v11877, 0.0
      %vm12006 = vcmp.ge.f32.partialorder %v11878, 0.0
      %vm12007 = vcmp.ge.f32.partialorder %v11879, 0.0
      %vm12008 = vcmp.ge.f32.partialorder %v11880, 0.0
      %vm12009 = vcmp.ge.f32.partialorder %v11881, 0.0
      %vm12010 = vcmp.ge.f32.partialorder %v11882, 0.0
      %vm12011 = vcmp.ge.f32.partialorder %v11883, 0.0
      %vm12012 = vcmp.ge.f32.partialorder %v11884, 0.0
      %vm12013 = vcmp.ge.f32.partialorder %v11885, 0.0
      %vm12014 = vcmp.ge.f32.partialorder %v11886, 0.0
      %vm12015 = vcmp.ge.f32.partialorder %v11887, 0.0
      %vm12016 = vcmp.ge.f32.partialorder %v11888, 0.0
      %vm12017 = vcmp.ge.f32.partialorder %v11889, 0.0
      %vm12018 = vcmp.ge.f32.partialorder %v11890, 0.0
      %vm12019 = vcmp.ge.f32.partialorder %v11891, 0.0
      %vm12020 = vcmp.ge.f32.partialorder %v11892, 0.0
      %vm12021 = vcmp.ge.f32.partialorder %v11893, 0.0
      %vm12022 = vcmp.ge.f32.partialorder %v11894, 0.0
      %vm12023 = vcmp.ge.f32.partialorder %v11895, 0.0
      %vm12024 = vcmp.ge.f32.partialorder %v11896, 0.0
      %vm12025 = vcmp.ge.f32.partialorder %v11897, 0.0
      %vm12026 = vcmp.ge.f32.partialorder %v11898, 0.0
      %vm12027 = vcmp.ge.f32.partialorder %v11899, 0.0
      %vm12028 = vcmp.ge.f32.partialorder %v11900, 0.0
      %vm12029 = vcmp.ge.f32.partialorder %v11901, 0.0
      %v12030 = vmul.f32 %v11774, 0.2
      %v12031 = vmul.f32 %v11775, 0.2
      %v12032 = vmul.f32 %v11776, 0.2
      %v12033 = vmul.f32 %v11777, 0.2
      %v12034 = vmul.f32 %v11778, 0.2
      %v12035 = vmul.f32 %v11779, 0.2
      %v12036 = vmul.f32 %v11780, 0.2
      %v12037 = vmul.f32 %v11781, 0.2
      %v12038 = vmul.f32 %v11782, 0.2
      %v12039 = vmul.f32 %v11783, 0.2
      %v12040 = vmul.f32 %v11784, 0.2
      %v12041 = vmul.f32 %v11785, 0.2
      %v12042 = vmul.f32 %v11786, 0.2
      %v12043 = vmul.f32 %v11787, 0.2
      %v12044 = vmul.f32 %v11788, 0.2
      %v12045 = vmul.f32 %v11789, 0.2
      %v12046 = vmul.f32 %v11790, 0.2
      %v12047 = vmul.f32 %v11791, 0.2
      %v12048 = vmul.f32 %v11792, 0.2
      %v12049 = vmul.f32 %v11793, 0.2
      %v12050 = vmul.f32 %v11794, 0.2
      %v12051 = vmul.f32 %v11795, 0.2
      %v12052 = vmul.f32 %v11796, 0.2
      %v12053 = vmul.f32 %v11797, 0.2
      %v12054 = vmul.f32 %v11798, 0.2
      %v12055 = vmul.f32 %v11799, 0.2
      %v12056 = vmul.f32 %v11800, 0.2
      %v12057 = vmul.f32 %v11801, 0.2
      %v12058 = vmul.f32 %v11802, 0.2
      %v12059 = vmul.f32 %v11803, 0.2
      %v12060 = vmul.f32 %v11804, 0.2
      %v12061 = vmul.f32 %v11805, 0.2
      %v12062 = vmul.f32 %v11806, 0.2
      %v12063 = vmul.f32 %v11807, 0.2
      %v12064 = vmul.f32 %v11808, 0.2
      %v12065 = vmul.f32 %v11809, 0.2
      %v12066 = vmul.f32 %v11810, 0.2
      %v12067 = vmul.f32 %v11811, 0.2
      %v12068 = vmul.f32 %v11812, 0.2
      %v12069 = vmul.f32 %v11813, 0.2
      %v12070 = vmul.f32 %v11814, 0.2
      %v12071 = vmul.f32 %v11815, 0.2
      %v12072 = vmul.f32 %v11816, 0.2
      %v12073 = vmul.f32 %v11817, 0.2
      %v12074 = vmul.f32 %v11818, 0.2
      %v12075 = vmul.f32 %v11819, 0.2
      %v12076 = vmul.f32 %v11820, 0.2
      %v12077 = vmul.f32 %v11821, 0.2
      %v12078 = vmul.f32 %v11822, 0.2
      %v12079 = vmul.f32 %v11823, 0.2
      %v12080 = vmul.f32 %v11824, 0.2
      %v12081 = vmul.f32 %v11825, 0.2
      %v12082 = vmul.f32 %v11826, 0.2
      %v12083 = vmul.f32 %v11827, 0.2
      %v12084 = vmul.f32 %v11828, 0.2
      %v12085 = vmul.f32 %v11829, 0.2
      %v12086 = vmul.f32 %v11830, 0.2
      %v12087 = vmul.f32 %v11831, 0.2
      %v12088 = vmul.f32 %v11832, 0.2
      %v12089 = vmul.f32 %v11833, 0.2
      %v12090 = vmul.f32 %v11834, 0.2
      %v12091 = vmul.f32 %v11835, 0.2
      %v12092 = vmul.f32 %v11836, 0.2
      %v12093 = vmul.f32 %v11837, 0.2
      %v12094 = vmul.f32 %v11838, 0.2
      %v12095 = vmul.f32 %v11839, 0.2
      %v12096 = vmul.f32 %v11840, 0.2
      %v12097 = vmul.f32 %v11841, 0.2
      %v12098 = vmul.f32 %v11842, 0.2
      %v12099 = vmul.f32 %v11843, 0.2
      %v12100 = vmul.f32 %v11844, 0.2
      %v12101 = vmul.f32 %v11845, 0.2
      %v12102 = vmul.f32 %v11846, 0.2
      %v12103 = vmul.f32 %v11847, 0.2
      %v12104 = vmul.f32 %v11848, 0.2
      %v12105 = vmul.f32 %v11849, 0.2
      %v12106 = vmul.f32 %v11850, 0.2
      %v12107 = vmul.f32 %v11851, 0.2
      %v12108 = vmul.f32 %v11852, 0.2
      %v12109 = vmul.f32 %v11853, 0.2
      %v12110 = vmul.f32 %v11854, 0.2
      %v12111 = vmul.f32 %v11855, 0.2
      %v12112 = vmul.f32 %v11856, 0.2
      %v12113 = vmul.f32 %v11857, 0.2
      %v12114 = vmul.f32 %v11858, 0.2
      %v12115 = vmul.f32 %v11859, 0.2
      %v12116 = vmul.f32 %v11860, 0.2
      %v12117 = vmul.f32 %v11861, 0.2
      %v12118 = vmul.f32 %v11862, 0.2
      %v12119 = vmul.f32 %v11863, 0.2
      %v12120 = vmul.f32 %v11864, 0.2
      %v12121 = vmul.f32 %v11865, 0.2
      %v12122 = vmul.f32 %v11866, 0.2
      %v12123 = vmul.f32 %v11867, 0.2
      %v12124 = vmul.f32 %v11868, 0.2
      %v12125 = vmul.f32 %v11869, 0.2
      %v12126 = vmul.f32 %v11870, 0.2
      %v12127 = vmul.f32 %v11871, 0.2
      %v12128 = vmul.f32 %v11872, 0.2
      %v12129 = vmul.f32 %v11873, 0.2
      %v12130 = vmul.f32 %v11874, 0.2
      %v12131 = vmul.f32 %v11875, 0.2
      %v12132 = vmul.f32 %v11876, 0.2
      %v12133 = vmul.f32 %v11877, 0.2
      %v12134 = vmul.f32 %v11878, 0.2
      %v12135 = vmul.f32 %v11879, 0.2
      %v12136 = vmul.f32 %v11880, 0.2
      %v12137 = vmul.f32 %v11881, 0.2
      %v12138 = vmul.f32 %v11882, 0.2
      %v12139 = vmul.f32 %v11883, 0.2
      %v12140 = vmul.f32 %v11884, 0.2
      %v12141 = vmul.f32 %v11885, 0.2
      %v12142 = vmul.f32 %v11886, 0.2
      %v12143 = vmul.f32 %v11887, 0.2
      %v12144 = vmul.f32 %v11888, 0.2
      %v12145 = vmul.f32 %v11889, 0.2
      %v12146 = vmul.f32 %v11890, 0.2
      %v12147 = vmul.f32 %v11891, 0.2
      %v12148 = vmul.f32 %v11892, 0.2
      %v12149 = vmul.f32 %v11893, 0.2
      %v12150 = vmul.f32 %v11894, 0.2
      %v12151 = vmul.f32 %v11895, 0.2
      %v12152 = vmul.f32 %v11896, 0.2
      %v12153 = vmul.f32 %v11897, 0.2
      %v12154 = vmul.f32 %v11898, 0.2
      %v12155 = vmul.f32 %v11899, 0.2
      %v12156 = vmul.f32 %v11900, 0.2
      %v12157 = vmul.f32 %v11901, 0.2
      %v12158 = vsel %vm11902, %v11774, %v12030
      %v12159 = vsel %vm11903, %v11775, %v12031
      %v12160 = vsel %vm11904, %v11776, %v12032
      %v12161 = vsel %vm11905, %v11777, %v12033
      %v12162 = vsel %vm11906, %v11778, %v12034
      %v12163 = vsel %vm11907, %v11779, %v12035
      %v12164 = vsel %vm11908, %v11780, %v12036
      %v12165 = vsel %vm11909, %v11781, %v12037
      %v12166 = vsel %vm11910, %v11782, %v12038
      %v12167 = vsel %vm11911, %v11783, %v12039
      %v12168 = vsel %vm11912, %v11784, %v12040
      %v12169 = vsel %vm11913, %v11785, %v12041
      %v12170 = vsel %vm11914, %v11786, %v12042
      %v12171 = vsel %vm11915, %v11787, %v12043
      %v12172 = vsel %vm11916, %v11788, %v12044
      %v12173 = vsel %vm11917, %v11789, %v12045
      %v12174 = vsel %vm11918, %v11790, %v12046
      %v12175 = vsel %vm11919, %v11791, %v12047
      %v12176 = vsel %vm11920, %v11792, %v12048
      %v12177 = vsel %vm11921, %v11793, %v12049
      %v12178 = vsel %vm11922, %v11794, %v12050
      %v12179 = vsel %vm11923, %v11795, %v12051
      %v12180 = vsel %vm11924, %v11796, %v12052
      %v12181 = vsel %vm11925, %v11797, %v12053
      %v12182 = vsel %vm11926, %v11798, %v12054
      %v12183 = vsel %vm11927, %v11799, %v12055
      %v12184 = vsel %vm11928, %v11800, %v12056
      %v12185 = vsel %vm11929, %v11801, %v12057
      %v12186 = vsel %vm11930, %v11802, %v12058
      %v12187 = vsel %vm11931, %v11803, %v12059
      %v12188 = vsel %vm11932, %v11804, %v12060
      %v12189 = vsel %vm11933, %v11805, %v12061
      %v12190 = vsel %vm11934, %v11806, %v12062
      %v12191 = vsel %vm11935, %v11807, %v12063
      %v12192 = vsel %vm11936, %v11808, %v12064
      %v12193 = vsel %vm11937, %v11809, %v12065
      %v12194 = vsel %vm11938, %v11810, %v12066
      %v12195 = vsel %vm11939, %v11811, %v12067
      %v12196 = vsel %vm11940, %v11812, %v12068
      %v12197 = vsel %vm11941, %v11813, %v12069
      %v12198 = vsel %vm11942, %v11814, %v12070
      %v12199 = vsel %vm11943, %v11815, %v12071
      %v12200 = vsel %vm11944, %v11816, %v12072
      %v12201 = vsel %vm11945, %v11817, %v12073
      %v12202 = vsel %vm11946, %v11818, %v12074
      %v12203 = vsel %vm11947, %v11819, %v12075
      %v12204 = vsel %vm11948, %v11820, %v12076
      %v12205 = vsel %vm11949, %v11821, %v12077
      %v12206 = vsel %vm11950, %v11822, %v12078
      %v12207 = vsel %vm11951, %v11823, %v12079
      %v12208 = vsel %vm11952, %v11824, %v12080
      %v12209 = vsel %vm11953, %v11825, %v12081
      %v12210 = vsel %vm11954, %v11826, %v12082
      %v12211 = vsel %vm11955, %v11827, %v12083
      %v12212 = vsel %vm11956, %v11828, %v12084
      %v12213 = vsel %vm11957, %v11829, %v12085
      %v12214 = vsel %vm11958, %v11830, %v12086
      %v12215 = vsel %vm11959, %v11831, %v12087
      %v12216 = vsel %vm11960, %v11832, %v12088
      %v12217 = vsel %vm11961, %v11833, %v12089
      %v12218 = vsel %vm11962, %v11834, %v12090
      %v12219 = vsel %vm11963, %v11835, %v12091
      %v12220 = vsel %vm11964, %v11836, %v12092
      %v12221 = vsel %vm11965, %v11837, %v12093
      %v12222 = vsel %vm11966, %v11838, %v12094
      %v12223 = vsel %vm11967, %v11839, %v12095
      %v12224 = vsel %vm11968, %v11840, %v12096
      %v12225 = vsel %vm11969, %v11841, %v12097
      %v12226 = vsel %vm11970, %v11842, %v12098
      %v12227 = vsel %vm11971, %v11843, %v12099
      %v12228 = vsel %vm11972, %v11844, %v12100
      %v12229 = vsel %vm11973, %v11845, %v12101
      %v12230 = vsel %vm11974, %v11846, %v12102
      %v12231 = vsel %vm11975, %v11847, %v12103
      %v12232 = vsel %vm11976, %v11848, %v12104
      %v12233 = vsel %vm11977, %v11849, %v12105
      %v12234 = vsel %vm11978, %v11850, %v12106
      %v12235 = vsel %vm11979, %v11851, %v12107
      %v12236 = vsel %vm11980, %v11852, %v12108
      %v12237 = vsel %vm11981, %v11853, %v12109
      %v12238 = vsel %vm11982, %v11854, %v12110
      %v12239 = vsel %vm11983, %v11855, %v12111
      %v12240 = vsel %vm11984, %v11856, %v12112
      %v12241 = vsel %vm11985, %v11857, %v12113
      %v12242 = vsel %vm11986, %v11858, %v12114
      %v12243 = vsel %vm11987, %v11859, %v12115
      %v12244 = vsel %vm11988, %v11860, %v12116
      %v12245 = vsel %vm11989, %v11861, %v12117
      %v12246 = vsel %vm11990, %v11862, %v12118
      %v12247 = vsel %vm11991, %v11863, %v12119
      %v12248 = vsel %vm11992, %v11864, %v12120
      %v12249 = vsel %vm11993, %v11865, %v12121
      %v12250 = vsel %vm11994, %v11866, %v12122
      %v12251 = vsel %vm11995, %v11867, %v12123
      %v12252 = vsel %vm11996, %v11868, %v12124
      %v12253 = vsel %vm11997, %v11869, %v12125
      %v12254 = vsel %vm11998, %v11870, %v12126
      %v12255 = vsel %vm11999, %v11871, %v12127
      %v12256 = vsel %vm12000, %v11872, %v12128
      %v12257 = vsel %vm12001, %v11873, %v12129
      %v12258 = vsel %vm12002, %v11874, %v12130
      %v12259 = vsel %vm12003, %v11875, %v12131
      %v12260 = vsel %vm12004, %v11876, %v12132
      %v12261 = vsel %vm12005, %v11877, %v12133
      %v12262 = vsel %vm12006, %v11878, %v12134
      %v12263 = vsel %vm12007, %v11879, %v12135
      %v12264 = vsel %vm12008, %v11880, %v12136
      %v12265 = vsel %vm12009, %v11881, %v12137
      %v12266 = vsel %vm12010, %v11882, %v12138
      %v12267 = vsel %vm12011, %v11883, %v12139
      %v12268 = vsel %vm12012, %v11884, %v12140
      %v12269 = vsel %vm12013, %v11885, %v12141
      %v12270 = vsel %vm12014, %v11886, %v12142
      %v12271 = vsel %vm12015, %v11887, %v12143
      %v12272 = vsel %vm12016, %v11888, %v12144
      %v12273 = vsel %vm12017, %v11889, %v12145
      %v12274 = vsel %vm12018, %v11890, %v12146
      %v12275 = vsel %vm12019, %v11891, %v12147
      %v12276 = vsel %vm12020, %v11892, %v12148
      %v12277 = vsel %vm12021, %v11893, %v12149
      %v12278 = vsel %vm12022, %v11894, %v12150
      %v12279 = vsel %vm12023, %v11895, %v12151
      %v12280 = vsel %vm12024, %v11896, %v12152
      %v12281 = vsel %vm12025, %v11897, %v12153
      %v12282 = vsel %vm12026, %v11898, %v12154
      %v12283 = vsel %vm12027, %v11899, %v12155
      %v12284 = vsel %vm12028, %v11900, %v12156
      %v12285 = vsel %vm12029, %v11901, %v12157
      %vm12286 = vcmask 195584
      %12287 = vst.msk [vmem:[%s163] sm:$0xff] %vm12286, %v12158
      %12288 = vst.msk [vmem:[%s163 + $0x8] sm:$0xff] %vm12286, %v12159
      %12289 = vst.msk [vmem:[%s163 + $0x10] sm:$0xff] %vm12286, %v12160
      %12290 = vst.msk [vmem:[%s163 + $0x18] sm:$0xff] %vm12286, %v12161
      %12291 = vst.msk [vmem:[%s163 + $0x20] sm:$0xff] %vm12286, %v12162
      %12292 = vst.msk [vmem:[%s163 + $0x28] sm:$0xff] %vm12286, %v12163
      %12293 = vst.msk [vmem:[%s163 + $0x30] sm:$0xff] %vm12286, %v12164
      %12294 = vst.msk [vmem:[%s163 + $0x38] sm:$0xff] %vm12286, %v12165
      %12295 = vst.msk [vmem:[%s163 + $0x40] sm:$0xff] %vm12286, %v12166
      %12296 = vst.msk [vmem:[%s163 + $0x48] sm:$0xff] %vm12286, %v12167
      %12297 = vst.msk [vmem:[%s163 + $0x50] sm:$0xff] %vm12286, %v12168
      %12298 = vst.msk [vmem:[%s163 + $0x58] sm:$0xff] %vm12286, %v12169
      %12299 = vst.msk [vmem:[%s163 + $0x60] sm:$0xff] %vm12286, %v12170
      %12300 = vst.msk [vmem:[%s163 + $0x68] sm:$0xff] %vm12286, %v12171
      %12301 = vst.msk [vmem:[%s163 + $0x70] sm:$0xff] %vm12286, %v12172
      %12302 = vst.msk [vmem:[%s163 + $0x78] sm:$0xff] %vm12286, %v12173
      %12303 = vst.msk [vmem:[%s163 + $0x80] sm:$0xff] %vm12286, %v12174
      %12304 = vst.msk [vmem:[%s163 + $0x88] sm:$0xff] %vm12286, %v12175
      %12305 = vst.msk [vmem:[%s163 + $0x90] sm:$0xff] %vm12286, %v12176
      %12306 = vst.msk [vmem:[%s163 + $0x98] sm:$0xff] %vm12286, %v12177
      %12307 = vst.msk [vmem:[%s163 + $0xa0] sm:$0xff] %vm12286, %v12178
      %12308 = vst.msk [vmem:[%s163 + $0xa8] sm:$0xff] %vm12286, %v12179
      %12309 = vst.msk [vmem:[%s163 + $0xb0] sm:$0xff] %vm12286, %v12180
      %12310 = vst.msk [vmem:[%s163 + $0xb8] sm:$0xff] %vm12286, %v12181
      %12311 = vst.msk [vmem:[%s163 + $0xc0] sm:$0xff] %vm12286, %v12182
      %12312 = vst.msk [vmem:[%s163 + $0xc8] sm:$0xff] %vm12286, %v12183
      %12313 = vst.msk [vmem:[%s163 + $0xd0] sm:$0xff] %vm12286, %v12184
      %12314 = vst.msk [vmem:[%s163 + $0xd8] sm:$0xff] %vm12286, %v12185
      %12315 = vst.msk [vmem:[%s163 + $0xe0] sm:$0xff] %vm12286, %v12186
      %12316 = vst.msk [vmem:[%s163 + $0xe8] sm:$0xff] %vm12286, %v12187
      %12317 = vst.msk [vmem:[%s163 + $0xf0] sm:$0xff] %vm12286, %v12188
      %12318 = vst.msk [vmem:[%s163 + $0xf8] sm:$0xff] %vm12286, %v12189
      %12319 = vst.msk [vmem:[%s163 + $0x100] sm:$0xff] %vm12286, %v12190
      %12320 = vst.msk [vmem:[%s163 + $0x108] sm:$0xff] %vm12286, %v12191
      %12321 = vst.msk [vmem:[%s163 + $0x110] sm:$0xff] %vm12286, %v12192
      %12322 = vst.msk [vmem:[%s163 + $0x118] sm:$0xff] %vm12286, %v12193
      %12323 = vst.msk [vmem:[%s163 + $0x120] sm:$0xff] %vm12286, %v12194
      %12324 = vst.msk [vmem:[%s163 + $0x128] sm:$0xff] %vm12286, %v12195
      %12325 = vst.msk [vmem:[%s163 + $0x130] sm:$0xff] %vm12286, %v12196
      %12326 = vst.msk [vmem:[%s163 + $0x138] sm:$0xff] %vm12286, %v12197
      %12327 = vst.msk [vmem:[%s163 + $0x140] sm:$0xff] %vm12286, %v12198
      %12328 = vst.msk [vmem:[%s163 + $0x148] sm:$0xff] %vm12286, %v12199
      %12329 = vst.msk [vmem:[%s163 + $0x150] sm:$0xff] %vm12286, %v12200
      %12330 = vst.msk [vmem:[%s163 + $0x158] sm:$0xff] %vm12286, %v12201
      %12331 = vst.msk [vmem:[%s163 + $0x160] sm:$0xff] %vm12286, %v12202
      %12332 = vst.msk [vmem:[%s163 + $0x168] sm:$0xff] %vm12286, %v12203
      %12333 = vst.msk [vmem:[%s163 + $0x170] sm:$0xff] %vm12286, %v12204
      %12334 = vst.msk [vmem:[%s163 + $0x178] sm:$0xff] %vm12286, %v12205
      %12335 = vst.msk [vmem:[%s163 + $0x180] sm:$0xff] %vm12286, %v12206
      %12336 = vst.msk [vmem:[%s163 + $0x188] sm:$0xff] %vm12286, %v12207
      %12337 = vst.msk [vmem:[%s163 + $0x190] sm:$0xff] %vm12286, %v12208
      %12338 = vst.msk [vmem:[%s163 + $0x198] sm:$0xff] %vm12286, %v12209
      %12339 = vst.msk [vmem:[%s163 + $0x1a0] sm:$0xff] %vm12286, %v12210
      %12340 = vst.msk [vmem:[%s163 + $0x1a8] sm:$0xff] %vm12286, %v12211
      %12341 = vst.msk [vmem:[%s163 + $0x1b0] sm:$0xff] %vm12286, %v12212
      %12342 = vst.msk [vmem:[%s163 + $0x1b8] sm:$0xff] %vm12286, %v12213
      %12343 = vst.msk [vmem:[%s163 + $0x1c0] sm:$0xff] %vm12286, %v12214
      %12344 = vst.msk [vmem:[%s163 + $0x1c8] sm:$0xff] %vm12286, %v12215
      %12345 = vst.msk [vmem:[%s163 + $0x1d0] sm:$0xff] %vm12286, %v12216
      %12346 = vst.msk [vmem:[%s163 + $0x1d8] sm:$0xff] %vm12286, %v12217
      %12347 = vst.msk [vmem:[%s163 + $0x1e0] sm:$0xff] %vm12286, %v12218
      %12348 = vst.msk [vmem:[%s163 + $0x1e8] sm:$0xff] %vm12286, %v12219
      %12349 = vst.msk [vmem:[%s163 + $0x1f0] sm:$0xff] %vm12286, %v12220
      %12350 = vst.msk [vmem:[%s163 + $0x1f8] sm:$0xff] %vm12286, %v12221
      %12351 = vst.msk [vmem:[%s163 + $0x200] sm:$0xff] %vm12286, %v12222
      %12352 = vst.msk [vmem:[%s163 + $0x208] sm:$0xff] %vm12286, %v12223
      %12353 = vst.msk [vmem:[%s163 + $0x210] sm:$0xff] %vm12286, %v12224
      %12354 = vst.msk [vmem:[%s163 + $0x218] sm:$0xff] %vm12286, %v12225
      %12355 = vst.msk [vmem:[%s163 + $0x220] sm:$0xff] %vm12286, %v12226
      %12356 = vst.msk [vmem:[%s163 + $0x228] sm:$0xff] %vm12286, %v12227
      %12357 = vst.msk [vmem:[%s163 + $0x230] sm:$0xff] %vm12286, %v12228
      %12358 = vst.msk [vmem:[%s163 + $0x238] sm:$0xff] %vm12286, %v12229
      %12359 = vst.msk [vmem:[%s163 + $0x240] sm:$0xff] %vm12286, %v12230
      %12360 = vst.msk [vmem:[%s163 + $0x248] sm:$0xff] %vm12286, %v12231
      %12361 = vst.msk [vmem:[%s163 + $0x250] sm:$0xff] %vm12286, %v12232
      %12362 = vst.msk [vmem:[%s163 + $0x258] sm:$0xff] %vm12286, %v12233
      %12363 = vst.msk [vmem:[%s163 + $0x260] sm:$0xff] %vm12286, %v12234
      %12364 = vst.msk [vmem:[%s163 + $0x268] sm:$0xff] %vm12286, %v12235
      %12365 = vst.msk [vmem:[%s163 + $0x270] sm:$0xff] %vm12286, %v12236
      %12366 = vst.msk [vmem:[%s163 + $0x278] sm:$0xff] %vm12286, %v12237
      %12367 = vst.msk [vmem:[%s163 + $0x280] sm:$0xff] %vm12286, %v12238
      %12368 = vst.msk [vmem:[%s163 + $0x288] sm:$0xff] %vm12286, %v12239
      %12369 = vst.msk [vmem:[%s163 + $0x290] sm:$0xff] %vm12286, %v12240
      %12370 = vst.msk [vmem:[%s163 + $0x298] sm:$0xff] %vm12286, %v12241
      %12371 = vst.msk [vmem:[%s163 + $0x2a0] sm:$0xff] %vm12286, %v12242
      %12372 = vst.msk [vmem:[%s163 + $0x2a8] sm:$0xff] %vm12286, %v12243
      %12373 = vst.msk [vmem:[%s163 + $0x2b0] sm:$0xff] %vm12286, %v12244
      %12374 = vst.msk [vmem:[%s163 + $0x2b8] sm:$0xff] %vm12286, %v12245
      %12375 = vst.msk [vmem:[%s163 + $0x2c0] sm:$0xff] %vm12286, %v12246
      %12376 = vst.msk [vmem:[%s163 + $0x2c8] sm:$0xff] %vm12286, %v12247
      %12377 = vst.msk [vmem:[%s163 + $0x2d0] sm:$0xff] %vm12286, %v12248
      %12378 = vst.msk [vmem:[%s163 + $0x2d8] sm:$0xff] %vm12286, %v12249
      %12379 = vst.msk [vmem:[%s163 + $0x2e0] sm:$0xff] %vm12286, %v12250
      %12380 = vst.msk [vmem:[%s163 + $0x2e8] sm:$0xff] %vm12286, %v12251
      %12381 = vst.msk [vmem:[%s163 + $0x2f0] sm:$0xff] %vm12286, %v12252
      %12382 = vst.msk [vmem:[%s163 + $0x2f8] sm:$0xff] %vm12286, %v12253
      %12383 = vst.msk [vmem:[%s163 + $0x300] sm:$0xff] %vm12286, %v12254
      %12384 = vst.msk [vmem:[%s163 + $0x308] sm:$0xff] %vm12286, %v12255
      %12385 = vst.msk [vmem:[%s163 + $0x310] sm:$0xff] %vm12286, %v12256
      %12386 = vst.msk [vmem:[%s163 + $0x318] sm:$0xff] %vm12286, %v12257
      %12387 = vst.msk [vmem:[%s163 + $0x320] sm:$0xff] %vm12286, %v12258
      %12388 = vst.msk [vmem:[%s163 + $0x328] sm:$0xff] %vm12286, %v12259
      %12389 = vst.msk [vmem:[%s163 + $0x330] sm:$0xff] %vm12286, %v12260
      %12390 = vst.msk [vmem:[%s163 + $0x338] sm:$0xff] %vm12286, %v12261
      %12391 = vst.msk [vmem:[%s163 + $0x340] sm:$0xff] %vm12286, %v12262
      %12392 = vst.msk [vmem:[%s163 + $0x348] sm:$0xff] %vm12286, %v12263
      %12393 = vst.msk [vmem:[%s163 + $0x350] sm:$0xff] %vm12286, %v12264
      %12394 = vst.msk [vmem:[%s163 + $0x358] sm:$0xff] %vm12286, %v12265
      %12395 = vst.msk [vmem:[%s163 + $0x360] sm:$0xff] %vm12286, %v12266
      %12396 = vst.msk [vmem:[%s163 + $0x368] sm:$0xff] %vm12286, %v12267
      %12397 = vst.msk [vmem:[%s163 + $0x370] sm:$0xff] %vm12286, %v12268
      %12398 = vst.msk [vmem:[%s163 + $0x378] sm:$0xff] %vm12286, %v12269
      %12399 = vst.msk [vmem:[%s163 + $0x380] sm:$0xff] %vm12286, %v12270
      %12400 = vst.msk [vmem:[%s163 + $0x388] sm:$0xff] %vm12286, %v12271
      %12401 = vst.msk [vmem:[%s163 + $0x390] sm:$0xff] %vm12286, %v12272
      %12402 = vst.msk [vmem:[%s163 + $0x398] sm:$0xff] %vm12286, %v12273
      %12403 = vst.msk [vmem:[%s163 + $0x3a0] sm:$0xff] %vm12286, %v12274
      %12404 = vst.msk [vmem:[%s163 + $0x3a8] sm:$0xff] %vm12286, %v12275
      %12405 = vst.msk [vmem:[%s163 + $0x3b0] sm:$0xff] %vm12286, %v12276
      %12406 = vst.msk [vmem:[%s163 + $0x3b8] sm:$0xff] %vm12286, %v12277
      %12407 = vst.msk [vmem:[%s163 + $0x3c0] sm:$0xff] %vm12286, %v12278
      %12408 = vst.msk [vmem:[%s163 + $0x3c8] sm:$0xff] %vm12286, %v12279
      %12409 = vst.msk [vmem:[%s163 + $0x3d0] sm:$0xff] %vm12286, %v12280
      %12410 = vst.msk [vmem:[%s163 + $0x3d8] sm:$0xff] %vm12286, %v12281
      %12411 = vst.msk [vmem:[%s163 + $0x3e0] sm:$0xff] %vm12286, %v12282
      %12412 = vst.msk [vmem:[%s163 + $0x3e8] sm:$0xff] %vm12286, %v12283
      %12413 = vst.msk [vmem:[%s163 + $0x3f0] sm:$0xff] %vm12286, %v12284
      %12414 = vst.msk [vmem:[%s163 + $0x3f8] sm:$0xff] %vm12286, %v12285
      %p12415 = scmp.lt.s32.totalorder %s13, 1
      %s12416 = scalar_select %p12415, %s13, 1
      %s12417 = smul.addr %s12416, 128
      %s12418 = smul.addr %s12417, 8
      %s12419 = scalar_lea.vmem %s2, %s12418
      // Predicated region
      $region29: #{tpu_custom_call.1} parent=27 // pred_check
        %p12420 = pneg %p83
      $region30: #{tpu_custom_call.1} parent=27 // pred_check_branch
        %12422 = sbr.rel (%p12420) target = $region32
      $region31: #{tpu_custom_call.1} parent=27 // pred_region
        _
      $region32: #{tpu_custom_call.1} parent=27 // pred_fallthru
        _
    $region28: #{tpu_custom_call.1} parent=5 // pred_fallthru
      _
    %p12423 = scmp.le.s32.totalorder 2, %s8
    // Predicated region
    $region33: #{tpu_custom_call.1} parent=5 // pred_check
      %p12424 = pneg %p12423
    $region34: #{tpu_custom_call.1} parent=5 // pred_check_branch
      %12426 = sbr.rel (%p12424) target = $region36
    $region35: #{tpu_custom_call.1} parent=5 // pred_region
      %s12427 = ssub.s32 %s8, 2
      // Predicated region
      $region37: #{tpu_custom_call.1} parent=35 // pred_check
        %p12428 = pneg %p89
      $region38: #{tpu_custom_call.1} parent=35 // pred_check_branch
        %12430 = sbr.rel (%p12428) target = $region40
      $region39: #{tpu_custom_call.1} parent=35 // pred_region
        %p12431 = scmp.lt.s32.totalorder %s14, 1
        %s12432 = scalar_select %p12431, %s14, 1
        %s12433 = smul.addr %s12432, 128
        %s12434 = smul.addr %s12433, 8
        %s12435 = scalar_lea.vmem %s2, %s12434
      $region40: #{tpu_custom_call.1} parent=35 // pred_fallthru
        _
    $region36: #{tpu_custom_call.1} parent=5 // pred_fallthru
      _
  $region6: #{tpu_custom_call.1} parent=0 // loop_footer
    %s12 = sadd.s32 1, %s8
  $region7: #{tpu_custom_call.1} parent=0 // loop_footer_branch
    %7 = sbr.rel target = $region3
  $region8: #{tpu_custom_call.1} parent=0 // loop_exit
    _

</llo_original>
